<compile_context>
chip_gen: v7x
topology: tpu7x:2x2x1
jax: 0.10.0
libtpu: 0.0.40
codegen_flags: <defaults>
</compile_context>

<pallas_src>
import jax
import jax.numpy as jnp
from jax.experimental import pallas as pl
from jax.experimental.pallas import tpu as pltpu

# ----------------------------- hyperparameters ------------------------------
d_model = 512
d_ff = 2048
LN_EPS = 1e-5          # torch.nn.LayerNorm default
FF_CHUNK = 512         # d_ff processed in 4 chunks of 512 columns


def _round_up(a, b):
    return ((a + b - 1) // b) * b


# ------------------------------ Pallas kernel -------------------------------
def _poswise_ffn_kernel(x_ref, w1_ref, b1_ref, w2_ref, b2_ref, g_ref, beta_ref,
                        o_ref):
    """Fused LN( relu(x@W1 + b1) @ W2 + b2 + x ) on one (tm, d_model) row tile."""
    x = x_ref[...]                                    # (tm, d_model) fp32
    x_bf = x.astype(jnp.bfloat16)                     # MXU operand (bf16-native)

    # fp32 accumulator, seeded with residual + second conv bias.
    y = x + b2_ref[...]

    # Chunk d_ff so only a (tm, FF_CHUNK) intermediate is live at a time
    # (static Python loop -> fully unrolled for the LLO scheduler).
    for c in range(0, d_ff, FF_CHUNK):
        h = jnp.dot(x_bf, w1_ref[:, c:c + FF_CHUNK],
                    preferred_element_type=jnp.float32)
        h = jnp.maximum(h + b1_ref[:, c:c + FF_CHUNK], 0.0)      # ReLU (fp32)
        y = y + jnp.dot(h.astype(jnp.bfloat16), w2_ref[c:c + FF_CHUNK, :],
                        preferred_element_type=jnp.float32)

    # LayerNorm over the feature dim (fp32).
    mean = jnp.mean(y, axis=-1, keepdims=True)
    var = jnp.mean(jnp.square(y - mean), axis=-1, keepdims=True)
    o_ref[...] = ((y - mean) * jax.lax.rsqrt(var + LN_EPS) * g_ref[...]
                  + beta_ref[...])


def poswise_ffn(x, w1, b1, w2, b2, gamma, beta, *, row_tile=512):
    """x: (B, L, d_model) fp32. W1: (d_model, d_ff), W2: (d_ff, d_model)."""
    B, L, dm = x.shape
    assert dm == d_model
    M = B * L
    x2 = x.reshape(M, dm).astype(jnp.float32)

    # Pad rows only up to the 8-sublane granule (no full-tile padding);
    # partial last grid blocks are handled by Pallas' ragged-block masking.
    M_pad = _round_up(max(M, 8), 8)
    if M_pad != M:
        x2 = jnp.pad(x2, ((0, M_pad - M), (0, 0)))

    # Row tile: large enough to hide MXU weight pushes / per-step overhead,
    # but split into >= 2 grid steps when possible (v7x has 2 TensorCores).
    if M_pad >= 2 * row_tile:
        tm = row_tile
    else:
        tm = max(8, min(_round_up(pl.cdiv(M_pad, 2), 8), M_pad))
    grid = (pl.cdiv(M_pad, tm),)

    # Generation-aware VMEM budget: v7x has 64 MiB physical, v5e/v6e 128 MiB.
    try:
        vmem_phys = pltpu.get_tpu_info().vmem_capacity_bytes
    except Exception:
        vmem_phys = 64 * 1024 * 1024                 # conservative fallback
    vmem_limit = int(min(96 * 1024 * 1024, vmem_phys - 8 * 1024 * 1024))

    # bf16 weights for the MXU (activations are cast per-tile in the kernel).
    w1_bf = w1.astype(jnp.bfloat16)
    w2_bf = w2.astype(jnp.bfloat16)

    const_kw = dict(pipeline_mode=pl.Buffered(1))    # loop-invariant operands

    cost = pl.CostEstimate(
        flops=4 * M_pad * d_model * d_ff,                    # two matmuls
        transcendentals=M_pad,                               # rsqrt per row
        bytes_accessed=(2 * M_pad * d_model * 4              # x read + out write
                        + 2 * d_model * d_ff * 2             # bf16 W1 + W2
                        + (d_ff + 3 * d_model) * 4),         # biases + LN params
    )

    out = pl.pallas_call(
        _poswise_ffn_kernel,
        out_shape=jax.ShapeDtypeStruct((M_pad, dm), jnp.float32),
        grid=grid,
        in_specs=[
            pl.BlockSpec((tm, dm), lambda i: (i, 0)),                  # x rows
            pl.BlockSpec((dm, d_ff), lambda i: (0, 0), **const_kw),    # W1 (bf16)
            pl.BlockSpec((1, d_ff), lambda i: (0, 0), **const_kw),     # b1
            pl.BlockSpec((d_ff, dm), lambda i: (0, 0), **const_kw),    # W2 (bf16)
            pl.BlockSpec((1, dm), lambda i: (0, 0), **const_kw),       # b2
            pl.BlockSpec((1, dm), lambda i: (0, 0), **const_kw),       # LN gamma
            pl.BlockSpec((1, dm), lambda i: (0, 0), **const_kw),       # LN beta
        ],
        out_specs=pl.BlockSpec((tm, dm), lambda i: (i, 0)),
        compiler_params=pltpu.CompilerParams(
            dimension_semantics=("parallel",),
            vmem_limit_bytes=vmem_limit,
        ),
        cost_estimate=cost,
    )(
        x2,
        w1_bf, b1.reshape(1, d_ff).astype(jnp.float32),
        w2_bf, b2.reshape(1, d_model).astype(jnp.float32),
        gamma.reshape(1, d_model).astype(jnp.float32),
        beta.reshape(1, d_model).astype(jnp.float32),
    )
    return out[:M].reshape(B, L, dm)


# --------------------------- pure-JAX reference ------------------------------
def poswise_ffn_reference(x, w1, b1, w2, b2, gamma, beta):
    hp = jax.lax.Precision.HIGHEST
    h = jnp.maximum(jnp.einsum("bld,df->blf", x, w1, precision=hp) + b1, 0.0)
    y = jnp.einsum("blf,fd->bld", h, w2, precision=hp) + b2 + x
    mean = jnp.mean(y, axis=-1, keepdims=True)
    var = jnp.mean(jnp.square(y - mean), axis=-1, keepdims=True)
    return (y - mean) * jax.lax.rsqrt(var + LN_EPS) * gamma + beta


# ---------------------------------- main -------------------------------------
if __name__ == "__main__":
    key = jax.random.PRNGKey(0)
    k_x, k_w1, k_b1, k_w2, k_b2 = jax.random.split(key, 5)

    batch, seq = 2, 8  # small shapes; channel dims fixed by the module (512, 2048)
    x = jax.random.normal(k_x, (batch, seq, d_model), dtype=jnp.float32)

    # Pointwise-linear equivalents of the conv1d(k=1) weights.
    w1 = 0.02 * jax.random.normal(k_w1, (d_model, d_ff), dtype=jnp.float32)
    b1 = 0.01 * jax.random.normal(k_b1, (d_ff,), dtype=jnp.float32)
    w2 = 0.02 * jax.random.normal(k_w2, (d_ff, d_model), dtype=jnp.float32)
    b2 = 0.01 * jax.random.normal(k_b2, (d_model,), dtype=jnp.float32)
    gamma = jnp.ones((d_model,), jnp.float32)
    beta = jnp.zeros((d_model,), jnp.float32)

    fwd = jax.jit(poswise_ffn)
    out = fwd(x, w1, b1, w2, b2, gamma, beta)
    jax.block_until_ready(out)

    ref = poswise_ffn_reference(x, w1, b1, w2, b2, gamma, beta)

    assert out.shape == (batch, seq, d_model)
    assert bool(jnp.all(jnp.isfinite(out)))
    max_err = float(jnp.max(jnp.abs(out - ref)))
    # bf16 MXU operands (fp32 accumulation) vs a fp32 HIGHEST-precision reference.
    assert max_err < 3e-2, f"max abs error vs reference: {max_err}"
    print("KERNEL_OK")
</pallas_src>

<mosaic_0001>
module attributes {stable_mosaic.version = 11 : i64} {
  func.func @_poswise_ffn_kernel(%arg0: i32, %arg1: memref<8x512xf32, #tpu.memory_space<vmem>>, %arg2: memref<512x2048xbf16, #tpu.memory_space<vmem>>, %arg3: memref<1x2048xf32, #tpu.memory_space<vmem>>, %arg4: memref<2048x512xbf16, #tpu.memory_space<vmem>>, %arg5: memref<1x512xf32, #tpu.memory_space<vmem>>, %arg6: memref<1x512xf32, #tpu.memory_space<vmem>>, %arg7: memref<1x512xf32, #tpu.memory_space<vmem>>, %arg8: memref<8x512xf32, #tpu.memory_space<vmem>>) attributes {dimension_semantics = [#tpu.dimension_semantics<parallel>], iteration_bounds = array<i64: 2>, scalar_prefetch = 0 : i64, scratch_operands = 0 : i64, tpu.core_type = #tpu.core_type<tc>, window_params = [{transform_indices = @transform_0, window_bounds = array<i64: 8, 512>}, {pipeline_mode = #tpu.pipeline_mode<synchronous>, transform_indices = @transform_1, window_bounds = array<i64: 512, 2048>}, {pipeline_mode = #tpu.pipeline_mode<synchronous>, transform_indices = @transform_2, window_bounds = array<i64: 1, 2048>}, {pipeline_mode = #tpu.pipeline_mode<synchronous>, transform_indices = @transform_3, window_bounds = array<i64: 2048, 512>}, {pipeline_mode = #tpu.pipeline_mode<synchronous>, transform_indices = @transform_4, window_bounds = array<i64: 1, 512>}, {pipeline_mode = #tpu.pipeline_mode<synchronous>, transform_indices = @transform_5, window_bounds = array<i64: 1, 512>}, {pipeline_mode = #tpu.pipeline_mode<synchronous>, transform_indices = @transform_6, window_bounds = array<i64: 1, 512>}, {transform_indices = @transform_7, window_bounds = array<i64: 8, 512>}]} {
    %c0 = arith.constant 0 : index
    %c0_0 = arith.constant 0 : index
    %0 = vector.load %arg1[%c0, %c0_0] : memref<8x512xf32, #tpu.memory_space<vmem>>, vector<8x512xf32>
    %1 = arith.truncf %0 : vector<8x512xf32> to vector<8x512xbf16>
    %c0_1 = arith.constant 0 : index
    %c0_2 = arith.constant 0 : index
    %2 = vector.load %arg5[%c0_1, %c0_2] : memref<1x512xf32, #tpu.memory_space<vmem>>, vector<1x512xf32>
    %3 = vector.broadcast %2 : vector<1x512xf32> to vector<8x512xf32>
    %4 = arith.addf %0, %3 : vector<8x512xf32>
    %c0_3 = arith.constant 0 : index
    %c0_4 = arith.constant 0 : index
    %5 = vector.load %arg2[%c0_3, %c0_4] : memref<512x2048xbf16, #tpu.memory_space<vmem>>, vector<512x512xbf16>
    %cst = arith.constant dense<0.000000e+00> : vector<8x512xf32>
    %6 = tpu.matmul %1, %5, %cst {dimension_numbers = #tpu.dot_dimension_numbers<[1], [0], [0], [1], [0, 0, 1, 1], [], []>} : vector<8x512xbf16>, vector<512x512xbf16>, vector<8x512xf32> -> vector<8x512xf32>
    %c0_5 = arith.constant 0 : index
    %c0_6 = arith.constant 0 : index
    %7 = vector.load %arg3[%c0_5, %c0_6] : memref<1x2048xf32, #tpu.memory_space<vmem>>, vector<1x512xf32>
    %8 = vector.broadcast %7 : vector<1x512xf32> to vector<8x512xf32>
    %9 = arith.addf %6, %8 : vector<8x512xf32>
    %cst_7 = arith.constant 0.000000e+00 : f32
    %10 = vector.broadcast %cst_7 : f32 to vector<8x512xf32>
    %11 = arith.maximumf %9, %10 : vector<8x512xf32>
    %12 = arith.truncf %11 : vector<8x512xf32> to vector<8x512xbf16>
    %c0_8 = arith.constant 0 : index
    %c0_9 = arith.constant 0 : index
    %13 = vector.load %arg4[%c0_8, %c0_9] : memref<2048x512xbf16, #tpu.memory_space<vmem>>, vector<512x512xbf16>
    %cst_10 = arith.constant dense<0.000000e+00> : vector<8x512xf32>
    %14 = tpu.matmul %12, %13, %cst_10 {dimension_numbers = #tpu.dot_dimension_numbers<[1], [0], [0], [1], [0, 0, 1, 1], [], []>} : vector<8x512xbf16>, vector<512x512xbf16>, vector<8x512xf32> -> vector<8x512xf32>
    %15 = arith.addf %4, %14 : vector<8x512xf32>
    %c0_11 = arith.constant 0 : index
    %c512 = arith.constant 512 : index
    %16 = vector.load %arg2[%c0_11, %c512] : memref<512x2048xbf16, #tpu.memory_space<vmem>>, vector<512x512xbf16>
    %cst_12 = arith.constant dense<0.000000e+00> : vector<8x512xf32>
    %17 = tpu.matmul %1, %16, %cst_12 {dimension_numbers = #tpu.dot_dimension_numbers<[1], [0], [0], [1], [0, 0, 1, 1], [], []>} : vector<8x512xbf16>, vector<512x512xbf16>, vector<8x512xf32> -> vector<8x512xf32>
    %c0_13 = arith.constant 0 : index
    %c512_14 = arith.constant 512 : index
    %18 = vector.load %arg3[%c0_13, %c512_14] : memref<1x2048xf32, #tpu.memory_space<vmem>>, vector<1x512xf32>
    %19 = vector.broadcast %18 : vector<1x512xf32> to vector<8x512xf32>
    %20 = arith.addf %17, %19 : vector<8x512xf32>
    %cst_15 = arith.constant 0.000000e+00 : f32
    %21 = vector.broadcast %cst_15 : f32 to vector<8x512xf32>
    %22 = arith.maximumf %20, %21 : vector<8x512xf32>
    %23 = arith.truncf %22 : vector<8x512xf32> to vector<8x512xbf16>
    %c512_16 = arith.constant 512 : index
    %c0_17 = arith.constant 0 : index
    %24 = vector.load %arg4[%c512_16, %c0_17] : memref<2048x512xbf16, #tpu.memory_space<vmem>>, vector<512x512xbf16>
    %cst_18 = arith.constant dense<0.000000e+00> : vector<8x512xf32>
    %25 = tpu.matmul %23, %24, %cst_18 {dimension_numbers = #tpu.dot_dimension_numbers<[1], [0], [0], [1], [0, 0, 1, 1], [], []>} : vector<8x512xbf16>, vector<512x512xbf16>, vector<8x512xf32> -> vector<8x512xf32>
    %26 = arith.addf %15, %25 : vector<8x512xf32>
    %c0_19 = arith.constant 0 : index
    %c1024 = arith.constant 1024 : index
    %27 = vector.load %arg2[%c0_19, %c1024] : memref<512x2048xbf16, #tpu.memory_space<vmem>>, vector<512x512xbf16>
    %cst_20 = arith.constant dense<0.000000e+00> : vector<8x512xf32>
    %28 = tpu.matmul %1, %27, %cst_20 {dimension_numbers = #tpu.dot_dimension_numbers<[1], [0], [0], [1], [0, 0, 1, 1], [], []>} : vector<8x512xbf16>, vector<512x512xbf16>, vector<8x512xf32> -> vector<8x512xf32>
    %c0_21 = arith.constant 0 : index
    %c1024_22 = arith.constant 1024 : index
    %29 = vector.load %arg3[%c0_21, %c1024_22] : memref<1x2048xf32, #tpu.memory_space<vmem>>, vector<1x512xf32>
    %30 = vector.broadcast %29 : vector<1x512xf32> to vector<8x512xf32>
    %31 = arith.addf %28, %30 : vector<8x512xf32>
    %cst_23 = arith.constant 0.000000e+00 : f32
    %32 = vector.broadcast %cst_23 : f32 to vector<8x512xf32>
    %33 = arith.maximumf %31, %32 : vector<8x512xf32>
    %34 = arith.truncf %33 : vector<8x512xf32> to vector<8x512xbf16>
    %c1024_24 = arith.constant 1024 : index
    %c0_25 = arith.constant 0 : index
    %35 = vector.load %arg4[%c1024_24, %c0_25] : memref<2048x512xbf16, #tpu.memory_space<vmem>>, vector<512x512xbf16>
    %cst_26 = arith.constant dense<0.000000e+00> : vector<8x512xf32>
    %36 = tpu.matmul %34, %35, %cst_26 {dimension_numbers = #tpu.dot_dimension_numbers<[1], [0], [0], [1], [0, 0, 1, 1], [], []>} : vector<8x512xbf16>, vector<512x512xbf16>, vector<8x512xf32> -> vector<8x512xf32>
    %37 = arith.addf %26, %36 : vector<8x512xf32>
    %c0_27 = arith.constant 0 : index
    %c1536 = arith.constant 1536 : index
    %38 = vector.load %arg2[%c0_27, %c1536] : memref<512x2048xbf16, #tpu.memory_space<vmem>>, vector<512x512xbf16>
    %cst_28 = arith.constant dense<0.000000e+00> : vector<8x512xf32>
    %39 = tpu.matmul %1, %38, %cst_28 {dimension_numbers = #tpu.dot_dimension_numbers<[1], [0], [0], [1], [0, 0, 1, 1], [], []>} : vector<8x512xbf16>, vector<512x512xbf16>, vector<8x512xf32> -> vector<8x512xf32>
    %c0_29 = arith.constant 0 : index
    %c1536_30 = arith.constant 1536 : index
    %40 = vector.load %arg3[%c0_29, %c1536_30] : memref<1x2048xf32, #tpu.memory_space<vmem>>, vector<1x512xf32>
    %41 = vector.broadcast %40 : vector<1x512xf32> to vector<8x512xf32>
    %42 = arith.addf %39, %41 : vector<8x512xf32>
    %cst_31 = arith.constant 0.000000e+00 : f32
    %43 = vector.broadcast %cst_31 : f32 to vector<8x512xf32>
    %44 = arith.maximumf %42, %43 : vector<8x512xf32>
    %45 = arith.truncf %44 : vector<8x512xf32> to vector<8x512xbf16>
    %c1536_32 = arith.constant 1536 : index
    %c0_33 = arith.constant 0 : index
    %46 = vector.load %arg4[%c1536_32, %c0_33] : memref<2048x512xbf16, #tpu.memory_space<vmem>>, vector<512x512xbf16>
    %cst_34 = arith.constant dense<0.000000e+00> : vector<8x512xf32>
    %47 = tpu.matmul %45, %46, %cst_34 {dimension_numbers = #tpu.dot_dimension_numbers<[1], [0], [0], [1], [0, 0, 1, 1], [], []>} : vector<8x512xbf16>, vector<512x512xbf16>, vector<8x512xf32> -> vector<8x512xf32>
    %48 = arith.addf %37, %47 : vector<8x512xf32>
    %cst_35 = arith.constant dense<0.000000e+00> : vector<8xf32>
    %49 = vector.multi_reduction <add>, %48, %cst_35 [1] : vector<8x512xf32> to vector<8xf32>
    %50 = vector.shape_cast %49 : vector<8xf32> to vector<8x1xf32>
    %cst_36 = arith.constant 5.120000e+02 : f32
    %51 = vector.broadcast %cst_36 : f32 to vector<8x1xf32>
    %52 = arith.divf %50, %51 : vector<8x1xf32>
    %53 = vector.broadcast %52 : vector<8x1xf32> to vector<8x512xf32>
    %54 = arith.subf %48, %53 : vector<8x512xf32>
    %55 = arith.mulf %54, %54 : vector<8x512xf32>
    %cst_37 = arith.constant dense<0.000000e+00> : vector<8xf32>
    %56 = vector.multi_reduction <add>, %55, %cst_37 [1] : vector<8x512xf32> to vector<8xf32>
    %57 = vector.shape_cast %56 : vector<8xf32> to vector<8x1xf32>
    %cst_38 = arith.constant 5.120000e+02 : f32
    %58 = vector.broadcast %cst_38 : f32 to vector<8x1xf32>
    %59 = arith.divf %57, %58 : vector<8x1xf32>
    %60 = vector.broadcast %52 : vector<8x1xf32> to vector<8x512xf32>
    %61 = arith.subf %48, %60 : vector<8x512xf32>
    %cst_39 = arith.constant 9.99999974E-6 : f32
    %62 = vector.broadcast %cst_39 : f32 to vector<8x1xf32>
    %63 = arith.addf %59, %62 : vector<8x1xf32>
    %64 = math.rsqrt %63 : vector<8x1xf32>
    %65 = vector.broadcast %64 : vector<8x1xf32> to vector<8x512xf32>
    %66 = arith.mulf %61, %65 : vector<8x512xf32>
    %c0_40 = arith.constant 0 : index
    %c0_41 = arith.constant 0 : index
    %67 = vector.load %arg6[%c0_40, %c0_41] : memref<1x512xf32, #tpu.memory_space<vmem>>, vector<1x512xf32>
    %68 = vector.broadcast %67 : vector<1x512xf32> to vector<8x512xf32>
    %69 = arith.mulf %66, %68 : vector<8x512xf32>
    %c0_42 = arith.constant 0 : index
    %c0_43 = arith.constant 0 : index
    %70 = vector.load %arg7[%c0_42, %c0_43] : memref<1x512xf32, #tpu.memory_space<vmem>>, vector<1x512xf32>
    %71 = vector.broadcast %70 : vector<1x512xf32> to vector<8x512xf32>
    %72 = arith.addf %69, %71 : vector<8x512xf32>
    %c0_44 = arith.constant 0 : index
    %c0_45 = arith.constant 0 : index
    %73 = vector.load %arg8[%c0_44, %c0_45] : memref<8x512xf32, #tpu.memory_space<vmem>>, vector<8x512xf32>
    tpu.vector_store %arg8[%c0_44, %c0_45], %72 {strides = array<i32>} : memref<8x512xf32, #tpu.memory_space<vmem>>, vector<8x512xf32>,
    return
  }
  func.func @transform_0(%arg0: i32) -> (i32, i32) {
    %c0_i32 = arith.constant 0 : i32
    %c0_i32_0 = arith.constant 0 : i32
    return %arg0, %c0_i32 : i32, i32
  }
  func.func @transform_1(%arg0: i32) -> (i32, i32) {
    %c0_i32 = arith.constant 0 : i32
    %c0_i32_0 = arith.constant 0 : i32
    %c0_i32_1 = arith.constant 0 : i32
    return %c0_i32, %c0_i32_0 : i32, i32
  }
  func.func @transform_2(%arg0: i32) -> (i32, i32) {
    %c0_i32 = arith.constant 0 : i32
    %c0_i32_0 = arith.constant 0 : i32
    %c0_i32_1 = arith.constant 0 : i32
    return %c0_i32, %c0_i32_0 : i32, i32
  }
  func.func @transform_3(%arg0: i32) -> (i32, i32) {
    %c0_i32 = arith.constant 0 : i32
    %c0_i32_0 = arith.constant 0 : i32
    %c0_i32_1 = arith.constant 0 : i32
    return %c0_i32, %c0_i32_0 : i32, i32
  }
  func.func @transform_4(%arg0: i32) -> (i32, i32) {
    %c0_i32 = arith.constant 0 : i32
    %c0_i32_0 = arith.constant 0 : i32
    %c0_i32_1 = arith.constant 0 : i32
    return %c0_i32, %c0_i32_0 : i32, i32
  }
  func.func @transform_5(%arg0: i32) -> (i32, i32) {
    %c0_i32 = arith.constant 0 : i32
    %c0_i32_0 = arith.constant 0 : i32
    %c0_i32_1 = arith.constant 0 : i32
    return %c0_i32, %c0_i32_0 : i32, i32
  }
  func.func @transform_6(%arg0: i32) -> (i32, i32) {
    %c0_i32 = arith.constant 0 : i32
    %c0_i32_0 = arith.constant 0 : i32
    %c0_i32_1 = arith.constant 0 : i32
    return %c0_i32, %c0_i32_0 : i32, i32
  }
  func.func @transform_7(%arg0: i32) -> (i32, i32) {
    %c0_i32 = arith.constant 0 : i32
    %c0_i32_0 = arith.constant 0 : i32
    return %arg0, %c0_i32 : i32, i32
  }
}

</mosaic_0001>

<llo_original>
// kernel: poswise_ffn.1
$region0: #{poswise_ffn.1}
  #allocation0 [shape = 'u32[]', space=smem, size = 0x4, offset = 0x4, fixed_abs, tag = 'smem constant byte address 0x4 - core index']
  #allocation1 [shape = 'u32[144,128]{1,0:T(1,128)}', space=vmem, size = 0x12000, scoped, tag = 'internal scratch']
  %s0 = inlined_call_operand.vmem [shape: f32[16,512], index: 0, kind: input, shape index: {}]
  %s1 = inlined_call_operand.vmem [shape: bf16[512,2048], index: 1, kind: input, shape index: {}]
  %s2 = inlined_call_operand.vmem [shape: f32[1,2048], index: 2, kind: input, shape index: {}]
  %s3 = inlined_call_operand.vmem [shape: bf16[2048,512], index: 3, kind: input, shape index: {}]
  %s4 = inlined_call_operand.vmem [shape: f32[1,512], index: 4, kind: input, shape index: {}]
  %s5 = inlined_call_operand.vmem [shape: f32[1,512], index: 5, kind: input, shape index: {}]
  %s6 = inlined_call_operand.vmem [shape: f32[1,512], index: 6, kind: input, shape index: {}]
  %s7 = inlined_call_operand.hbm [shape: f32[16,512], index: 7, kind: output, shape index: {}]
  %s8 = sld [smem:[#allocation0]]
  $region61: #{poswise_ffn.1} parent=0
    _
  %s10 = ssub.s32 1, %s8
  %s11 = scalar_select 0, %s10, %s8
  $region1: #{poswise_ffn.1} parent=0
    #allocation2 [shape = 'u8[32768]{0}', space=vmem, size = 0x8000, scoped, tag = 'output window, operand 0']
    #allocation3 [shape = 's32[2]{0}', space=sflag, size = 0x8, scoped, tag = 'scoped memory for poswise_ffn.1']
    %12 = vsyncpa [#allocation3], 0
    %s13 = scalar_lea.sflag [#allocation3], 1
    %14 = vsyncpa %s13, 0
    loop: start=0, step=1, limit=4
    $region2: #{poswise_ffn.1} parent=1 // loop_pre_header
      _
    $region3: #{poswise_ffn.1} parent=1 // loop_header
      %s16 = sphi 0, %s20
      %p17 = scmp.ge.s32.totalorder %s16, 4
      %s26 = sphi 0, %s28
      %s29 = sphi 0, %s26
      %s30 = sphi 0, %s29
      %s46 = sphi 0, %s30
      %s50 = sphi 0, %s50
      %s52 = sphi 0, %s50
      %s53 = sphi 0, %s52
      %s67 = sphi 0, %s53
      %s71 = sphi 0, %s71
      %s73 = sphi 0, %s71
      %s74 = sphi 0, %s73
      %s88 = sphi 0, %s74
      %s92 = sphi 0, %s92
      %s94 = sphi 0, %s92
      %s95 = sphi 0, %s94
      %s109 = sphi 0, %s95
      %s113 = sphi 0, %s113
      %s115 = sphi 0, %s113
      %s116 = sphi 0, %s115
      %s130 = sphi 0, %s116
      %s134 = sphi 0, %s134
      %s136 = sphi 0, %s134
      %s137 = sphi 0, %s136
      %s151 = sphi 0, %s137
      %s155 = sphi 0, %s155
      %s157 = sphi 0, %s155
      %s158 = sphi 0, %s157
      %s172 = sphi 0, %s158
      %s178 = sphi 0, %s180
      %s181 = sphi 0, %s178
      %s182 = sphi 0, %s181
      %s198 = sphi 0, %s182
    $region4: #{poswise_ffn.1} parent=1 // loop_header_branch
      %19 = sbr.rel (%p17) target = $region8
    $region5: #{poswise_ffn.1} parent=1 // loop_body
      %s21 = ssub.s32 %s16, 1
      %s22 = ssub.s32 %s16, 2
      %s23 = sadd.s32 %s16, 1
      %s24 = ssub.s32 %s16, %s23
      %p25 = scmp.eq.s32.totalorder %s24, 0
      %s27 = sadd.s32 %s26, 1
      %s28 = scalar_select %p25, %s26, %s27
      %p31 = pneg %p25
      %p32 = scmp.eq.s32.totalorder %s16, 1
      %p33 = por %p31, %p32
      %p34 = scmp.ne.s32.totalorder %s26, %s29
      %p35 = scmp.eq.s32.totalorder %s16, 0
      %p36 = por %p34, %p35
      %p37 = scmp.ne.s32.totalorder %s26, %s29
      %p38 = scmp.eq.s32.totalorder %s21, 1
      %p39 = por %p37, %p38
      %p40 = scmp.ne.s32.totalorder %s29, %s30
      %p41 = scmp.eq.s32.totalorder %s21, 0
      %p42 = por %p40, %p41
      %p43 = scmp.ne.s32.totalorder %s29, %s30
      %p44 = scmp.eq.s32.totalorder %s22, 1
      %p45 = por %p43, %p44
      %p47 = scmp.ne.s32.totalorder %s30, %s46
      %p48 = scmp.eq.s32.totalorder %s22, 0
      %p49 = por %p47, %p48
      %s51 = sadd.s32 %s50, 1
      %p54 = scmp.eq.s32.totalorder %s16, 1
      %p55 = scmp.ne.s32.totalorder %s50, %s52
      %p56 = scmp.eq.s32.totalorder %s16, 0
      %p57 = por %p55, %p56
      %p58 = scmp.ne.s32.totalorder %s50, %s52
      %p59 = scmp.eq.s32.totalorder %s21, 1
      %p60 = por %p58, %p59
      %p61 = scmp.ne.s32.totalorder %s52, %s53
      %p62 = scmp.eq.s32.totalorder %s21, 0
      %p63 = por %p61, %p62
      %p64 = scmp.ne.s32.totalorder %s52, %s53
      %p65 = scmp.eq.s32.totalorder %s22, 1
      %p66 = por %p64, %p65
      %p68 = scmp.ne.s32.totalorder %s53, %s67
      %p69 = scmp.eq.s32.totalorder %s22, 0
      %p70 = por %p68, %p69
      %s72 = sadd.s32 %s71, 1
      %p75 = scmp.eq.s32.totalorder %s16, 1
      %p76 = scmp.ne.s32.totalorder %s71, %s73
      %p77 = scmp.eq.s32.totalorder %s16, 0
      %p78 = por %p76, %p77
      %p79 = scmp.ne.s32.totalorder %s71, %s73
      %p80 = scmp.eq.s32.totalorder %s21, 1
      %p81 = por %p79, %p80
      %p82 = scmp.ne.s32.totalorder %s73, %s74
      %p83 = scmp.eq.s32.totalorder %s21, 0
      %p84 = por %p82, %p83
      %p85 = scmp.ne.s32.totalorder %s73, %s74
      %p86 = scmp.eq.s32.totalorder %s22, 1
      %p87 = por %p85, %p86
      %p89 = scmp.ne.s32.totalorder %s74, %s88
      %p90 = scmp.eq.s32.totalorder %s22, 0
      %p91 = por %p89, %p90
      %s93 = sadd.s32 %s92, 1
      %p96 = scmp.eq.s32.totalorder %s16, 1
      %p97 = scmp.ne.s32.totalorder %s92, %s94
      %p98 = scmp.eq.s32.totalorder %s16, 0
      %p99 = por %p97, %p98
      %p100 = scmp.ne.s32.totalorder %s92, %s94
      %p101 = scmp.eq.s32.totalorder %s21, 1
      %p102 = por %p100, %p101
      %p103 = scmp.ne.s32.totalorder %s94, %s95
      %p104 = scmp.eq.s32.totalorder %s21, 0
      %p105 = por %p103, %p104
      %p106 = scmp.ne.s32.totalorder %s94, %s95
      %p107 = scmp.eq.s32.totalorder %s22, 1
      %p108 = por %p106, %p107
      %p110 = scmp.ne.s32.totalorder %s95, %s109
      %p111 = scmp.eq.s32.totalorder %s22, 0
      %p112 = por %p110, %p111
      %s114 = sadd.s32 %s113, 1
      %p117 = scmp.eq.s32.totalorder %s16, 1
      %p118 = scmp.ne.s32.totalorder %s113, %s115
      %p119 = scmp.eq.s32.totalorder %s16, 0
      %p120 = por %p118, %p119
      %p121 = scmp.ne.s32.totalorder %s113, %s115
      %p122 = scmp.eq.s32.totalorder %s21, 1
      %p123 = por %p121, %p122
      %p124 = scmp.ne.s32.totalorder %s115, %s116
      %p125 = scmp.eq.s32.totalorder %s21, 0
      %p126 = por %p124, %p125
      %p127 = scmp.ne.s32.totalorder %s115, %s116
      %p128 = scmp.eq.s32.totalorder %s22, 1
      %p129 = por %p127, %p128
      %p131 = scmp.ne.s32.totalorder %s116, %s130
      %p132 = scmp.eq.s32.totalorder %s22, 0
      %p133 = por %p131, %p132
      %s135 = sadd.s32 %s134, 1
      %p138 = scmp.eq.s32.totalorder %s16, 1
      %p139 = scmp.ne.s32.totalorder %s134, %s136
      %p140 = scmp.eq.s32.totalorder %s16, 0
      %p141 = por %p139, %p140
      %p142 = scmp.ne.s32.totalorder %s134, %s136
      %p143 = scmp.eq.s32.totalorder %s21, 1
      %p144 = por %p142, %p143
      %p145 = scmp.ne.s32.totalorder %s136, %s137
      %p146 = scmp.eq.s32.totalorder %s21, 0
      %p147 = por %p145, %p146
      %p148 = scmp.ne.s32.totalorder %s136, %s137
      %p149 = scmp.eq.s32.totalorder %s22, 1
      %p150 = por %p148, %p149
      %p152 = scmp.ne.s32.totalorder %s137, %s151
      %p153 = scmp.eq.s32.totalorder %s22, 0
      %p154 = por %p152, %p153
      %s156 = sadd.s32 %s155, 1
      %p159 = scmp.eq.s32.totalorder %s16, 1
      %p160 = scmp.ne.s32.totalorder %s155, %s157
      %p161 = scmp.eq.s32.totalorder %s16, 0
      %p162 = por %p160, %p161
      %p163 = scmp.ne.s32.totalorder %s155, %s157
      %p164 = scmp.eq.s32.totalorder %s21, 1
      %p165 = por %p163, %p164
      %p166 = scmp.ne.s32.totalorder %s157, %s158
      %p167 = scmp.eq.s32.totalorder %s21, 0
      %p168 = por %p166, %p167
      %p169 = scmp.ne.s32.totalorder %s157, %s158
      %p170 = scmp.eq.s32.totalorder %s22, 1
      %p171 = por %p169, %p170
      %p173 = scmp.ne.s32.totalorder %s158, %s172
      %p174 = scmp.eq.s32.totalorder %s22, 0
      %p175 = por %p173, %p174
      %s176 = ssub.s32 %s16, %s23
      %p177 = scmp.eq.s32.totalorder %s176, 0
      %s179 = sadd.s32 %s178, 1
      %s180 = scalar_select %p177, %s178, %s179
      %p183 = pneg %p177
      %p184 = scmp.eq.s32.totalorder %s16, 1
      %p185 = por %p183, %p184
      %p186 = scmp.ne.s32.totalorder %s178, %s181
      %p187 = scmp.eq.s32.totalorder %s16, 0
      %p188 = por %p186, %p187
      %p189 = scmp.ne.s32.totalorder %s178, %s181
      %p190 = scmp.eq.s32.totalorder %s21, 1
      %p191 = por %p189, %p190
      %p192 = scmp.ne.s32.totalorder %s181, %s182
      %p193 = scmp.eq.s32.totalorder %s21, 0
      %p194 = por %p192, %p193
      %p195 = scmp.ne.s32.totalorder %s181, %s182
      %p196 = scmp.eq.s32.totalorder %s22, 1
      %p197 = por %p195, %p196
      %p199 = scmp.ne.s32.totalorder %s182, %s198
      %p200 = scmp.eq.s32.totalorder %s22, 0
      %p201 = por %p199, %p200
      %p202 = scmp.le.s32.totalorder 1, %s16
      %p203 = scmp.lt.s32.totalorder %s16, 3
      %p204 = pnand %p202, %p203
      %p205 = pneg %p204
      // Predicated region
      $region9: #{poswise_ffn.1} parent=5 // pred_check
        _
      $region10: #{poswise_ffn.1} parent=5 // pred_check_branch
        %207 = sbr.rel (%p204) target = $region12
      $region11: #{poswise_ffn.1} parent=5 // pred_region
        %s208 = ssub.s32 %s16, 1
        // Predicated region
        $region13: #{poswise_ffn.1} parent=11 // pred_check
          %p209 = pneg %p63
        $region14: #{poswise_ffn.1} parent=11 // pred_check_branch
          %211 = sbr.rel (%p209) target = $region16
        $region15: #{poswise_ffn.1} parent=11 // pred_region
          _
        $region16: #{poswise_ffn.1} parent=11 // pred_fallthru
          _
        // Predicated region
        $region17: #{poswise_ffn.1} parent=11 // pred_check
          %p212 = pneg %p84
        $region18: #{poswise_ffn.1} parent=11 // pred_check_branch
          %214 = sbr.rel (%p212) target = $region20
        $region19: #{poswise_ffn.1} parent=11 // pred_region
          _
        $region20: #{poswise_ffn.1} parent=11 // pred_fallthru
          _
        // Predicated region
        $region21: #{poswise_ffn.1} parent=11 // pred_check
          %p215 = pneg %p105
        $region22: #{poswise_ffn.1} parent=11 // pred_check_branch
          %217 = sbr.rel (%p215) target = $region24
        $region23: #{poswise_ffn.1} parent=11 // pred_region
          _
        $region24: #{poswise_ffn.1} parent=11 // pred_fallthru
          _
        // Predicated region
        $region25: #{poswise_ffn.1} parent=11 // pred_check
          %p218 = pneg %p126
        $region26: #{poswise_ffn.1} parent=11 // pred_check_branch
          %220 = sbr.rel (%p218) target = $region28
        $region27: #{poswise_ffn.1} parent=11 // pred_region
          _
        $region28: #{poswise_ffn.1} parent=11 // pred_fallthru
          _
        // Predicated region
        $region29: #{poswise_ffn.1} parent=11 // pred_check
          %p221 = pneg %p147
        $region30: #{poswise_ffn.1} parent=11 // pred_check_branch
          %223 = sbr.rel (%p221) target = $region32
        $region31: #{poswise_ffn.1} parent=11 // pred_region
          _
        $region32: #{poswise_ffn.1} parent=11 // pred_fallthru
          _
        // Predicated region
        $region33: #{poswise_ffn.1} parent=11 // pred_check
          %p224 = pneg %p168
        $region34: #{poswise_ffn.1} parent=11 // pred_check_branch
          %226 = sbr.rel (%p224) target = $region36
        $region35: #{poswise_ffn.1} parent=11 // pred_region
          _
        $region36: #{poswise_ffn.1} parent=11 // pred_fallthru
          _
      $region12: #{poswise_ffn.1} parent=5 // pred_fallthru
        _
      %p227 = scmp.lt.s32.totalorder %s16, 2
      // Predicated region
      $region37: #{poswise_ffn.1} parent=5 // pred_check
        %p228 = pneg %p227
      $region38: #{poswise_ffn.1} parent=5 // pred_check_branch
        %230 = sbr.rel (%p228) target = $region40
      $region39: #{poswise_ffn.1} parent=5 // pred_region
        // Predicated region
        $region41: #{poswise_ffn.1} parent=39 // pred_check
          %p231 = pneg %p36
        $region42: #{poswise_ffn.1} parent=39 // pred_check_branch
          %233 = sbr.rel (%p231) target = $region44
        $region43: #{poswise_ffn.1} parent=39 // pred_region
          %p234 = scmp.lt.s32.totalorder %s16, 1
          %s235 = scalar_select %p234, %s16, 1
          %s236 = smul.addr %s235, 4
          %s237 = smul.addr %s236, 8
          %s238 = scalar_lea.vmem %s0, %s237
        $region44: #{poswise_ffn.1} parent=39 // pred_fallthru
          _
      $region40: #{poswise_ffn.1} parent=5 // pred_fallthru
        _
      %p239 = scmp.le.s32.totalorder 1, %s16
      %p240 = scmp.lt.s32.totalorder %s16, 3
      %p241 = pnand %p239, %p240
      %p242 = pneg %p241
      // Predicated region
      $region45: #{poswise_ffn.1} parent=5 // pred_check
        _
      $region46: #{poswise_ffn.1} parent=5 // pred_check_branch
        %244 = sbr.rel (%p241) target = $region48
      $region47: #{poswise_ffn.1} parent=5 // pred_region
        %s245 = ssub.s32 %s16, 1
        %p246 = scmp.lt.s32.totalorder %s21, 1
        %s247 = scalar_select %p246, %s21, 1
        %s248 = smul.addr %s247, 4
        %s249 = smul.addr %s248, 8
        %s250 = scalar_lea.vmem %s0, %s249
        %p251 = pneg %p42
        %p252 = pneg %p39
        %p253 = pneg %p63
        %p254 = pneg %p60
        %p255 = pneg %p84
        %p256 = pneg %p81
        %p257 = pneg %p105
        %p258 = pneg %p102
        %p259 = pneg %p126
        %p260 = pneg %p123
        %p261 = pneg %p147
        %p262 = pneg %p144
        %p263 = pneg %p168
        %p264 = pneg %p165
        %p265 = pneg %p194
        %p266 = pneg %p191
        %s267 = sand.u32 %s181, 1
        %s268 = scalar_lea.sflag [#allocation3], %s267
        %s269 = sand.u32 %s181, 1
        %s270 = smul.addr %s269, 32
        %s271 = scalar_lea.vmem [#allocation2], %s270
        %p272 = scmp.lt.s32.totalorder %s21, 1
        %s273 = scalar_select %p272, %s21, 1
        %s274 = smul.addr %s273, 4
        %s275 = smul.addr %s274, 8
        %s276 = scalar_lea.vmem %s0, %s275
        %v277 = vld [vmem:[%s276] sm:$0xff]
        %v278 = vld [vmem:[%s276 + $0x8] sm:$0xff]
        %v279 = vld [vmem:[%s276 + $0x10] sm:$0xff]
        %v280 = vld [vmem:[%s276 + $0x18] sm:$0xff]
        %v281 = vpack.c.bf16 %v277, %v277
        %v282 = vpack.c.bf16 %v278, %v278
        %v283 = vpack.c.bf16 %v279, %v279
        %v284 = vpack.c.bf16 %v280, %v280
        %v285 = vld [vmem:[%s4] sm:$0xf]
        %v287 = vlaneseq
        %v288 = vshrl.u32 %v287, 7
        %v289 = vsub.s32 0, %v288
        %v290 = vrot.slane %v285, %v289
        %v291 = vlaneseq
        %v292 = vshrl.u32 %v291, 7
        %v293 = vsub.s32 1, %v292
        %v294 = vrot.slane %v285, %v293
        %v295 = vlaneseq
        %v296 = vshrl.u32 %v295, 7
        %v297 = vsub.s32 2, %v296
        %v298 = vrot.slane %v285, %v297
        %v299 = vlaneseq
        %v300 = vshrl.u32 %v299, 7
        %v301 = vsub.s32 3, %v300
        %v302 = vrot.slane %v285, %v301
        %v307 = vadd.f32 %v277, %v290
        %v308 = vadd.f32 %v278, %v294
        %v309 = vadd.f32 %v279, %v298
        %v310 = vadd.f32 %v280, %v302
        %v311 = vld [vmem:[%s1] sm:$0xff]
        %v312 = vld [vmem:[%s1 + $0x8] sm:$0xff]
        %v313 = vld [vmem:[%s1 + $0x40] sm:$0xff]
        %v314 = vld [vmem:[%s1 + $0x48] sm:$0xff]
        %v315 = vld [vmem:[%s1 + $0x80] sm:$0xff]
        %v316 = vld [vmem:[%s1 + $0x88] sm:$0xff]
        %v317 = vld [vmem:[%s1 + $0xc0] sm:$0xff]
        %v318 = vld [vmem:[%s1 + $0xc8] sm:$0xff]
        %v319 = vld [vmem:[%s1 + $0x100] sm:$0xff]
        %v320 = vld [vmem:[%s1 + $0x108] sm:$0xff]
        %v321 = vld [vmem:[%s1 + $0x140] sm:$0xff]
        %v322 = vld [vmem:[%s1 + $0x148] sm:$0xff]
        %v323 = vld [vmem:[%s1 + $0x180] sm:$0xff]
        %v324 = vld [vmem:[%s1 + $0x188] sm:$0xff]
        %v325 = vld [vmem:[%s1 + $0x1c0] sm:$0xff]
        %v326 = vld [vmem:[%s1 + $0x1c8] sm:$0xff]
        %v327 = vld [vmem:[%s1 + $0x200] sm:$0xff]
        %v328 = vld [vmem:[%s1 + $0x208] sm:$0xff]
        %v329 = vld [vmem:[%s1 + $0x240] sm:$0xff]
        %v330 = vld [vmem:[%s1 + $0x248] sm:$0xff]
        %v331 = vld [vmem:[%s1 + $0x280] sm:$0xff]
        %v332 = vld [vmem:[%s1 + $0x288] sm:$0xff]
        %v333 = vld [vmem:[%s1 + $0x2c0] sm:$0xff]
        %v334 = vld [vmem:[%s1 + $0x2c8] sm:$0xff]
        %v335 = vld [vmem:[%s1 + $0x300] sm:$0xff]
        %v336 = vld [vmem:[%s1 + $0x308] sm:$0xff]
        %v337 = vld [vmem:[%s1 + $0x340] sm:$0xff]
        %v338 = vld [vmem:[%s1 + $0x348] sm:$0xff]
        %v339 = vld [vmem:[%s1 + $0x380] sm:$0xff]
        %v340 = vld [vmem:[%s1 + $0x388] sm:$0xff]
        %v341 = vld [vmem:[%s1 + $0x3c0] sm:$0xff]
        %v342 = vld [vmem:[%s1 + $0x3c8] sm:$0xff]
        %v343 = vld [vmem:[%s1 + $0x400] sm:$0xff]
        %v344 = vld [vmem:[%s1 + $0x408] sm:$0xff]
        %v345 = vld [vmem:[%s1 + $0x440] sm:$0xff]
        %v346 = vld [vmem:[%s1 + $0x448] sm:$0xff]
        %v347 = vld [vmem:[%s1 + $0x480] sm:$0xff]
        %v348 = vld [vmem:[%s1 + $0x488] sm:$0xff]
        %v349 = vld [vmem:[%s1 + $0x4c0] sm:$0xff]
        %v350 = vld [vmem:[%s1 + $0x4c8] sm:$0xff]
        %v351 = vld [vmem:[%s1 + $0x500] sm:$0xff]
        %v352 = vld [vmem:[%s1 + $0x508] sm:$0xff]
        %v353 = vld [vmem:[%s1 + $0x540] sm:$0xff]
        %v354 = vld [vmem:[%s1 + $0x548] sm:$0xff]
        %v355 = vld [vmem:[%s1 + $0x580] sm:$0xff]
        %v356 = vld [vmem:[%s1 + $0x588] sm:$0xff]
        %v357 = vld [vmem:[%s1 + $0x5c0] sm:$0xff]
        %v358 = vld [vmem:[%s1 + $0x5c8] sm:$0xff]
        %v359 = vld [vmem:[%s1 + $0x600] sm:$0xff]
        %v360 = vld [vmem:[%s1 + $0x608] sm:$0xff]
        %v361 = vld [vmem:[%s1 + $0x640] sm:$0xff]
        %v362 = vld [vmem:[%s1 + $0x648] sm:$0xff]
        %v363 = vld [vmem:[%s1 + $0x680] sm:$0xff]
        %v364 = vld [vmem:[%s1 + $0x688] sm:$0xff]
        %v365 = vld [vmem:[%s1 + $0x6c0] sm:$0xff]
        %v366 = vld [vmem:[%s1 + $0x6c8] sm:$0xff]
        %v367 = vld [vmem:[%s1 + $0x700] sm:$0xff]
        %v368 = vld [vmem:[%s1 + $0x708] sm:$0xff]
        %v369 = vld [vmem:[%s1 + $0x740] sm:$0xff]
        %v370 = vld [vmem:[%s1 + $0x748] sm:$0xff]
        %v371 = vld [vmem:[%s1 + $0x780] sm:$0xff]
        %v372 = vld [vmem:[%s1 + $0x788] sm:$0xff]
        %v373 = vld [vmem:[%s1 + $0x7c0] sm:$0xff]
        %v374 = vld [vmem:[%s1 + $0x7c8] sm:$0xff]
        %v375 = vld [vmem:[%s1 + $0x800] sm:$0xff]
        %v376 = vld [vmem:[%s1 + $0x808] sm:$0xff]
        %v377 = vld [vmem:[%s1 + $0x840] sm:$0xff]
        %v378 = vld [vmem:[%s1 + $0x848] sm:$0xff]
        %v379 = vld [vmem:[%s1 + $0x880] sm:$0xff]
        %v380 = vld [vmem:[%s1 + $0x888] sm:$0xff]
        %v381 = vld [vmem:[%s1 + $0x8c0] sm:$0xff]
        %v382 = vld [vmem:[%s1 + $0x8c8] sm:$0xff]
        %v383 = vld [vmem:[%s1 + $0x900] sm:$0xff]
        %v384 = vld [vmem:[%s1 + $0x908] sm:$0xff]
        %v385 = vld [vmem:[%s1 + $0x940] sm:$0xff]
        %v386 = vld [vmem:[%s1 + $0x948] sm:$0xff]
        %v387 = vld [vmem:[%s1 + $0x980] sm:$0xff]
        %v388 = vld [vmem:[%s1 + $0x988] sm:$0xff]
        %v389 = vld [vmem:[%s1 + $0x9c0] sm:$0xff]
        %v390 = vld [vmem:[%s1 + $0x9c8] sm:$0xff]
        %v391 = vld [vmem:[%s1 + $0xa00] sm:$0xff]
        %v392 = vld [vmem:[%s1 + $0xa08] sm:$0xff]
        %v393 = vld [vmem:[%s1 + $0xa40] sm:$0xff]
        %v394 = vld [vmem:[%s1 + $0xa48] sm:$0xff]
        %v395 = vld [vmem:[%s1 + $0xa80] sm:$0xff]
        %v396 = vld [vmem:[%s1 + $0xa88] sm:$0xff]
        %v397 = vld [vmem:[%s1 + $0xac0] sm:$0xff]
        %v398 = vld [vmem:[%s1 + $0xac8] sm:$0xff]
        %v399 = vld [vmem:[%s1 + $0xb00] sm:$0xff]
        %v400 = vld [vmem:[%s1 + $0xb08] sm:$0xff]
        %v401 = vld [vmem:[%s1 + $0xb40] sm:$0xff]
        %v402 = vld [vmem:[%s1 + $0xb48] sm:$0xff]
        %v403 = vld [vmem:[%s1 + $0xb80] sm:$0xff]
        %v404 = vld [vmem:[%s1 + $0xb88] sm:$0xff]
        %v405 = vld [vmem:[%s1 + $0xbc0] sm:$0xff]
        %v406 = vld [vmem:[%s1 + $0xbc8] sm:$0xff]
        %v407 = vld [vmem:[%s1 + $0xc00] sm:$0xff]
        %v408 = vld [vmem:[%s1 + $0xc08] sm:$0xff]
        %v409 = vld [vmem:[%s1 + $0xc40] sm:$0xff]
        %v410 = vld [vmem:[%s1 + $0xc48] sm:$0xff]
        %v411 = vld [vmem:[%s1 + $0xc80] sm:$0xff]
        %v412 = vld [vmem:[%s1 + $0xc88] sm:$0xff]
        %v413 = vld [vmem:[%s1 + $0xcc0] sm:$0xff]
        %v414 = vld [vmem:[%s1 + $0xcc8] sm:$0xff]
        %v415 = vld [vmem:[%s1 + $0xd00] sm:$0xff]
        %v416 = vld [vmem:[%s1 + $0xd08] sm:$0xff]
        %v417 = vld [vmem:[%s1 + $0xd40] sm:$0xff]
        %v418 = vld [vmem:[%s1 + $0xd48] sm:$0xff]
        %v419 = vld [vmem:[%s1 + $0xd80] sm:$0xff]
        %v420 = vld [vmem:[%s1 + $0xd88] sm:$0xff]
        %v421 = vld [vmem:[%s1 + $0xdc0] sm:$0xff]
        %v422 = vld [vmem:[%s1 + $0xdc8] sm:$0xff]
        %v423 = vld [vmem:[%s1 + $0xe00] sm:$0xff]
        %v424 = vld [vmem:[%s1 + $0xe08] sm:$0xff]
        %v425 = vld [vmem:[%s1 + $0xe40] sm:$0xff]
        %v426 = vld [vmem:[%s1 + $0xe48] sm:$0xff]
        %v427 = vld [vmem:[%s1 + $0xe80] sm:$0xff]
        %v428 = vld [vmem:[%s1 + $0xe88] sm:$0xff]
        %v429 = vld [vmem:[%s1 + $0xec0] sm:$0xff]
        %v430 = vld [vmem:[%s1 + $0xec8] sm:$0xff]
        %v431 = vld [vmem:[%s1 + $0xf00] sm:$0xff]
        %v432 = vld [vmem:[%s1 + $0xf08] sm:$0xff]
        %v433 = vld [vmem:[%s1 + $0xf40] sm:$0xff]
        %v434 = vld [vmem:[%s1 + $0xf48] sm:$0xff]
        %v435 = vld [vmem:[%s1 + $0xf80] sm:$0xff]
        %v436 = vld [vmem:[%s1 + $0xf88] sm:$0xff]
        %v437 = vld [vmem:[%s1 + $0xfc0] sm:$0xff]
        %v438 = vld [vmem:[%s1 + $0xfc8] sm:$0xff]
        %v439 = vld [vmem:[%s2] sm:$0xf]
        %v441 = vlaneseq
        %v442 = vshrl.u32 %v441, 7
        %v443 = vsub.s32 0, %v442
        %v444 = vrot.slane %v439, %v443
        %v445 = vlaneseq
        %v446 = vshrl.u32 %v445, 7
        %v447 = vsub.s32 1, %v446
        %v448 = vrot.slane %v439, %v447
        %v449 = vlaneseq
        %v450 = vshrl.u32 %v449, 7
        %v451 = vsub.s32 2, %v450
        %v452 = vrot.slane %v439, %v451
        %v453 = vlaneseq
        %v454 = vshrl.u32 %v453, 7
        %v455 = vsub.s32 3, %v454
        %v456 = vrot.slane %v439, %v455
        %v589 = vunpack.c.l.b16 %v311
        %v590 = vunpack.c.h.b16 %v311
        %v591 = vunpack.c.l.b16 %v312
        %v592 = vunpack.c.h.b16 %v312
        %v593 = vunpack.c.l.b16 %v313
        %v594 = vunpack.c.h.b16 %v313
        %v595 = vunpack.c.l.b16 %v314
        %v596 = vunpack.c.h.b16 %v314
        %v597 = vunpack.c.l.b16 %v315
        %v598 = vunpack.c.h.b16 %v315
        %v599 = vunpack.c.l.b16 %v316
        %v600 = vunpack.c.h.b16 %v316
        %v601 = vunpack.c.l.b16 %v317
        %v602 = vunpack.c.h.b16 %v317
        %v603 = vunpack.c.l.b16 %v318
        %v604 = vunpack.c.h.b16 %v318
        %v605 = vunpack.c.l.b16 %v319
        %v606 = vunpack.c.h.b16 %v319
        %v607 = vunpack.c.l.b16 %v320
        %v608 = vunpack.c.h.b16 %v320
        %v609 = vunpack.c.l.b16 %v321
        %v610 = vunpack.c.h.b16 %v321
        %v611 = vunpack.c.l.b16 %v322
        %v612 = vunpack.c.h.b16 %v322
        %v613 = vunpack.c.l.b16 %v323
        %v614 = vunpack.c.h.b16 %v323
        %v615 = vunpack.c.l.b16 %v324
        %v616 = vunpack.c.h.b16 %v324
        %v617 = vunpack.c.l.b16 %v325
        %v618 = vunpack.c.h.b16 %v325
        %v619 = vunpack.c.l.b16 %v326
        %v620 = vunpack.c.h.b16 %v326
        %v621 = vunpack.c.l.b16 %v327
        %v622 = vunpack.c.h.b16 %v327
        %v623 = vunpack.c.l.b16 %v328
        %v624 = vunpack.c.h.b16 %v328
        %v625 = vunpack.c.l.b16 %v329
        %v626 = vunpack.c.h.b16 %v329
        %v627 = vunpack.c.l.b16 %v330
        %v628 = vunpack.c.h.b16 %v330
        %v629 = vunpack.c.l.b16 %v331
        %v630 = vunpack.c.h.b16 %v331
        %v631 = vunpack.c.l.b16 %v332
        %v632 = vunpack.c.h.b16 %v332
        %v633 = vunpack.c.l.b16 %v333
        %v634 = vunpack.c.h.b16 %v333
        %v635 = vunpack.c.l.b16 %v334
        %v636 = vunpack.c.h.b16 %v334
        %v637 = vunpack.c.l.b16 %v335
        %v638 = vunpack.c.h.b16 %v335
        %v639 = vunpack.c.l.b16 %v336
        %v640 = vunpack.c.h.b16 %v336
        %v641 = vunpack.c.l.b16 %v337
        %v642 = vunpack.c.h.b16 %v337
        %v643 = vunpack.c.l.b16 %v338
        %v644 = vunpack.c.h.b16 %v338
        %v645 = vunpack.c.l.b16 %v339
        %v646 = vunpack.c.h.b16 %v339
        %v647 = vunpack.c.l.b16 %v340
        %v648 = vunpack.c.h.b16 %v340
        %v649 = vunpack.c.l.b16 %v341
        %v650 = vunpack.c.h.b16 %v341
        %v651 = vunpack.c.l.b16 %v342
        %v652 = vunpack.c.h.b16 %v342
        %v653 = vunpack.c.l.b16 %v343
        %v654 = vunpack.c.h.b16 %v343
        %v655 = vunpack.c.l.b16 %v344
        %v656 = vunpack.c.h.b16 %v344
        %v657 = vunpack.c.l.b16 %v345
        %v658 = vunpack.c.h.b16 %v345
        %v659 = vunpack.c.l.b16 %v346
        %v660 = vunpack.c.h.b16 %v346
        %v661 = vunpack.c.l.b16 %v347
        %v662 = vunpack.c.h.b16 %v347
        %v663 = vunpack.c.l.b16 %v348
        %v664 = vunpack.c.h.b16 %v348
        %v665 = vunpack.c.l.b16 %v349
        %v666 = vunpack.c.h.b16 %v349
        %v667 = vunpack.c.l.b16 %v350
        %v668 = vunpack.c.h.b16 %v350
        %v669 = vunpack.c.l.b16 %v351
        %v670 = vunpack.c.h.b16 %v351
        %v671 = vunpack.c.l.b16 %v352
        %v672 = vunpack.c.h.b16 %v352
        %v673 = vunpack.c.l.b16 %v353
        %v674 = vunpack.c.h.b16 %v353
        %v675 = vunpack.c.l.b16 %v354
        %v676 = vunpack.c.h.b16 %v354
        %v677 = vunpack.c.l.b16 %v355
        %v678 = vunpack.c.h.b16 %v355
        %v679 = vunpack.c.l.b16 %v356
        %v680 = vunpack.c.h.b16 %v356
        %v681 = vunpack.c.l.b16 %v357
        %v682 = vunpack.c.h.b16 %v357
        %v683 = vunpack.c.l.b16 %v358
        %v684 = vunpack.c.h.b16 %v358
        %v685 = vunpack.c.l.b16 %v359
        %v686 = vunpack.c.h.b16 %v359
        %v687 = vunpack.c.l.b16 %v360
        %v688 = vunpack.c.h.b16 %v360
        %v689 = vunpack.c.l.b16 %v361
        %v690 = vunpack.c.h.b16 %v361
        %v691 = vunpack.c.l.b16 %v362
        %v692 = vunpack.c.h.b16 %v362
        %v693 = vunpack.c.l.b16 %v363
        %v694 = vunpack.c.h.b16 %v363
        %v695 = vunpack.c.l.b16 %v364
        %v696 = vunpack.c.h.b16 %v364
        %v697 = vunpack.c.l.b16 %v365
        %v698 = vunpack.c.h.b16 %v365
        %v699 = vunpack.c.l.b16 %v366
        %v700 = vunpack.c.h.b16 %v366
        %v701 = vunpack.c.l.b16 %v367
        %v702 = vunpack.c.h.b16 %v367
        %v703 = vunpack.c.l.b16 %v368
        %v704 = vunpack.c.h.b16 %v368
        %v705 = vunpack.c.l.b16 %v369
        %v706 = vunpack.c.h.b16 %v369
        %v707 = vunpack.c.l.b16 %v370
        %v708 = vunpack.c.h.b16 %v370
        %v709 = vunpack.c.l.b16 %v371
        %v710 = vunpack.c.h.b16 %v371
        %v711 = vunpack.c.l.b16 %v372
        %v712 = vunpack.c.h.b16 %v372
        %v713 = vunpack.c.l.b16 %v373
        %v714 = vunpack.c.h.b16 %v373
        %v715 = vunpack.c.l.b16 %v374
        %v716 = vunpack.c.h.b16 %v374
        %v717 = vunpack.c.l.b16 %v375
        %v718 = vunpack.c.h.b16 %v375
        %v719 = vunpack.c.l.b16 %v376
        %v720 = vunpack.c.h.b16 %v376
        %v721 = vunpack.c.l.b16 %v377
        %v722 = vunpack.c.h.b16 %v377
        %v723 = vunpack.c.l.b16 %v378
        %v724 = vunpack.c.h.b16 %v378
        %v725 = vunpack.c.l.b16 %v379
        %v726 = vunpack.c.h.b16 %v379
        %v727 = vunpack.c.l.b16 %v380
        %v728 = vunpack.c.h.b16 %v380
        %v729 = vunpack.c.l.b16 %v381
        %v730 = vunpack.c.h.b16 %v381
        %v731 = vunpack.c.l.b16 %v382
        %v732 = vunpack.c.h.b16 %v382
        %v733 = vunpack.c.l.b16 %v383
        %v734 = vunpack.c.h.b16 %v383
        %v735 = vunpack.c.l.b16 %v384
        %v736 = vunpack.c.h.b16 %v384
        %v737 = vunpack.c.l.b16 %v385
        %v738 = vunpack.c.h.b16 %v385
        %v739 = vunpack.c.l.b16 %v386
        %v740 = vunpack.c.h.b16 %v386
        %v741 = vunpack.c.l.b16 %v387
        %v742 = vunpack.c.h.b16 %v387
        %v743 = vunpack.c.l.b16 %v388
        %v744 = vunpack.c.h.b16 %v388
        %v745 = vunpack.c.l.b16 %v389
        %v746 = vunpack.c.h.b16 %v389
        %v747 = vunpack.c.l.b16 %v390
        %v748 = vunpack.c.h.b16 %v390
        %v749 = vunpack.c.l.b16 %v391
        %v750 = vunpack.c.h.b16 %v391
        %v751 = vunpack.c.l.b16 %v392
        %v752 = vunpack.c.h.b16 %v392
        %v753 = vunpack.c.l.b16 %v393
        %v754 = vunpack.c.h.b16 %v393
        %v755 = vunpack.c.l.b16 %v394
        %v756 = vunpack.c.h.b16 %v394
        %v757 = vunpack.c.l.b16 %v395
        %v758 = vunpack.c.h.b16 %v395
        %v759 = vunpack.c.l.b16 %v396
        %v760 = vunpack.c.h.b16 %v396
        %v761 = vunpack.c.l.b16 %v397
        %v762 = vunpack.c.h.b16 %v397
        %v763 = vunpack.c.l.b16 %v398
        %v764 = vunpack.c.h.b16 %v398
        %v765 = vunpack.c.l.b16 %v399
        %v766 = vunpack.c.h.b16 %v399
        %v767 = vunpack.c.l.b16 %v400
        %v768 = vunpack.c.h.b16 %v400
        %v769 = vunpack.c.l.b16 %v401
        %v770 = vunpack.c.h.b16 %v401
        %v771 = vunpack.c.l.b16 %v402
        %v772 = vunpack.c.h.b16 %v402
        %v773 = vunpack.c.l.b16 %v403
        %v774 = vunpack.c.h.b16 %v403
        %v775 = vunpack.c.l.b16 %v404
        %v776 = vunpack.c.h.b16 %v404
        %v777 = vunpack.c.l.b16 %v405
        %v778 = vunpack.c.h.b16 %v405
        %v779 = vunpack.c.l.b16 %v406
        %v780 = vunpack.c.h.b16 %v406
        %v781 = vunpack.c.l.b16 %v407
        %v782 = vunpack.c.h.b16 %v407
        %v783 = vunpack.c.l.b16 %v408
        %v784 = vunpack.c.h.b16 %v408
        %v785 = vunpack.c.l.b16 %v409
        %v786 = vunpack.c.h.b16 %v409
        %v787 = vunpack.c.l.b16 %v410
        %v788 = vunpack.c.h.b16 %v410
        %v789 = vunpack.c.l.b16 %v411
        %v790 = vunpack.c.h.b16 %v411
        %v791 = vunpack.c.l.b16 %v412
        %v792 = vunpack.c.h.b16 %v412
        %v793 = vunpack.c.l.b16 %v413
        %v794 = vunpack.c.h.b16 %v413
        %v795 = vunpack.c.l.b16 %v414
        %v796 = vunpack.c.h.b16 %v414
        %v797 = vunpack.c.l.b16 %v415
        %v798 = vunpack.c.h.b16 %v415
        %v799 = vunpack.c.l.b16 %v416
        %v800 = vunpack.c.h.b16 %v416
        %v801 = vunpack.c.l.b16 %v417
        %v802 = vunpack.c.h.b16 %v417
        %v803 = vunpack.c.l.b16 %v418
        %v804 = vunpack.c.h.b16 %v418
        %v805 = vunpack.c.l.b16 %v419
        %v806 = vunpack.c.h.b16 %v419
        %v807 = vunpack.c.l.b16 %v420
        %v808 = vunpack.c.h.b16 %v420
        %v809 = vunpack.c.l.b16 %v421
        %v810 = vunpack.c.h.b16 %v421
        %v811 = vunpack.c.l.b16 %v422
        %v812 = vunpack.c.h.b16 %v422
        %v813 = vunpack.c.l.b16 %v423
        %v814 = vunpack.c.h.b16 %v423
        %v815 = vunpack.c.l.b16 %v424
        %v816 = vunpack.c.h.b16 %v424
        %v817 = vunpack.c.l.b16 %v425
        %v818 = vunpack.c.h.b16 %v425
        %v819 = vunpack.c.l.b16 %v426
        %v820 = vunpack.c.h.b16 %v426
        %v821 = vunpack.c.l.b16 %v427
        %v822 = vunpack.c.h.b16 %v427
        %v823 = vunpack.c.l.b16 %v428
        %v824 = vunpack.c.h.b16 %v428
        %v825 = vunpack.c.l.b16 %v429
        %v826 = vunpack.c.h.b16 %v429
        %v827 = vunpack.c.l.b16 %v430
        %v828 = vunpack.c.h.b16 %v430
        %v829 = vunpack.c.l.b16 %v431
        %v830 = vunpack.c.h.b16 %v431
        %v831 = vunpack.c.l.b16 %v432
        %v832 = vunpack.c.h.b16 %v432
        %v833 = vunpack.c.l.b16 %v433
        %v834 = vunpack.c.h.b16 %v433
        %v835 = vunpack.c.l.b16 %v434
        %v836 = vunpack.c.h.b16 %v434
        %v837 = vunpack.c.l.b16 %v435
        %v838 = vunpack.c.h.b16 %v435
        %v839 = vunpack.c.l.b16 %v436
        %v840 = vunpack.c.h.b16 %v436
        %v841 = vunpack.c.l.b16 %v437
        %v842 = vunpack.c.h.b16 %v437
        %v843 = vunpack.c.l.b16 %v438
        %v844 = vunpack.c.h.b16 %v438
        %v845 = vpack.c.b16 %v593, %v589
        %v846 = vpack.c.b16 %v594, %v590
        %v847 = vpack.c.b16 %v595, %v591
        %v848 = vpack.c.b16 %v596, %v592
        %v849 = vpack.c.b16 %v601, %v597
        %v850 = vpack.c.b16 %v602, %v598
        %v851 = vpack.c.b16 %v603, %v599
        %v852 = vpack.c.b16 %v604, %v600
        %v853 = vpack.c.b16 %v609, %v605
        %v854 = vpack.c.b16 %v610, %v606
        %v855 = vpack.c.b16 %v611, %v607
        %v856 = vpack.c.b16 %v612, %v608
        %v857 = vpack.c.b16 %v617, %v613
        %v858 = vpack.c.b16 %v618, %v614
        %v859 = vpack.c.b16 %v619, %v615
        %v860 = vpack.c.b16 %v620, %v616
        %v861 = vpack.c.b16 %v625, %v621
        %v862 = vpack.c.b16 %v626, %v622
        %v863 = vpack.c.b16 %v627, %v623
        %v864 = vpack.c.b16 %v628, %v624
        %v865 = vpack.c.b16 %v633, %v629
        %v866 = vpack.c.b16 %v634, %v630
        %v867 = vpack.c.b16 %v635, %v631
        %v868 = vpack.c.b16 %v636, %v632
        %v869 = vpack.c.b16 %v641, %v637
        %v870 = vpack.c.b16 %v642, %v638
        %v871 = vpack.c.b16 %v643, %v639
        %v872 = vpack.c.b16 %v644, %v640
        %v873 = vpack.c.b16 %v649, %v645
        %v874 = vpack.c.b16 %v650, %v646
        %v875 = vpack.c.b16 %v651, %v647
        %v876 = vpack.c.b16 %v652, %v648
        %v877 = vpack.c.b16 %v657, %v653
        %v878 = vpack.c.b16 %v658, %v654
        %v879 = vpack.c.b16 %v659, %v655
        %v880 = vpack.c.b16 %v660, %v656
        %v881 = vpack.c.b16 %v665, %v661
        %v882 = vpack.c.b16 %v666, %v662
        %v883 = vpack.c.b16 %v667, %v663
        %v884 = vpack.c.b16 %v668, %v664
        %v885 = vpack.c.b16 %v673, %v669
        %v886 = vpack.c.b16 %v674, %v670
        %v887 = vpack.c.b16 %v675, %v671
        %v888 = vpack.c.b16 %v676, %v672
        %v889 = vpack.c.b16 %v681, %v677
        %v890 = vpack.c.b16 %v682, %v678
        %v891 = vpack.c.b16 %v683, %v679
        %v892 = vpack.c.b16 %v684, %v680
        %v893 = vpack.c.b16 %v689, %v685
        %v894 = vpack.c.b16 %v690, %v686
        %v895 = vpack.c.b16 %v691, %v687
        %v896 = vpack.c.b16 %v692, %v688
        %v897 = vpack.c.b16 %v697, %v693
        %v898 = vpack.c.b16 %v698, %v694
        %v899 = vpack.c.b16 %v699, %v695
        %v900 = vpack.c.b16 %v700, %v696
        %v901 = vpack.c.b16 %v705, %v701
        %v902 = vpack.c.b16 %v706, %v702
        %v903 = vpack.c.b16 %v707, %v703
        %v904 = vpack.c.b16 %v708, %v704
        %v905 = vpack.c.b16 %v713, %v709
        %v906 = vpack.c.b16 %v714, %v710
        %v907 = vpack.c.b16 %v715, %v711
        %v908 = vpack.c.b16 %v716, %v712
        %v909 = vpack.c.b16 %v721, %v717
        %v910 = vpack.c.b16 %v722, %v718
        %v911 = vpack.c.b16 %v723, %v719
        %v912 = vpack.c.b16 %v724, %v720
        %v913 = vpack.c.b16 %v729, %v725
        %v914 = vpack.c.b16 %v730, %v726
        %v915 = vpack.c.b16 %v731, %v727
        %v916 = vpack.c.b16 %v732, %v728
        %v917 = vpack.c.b16 %v737, %v733
        %v918 = vpack.c.b16 %v738, %v734
        %v919 = vpack.c.b16 %v739, %v735
        %v920 = vpack.c.b16 %v740, %v736
        %v921 = vpack.c.b16 %v745, %v741
        %v922 = vpack.c.b16 %v746, %v742
        %v923 = vpack.c.b16 %v747, %v743
        %v924 = vpack.c.b16 %v748, %v744
        %v925 = vpack.c.b16 %v753, %v749
        %v926 = vpack.c.b16 %v754, %v750
        %v927 = vpack.c.b16 %v755, %v751
        %v928 = vpack.c.b16 %v756, %v752
        %v929 = vpack.c.b16 %v761, %v757
        %v930 = vpack.c.b16 %v762, %v758
        %v931 = vpack.c.b16 %v763, %v759
        %v932 = vpack.c.b16 %v764, %v760
        %v933 = vpack.c.b16 %v769, %v765
        %v934 = vpack.c.b16 %v770, %v766
        %v935 = vpack.c.b16 %v771, %v767
        %v936 = vpack.c.b16 %v772, %v768
        %v937 = vpack.c.b16 %v777, %v773
        %v938 = vpack.c.b16 %v778, %v774
        %v939 = vpack.c.b16 %v779, %v775
        %v940 = vpack.c.b16 %v780, %v776
        %v941 = vpack.c.b16 %v785, %v781
        %v942 = vpack.c.b16 %v786, %v782
        %v943 = vpack.c.b16 %v787, %v783
        %v944 = vpack.c.b16 %v788, %v784
        %v945 = vpack.c.b16 %v793, %v789
        %v946 = vpack.c.b16 %v794, %v790
        %v947 = vpack.c.b16 %v795, %v791
        %v948 = vpack.c.b16 %v796, %v792
        %v949 = vpack.c.b16 %v801, %v797
        %v950 = vpack.c.b16 %v802, %v798
        %v951 = vpack.c.b16 %v803, %v799
        %v952 = vpack.c.b16 %v804, %v800
        %v953 = vpack.c.b16 %v809, %v805
        %v954 = vpack.c.b16 %v810, %v806
        %v955 = vpack.c.b16 %v811, %v807
        %v956 = vpack.c.b16 %v812, %v808
        %v957 = vpack.c.b16 %v817, %v813
        %v958 = vpack.c.b16 %v818, %v814
        %v959 = vpack.c.b16 %v819, %v815
        %v960 = vpack.c.b16 %v820, %v816
        %v961 = vpack.c.b16 %v825, %v821
        %v962 = vpack.c.b16 %v826, %v822
        %v963 = vpack.c.b16 %v827, %v823
        %v964 = vpack.c.b16 %v828, %v824
        %v965 = vpack.c.b16 %v833, %v829
        %v966 = vpack.c.b16 %v834, %v830
        %v967 = vpack.c.b16 %v835, %v831
        %v968 = vpack.c.b16 %v836, %v832
        %v969 = vpack.c.b16 %v841, %v837
        %v970 = vpack.c.b16 %v842, %v838
        %v971 = vpack.c.b16 %v843, %v839
        %v972 = vpack.c.b16 %v844, %v840
        %1101 = vmatprep.subr.bf16.mxu0 %v846
        %1102 = vmatpush1.bf16.msra.mxu0 %v845
        %1103 = vmatprep.subr.bf16.mxu0 %v850
        %1104 = vmatpush1.bf16.msra.mxu0 %v849
        %1105 = vmatprep.subr.bf16.mxu0 %v854
        %1106 = vmatpush1.bf16.msra.mxu0 %v853
        %1107 = vmatprep.subr.bf16.mxu0 %v858
        %1108 = vmatpush1.bf16.msra.mxu0 %v857
        %1109 = vmatprep.subr.bf16.mxu0 %v862
        %1110 = vmatpush1.bf16.msra.mxu0 %v861
        %1111 = vmatprep.subr.bf16.mxu0 %v866
        %1112 = vmatpush1.bf16.msra.mxu0 %v865
        %1113 = vmatprep.subr.bf16.mxu0 %v870
        %1114 = vmatpush1.bf16.msra.mxu0 %v869
        %1115 = vmatprep.subr.bf16.mxu0 %v874
        %1116 = vmatpush1.bf16.msra.mxu0 %v873
        %1117 = vmatprep.subr.bf16.mxu0 %v878
        %1118 = vmatpush1.bf16.msra.mxu0 %v877
        %1119 = vmatprep.subr.bf16.mxu0 %v882
        %1120 = vmatpush1.bf16.msra.mxu0 %v881
        %1121 = vmatprep.subr.bf16.mxu0 %v886
        %1122 = vmatpush1.bf16.msra.mxu0 %v885
        %1123 = vmatprep.subr.bf16.mxu0 %v890
        %1124 = vmatpush1.bf16.msra.mxu0 %v889
        %1125 = vmatprep.subr.bf16.mxu0 %v894
        %1126 = vmatpush1.bf16.msra.mxu0 %v893
        %1127 = vmatprep.subr.bf16.mxu0 %v898
        %1128 = vmatpush1.bf16.msra.mxu0 %v897
        %1129 = vmatprep.subr.bf16.mxu0 %v902
        %1130 = vmatpush1.bf16.msra.mxu0 %v901
        %1131 = vmatprep.subr.bf16.mxu0 %v906
        %1132 = vmatpush1.bf16.msra.mxu0 %v905
        %1133 = vmatprep.mubr.bf16.mxu0 %v282
        %1134 = vmatmul.mubr.bf16.gmra.mrb[0].mxu0 %v281
        %v1135 = vpop.f32.mrb[0].mxu0
        %v1136 = vadd.f32 %v444, %v1135
        %v1137 = vpop.f32.mrb[0].mxu0
        %v1138 = vadd.f32 %v448, %v1137
        %v1139 = vpop.f32.mrb[0].mxu0
        %v1140 = vpop.f32.mrb[0].mxu0
        %1141 = vdwg.mxu0
        %1142 = vmatprep.subr.bf16.mxu0 %v910
        %1143 = vmatpush1.bf16.msra.mxu0 %v909
        %1144 = vmatprep.subr.bf16.mxu0 %v914
        %1145 = vmatpush1.bf16.msra.mxu0 %v913
        %1146 = vmatprep.subr.bf16.mxu0 %v918
        %1147 = vmatpush1.bf16.msra.mxu0 %v917
        %1148 = vmatprep.subr.bf16.mxu0 %v922
        %1149 = vmatpush1.bf16.msra.mxu0 %v921
        %1150 = vmatprep.subr.bf16.mxu0 %v926
        %1151 = vmatpush1.bf16.msra.mxu0 %v925
        %1152 = vmatprep.subr.bf16.mxu0 %v930
        %1153 = vmatpush1.bf16.msra.mxu0 %v929
        %1154 = vmatprep.subr.bf16.mxu0 %v934
        %1155 = vmatpush1.bf16.msra.mxu0 %v933
        %1156 = vmatprep.subr.bf16.mxu0 %v938
        %1157 = vmatpush1.bf16.msra.mxu0 %v937
        %1158 = vmatprep.subr.bf16.mxu0 %v942
        %1159 = vmatpush1.bf16.msra.mxu0 %v941
        %1160 = vmatprep.subr.bf16.mxu0 %v946
        %1161 = vmatpush1.bf16.msra.mxu0 %v945
        %1162 = vmatprep.subr.bf16.mxu0 %v950
        %1163 = vmatpush1.bf16.msra.mxu0 %v949
        %1164 = vmatprep.subr.bf16.mxu0 %v954
        %1165 = vmatpush1.bf16.msra.mxu0 %v953
        %1166 = vmatprep.subr.bf16.mxu0 %v958
        %1167 = vmatpush1.bf16.msra.mxu0 %v957
        %1168 = vmatprep.subr.bf16.mxu0 %v962
        %1169 = vmatpush1.bf16.msra.mxu0 %v961
        %1170 = vmatprep.subr.bf16.mxu0 %v966
        %1171 = vmatpush1.bf16.msra.mxu0 %v965
        %1172 = vmatprep.subr.bf16.mxu0 %v970
        %1173 = vmatpush1.bf16.msra.mxu0 %v969
        %1174 = vmatprep.mubr.bf16.mxu0 %v284
        %1175 = vmatmul.mubr.bf16.gmra.mrb[0].mxu0 %v283
        %v1176 = vpop.f32.mrb[0].mxu0
        %v1177 = vadd.f32 %v1136, %v1176
        %v1178 = vpop.f32.mrb[0].mxu0
        %v1179 = vadd.f32 %v1138, %v1178
        %v1180 = vpop.f32.mrb[0].mxu0
        %v1181 = vpop.f32.mrb[0].mxu0
        %1182 = vdwg.mxu0
        %1183 = vmatprep.subr.bf16.mxu0 %v848
        %1184 = vmatpush1.bf16.msra.mxu0 %v847
        %1185 = vmatprep.subr.bf16.mxu0 %v852
        %1186 = vmatpush1.bf16.msra.mxu0 %v851
        %1187 = vmatprep.subr.bf16.mxu0 %v856
        %1188 = vmatpush1.bf16.msra.mxu0 %v855
        %1189 = vmatprep.subr.bf16.mxu0 %v860
        %1190 = vmatpush1.bf16.msra.mxu0 %v859
        %1191 = vmatprep.subr.bf16.mxu0 %v864
        %1192 = vmatpush1.bf16.msra.mxu0 %v863
        %1193 = vmatprep.subr.bf16.mxu0 %v868
        %1194 = vmatpush1.bf16.msra.mxu0 %v867
        %1195 = vmatprep.subr.bf16.mxu0 %v872
        %1196 = vmatpush1.bf16.msra.mxu0 %v871
        %1197 = vmatprep.subr.bf16.mxu0 %v876
        %1198 = vmatpush1.bf16.msra.mxu0 %v875
        %1199 = vmatprep.subr.bf16.mxu0 %v880
        %1200 = vmatpush1.bf16.msra.mxu0 %v879
        %1201 = vmatprep.subr.bf16.mxu0 %v884
        %1202 = vmatpush1.bf16.msra.mxu0 %v883
        %1203 = vmatprep.subr.bf16.mxu0 %v888
        %1204 = vmatpush1.bf16.msra.mxu0 %v887
        %1205 = vmatprep.subr.bf16.mxu0 %v892
        %1206 = vmatpush1.bf16.msra.mxu0 %v891
        %1207 = vmatprep.subr.bf16.mxu0 %v896
        %1208 = vmatpush1.bf16.msra.mxu0 %v895
        %1209 = vmatprep.subr.bf16.mxu0 %v900
        %1210 = vmatpush1.bf16.msra.mxu0 %v899
        %1211 = vmatprep.subr.bf16.mxu0 %v904
        %1212 = vmatpush1.bf16.msra.mxu0 %v903
        %1213 = vmatprep.subr.bf16.mxu0 %v908
        %1214 = vmatpush1.bf16.msra.mxu0 %v907
        %1215 = vmatprep.mubr.bf16.mxu0 %v282
        %1216 = vmatmul.mubr.bf16.gmra.mrb[0].mxu0 %v281
        %v1217 = vpop.f32.mrb[0].mxu0
        %v1218 = vadd.f32 %v452, %v1217
        %v1219 = vpop.f32.mrb[0].mxu0
        %v1220 = vadd.f32 %v456, %v1219
        %v1221 = vpop.f32.mrb[0].mxu0
        %v1222 = vpop.f32.mrb[0].mxu0
        %1223 = vdwg.mxu0
        %1224 = vmatprep.subr.bf16.mxu0 %v912
        %1225 = vmatpush1.bf16.msra.mxu0 %v911
        %1226 = vmatprep.subr.bf16.mxu0 %v916
        %1227 = vmatpush1.bf16.msra.mxu0 %v915
        %1228 = vmatprep.subr.bf16.mxu0 %v920
        %1229 = vmatpush1.bf16.msra.mxu0 %v919
        %1230 = vmatprep.subr.bf16.mxu0 %v924
        %1231 = vmatpush1.bf16.msra.mxu0 %v923
        %1232 = vmatprep.subr.bf16.mxu0 %v928
        %1233 = vmatpush1.bf16.msra.mxu0 %v927
        %1234 = vmatprep.subr.bf16.mxu0 %v932
        %1235 = vmatpush1.bf16.msra.mxu0 %v931
        %1236 = vmatprep.subr.bf16.mxu0 %v936
        %1237 = vmatpush1.bf16.msra.mxu0 %v935
        %1238 = vmatprep.subr.bf16.mxu0 %v940
        %1239 = vmatpush1.bf16.msra.mxu0 %v939
        %1240 = vmatprep.subr.bf16.mxu0 %v944
        %1241 = vmatpush1.bf16.msra.mxu0 %v943
        %1242 = vmatprep.subr.bf16.mxu0 %v948
        %1243 = vmatpush1.bf16.msra.mxu0 %v947
        %1244 = vmatprep.subr.bf16.mxu0 %v952
        %1245 = vmatpush1.bf16.msra.mxu0 %v951
        %1246 = vmatprep.subr.bf16.mxu0 %v956
        %1247 = vmatpush1.bf16.msra.mxu0 %v955
        %1248 = vmatprep.subr.bf16.mxu0 %v960
        %1249 = vmatpush1.bf16.msra.mxu0 %v959
        %1250 = vmatprep.subr.bf16.mxu0 %v964
        %1251 = vmatpush1.bf16.msra.mxu0 %v963
        %1252 = vmatprep.subr.bf16.mxu0 %v968
        %1253 = vmatpush1.bf16.msra.mxu0 %v967
        %1254 = vmatprep.subr.bf16.mxu0 %v972
        %1255 = vmatpush1.bf16.msra.mxu0 %v971
        %1256 = vmatprep.mubr.bf16.mxu0 %v284
        %1257 = vmatmul.mubr.bf16.gmra.mrb[0].mxu0 %v283
        %v1258 = vpop.f32.mrb[0].mxu0
        %v1259 = vadd.f32 %v1218, %v1258
        %v1260 = vpop.f32.mrb[0].mxu0
        %v1261 = vadd.f32 %v1220, %v1260
        %v1262 = vpop.f32.mrb[0].mxu0
        %v1263 = vpop.f32.mrb[0].mxu0
        %1264 = vdwg.mxu0
        %v1265 = vmax.f32 %v1177, 0.0
        %v1266 = vmax.f32 %v1179, 0.0
        %v1267 = vmax.f32 %v1259, 0.0
        %v1268 = vmax.f32 %v1261, 0.0
        %v1269 = vpack.c.bf16 %v1265, %v1265
        %v1270 = vpack.c.bf16 %v1266, %v1266
        %v1271 = vpack.c.bf16 %v1267, %v1267
        %v1272 = vpack.c.bf16 %v1268, %v1268
        %v1273 = vld [vmem:[%s3] sm:$0xff]
        %v1274 = vld [vmem:[%s3 + $0x8] sm:$0xff]
        %v1275 = vld [vmem:[%s3 + $0x10] sm:$0xff]
        %v1276 = vld [vmem:[%s3 + $0x18] sm:$0xff]
        %v1277 = vld [vmem:[%s3 + $0x20] sm:$0xff]
        %v1278 = vld [vmem:[%s3 + $0x28] sm:$0xff]
        %v1279 = vld [vmem:[%s3 + $0x30] sm:$0xff]
        %v1280 = vld [vmem:[%s3 + $0x38] sm:$0xff]
        %v1281 = vld [vmem:[%s3 + $0x40] sm:$0xff]
        %v1282 = vld [vmem:[%s3 + $0x48] sm:$0xff]
        %v1283 = vld [vmem:[%s3 + $0x50] sm:$0xff]
        %v1284 = vld [vmem:[%s3 + $0x58] sm:$0xff]
        %v1285 = vld [vmem:[%s3 + $0x60] sm:$0xff]
        %v1286 = vld [vmem:[%s3 + $0x68] sm:$0xff]
        %v1287 = vld [vmem:[%s3 + $0x70] sm:$0xff]
        %v1288 = vld [vmem:[%s3 + $0x78] sm:$0xff]
        %v1289 = vld [vmem:[%s3 + $0x80] sm:$0xff]
        %v1290 = vld [vmem:[%s3 + $0x88] sm:$0xff]
        %v1291 = vld [vmem:[%s3 + $0x90] sm:$0xff]
        %v1292 = vld [vmem:[%s3 + $0x98] sm:$0xff]
        %v1293 = vld [vmem:[%s3 + $0xa0] sm:$0xff]
        %v1294 = vld [vmem:[%s3 + $0xa8] sm:$0xff]
        %v1295 = vld [vmem:[%s3 + $0xb0] sm:$0xff]
        %v1296 = vld [vmem:[%s3 + $0xb8] sm:$0xff]
        %v1297 = vld [vmem:[%s3 + $0xc0] sm:$0xff]
        %v1298 = vld [vmem:[%s3 + $0xc8] sm:$0xff]
        %v1299 = vld [vmem:[%s3 + $0xd0] sm:$0xff]
        %v1300 = vld [vmem:[%s3 + $0xd8] sm:$0xff]
        %v1301 = vld [vmem:[%s3 + $0xe0] sm:$0xff]
        %v1302 = vld [vmem:[%s3 + $0xe8] sm:$0xff]
        %v1303 = vld [vmem:[%s3 + $0xf0] sm:$0xff]
        %v1304 = vld [vmem:[%s3 + $0xf8] sm:$0xff]
        %v1305 = vld [vmem:[%s3 + $0x100] sm:$0xff]
        %v1306 = vld [vmem:[%s3 + $0x108] sm:$0xff]
        %v1307 = vld [vmem:[%s3 + $0x110] sm:$0xff]
        %v1308 = vld [vmem:[%s3 + $0x118] sm:$0xff]
        %v1309 = vld [vmem:[%s3 + $0x120] sm:$0xff]
        %v1310 = vld [vmem:[%s3 + $0x128] sm:$0xff]
        %v1311 = vld [vmem:[%s3 + $0x130] sm:$0xff]
        %v1312 = vld [vmem:[%s3 + $0x138] sm:$0xff]
        %v1313 = vld [vmem:[%s3 + $0x140] sm:$0xff]
        %v1314 = vld [vmem:[%s3 + $0x148] sm:$0xff]
        %v1315 = vld [vmem:[%s3 + $0x150] sm:$0xff]
        %v1316 = vld [vmem:[%s3 + $0x158] sm:$0xff]
        %v1317 = vld [vmem:[%s3 + $0x160] sm:$0xff]
        %v1318 = vld [vmem:[%s3 + $0x168] sm:$0xff]
        %v1319 = vld [vmem:[%s3 + $0x170] sm:$0xff]
        %v1320 = vld [vmem:[%s3 + $0x178] sm:$0xff]
        %v1321 = vld [vmem:[%s3 + $0x180] sm:$0xff]
        %v1322 = vld [vmem:[%s3 + $0x188] sm:$0xff]
        %v1323 = vld [vmem:[%s3 + $0x190] sm:$0xff]
        %v1324 = vld [vmem:[%s3 + $0x198] sm:$0xff]
        %v1325 = vld [vmem:[%s3 + $0x1a0] sm:$0xff]
        %v1326 = vld [vmem:[%s3 + $0x1a8] sm:$0xff]
        %v1327 = vld [vmem:[%s3 + $0x1b0] sm:$0xff]
        %v1328 = vld [vmem:[%s3 + $0x1b8] sm:$0xff]
        %v1329 = vld [vmem:[%s3 + $0x1c0] sm:$0xff]
        %v1330 = vld [vmem:[%s3 + $0x1c8] sm:$0xff]
        %v1331 = vld [vmem:[%s3 + $0x1d0] sm:$0xff]
        %v1332 = vld [vmem:[%s3 + $0x1d8] sm:$0xff]
        %v1333 = vld [vmem:[%s3 + $0x1e0] sm:$0xff]
        %v1334 = vld [vmem:[%s3 + $0x1e8] sm:$0xff]
        %v1335 = vld [vmem:[%s3 + $0x1f0] sm:$0xff]
        %v1336 = vld [vmem:[%s3 + $0x1f8] sm:$0xff]
        %v1337 = vld [vmem:[%s3 + $0x200] sm:$0xff]
        %v1338 = vld [vmem:[%s3 + $0x208] sm:$0xff]
        %v1339 = vld [vmem:[%s3 + $0x210] sm:$0xff]
        %v1340 = vld [vmem:[%s3 + $0x218] sm:$0xff]
        %v1341 = vld [vmem:[%s3 + $0x220] sm:$0xff]
        %v1342 = vld [vmem:[%s3 + $0x228] sm:$0xff]
        %v1343 = vld [vmem:[%s3 + $0x230] sm:$0xff]
        %v1344 = vld [vmem:[%s3 + $0x238] sm:$0xff]
        %v1345 = vld [vmem:[%s3 + $0x240] sm:$0xff]
        %v1346 = vld [vmem:[%s3 + $0x248] sm:$0xff]
        %v1347 = vld [vmem:[%s3 + $0x250] sm:$0xff]
        %v1348 = vld [vmem:[%s3 + $0x258] sm:$0xff]
        %v1349 = vld [vmem:[%s3 + $0x260] sm:$0xff]
        %v1350 = vld [vmem:[%s3 + $0x268] sm:$0xff]
        %v1351 = vld [vmem:[%s3 + $0x270] sm:$0xff]
        %v1352 = vld [vmem:[%s3 + $0x278] sm:$0xff]
        %v1353 = vld [vmem:[%s3 + $0x280] sm:$0xff]
        %v1354 = vld [vmem:[%s3 + $0x288] sm:$0xff]
        %v1355 = vld [vmem:[%s3 + $0x290] sm:$0xff]
        %v1356 = vld [vmem:[%s3 + $0x298] sm:$0xff]
        %v1357 = vld [vmem:[%s3 + $0x2a0] sm:$0xff]
        %v1358 = vld [vmem:[%s3 + $0x2a8] sm:$0xff]
        %v1359 = vld [vmem:[%s3 + $0x2b0] sm:$0xff]
        %v1360 = vld [vmem:[%s3 + $0x2b8] sm:$0xff]
        %v1361 = vld [vmem:[%s3 + $0x2c0] sm:$0xff]
        %v1362 = vld [vmem:[%s3 + $0x2c8] sm:$0xff]
        %v1363 = vld [vmem:[%s3 + $0x2d0] sm:$0xff]
        %v1364 = vld [vmem:[%s3 + $0x2d8] sm:$0xff]
        %v1365 = vld [vmem:[%s3 + $0x2e0] sm:$0xff]
        %v1366 = vld [vmem:[%s3 + $0x2e8] sm:$0xff]
        %v1367 = vld [vmem:[%s3 + $0x2f0] sm:$0xff]
        %v1368 = vld [vmem:[%s3 + $0x2f8] sm:$0xff]
        %v1369 = vld [vmem:[%s3 + $0x300] sm:$0xff]
        %v1370 = vld [vmem:[%s3 + $0x308] sm:$0xff]
        %v1371 = vld [vmem:[%s3 + $0x310] sm:$0xff]
        %v1372 = vld [vmem:[%s3 + $0x318] sm:$0xff]
        %v1373 = vld [vmem:[%s3 + $0x320] sm:$0xff]
        %v1374 = vld [vmem:[%s3 + $0x328] sm:$0xff]
        %v1375 = vld [vmem:[%s3 + $0x330] sm:$0xff]
        %v1376 = vld [vmem:[%s3 + $0x338] sm:$0xff]
        %v1377 = vld [vmem:[%s3 + $0x340] sm:$0xff]
        %v1378 = vld [vmem:[%s3 + $0x348] sm:$0xff]
        %v1379 = vld [vmem:[%s3 + $0x350] sm:$0xff]
        %v1380 = vld [vmem:[%s3 + $0x358] sm:$0xff]
        %v1381 = vld [vmem:[%s3 + $0x360] sm:$0xff]
        %v1382 = vld [vmem:[%s3 + $0x368] sm:$0xff]
        %v1383 = vld [vmem:[%s3 + $0x370] sm:$0xff]
        %v1384 = vld [vmem:[%s3 + $0x378] sm:$0xff]
        %v1385 = vld [vmem:[%s3 + $0x380] sm:$0xff]
        %v1386 = vld [vmem:[%s3 + $0x388] sm:$0xff]
        %v1387 = vld [vmem:[%s3 + $0x390] sm:$0xff]
        %v1388 = vld [vmem:[%s3 + $0x398] sm:$0xff]
        %v1389 = vld [vmem:[%s3 + $0x3a0] sm:$0xff]
        %v1390 = vld [vmem:[%s3 + $0x3a8] sm:$0xff]
        %v1391 = vld [vmem:[%s3 + $0x3b0] sm:$0xff]
        %v1392 = vld [vmem:[%s3 + $0x3b8] sm:$0xff]
        %v1393 = vld [vmem:[%s3 + $0x3c0] sm:$0xff]
        %v1394 = vld [vmem:[%s3 + $0x3c8] sm:$0xff]
        %v1395 = vld [vmem:[%s3 + $0x3d0] sm:$0xff]
        %v1396 = vld [vmem:[%s3 + $0x3d8] sm:$0xff]
        %v1397 = vld [vmem:[%s3 + $0x3e0] sm:$0xff]
        %v1398 = vld [vmem:[%s3 + $0x3e8] sm:$0xff]
        %v1399 = vld [vmem:[%s3 + $0x3f0] sm:$0xff]
        %v1400 = vld [vmem:[%s3 + $0x3f8] sm:$0xff]
        %v1529 = vunpack.c.l.b16 %v1273
        %v1530 = vunpack.c.h.b16 %v1273
        %v1531 = vunpack.c.l.b16 %v1274
        %v1532 = vunpack.c.h.b16 %v1274
        %v1533 = vunpack.c.l.b16 %v1275
        %v1534 = vunpack.c.h.b16 %v1275
        %v1535 = vunpack.c.l.b16 %v1276
        %v1536 = vunpack.c.h.b16 %v1276
        %v1537 = vunpack.c.l.b16 %v1277
        %v1538 = vunpack.c.h.b16 %v1277
        %v1539 = vunpack.c.l.b16 %v1278
        %v1540 = vunpack.c.h.b16 %v1278
        %v1541 = vunpack.c.l.b16 %v1279
        %v1542 = vunpack.c.h.b16 %v1279
        %v1543 = vunpack.c.l.b16 %v1280
        %v1544 = vunpack.c.h.b16 %v1280
        %v1545 = vunpack.c.l.b16 %v1281
        %v1546 = vunpack.c.h.b16 %v1281
        %v1547 = vunpack.c.l.b16 %v1282
        %v1548 = vunpack.c.h.b16 %v1282
        %v1549 = vunpack.c.l.b16 %v1283
        %v1550 = vunpack.c.h.b16 %v1283
        %v1551 = vunpack.c.l.b16 %v1284
        %v1552 = vunpack.c.h.b16 %v1284
        %v1553 = vunpack.c.l.b16 %v1285
        %v1554 = vunpack.c.h.b16 %v1285
        %v1555 = vunpack.c.l.b16 %v1286
        %v1556 = vunpack.c.h.b16 %v1286
        %v1557 = vunpack.c.l.b16 %v1287
        %v1558 = vunpack.c.h.b16 %v1287
        %v1559 = vunpack.c.l.b16 %v1288
        %v1560 = vunpack.c.h.b16 %v1288
        %v1561 = vunpack.c.l.b16 %v1289
        %v1562 = vunpack.c.h.b16 %v1289
        %v1563 = vunpack.c.l.b16 %v1290
        %v1564 = vunpack.c.h.b16 %v1290
        %v1565 = vunpack.c.l.b16 %v1291
        %v1566 = vunpack.c.h.b16 %v1291
        %v1567 = vunpack.c.l.b16 %v1292
        %v1568 = vunpack.c.h.b16 %v1292
        %v1569 = vunpack.c.l.b16 %v1293
        %v1570 = vunpack.c.h.b16 %v1293
        %v1571 = vunpack.c.l.b16 %v1294
        %v1572 = vunpack.c.h.b16 %v1294
        %v1573 = vunpack.c.l.b16 %v1295
        %v1574 = vunpack.c.h.b16 %v1295
        %v1575 = vunpack.c.l.b16 %v1296
        %v1576 = vunpack.c.h.b16 %v1296
        %v1577 = vunpack.c.l.b16 %v1297
        %v1578 = vunpack.c.h.b16 %v1297
        %v1579 = vunpack.c.l.b16 %v1298
        %v1580 = vunpack.c.h.b16 %v1298
        %v1581 = vunpack.c.l.b16 %v1299
        %v1582 = vunpack.c.h.b16 %v1299
        %v1583 = vunpack.c.l.b16 %v1300
        %v1584 = vunpack.c.h.b16 %v1300
        %v1585 = vunpack.c.l.b16 %v1301
        %v1586 = vunpack.c.h.b16 %v1301
        %v1587 = vunpack.c.l.b16 %v1302
        %v1588 = vunpack.c.h.b16 %v1302
        %v1589 = vunpack.c.l.b16 %v1303
        %v1590 = vunpack.c.h.b16 %v1303
        %v1591 = vunpack.c.l.b16 %v1304
        %v1592 = vunpack.c.h.b16 %v1304
        %v1593 = vunpack.c.l.b16 %v1305
        %v1594 = vunpack.c.h.b16 %v1305
        %v1595 = vunpack.c.l.b16 %v1306
        %v1596 = vunpack.c.h.b16 %v1306
        %v1597 = vunpack.c.l.b16 %v1307
        %v1598 = vunpack.c.h.b16 %v1307
        %v1599 = vunpack.c.l.b16 %v1308
        %v1600 = vunpack.c.h.b16 %v1308
        %v1601 = vunpack.c.l.b16 %v1309
        %v1602 = vunpack.c.h.b16 %v1309
        %v1603 = vunpack.c.l.b16 %v1310
        %v1604 = vunpack.c.h.b16 %v1310
        %v1605 = vunpack.c.l.b16 %v1311
        %v1606 = vunpack.c.h.b16 %v1311
        %v1607 = vunpack.c.l.b16 %v1312
        %v1608 = vunpack.c.h.b16 %v1312
        %v1609 = vunpack.c.l.b16 %v1313
        %v1610 = vunpack.c.h.b16 %v1313
        %v1611 = vunpack.c.l.b16 %v1314
        %v1612 = vunpack.c.h.b16 %v1314
        %v1613 = vunpack.c.l.b16 %v1315
        %v1614 = vunpack.c.h.b16 %v1315
        %v1615 = vunpack.c.l.b16 %v1316
        %v1616 = vunpack.c.h.b16 %v1316
        %v1617 = vunpack.c.l.b16 %v1317
        %v1618 = vunpack.c.h.b16 %v1317
        %v1619 = vunpack.c.l.b16 %v1318
        %v1620 = vunpack.c.h.b16 %v1318
        %v1621 = vunpack.c.l.b16 %v1319
        %v1622 = vunpack.c.h.b16 %v1319
        %v1623 = vunpack.c.l.b16 %v1320
        %v1624 = vunpack.c.h.b16 %v1320
        %v1625 = vunpack.c.l.b16 %v1321
        %v1626 = vunpack.c.h.b16 %v1321
        %v1627 = vunpack.c.l.b16 %v1322
        %v1628 = vunpack.c.h.b16 %v1322
        %v1629 = vunpack.c.l.b16 %v1323
        %v1630 = vunpack.c.h.b16 %v1323
        %v1631 = vunpack.c.l.b16 %v1324
        %v1632 = vunpack.c.h.b16 %v1324
        %v1633 = vunpack.c.l.b16 %v1325
        %v1634 = vunpack.c.h.b16 %v1325
        %v1635 = vunpack.c.l.b16 %v1326
        %v1636 = vunpack.c.h.b16 %v1326
        %v1637 = vunpack.c.l.b16 %v1327
        %v1638 = vunpack.c.h.b16 %v1327
        %v1639 = vunpack.c.l.b16 %v1328
        %v1640 = vunpack.c.h.b16 %v1328
        %v1641 = vunpack.c.l.b16 %v1329
        %v1642 = vunpack.c.h.b16 %v1329
        %v1643 = vunpack.c.l.b16 %v1330
        %v1644 = vunpack.c.h.b16 %v1330
        %v1645 = vunpack.c.l.b16 %v1331
        %v1646 = vunpack.c.h.b16 %v1331
        %v1647 = vunpack.c.l.b16 %v1332
        %v1648 = vunpack.c.h.b16 %v1332
        %v1649 = vunpack.c.l.b16 %v1333
        %v1650 = vunpack.c.h.b16 %v1333
        %v1651 = vunpack.c.l.b16 %v1334
        %v1652 = vunpack.c.h.b16 %v1334
        %v1653 = vunpack.c.l.b16 %v1335
        %v1654 = vunpack.c.h.b16 %v1335
        %v1655 = vunpack.c.l.b16 %v1336
        %v1656 = vunpack.c.h.b16 %v1336
        %v1657 = vunpack.c.l.b16 %v1337
        %v1658 = vunpack.c.h.b16 %v1337
        %v1659 = vunpack.c.l.b16 %v1338
        %v1660 = vunpack.c.h.b16 %v1338
        %v1661 = vunpack.c.l.b16 %v1339
        %v1662 = vunpack.c.h.b16 %v1339
        %v1663 = vunpack.c.l.b16 %v1340
        %v1664 = vunpack.c.h.b16 %v1340
        %v1665 = vunpack.c.l.b16 %v1341
        %v1666 = vunpack.c.h.b16 %v1341
        %v1667 = vunpack.c.l.b16 %v1342
        %v1668 = vunpack.c.h.b16 %v1342
        %v1669 = vunpack.c.l.b16 %v1343
        %v1670 = vunpack.c.h.b16 %v1343
        %v1671 = vunpack.c.l.b16 %v1344
        %v1672 = vunpack.c.h.b16 %v1344
        %v1673 = vunpack.c.l.b16 %v1345
        %v1674 = vunpack.c.h.b16 %v1345
        %v1675 = vunpack.c.l.b16 %v1346
        %v1676 = vunpack.c.h.b16 %v1346
        %v1677 = vunpack.c.l.b16 %v1347
        %v1678 = vunpack.c.h.b16 %v1347
        %v1679 = vunpack.c.l.b16 %v1348
        %v1680 = vunpack.c.h.b16 %v1348
        %v1681 = vunpack.c.l.b16 %v1349
        %v1682 = vunpack.c.h.b16 %v1349
        %v1683 = vunpack.c.l.b16 %v1350
        %v1684 = vunpack.c.h.b16 %v1350
        %v1685 = vunpack.c.l.b16 %v1351
        %v1686 = vunpack.c.h.b16 %v1351
        %v1687 = vunpack.c.l.b16 %v1352
        %v1688 = vunpack.c.h.b16 %v1352
        %v1689 = vunpack.c.l.b16 %v1353
        %v1690 = vunpack.c.h.b16 %v1353
        %v1691 = vunpack.c.l.b16 %v1354
        %v1692 = vunpack.c.h.b16 %v1354
        %v1693 = vunpack.c.l.b16 %v1355
        %v1694 = vunpack.c.h.b16 %v1355
        %v1695 = vunpack.c.l.b16 %v1356
        %v1696 = vunpack.c.h.b16 %v1356
        %v1697 = vunpack.c.l.b16 %v1357
        %v1698 = vunpack.c.h.b16 %v1357
        %v1699 = vunpack.c.l.b16 %v1358
        %v1700 = vunpack.c.h.b16 %v1358
        %v1701 = vunpack.c.l.b16 %v1359
        %v1702 = vunpack.c.h.b16 %v1359
        %v1703 = vunpack.c.l.b16 %v1360
        %v1704 = vunpack.c.h.b16 %v1360
        %v1705 = vunpack.c.l.b16 %v1361
        %v1706 = vunpack.c.h.b16 %v1361
        %v1707 = vunpack.c.l.b16 %v1362
        %v1708 = vunpack.c.h.b16 %v1362
        %v1709 = vunpack.c.l.b16 %v1363
        %v1710 = vunpack.c.h.b16 %v1363
        %v1711 = vunpack.c.l.b16 %v1364
        %v1712 = vunpack.c.h.b16 %v1364
        %v1713 = vunpack.c.l.b16 %v1365
        %v1714 = vunpack.c.h.b16 %v1365
        %v1715 = vunpack.c.l.b16 %v1366
        %v1716 = vunpack.c.h.b16 %v1366
        %v1717 = vunpack.c.l.b16 %v1367
        %v1718 = vunpack.c.h.b16 %v1367
        %v1719 = vunpack.c.l.b16 %v1368
        %v1720 = vunpack.c.h.b16 %v1368
        %v1721 = vunpack.c.l.b16 %v1369
        %v1722 = vunpack.c.h.b16 %v1369
        %v1723 = vunpack.c.l.b16 %v1370
        %v1724 = vunpack.c.h.b16 %v1370
        %v1725 = vunpack.c.l.b16 %v1371
        %v1726 = vunpack.c.h.b16 %v1371
        %v1727 = vunpack.c.l.b16 %v1372
        %v1728 = vunpack.c.h.b16 %v1372
        %v1729 = vunpack.c.l.b16 %v1373
        %v1730 = vunpack.c.h.b16 %v1373
        %v1731 = vunpack.c.l.b16 %v1374
        %v1732 = vunpack.c.h.b16 %v1374
        %v1733 = vunpack.c.l.b16 %v1375
        %v1734 = vunpack.c.h.b16 %v1375
        %v1735 = vunpack.c.l.b16 %v1376
        %v1736 = vunpack.c.h.b16 %v1376
        %v1737 = vunpack.c.l.b16 %v1377
        %v1738 = vunpack.c.h.b16 %v1377
        %v1739 = vunpack.c.l.b16 %v1378
        %v1740 = vunpack.c.h.b16 %v1378
        %v1741 = vunpack.c.l.b16 %v1379
        %v1742 = vunpack.c.h.b16 %v1379
        %v1743 = vunpack.c.l.b16 %v1380
        %v1744 = vunpack.c.h.b16 %v1380
        %v1745 = vunpack.c.l.b16 %v1381
        %v1746 = vunpack.c.h.b16 %v1381
        %v1747 = vunpack.c.l.b16 %v1382
        %v1748 = vunpack.c.h.b16 %v1382
        %v1749 = vunpack.c.l.b16 %v1383
        %v1750 = vunpack.c.h.b16 %v1383
        %v1751 = vunpack.c.l.b16 %v1384
        %v1752 = vunpack.c.h.b16 %v1384
        %v1753 = vunpack.c.l.b16 %v1385
        %v1754 = vunpack.c.h.b16 %v1385
        %v1755 = vunpack.c.l.b16 %v1386
        %v1756 = vunpack.c.h.b16 %v1386
        %v1757 = vunpack.c.l.b16 %v1387
        %v1758 = vunpack.c.h.b16 %v1387
        %v1759 = vunpack.c.l.b16 %v1388
        %v1760 = vunpack.c.h.b16 %v1388
        %v1761 = vunpack.c.l.b16 %v1389
        %v1762 = vunpack.c.h.b16 %v1389
        %v1763 = vunpack.c.l.b16 %v1390
        %v1764 = vunpack.c.h.b16 %v1390
        %v1765 = vunpack.c.l.b16 %v1391
        %v1766 = vunpack.c.h.b16 %v1391
        %v1767 = vunpack.c.l.b16 %v1392
        %v1768 = vunpack.c.h.b16 %v1392
        %v1769 = vunpack.c.l.b16 %v1393
        %v1770 = vunpack.c.h.b16 %v1393
        %v1771 = vunpack.c.l.b16 %v1394
        %v1772 = vunpack.c.h.b16 %v1394
        %v1773 = vunpack.c.l.b16 %v1395
        %v1774 = vunpack.c.h.b16 %v1395
        %v1775 = vunpack.c.l.b16 %v1396
        %v1776 = vunpack.c.h.b16 %v1396
        %v1777 = vunpack.c.l.b16 %v1397
        %v1778 = vunpack.c.h.b16 %v1397
        %v1779 = vunpack.c.l.b16 %v1398
        %v1780 = vunpack.c.h.b16 %v1398
        %v1781 = vunpack.c.l.b16 %v1399
        %v1782 = vunpack.c.h.b16 %v1399
        %v1783 = vunpack.c.l.b16 %v1400
        %v1784 = vunpack.c.h.b16 %v1400
        %v1785 = vpack.c.b16 %v1533, %v1529
        %v1786 = vpack.c.b16 %v1534, %v1530
        %v1787 = vpack.c.b16 %v1535, %v1531
        %v1788 = vpack.c.b16 %v1536, %v1532
        %v1789 = vpack.c.b16 %v1541, %v1537
        %v1790 = vpack.c.b16 %v1542, %v1538
        %v1791 = vpack.c.b16 %v1543, %v1539
        %v1792 = vpack.c.b16 %v1544, %v1540
        %v1793 = vpack.c.b16 %v1549, %v1545
        %v1794 = vpack.c.b16 %v1550, %v1546
        %v1795 = vpack.c.b16 %v1551, %v1547
        %v1796 = vpack.c.b16 %v1552, %v1548
        %v1797 = vpack.c.b16 %v1557, %v1553
        %v1798 = vpack.c.b16 %v1558, %v1554
        %v1799 = vpack.c.b16 %v1559, %v1555
        %v1800 = vpack.c.b16 %v1560, %v1556
        %v1801 = vpack.c.b16 %v1565, %v1561
        %v1802 = vpack.c.b16 %v1566, %v1562
        %v1803 = vpack.c.b16 %v1567, %v1563
        %v1804 = vpack.c.b16 %v1568, %v1564
        %v1805 = vpack.c.b16 %v1573, %v1569
        %v1806 = vpack.c.b16 %v1574, %v1570
        %v1807 = vpack.c.b16 %v1575, %v1571
        %v1808 = vpack.c.b16 %v1576, %v1572
        %v1809 = vpack.c.b16 %v1581, %v1577
        %v1810 = vpack.c.b16 %v1582, %v1578
        %v1811 = vpack.c.b16 %v1583, %v1579
        %v1812 = vpack.c.b16 %v1584, %v1580
        %v1813 = vpack.c.b16 %v1589, %v1585
        %v1814 = vpack.c.b16 %v1590, %v1586
        %v1815 = vpack.c.b16 %v1591, %v1587
        %v1816 = vpack.c.b16 %v1592, %v1588
        %v1817 = vpack.c.b16 %v1597, %v1593
        %v1818 = vpack.c.b16 %v1598, %v1594
        %v1819 = vpack.c.b16 %v1599, %v1595
        %v1820 = vpack.c.b16 %v1600, %v1596
        %v1821 = vpack.c.b16 %v1605, %v1601
        %v1822 = vpack.c.b16 %v1606, %v1602
        %v1823 = vpack.c.b16 %v1607, %v1603
        %v1824 = vpack.c.b16 %v1608, %v1604
        %v1825 = vpack.c.b16 %v1613, %v1609
        %v1826 = vpack.c.b16 %v1614, %v1610
        %v1827 = vpack.c.b16 %v1615, %v1611
        %v1828 = vpack.c.b16 %v1616, %v1612
        %v1829 = vpack.c.b16 %v1621, %v1617
        %v1830 = vpack.c.b16 %v1622, %v1618
        %v1831 = vpack.c.b16 %v1623, %v1619
        %v1832 = vpack.c.b16 %v1624, %v1620
        %v1833 = vpack.c.b16 %v1629, %v1625
        %v1834 = vpack.c.b16 %v1630, %v1626
        %v1835 = vpack.c.b16 %v1631, %v1627
        %v1836 = vpack.c.b16 %v1632, %v1628
        %v1837 = vpack.c.b16 %v1637, %v1633
        %v1838 = vpack.c.b16 %v1638, %v1634
        %v1839 = vpack.c.b16 %v1639, %v1635
        %v1840 = vpack.c.b16 %v1640, %v1636
        %v1841 = vpack.c.b16 %v1645, %v1641
        %v1842 = vpack.c.b16 %v1646, %v1642
        %v1843 = vpack.c.b16 %v1647, %v1643
        %v1844 = vpack.c.b16 %v1648, %v1644
        %v1845 = vpack.c.b16 %v1653, %v1649
        %v1846 = vpack.c.b16 %v1654, %v1650
        %v1847 = vpack.c.b16 %v1655, %v1651
        %v1848 = vpack.c.b16 %v1656, %v1652
        %v1849 = vpack.c.b16 %v1661, %v1657
        %v1850 = vpack.c.b16 %v1662, %v1658
        %v1851 = vpack.c.b16 %v1663, %v1659
        %v1852 = vpack.c.b16 %v1664, %v1660
        %v1853 = vpack.c.b16 %v1669, %v1665
        %v1854 = vpack.c.b16 %v1670, %v1666
        %v1855 = vpack.c.b16 %v1671, %v1667
        %v1856 = vpack.c.b16 %v1672, %v1668
        %v1857 = vpack.c.b16 %v1677, %v1673
        %v1858 = vpack.c.b16 %v1678, %v1674
        %v1859 = vpack.c.b16 %v1679, %v1675
        %v1860 = vpack.c.b16 %v1680, %v1676
        %v1861 = vpack.c.b16 %v1685, %v1681
        %v1862 = vpack.c.b16 %v1686, %v1682
        %v1863 = vpack.c.b16 %v1687, %v1683
        %v1864 = vpack.c.b16 %v1688, %v1684
        %v1865 = vpack.c.b16 %v1693, %v1689
        %v1866 = vpack.c.b16 %v1694, %v1690
        %v1867 = vpack.c.b16 %v1695, %v1691
        %v1868 = vpack.c.b16 %v1696, %v1692
        %v1869 = vpack.c.b16 %v1701, %v1697
        %v1870 = vpack.c.b16 %v1702, %v1698
        %v1871 = vpack.c.b16 %v1703, %v1699
        %v1872 = vpack.c.b16 %v1704, %v1700
        %v1873 = vpack.c.b16 %v1709, %v1705
        %v1874 = vpack.c.b16 %v1710, %v1706
        %v1875 = vpack.c.b16 %v1711, %v1707
        %v1876 = vpack.c.b16 %v1712, %v1708
        %v1877 = vpack.c.b16 %v1717, %v1713
        %v1878 = vpack.c.b16 %v1718, %v1714
        %v1879 = vpack.c.b16 %v1719, %v1715
        %v1880 = vpack.c.b16 %v1720, %v1716
        %v1881 = vpack.c.b16 %v1725, %v1721
        %v1882 = vpack.c.b16 %v1726, %v1722
        %v1883 = vpack.c.b16 %v1727, %v1723
        %v1884 = vpack.c.b16 %v1728, %v1724
        %v1885 = vpack.c.b16 %v1733, %v1729
        %v1886 = vpack.c.b16 %v1734, %v1730
        %v1887 = vpack.c.b16 %v1735, %v1731
        %v1888 = vpack.c.b16 %v1736, %v1732
        %v1889 = vpack.c.b16 %v1741, %v1737
        %v1890 = vpack.c.b16 %v1742, %v1738
        %v1891 = vpack.c.b16 %v1743, %v1739
        %v1892 = vpack.c.b16 %v1744, %v1740
        %v1893 = vpack.c.b16 %v1749, %v1745
        %v1894 = vpack.c.b16 %v1750, %v1746
        %v1895 = vpack.c.b16 %v1751, %v1747
        %v1896 = vpack.c.b16 %v1752, %v1748
        %v1897 = vpack.c.b16 %v1757, %v1753
        %v1898 = vpack.c.b16 %v1758, %v1754
        %v1899 = vpack.c.b16 %v1759, %v1755
        %v1900 = vpack.c.b16 %v1760, %v1756
        %v1901 = vpack.c.b16 %v1765, %v1761
        %v1902 = vpack.c.b16 %v1766, %v1762
        %v1903 = vpack.c.b16 %v1767, %v1763
        %v1904 = vpack.c.b16 %v1768, %v1764
        %v1905 = vpack.c.b16 %v1773, %v1769
        %v1906 = vpack.c.b16 %v1774, %v1770
        %v1907 = vpack.c.b16 %v1775, %v1771
        %v1908 = vpack.c.b16 %v1776, %v1772
        %v1909 = vpack.c.b16 %v1781, %v1777
        %v1910 = vpack.c.b16 %v1782, %v1778
        %v1911 = vpack.c.b16 %v1783, %v1779
        %v1912 = vpack.c.b16 %v1784, %v1780
        %2041 = vmatprep.subr.bf16.mxu0 %v1786
        %2042 = vmatpush1.bf16.msra.mxu0 %v1785
        %2043 = vmatprep.subr.bf16.mxu0 %v1790
        %2044 = vmatpush1.bf16.msra.mxu0 %v1789
        %2045 = vmatprep.subr.bf16.mxu0 %v1794
        %2046 = vmatpush1.bf16.msra.mxu0 %v1793
        %2047 = vmatprep.subr.bf16.mxu0 %v1798
        %2048 = vmatpush1.bf16.msra.mxu0 %v1797
        %2049 = vmatprep.subr.bf16.mxu0 %v1802
        %2050 = vmatpush1.bf16.msra.mxu0 %v1801
        %2051 = vmatprep.subr.bf16.mxu0 %v1806
        %2052 = vmatpush1.bf16.msra.mxu0 %v1805
        %2053 = vmatprep.subr.bf16.mxu0 %v1810
        %2054 = vmatpush1.bf16.msra.mxu0 %v1809
        %2055 = vmatprep.subr.bf16.mxu0 %v1814
        %2056 = vmatpush1.bf16.msra.mxu0 %v1813
        %2057 = vmatprep.subr.bf16.mxu0 %v1818
        %2058 = vmatpush1.bf16.msra.mxu0 %v1817
        %2059 = vmatprep.subr.bf16.mxu0 %v1822
        %2060 = vmatpush1.bf16.msra.mxu0 %v1821
        %2061 = vmatprep.subr.bf16.mxu0 %v1826
        %2062 = vmatpush1.bf16.msra.mxu0 %v1825
        %2063 = vmatprep.subr.bf16.mxu0 %v1830
        %2064 = vmatpush1.bf16.msra.mxu0 %v1829
        %2065 = vmatprep.subr.bf16.mxu0 %v1834
        %2066 = vmatpush1.bf16.msra.mxu0 %v1833
        %2067 = vmatprep.subr.bf16.mxu0 %v1838
        %2068 = vmatpush1.bf16.msra.mxu0 %v1837
        %2069 = vmatprep.subr.bf16.mxu0 %v1842
        %2070 = vmatpush1.bf16.msra.mxu0 %v1841
        %2071 = vmatprep.subr.bf16.mxu0 %v1846
        %2072 = vmatpush1.bf16.msra.mxu0 %v1845
        %2073 = vmatprep.mubr.bf16.mxu0 %v1270
        %2074 = vmatmul.mubr.bf16.gmra.mrb[0].mxu0 %v1269
        %v2075 = vpop.f32.mrb[0].mxu0
        %v2076 = vadd.f32 0.0, %v2075
        %v2077 = vpop.f32.mrb[0].mxu0
        %v2078 = vadd.f32 0.0, %v2077
        %v2079 = vpop.f32.mrb[0].mxu0
        %v2080 = vpop.f32.mrb[0].mxu0
        %2081 = vdwg.mxu0
        %2082 = vmatprep.subr.bf16.mxu0 %v1850
        %2083 = vmatpush1.bf16.msra.mxu0 %v1849
        %2084 = vmatprep.subr.bf16.mxu0 %v1854
        %2085 = vmatpush1.bf16.msra.mxu0 %v1853
        %2086 = vmatprep.subr.bf16.mxu0 %v1858
        %2087 = vmatpush1.bf16.msra.mxu0 %v1857
        %2088 = vmatprep.subr.bf16.mxu0 %v1862
        %2089 = vmatpush1.bf16.msra.mxu0 %v1861
        %2090 = vmatprep.subr.bf16.mxu0 %v1866
        %2091 = vmatpush1.bf16.msra.mxu0 %v1865
        %2092 = vmatprep.subr.bf16.mxu0 %v1870
        %2093 = vmatpush1.bf16.msra.mxu0 %v1869
        %2094 = vmatprep.subr.bf16.mxu0 %v1874
        %2095 = vmatpush1.bf16.msra.mxu0 %v1873
        %2096 = vmatprep.subr.bf16.mxu0 %v1878
        %2097 = vmatpush1.bf16.msra.mxu0 %v1877
        %2098 = vmatprep.subr.bf16.mxu0 %v1882
        %2099 = vmatpush1.bf16.msra.mxu0 %v1881
        %2100 = vmatprep.subr.bf16.mxu0 %v1886
        %2101 = vmatpush1.bf16.msra.mxu0 %v1885
        %2102 = vmatprep.subr.bf16.mxu0 %v1890
        %2103 = vmatpush1.bf16.msra.mxu0 %v1889
        %2104 = vmatprep.subr.bf16.mxu0 %v1894
        %2105 = vmatpush1.bf16.msra.mxu0 %v1893
        %2106 = vmatprep.subr.bf16.mxu0 %v1898
        %2107 = vmatpush1.bf16.msra.mxu0 %v1897
        %2108 = vmatprep.subr.bf16.mxu0 %v1902
        %2109 = vmatpush1.bf16.msra.mxu0 %v1901
        %2110 = vmatprep.subr.bf16.mxu0 %v1906
        %2111 = vmatpush1.bf16.msra.mxu0 %v1905
        %2112 = vmatprep.subr.bf16.mxu0 %v1910
        %2113 = vmatpush1.bf16.msra.mxu0 %v1909
        %2114 = vmatprep.mubr.bf16.mxu0 %v1272
        %2115 = vmatmul.mubr.bf16.gmra.mrb[0].mxu0 %v1271
        %v2116 = vpop.f32.mrb[0].mxu0
        %v2117 = vadd.f32 %v2076, %v2116
        %v2118 = vpop.f32.mrb[0].mxu0
        %v2119 = vadd.f32 %v2078, %v2118
        %v2120 = vpop.f32.mrb[0].mxu0
        %v2121 = vpop.f32.mrb[0].mxu0
        %2122 = vdwg.mxu0
        %2123 = vmatprep.subr.bf16.mxu0 %v1788
        %2124 = vmatpush1.bf16.msra.mxu0 %v1787
        %2125 = vmatprep.subr.bf16.mxu0 %v1792
        %2126 = vmatpush1.bf16.msra.mxu0 %v1791
        %2127 = vmatprep.subr.bf16.mxu0 %v1796
        %2128 = vmatpush1.bf16.msra.mxu0 %v1795
        %2129 = vmatprep.subr.bf16.mxu0 %v1800
        %2130 = vmatpush1.bf16.msra.mxu0 %v1799
        %2131 = vmatprep.subr.bf16.mxu0 %v1804
        %2132 = vmatpush1.bf16.msra.mxu0 %v1803
        %2133 = vmatprep.subr.bf16.mxu0 %v1808
        %2134 = vmatpush1.bf16.msra.mxu0 %v1807
        %2135 = vmatprep.subr.bf16.mxu0 %v1812
        %2136 = vmatpush1.bf16.msra.mxu0 %v1811
        %2137 = vmatprep.subr.bf16.mxu0 %v1816
        %2138 = vmatpush1.bf16.msra.mxu0 %v1815
        %2139 = vmatprep.subr.bf16.mxu0 %v1820
        %2140 = vmatpush1.bf16.msra.mxu0 %v1819
        %2141 = vmatprep.subr.bf16.mxu0 %v1824
        %2142 = vmatpush1.bf16.msra.mxu0 %v1823
        %2143 = vmatprep.subr.bf16.mxu0 %v1828
        %2144 = vmatpush1.bf16.msra.mxu0 %v1827
        %2145 = vmatprep.subr.bf16.mxu0 %v1832
        %2146 = vmatpush1.bf16.msra.mxu0 %v1831
        %2147 = vmatprep.subr.bf16.mxu0 %v1836
        %2148 = vmatpush1.bf16.msra.mxu0 %v1835
        %2149 = vmatprep.subr.bf16.mxu0 %v1840
        %2150 = vmatpush1.bf16.msra.mxu0 %v1839
        %2151 = vmatprep.subr.bf16.mxu0 %v1844
        %2152 = vmatpush1.bf16.msra.mxu0 %v1843
        %2153 = vmatprep.subr.bf16.mxu0 %v1848
        %2154 = vmatpush1.bf16.msra.mxu0 %v1847
        %2155 = vmatprep.mubr.bf16.mxu0 %v1270
        %2156 = vmatmul.mubr.bf16.gmra.mrb[0].mxu0 %v1269
        %v2157 = vpop.f32.mrb[0].mxu0
        %v2158 = vadd.f32 0.0, %v2157
        %v2159 = vpop.f32.mrb[0].mxu0
        %v2160 = vadd.f32 0.0, %v2159
        %v2161 = vpop.f32.mrb[0].mxu0
        %v2162 = vpop.f32.mrb[0].mxu0
        %2163 = vdwg.mxu0
        %2164 = vmatprep.subr.bf16.mxu0 %v1852
        %2165 = vmatpush1.bf16.msra.mxu0 %v1851
        %2166 = vmatprep.subr.bf16.mxu0 %v1856
        %2167 = vmatpush1.bf16.msra.mxu0 %v1855
        %2168 = vmatprep.subr.bf16.mxu0 %v1860
        %2169 = vmatpush1.bf16.msra.mxu0 %v1859
        %2170 = vmatprep.subr.bf16.mxu0 %v1864
        %2171 = vmatpush1.bf16.msra.mxu0 %v1863
        %2172 = vmatprep.subr.bf16.mxu0 %v1868
        %2173 = vmatpush1.bf16.msra.mxu0 %v1867
        %2174 = vmatprep.subr.bf16.mxu0 %v1872
        %2175 = vmatpush1.bf16.msra.mxu0 %v1871
        %2176 = vmatprep.subr.bf16.mxu0 %v1876
        %2177 = vmatpush1.bf16.msra.mxu0 %v1875
        %2178 = vmatprep.subr.bf16.mxu0 %v1880
        %2179 = vmatpush1.bf16.msra.mxu0 %v1879
        %2180 = vmatprep.subr.bf16.mxu0 %v1884
        %2181 = vmatpush1.bf16.msra.mxu0 %v1883
        %2182 = vmatprep.subr.bf16.mxu0 %v1888
        %2183 = vmatpush1.bf16.msra.mxu0 %v1887
        %2184 = vmatprep.subr.bf16.mxu0 %v1892
        %2185 = vmatpush1.bf16.msra.mxu0 %v1891
        %2186 = vmatprep.subr.bf16.mxu0 %v1896
        %2187 = vmatpush1.bf16.msra.mxu0 %v1895
        %2188 = vmatprep.subr.bf16.mxu0 %v1900
        %2189 = vmatpush1.bf16.msra.mxu0 %v1899
        %2190 = vmatprep.subr.bf16.mxu0 %v1904
        %2191 = vmatpush1.bf16.msra.mxu0 %v1903
        %2192 = vmatprep.subr.bf16.mxu0 %v1908
        %2193 = vmatpush1.bf16.msra.mxu0 %v1907
        %2194 = vmatprep.subr.bf16.mxu0 %v1912
        %2195 = vmatpush1.bf16.msra.mxu0 %v1911
        %2196 = vmatprep.mubr.bf16.mxu0 %v1272
        %2197 = vmatmul.mubr.bf16.gmra.mrb[0].mxu0 %v1271
        %v2198 = vpop.f32.mrb[0].mxu0
        %v2199 = vadd.f32 %v2158, %v2198
        %v2200 = vpop.f32.mrb[0].mxu0
        %v2201 = vadd.f32 %v2160, %v2200
        %v2202 = vpop.f32.mrb[0].mxu0
        %v2203 = vpop.f32.mrb[0].mxu0
        %2204 = vdwg.mxu0
        %v2205 = vadd.f32 %v307, %v2117
        %v2206 = vadd.f32 %v308, %v2119
        %v2207 = vadd.f32 %v309, %v2199
        %v2208 = vadd.f32 %v310, %v2201
        %v2209 = vld [vmem:[%s1 + $0x10] sm:$0xff]
        %v2210 = vld [vmem:[%s1 + $0x18] sm:$0xff]
        %v2211 = vld [vmem:[%s1 + $0x50] sm:$0xff]
        %v2212 = vld [vmem:[%s1 + $0x58] sm:$0xff]
        %v2213 = vld [vmem:[%s1 + $0x90] sm:$0xff]
        %v2214 = vld [vmem:[%s1 + $0x98] sm:$0xff]
        %v2215 = vld [vmem:[%s1 + $0xd0] sm:$0xff]
        %v2216 = vld [vmem:[%s1 + $0xd8] sm:$0xff]
        %v2217 = vld [vmem:[%s1 + $0x110] sm:$0xff]
        %v2218 = vld [vmem:[%s1 + $0x118] sm:$0xff]
        %v2219 = vld [vmem:[%s1 + $0x150] sm:$0xff]
        %v2220 = vld [vmem:[%s1 + $0x158] sm:$0xff]
        %v2221 = vld [vmem:[%s1 + $0x190] sm:$0xff]
        %v2222 = vld [vmem:[%s1 + $0x198] sm:$0xff]
        %v2223 = vld [vmem:[%s1 + $0x1d0] sm:$0xff]
        %v2224 = vld [vmem:[%s1 + $0x1d8] sm:$0xff]
        %v2225 = vld [vmem:[%s1 + $0x210] sm:$0xff]
        %v2226 = vld [vmem:[%s1 + $0x218] sm:$0xff]
        %v2227 = vld [vmem:[%s1 + $0x250] sm:$0xff]
        %v2228 = vld [vmem:[%s1 + $0x258] sm:$0xff]
        %v2229 = vld [vmem:[%s1 + $0x290] sm:$0xff]
        %v2230 = vld [vmem:[%s1 + $0x298] sm:$0xff]
        %v2231 = vld [vmem:[%s1 + $0x2d0] sm:$0xff]
        %v2232 = vld [vmem:[%s1 + $0x2d8] sm:$0xff]
        %v2233 = vld [vmem:[%s1 + $0x310] sm:$0xff]
        %v2234 = vld [vmem:[%s1 + $0x318] sm:$0xff]
        %v2235 = vld [vmem:[%s1 + $0x350] sm:$0xff]
        %v2236 = vld [vmem:[%s1 + $0x358] sm:$0xff]
        %v2237 = vld [vmem:[%s1 + $0x390] sm:$0xff]
        %v2238 = vld [vmem:[%s1 + $0x398] sm:$0xff]
        %v2239 = vld [vmem:[%s1 + $0x3d0] sm:$0xff]
        %v2240 = vld [vmem:[%s1 + $0x3d8] sm:$0xff]
        %v2241 = vld [vmem:[%s1 + $0x410] sm:$0xff]
        %v2242 = vld [vmem:[%s1 + $0x418] sm:$0xff]
        %v2243 = vld [vmem:[%s1 + $0x450] sm:$0xff]
        %v2244 = vld [vmem:[%s1 + $0x458] sm:$0xff]
        %v2245 = vld [vmem:[%s1 + $0x490] sm:$0xff]
        %v2246 = vld [vmem:[%s1 + $0x498] sm:$0xff]
        %v2247 = vld [vmem:[%s1 + $0x4d0] sm:$0xff]
        %v2248 = vld [vmem:[%s1 + $0x4d8] sm:$0xff]
        %v2249 = vld [vmem:[%s1 + $0x510] sm:$0xff]
        %v2250 = vld [vmem:[%s1 + $0x518] sm:$0xff]
        %v2251 = vld [vmem:[%s1 + $0x550] sm:$0xff]
        %v2252 = vld [vmem:[%s1 + $0x558] sm:$0xff]
        %v2253 = vld [vmem:[%s1 + $0x590] sm:$0xff]
        %v2254 = vld [vmem:[%s1 + $0x598] sm:$0xff]
        %v2255 = vld [vmem:[%s1 + $0x5d0] sm:$0xff]
        %v2256 = vld [vmem:[%s1 + $0x5d8] sm:$0xff]
        %v2257 = vld [vmem:[%s1 + $0x610] sm:$0xff]
        %v2258 = vld [vmem:[%s1 + $0x618] sm:$0xff]
        %v2259 = vld [vmem:[%s1 + $0x650] sm:$0xff]
        %v2260 = vld [vmem:[%s1 + $0x658] sm:$0xff]
        %v2261 = vld [vmem:[%s1 + $0x690] sm:$0xff]
        %v2262 = vld [vmem:[%s1 + $0x698] sm:$0xff]
        %v2263 = vld [vmem:[%s1 + $0x6d0] sm:$0xff]
        %v2264 = vld [vmem:[%s1 + $0x6d8] sm:$0xff]
        %v2265 = vld [vmem:[%s1 + $0x710] sm:$0xff]
        %v2266 = vld [vmem:[%s1 + $0x718] sm:$0xff]
        %v2267 = vld [vmem:[%s1 + $0x750] sm:$0xff]
        %v2268 = vld [vmem:[%s1 + $0x758] sm:$0xff]
        %v2269 = vld [vmem:[%s1 + $0x790] sm:$0xff]
        %v2270 = vld [vmem:[%s1 + $0x798] sm:$0xff]
        %v2271 = vld [vmem:[%s1 + $0x7d0] sm:$0xff]
        %v2272 = vld [vmem:[%s1 + $0x7d8] sm:$0xff]
        %v2273 = vld [vmem:[%s1 + $0x810] sm:$0xff]
        %v2274 = vld [vmem:[%s1 + $0x818] sm:$0xff]
        %v2275 = vld [vmem:[%s1 + $0x850] sm:$0xff]
        %v2276 = vld [vmem:[%s1 + $0x858] sm:$0xff]
        %v2277 = vld [vmem:[%s1 + $0x890] sm:$0xff]
        %v2278 = vld [vmem:[%s1 + $0x898] sm:$0xff]
        %v2279 = vld [vmem:[%s1 + $0x8d0] sm:$0xff]
        %v2280 = vld [vmem:[%s1 + $0x8d8] sm:$0xff]
        %v2281 = vld [vmem:[%s1 + $0x910] sm:$0xff]
        %v2282 = vld [vmem:[%s1 + $0x918] sm:$0xff]
        %v2283 = vld [vmem:[%s1 + $0x950] sm:$0xff]
        %v2284 = vld [vmem:[%s1 + $0x958] sm:$0xff]
        %v2285 = vld [vmem:[%s1 + $0x990] sm:$0xff]
        %v2286 = vld [vmem:[%s1 + $0x998] sm:$0xff]
        %v2287 = vld [vmem:[%s1 + $0x9d0] sm:$0xff]
        %v2288 = vld [vmem:[%s1 + $0x9d8] sm:$0xff]
        %v2289 = vld [vmem:[%s1 + $0xa10] sm:$0xff]
        %v2290 = vld [vmem:[%s1 + $0xa18] sm:$0xff]
        %v2291 = vld [vmem:[%s1 + $0xa50] sm:$0xff]
        %v2292 = vld [vmem:[%s1 + $0xa58] sm:$0xff]
        %v2293 = vld [vmem:[%s1 + $0xa90] sm:$0xff]
        %v2294 = vld [vmem:[%s1 + $0xa98] sm:$0xff]
        %v2295 = vld [vmem:[%s1 + $0xad0] sm:$0xff]
        %v2296 = vld [vmem:[%s1 + $0xad8] sm:$0xff]
        %v2297 = vld [vmem:[%s1 + $0xb10] sm:$0xff]
        %v2298 = vld [vmem:[%s1 + $0xb18] sm:$0xff]
        %v2299 = vld [vmem:[%s1 + $0xb50] sm:$0xff]
        %v2300 = vld [vmem:[%s1 + $0xb58] sm:$0xff]
        %v2301 = vld [vmem:[%s1 + $0xb90] sm:$0xff]
        %v2302 = vld [vmem:[%s1 + $0xb98] sm:$0xff]
        %v2303 = vld [vmem:[%s1 + $0xbd0] sm:$0xff]
        %v2304 = vld [vmem:[%s1 + $0xbd8] sm:$0xff]
        %v2305 = vld [vmem:[%s1 + $0xc10] sm:$0xff]
        %v2306 = vld [vmem:[%s1 + $0xc18] sm:$0xff]
        %v2307 = vld [vmem:[%s1 + $0xc50] sm:$0xff]
        %v2308 = vld [vmem:[%s1 + $0xc58] sm:$0xff]
        %v2309 = vld [vmem:[%s1 + $0xc90] sm:$0xff]
        %v2310 = vld [vmem:[%s1 + $0xc98] sm:$0xff]
        %v2311 = vld [vmem:[%s1 + $0xcd0] sm:$0xff]
        %v2312 = vld [vmem:[%s1 + $0xcd8] sm:$0xff]
        %v2313 = vld [vmem:[%s1 + $0xd10] sm:$0xff]
        %v2314 = vld [vmem:[%s1 + $0xd18] sm:$0xff]
        %v2315 = vld [vmem:[%s1 + $0xd50] sm:$0xff]
        %v2316 = vld [vmem:[%s1 + $0xd58] sm:$0xff]
        %v2317 = vld [vmem:[%s1 + $0xd90] sm:$0xff]
        %v2318 = vld [vmem:[%s1 + $0xd98] sm:$0xff]
        %v2319 = vld [vmem:[%s1 + $0xdd0] sm:$0xff]
        %v2320 = vld [vmem:[%s1 + $0xdd8] sm:$0xff]
        %v2321 = vld [vmem:[%s1 + $0xe10] sm:$0xff]
        %v2322 = vld [vmem:[%s1 + $0xe18] sm:$0xff]
        %v2323 = vld [vmem:[%s1 + $0xe50] sm:$0xff]
        %v2324 = vld [vmem:[%s1 + $0xe58] sm:$0xff]
        %v2325 = vld [vmem:[%s1 + $0xe90] sm:$0xff]
        %v2326 = vld [vmem:[%s1 + $0xe98] sm:$0xff]
        %v2327 = vld [vmem:[%s1 + $0xed0] sm:$0xff]
        %v2328 = vld [vmem:[%s1 + $0xed8] sm:$0xff]
        %v2329 = vld [vmem:[%s1 + $0xf10] sm:$0xff]
        %v2330 = vld [vmem:[%s1 + $0xf18] sm:$0xff]
        %v2331 = vld [vmem:[%s1 + $0xf50] sm:$0xff]
        %v2332 = vld [vmem:[%s1 + $0xf58] sm:$0xff]
        %v2333 = vld [vmem:[%s1 + $0xf90] sm:$0xff]
        %v2334 = vld [vmem:[%s1 + $0xf98] sm:$0xff]
        %v2335 = vld [vmem:[%s1 + $0xfd0] sm:$0xff]
        %v2336 = vld [vmem:[%s1 + $0xfd8] sm:$0xff]
        %v2337 = vld [vmem:[%s2 + $0x4] sm:$0xf]
        %v2339 = vlaneseq
        %v2340 = vshrl.u32 %v2339, 7
        %v2341 = vsub.s32 0, %v2340
        %v2342 = vrot.slane %v2337, %v2341
        %v2343 = vlaneseq
        %v2344 = vshrl.u32 %v2343, 7
        %v2345 = vsub.s32 1, %v2344
        %v2346 = vrot.slane %v2337, %v2345
        %v2347 = vlaneseq
        %v2348 = vshrl.u32 %v2347, 7
        %v2349 = vsub.s32 2, %v2348
        %v2350 = vrot.slane %v2337, %v2349
        %v2351 = vlaneseq
        %v2352 = vshrl.u32 %v2351, 7
        %v2353 = vsub.s32 3, %v2352
        %v2354 = vrot.slane %v2337, %v2353
        %v2487 = vunpack.c.l.b16 %v2209
        %v2488 = vunpack.c.h.b16 %v2209
        %v2489 = vunpack.c.l.b16 %v2210
        %v2490 = vunpack.c.h.b16 %v2210
        %v2491 = vunpack.c.l.b16 %v2211
        %v2492 = vunpack.c.h.b16 %v2211
        %v2493 = vunpack.c.l.b16 %v2212
        %v2494 = vunpack.c.h.b16 %v2212
        %v2495 = vunpack.c.l.b16 %v2213
        %v2496 = vunpack.c.h.b16 %v2213
        %v2497 = vunpack.c.l.b16 %v2214
        %v2498 = vunpack.c.h.b16 %v2214
        %v2499 = vunpack.c.l.b16 %v2215
        %v2500 = vunpack.c.h.b16 %v2215
        %v2501 = vunpack.c.l.b16 %v2216
        %v2502 = vunpack.c.h.b16 %v2216
        %v2503 = vunpack.c.l.b16 %v2217
        %v2504 = vunpack.c.h.b16 %v2217
        %v2505 = vunpack.c.l.b16 %v2218
        %v2506 = vunpack.c.h.b16 %v2218
        %v2507 = vunpack.c.l.b16 %v2219
        %v2508 = vunpack.c.h.b16 %v2219
        %v2509 = vunpack.c.l.b16 %v2220
        %v2510 = vunpack.c.h.b16 %v2220
        %v2511 = vunpack.c.l.b16 %v2221
        %v2512 = vunpack.c.h.b16 %v2221
        %v2513 = vunpack.c.l.b16 %v2222
        %v2514 = vunpack.c.h.b16 %v2222
        %v2515 = vunpack.c.l.b16 %v2223
        %v2516 = vunpack.c.h.b16 %v2223
        %v2517 = vunpack.c.l.b16 %v2224
        %v2518 = vunpack.c.h.b16 %v2224
        %v2519 = vunpack.c.l.b16 %v2225
        %v2520 = vunpack.c.h.b16 %v2225
        %v2521 = vunpack.c.l.b16 %v2226
        %v2522 = vunpack.c.h.b16 %v2226
        %v2523 = vunpack.c.l.b16 %v2227
        %v2524 = vunpack.c.h.b16 %v2227
        %v2525 = vunpack.c.l.b16 %v2228
        %v2526 = vunpack.c.h.b16 %v2228
        %v2527 = vunpack.c.l.b16 %v2229
        %v2528 = vunpack.c.h.b16 %v2229
        %v2529 = vunpack.c.l.b16 %v2230
        %v2530 = vunpack.c.h.b16 %v2230
        %v2531 = vunpack.c.l.b16 %v2231
        %v2532 = vunpack.c.h.b16 %v2231
        %v2533 = vunpack.c.l.b16 %v2232
        %v2534 = vunpack.c.h.b16 %v2232
        %v2535 = vunpack.c.l.b16 %v2233
        %v2536 = vunpack.c.h.b16 %v2233
        %v2537 = vunpack.c.l.b16 %v2234
        %v2538 = vunpack.c.h.b16 %v2234
        %v2539 = vunpack.c.l.b16 %v2235
        %v2540 = vunpack.c.h.b16 %v2235
        %v2541 = vunpack.c.l.b16 %v2236
        %v2542 = vunpack.c.h.b16 %v2236
        %v2543 = vunpack.c.l.b16 %v2237
        %v2544 = vunpack.c.h.b16 %v2237
        %v2545 = vunpack.c.l.b16 %v2238
        %v2546 = vunpack.c.h.b16 %v2238
        %v2547 = vunpack.c.l.b16 %v2239
        %v2548 = vunpack.c.h.b16 %v2239
        %v2549 = vunpack.c.l.b16 %v2240
        %v2550 = vunpack.c.h.b16 %v2240
        %v2551 = vunpack.c.l.b16 %v2241
        %v2552 = vunpack.c.h.b16 %v2241
        %v2553 = vunpack.c.l.b16 %v2242
        %v2554 = vunpack.c.h.b16 %v2242
        %v2555 = vunpack.c.l.b16 %v2243
        %v2556 = vunpack.c.h.b16 %v2243
        %v2557 = vunpack.c.l.b16 %v2244
        %v2558 = vunpack.c.h.b16 %v2244
        %v2559 = vunpack.c.l.b16 %v2245
        %v2560 = vunpack.c.h.b16 %v2245
        %v2561 = vunpack.c.l.b16 %v2246
        %v2562 = vunpack.c.h.b16 %v2246
        %v2563 = vunpack.c.l.b16 %v2247
        %v2564 = vunpack.c.h.b16 %v2247
        %v2565 = vunpack.c.l.b16 %v2248
        %v2566 = vunpack.c.h.b16 %v2248
        %v2567 = vunpack.c.l.b16 %v2249
        %v2568 = vunpack.c.h.b16 %v2249
        %v2569 = vunpack.c.l.b16 %v2250
        %v2570 = vunpack.c.h.b16 %v2250
        %v2571 = vunpack.c.l.b16 %v2251
        %v2572 = vunpack.c.h.b16 %v2251
        %v2573 = vunpack.c.l.b16 %v2252
        %v2574 = vunpack.c.h.b16 %v2252
        %v2575 = vunpack.c.l.b16 %v2253
        %v2576 = vunpack.c.h.b16 %v2253
        %v2577 = vunpack.c.l.b16 %v2254
        %v2578 = vunpack.c.h.b16 %v2254
        %v2579 = vunpack.c.l.b16 %v2255
        %v2580 = vunpack.c.h.b16 %v2255
        %v2581 = vunpack.c.l.b16 %v2256
        %v2582 = vunpack.c.h.b16 %v2256
        %v2583 = vunpack.c.l.b16 %v2257
        %v2584 = vunpack.c.h.b16 %v2257
        %v2585 = vunpack.c.l.b16 %v2258
        %v2586 = vunpack.c.h.b16 %v2258
        %v2587 = vunpack.c.l.b16 %v2259
        %v2588 = vunpack.c.h.b16 %v2259
        %v2589 = vunpack.c.l.b16 %v2260
        %v2590 = vunpack.c.h.b16 %v2260
        %v2591 = vunpack.c.l.b16 %v2261
        %v2592 = vunpack.c.h.b16 %v2261
        %v2593 = vunpack.c.l.b16 %v2262
        %v2594 = vunpack.c.h.b16 %v2262
        %v2595 = vunpack.c.l.b16 %v2263
        %v2596 = vunpack.c.h.b16 %v2263
        %v2597 = vunpack.c.l.b16 %v2264
        %v2598 = vunpack.c.h.b16 %v2264
        %v2599 = vunpack.c.l.b16 %v2265
        %v2600 = vunpack.c.h.b16 %v2265
        %v2601 = vunpack.c.l.b16 %v2266
        %v2602 = vunpack.c.h.b16 %v2266
        %v2603 = vunpack.c.l.b16 %v2267
        %v2604 = vunpack.c.h.b16 %v2267
        %v2605 = vunpack.c.l.b16 %v2268
        %v2606 = vunpack.c.h.b16 %v2268
        %v2607 = vunpack.c.l.b16 %v2269
        %v2608 = vunpack.c.h.b16 %v2269
        %v2609 = vunpack.c.l.b16 %v2270
        %v2610 = vunpack.c.h.b16 %v2270
        %v2611 = vunpack.c.l.b16 %v2271
        %v2612 = vunpack.c.h.b16 %v2271
        %v2613 = vunpack.c.l.b16 %v2272
        %v2614 = vunpack.c.h.b16 %v2272
        %v2615 = vunpack.c.l.b16 %v2273
        %v2616 = vunpack.c.h.b16 %v2273
        %v2617 = vunpack.c.l.b16 %v2274
        %v2618 = vunpack.c.h.b16 %v2274
        %v2619 = vunpack.c.l.b16 %v2275
        %v2620 = vunpack.c.h.b16 %v2275
        %v2621 = vunpack.c.l.b16 %v2276
        %v2622 = vunpack.c.h.b16 %v2276
        %v2623 = vunpack.c.l.b16 %v2277
        %v2624 = vunpack.c.h.b16 %v2277
        %v2625 = vunpack.c.l.b16 %v2278
        %v2626 = vunpack.c.h.b16 %v2278
        %v2627 = vunpack.c.l.b16 %v2279
        %v2628 = vunpack.c.h.b16 %v2279
        %v2629 = vunpack.c.l.b16 %v2280
        %v2630 = vunpack.c.h.b16 %v2280
        %v2631 = vunpack.c.l.b16 %v2281
        %v2632 = vunpack.c.h.b16 %v2281
        %v2633 = vunpack.c.l.b16 %v2282
        %v2634 = vunpack.c.h.b16 %v2282
        %v2635 = vunpack.c.l.b16 %v2283
        %v2636 = vunpack.c.h.b16 %v2283
        %v2637 = vunpack.c.l.b16 %v2284
        %v2638 = vunpack.c.h.b16 %v2284
        %v2639 = vunpack.c.l.b16 %v2285
        %v2640 = vunpack.c.h.b16 %v2285
        %v2641 = vunpack.c.l.b16 %v2286
        %v2642 = vunpack.c.h.b16 %v2286
        %v2643 = vunpack.c.l.b16 %v2287
        %v2644 = vunpack.c.h.b16 %v2287
        %v2645 = vunpack.c.l.b16 %v2288
        %v2646 = vunpack.c.h.b16 %v2288
        %v2647 = vunpack.c.l.b16 %v2289
        %v2648 = vunpack.c.h.b16 %v2289
        %v2649 = vunpack.c.l.b16 %v2290
        %v2650 = vunpack.c.h.b16 %v2290
        %v2651 = vunpack.c.l.b16 %v2291
        %v2652 = vunpack.c.h.b16 %v2291
        %v2653 = vunpack.c.l.b16 %v2292
        %v2654 = vunpack.c.h.b16 %v2292
        %v2655 = vunpack.c.l.b16 %v2293
        %v2656 = vunpack.c.h.b16 %v2293
        %v2657 = vunpack.c.l.b16 %v2294
        %v2658 = vunpack.c.h.b16 %v2294
        %v2659 = vunpack.c.l.b16 %v2295
        %v2660 = vunpack.c.h.b16 %v2295
        %v2661 = vunpack.c.l.b16 %v2296
        %v2662 = vunpack.c.h.b16 %v2296
        %v2663 = vunpack.c.l.b16 %v2297
        %v2664 = vunpack.c.h.b16 %v2297
        %v2665 = vunpack.c.l.b16 %v2298
        %v2666 = vunpack.c.h.b16 %v2298
        %v2667 = vunpack.c.l.b16 %v2299
        %v2668 = vunpack.c.h.b16 %v2299
        %v2669 = vunpack.c.l.b16 %v2300
        %v2670 = vunpack.c.h.b16 %v2300
        %v2671 = vunpack.c.l.b16 %v2301
        %v2672 = vunpack.c.h.b16 %v2301
        %v2673 = vunpack.c.l.b16 %v2302
        %v2674 = vunpack.c.h.b16 %v2302
        %v2675 = vunpack.c.l.b16 %v2303
        %v2676 = vunpack.c.h.b16 %v2303
        %v2677 = vunpack.c.l.b16 %v2304
        %v2678 = vunpack.c.h.b16 %v2304
        %v2679 = vunpack.c.l.b16 %v2305
        %v2680 = vunpack.c.h.b16 %v2305
        %v2681 = vunpack.c.l.b16 %v2306
        %v2682 = vunpack.c.h.b16 %v2306
        %v2683 = vunpack.c.l.b16 %v2307
        %v2684 = vunpack.c.h.b16 %v2307
        %v2685 = vunpack.c.l.b16 %v2308
        %v2686 = vunpack.c.h.b16 %v2308
        %v2687 = vunpack.c.l.b16 %v2309
        %v2688 = vunpack.c.h.b16 %v2309
        %v2689 = vunpack.c.l.b16 %v2310
        %v2690 = vunpack.c.h.b16 %v2310
        %v2691 = vunpack.c.l.b16 %v2311
        %v2692 = vunpack.c.h.b16 %v2311
        %v2693 = vunpack.c.l.b16 %v2312
        %v2694 = vunpack.c.h.b16 %v2312
        %v2695 = vunpack.c.l.b16 %v2313
        %v2696 = vunpack.c.h.b16 %v2313
        %v2697 = vunpack.c.l.b16 %v2314
        %v2698 = vunpack.c.h.b16 %v2314
        %v2699 = vunpack.c.l.b16 %v2315
        %v2700 = vunpack.c.h.b16 %v2315
        %v2701 = vunpack.c.l.b16 %v2316
        %v2702 = vunpack.c.h.b16 %v2316
        %v2703 = vunpack.c.l.b16 %v2317
        %v2704 = vunpack.c.h.b16 %v2317
        %v2705 = vunpack.c.l.b16 %v2318
        %v2706 = vunpack.c.h.b16 %v2318
        %v2707 = vunpack.c.l.b16 %v2319
        %v2708 = vunpack.c.h.b16 %v2319
        %v2709 = vunpack.c.l.b16 %v2320
        %v2710 = vunpack.c.h.b16 %v2320
        %v2711 = vunpack.c.l.b16 %v2321
        %v2712 = vunpack.c.h.b16 %v2321
        %v2713 = vunpack.c.l.b16 %v2322
        %v2714 = vunpack.c.h.b16 %v2322
        %v2715 = vunpack.c.l.b16 %v2323
        %v2716 = vunpack.c.h.b16 %v2323
        %v2717 = vunpack.c.l.b16 %v2324
        %v2718 = vunpack.c.h.b16 %v2324
        %v2719 = vunpack.c.l.b16 %v2325
        %v2720 = vunpack.c.h.b16 %v2325
        %v2721 = vunpack.c.l.b16 %v2326
        %v2722 = vunpack.c.h.b16 %v2326
        %v2723 = vunpack.c.l.b16 %v2327
        %v2724 = vunpack.c.h.b16 %v2327
        %v2725 = vunpack.c.l.b16 %v2328
        %v2726 = vunpack.c.h.b16 %v2328
        %v2727 = vunpack.c.l.b16 %v2329
        %v2728 = vunpack.c.h.b16 %v2329
        %v2729 = vunpack.c.l.b16 %v2330
        %v2730 = vunpack.c.h.b16 %v2330
        %v2731 = vunpack.c.l.b16 %v2331
        %v2732 = vunpack.c.h.b16 %v2331
        %v2733 = vunpack.c.l.b16 %v2332
        %v2734 = vunpack.c.h.b16 %v2332
        %v2735 = vunpack.c.l.b16 %v2333
        %v2736 = vunpack.c.h.b16 %v2333
        %v2737 = vunpack.c.l.b16 %v2334
        %v2738 = vunpack.c.h.b16 %v2334
        %v2739 = vunpack.c.l.b16 %v2335
        %v2740 = vunpack.c.h.b16 %v2335
        %v2741 = vunpack.c.l.b16 %v2336
        %v2742 = vunpack.c.h.b16 %v2336
        %v2743 = vpack.c.b16 %v2491, %v2487
        %v2744 = vpack.c.b16 %v2492, %v2488
        %v2745 = vpack.c.b16 %v2493, %v2489
        %v2746 = vpack.c.b16 %v2494, %v2490
        %v2747 = vpack.c.b16 %v2499, %v2495
        %v2748 = vpack.c.b16 %v2500, %v2496
        %v2749 = vpack.c.b16 %v2501, %v2497
        %v2750 = vpack.c.b16 %v2502, %v2498
        %v2751 = vpack.c.b16 %v2507, %v2503
        %v2752 = vpack.c.b16 %v2508, %v2504
        %v2753 = vpack.c.b16 %v2509, %v2505
        %v2754 = vpack.c.b16 %v2510, %v2506
        %v2755 = vpack.c.b16 %v2515, %v2511
        %v2756 = vpack.c.b16 %v2516, %v2512
        %v2757 = vpack.c.b16 %v2517, %v2513
        %v2758 = vpack.c.b16 %v2518, %v2514
        %v2759 = vpack.c.b16 %v2523, %v2519
        %v2760 = vpack.c.b16 %v2524, %v2520
        %v2761 = vpack.c.b16 %v2525, %v2521
        %v2762 = vpack.c.b16 %v2526, %v2522
        %v2763 = vpack.c.b16 %v2531, %v2527
        %v2764 = vpack.c.b16 %v2532, %v2528
        %v2765 = vpack.c.b16 %v2533, %v2529
        %v2766 = vpack.c.b16 %v2534, %v2530
        %v2767 = vpack.c.b16 %v2539, %v2535
        %v2768 = vpack.c.b16 %v2540, %v2536
        %v2769 = vpack.c.b16 %v2541, %v2537
        %v2770 = vpack.c.b16 %v2542, %v2538
        %v2771 = vpack.c.b16 %v2547, %v2543
        %v2772 = vpack.c.b16 %v2548, %v2544
        %v2773 = vpack.c.b16 %v2549, %v2545
        %v2774 = vpack.c.b16 %v2550, %v2546
        %v2775 = vpack.c.b16 %v2555, %v2551
        %v2776 = vpack.c.b16 %v2556, %v2552
        %v2777 = vpack.c.b16 %v2557, %v2553
        %v2778 = vpack.c.b16 %v2558, %v2554
        %v2779 = vpack.c.b16 %v2563, %v2559
        %v2780 = vpack.c.b16 %v2564, %v2560
        %v2781 = vpack.c.b16 %v2565, %v2561
        %v2782 = vpack.c.b16 %v2566, %v2562
        %v2783 = vpack.c.b16 %v2571, %v2567
        %v2784 = vpack.c.b16 %v2572, %v2568
        %v2785 = vpack.c.b16 %v2573, %v2569
        %v2786 = vpack.c.b16 %v2574, %v2570
        %v2787 = vpack.c.b16 %v2579, %v2575
        %v2788 = vpack.c.b16 %v2580, %v2576
        %v2789 = vpack.c.b16 %v2581, %v2577
        %v2790 = vpack.c.b16 %v2582, %v2578
        %v2791 = vpack.c.b16 %v2587, %v2583
        %v2792 = vpack.c.b16 %v2588, %v2584
        %v2793 = vpack.c.b16 %v2589, %v2585
        %v2794 = vpack.c.b16 %v2590, %v2586
        %v2795 = vpack.c.b16 %v2595, %v2591
        %v2796 = vpack.c.b16 %v2596, %v2592
        %v2797 = vpack.c.b16 %v2597, %v2593
        %v2798 = vpack.c.b16 %v2598, %v2594
        %v2799 = vpack.c.b16 %v2603, %v2599
        %v2800 = vpack.c.b16 %v2604, %v2600
        %v2801 = vpack.c.b16 %v2605, %v2601
        %v2802 = vpack.c.b16 %v2606, %v2602
        %v2803 = vpack.c.b16 %v2611, %v2607
        %v2804 = vpack.c.b16 %v2612, %v2608
        %v2805 = vpack.c.b16 %v2613, %v2609
        %v2806 = vpack.c.b16 %v2614, %v2610
        %v2807 = vpack.c.b16 %v2619, %v2615
        %v2808 = vpack.c.b16 %v2620, %v2616
        %v2809 = vpack.c.b16 %v2621, %v2617
        %v2810 = vpack.c.b16 %v2622, %v2618
        %v2811 = vpack.c.b16 %v2627, %v2623
        %v2812 = vpack.c.b16 %v2628, %v2624
        %v2813 = vpack.c.b16 %v2629, %v2625
        %v2814 = vpack.c.b16 %v2630, %v2626
        %v2815 = vpack.c.b16 %v2635, %v2631
        %v2816 = vpack.c.b16 %v2636, %v2632
        %v2817 = vpack.c.b16 %v2637, %v2633
        %v2818 = vpack.c.b16 %v2638, %v2634
        %v2819 = vpack.c.b16 %v2643, %v2639
        %v2820 = vpack.c.b16 %v2644, %v2640
        %v2821 = vpack.c.b16 %v2645, %v2641
        %v2822 = vpack.c.b16 %v2646, %v2642
        %v2823 = vpack.c.b16 %v2651, %v2647
        %v2824 = vpack.c.b16 %v2652, %v2648
        %v2825 = vpack.c.b16 %v2653, %v2649
        %v2826 = vpack.c.b16 %v2654, %v2650
        %v2827 = vpack.c.b16 %v2659, %v2655
        %v2828 = vpack.c.b16 %v2660, %v2656
        %v2829 = vpack.c.b16 %v2661, %v2657
        %v2830 = vpack.c.b16 %v2662, %v2658
        %v2831 = vpack.c.b16 %v2667, %v2663
        %v2832 = vpack.c.b16 %v2668, %v2664
        %v2833 = vpack.c.b16 %v2669, %v2665
        %v2834 = vpack.c.b16 %v2670, %v2666
        %v2835 = vpack.c.b16 %v2675, %v2671
        %v2836 = vpack.c.b16 %v2676, %v2672
        %v2837 = vpack.c.b16 %v2677, %v2673
        %v2838 = vpack.c.b16 %v2678, %v2674
        %v2839 = vpack.c.b16 %v2683, %v2679
        %v2840 = vpack.c.b16 %v2684, %v2680
        %v2841 = vpack.c.b16 %v2685, %v2681
        %v2842 = vpack.c.b16 %v2686, %v2682
        %v2843 = vpack.c.b16 %v2691, %v2687
        %v2844 = vpack.c.b16 %v2692, %v2688
        %v2845 = vpack.c.b16 %v2693, %v2689
        %v2846 = vpack.c.b16 %v2694, %v2690
        %v2847 = vpack.c.b16 %v2699, %v2695
        %v2848 = vpack.c.b16 %v2700, %v2696
        %v2849 = vpack.c.b16 %v2701, %v2697
        %v2850 = vpack.c.b16 %v2702, %v2698
        %v2851 = vpack.c.b16 %v2707, %v2703
        %v2852 = vpack.c.b16 %v2708, %v2704
        %v2853 = vpack.c.b16 %v2709, %v2705
        %v2854 = vpack.c.b16 %v2710, %v2706
        %v2855 = vpack.c.b16 %v2715, %v2711
        %v2856 = vpack.c.b16 %v2716, %v2712
        %v2857 = vpack.c.b16 %v2717, %v2713
        %v2858 = vpack.c.b16 %v2718, %v2714
        %v2859 = vpack.c.b16 %v2723, %v2719
        %v2860 = vpack.c.b16 %v2724, %v2720
        %v2861 = vpack.c.b16 %v2725, %v2721
        %v2862 = vpack.c.b16 %v2726, %v2722
        %v2863 = vpack.c.b16 %v2731, %v2727
        %v2864 = vpack.c.b16 %v2732, %v2728
        %v2865 = vpack.c.b16 %v2733, %v2729
        %v2866 = vpack.c.b16 %v2734, %v2730
        %v2867 = vpack.c.b16 %v2739, %v2735
        %v2868 = vpack.c.b16 %v2740, %v2736
        %v2869 = vpack.c.b16 %v2741, %v2737
        %v2870 = vpack.c.b16 %v2742, %v2738
        %2999 = vmatprep.subr.bf16.mxu0 %v2744
        %3000 = vmatpush1.bf16.msra.mxu0 %v2743
        %3001 = vmatprep.subr.bf16.mxu0 %v2748
        %3002 = vmatpush1.bf16.msra.mxu0 %v2747
        %3003 = vmatprep.subr.bf16.mxu0 %v2752
        %3004 = vmatpush1.bf16.msra.mxu0 %v2751
        %3005 = vmatprep.subr.bf16.mxu0 %v2756
        %3006 = vmatpush1.bf16.msra.mxu0 %v2755
        %3007 = vmatprep.subr.bf16.mxu0 %v2760
        %3008 = vmatpush1.bf16.msra.mxu0 %v2759
        %3009 = vmatprep.subr.bf16.mxu0 %v2764
        %3010 = vmatpush1.bf16.msra.mxu0 %v2763
        %3011 = vmatprep.subr.bf16.mxu0 %v2768
        %3012 = vmatpush1.bf16.msra.mxu0 %v2767
        %3013 = vmatprep.subr.bf16.mxu0 %v2772
        %3014 = vmatpush1.bf16.msra.mxu0 %v2771
        %3015 = vmatprep.subr.bf16.mxu0 %v2776
        %3016 = vmatpush1.bf16.msra.mxu0 %v2775
        %3017 = vmatprep.subr.bf16.mxu0 %v2780
        %3018 = vmatpush1.bf16.msra.mxu0 %v2779
        %3019 = vmatprep.subr.bf16.mxu0 %v2784
        %3020 = vmatpush1.bf16.msra.mxu0 %v2783
        %3021 = vmatprep.subr.bf16.mxu0 %v2788
        %3022 = vmatpush1.bf16.msra.mxu0 %v2787
        %3023 = vmatprep.subr.bf16.mxu0 %v2792
        %3024 = vmatpush1.bf16.msra.mxu0 %v2791
        %3025 = vmatprep.subr.bf16.mxu0 %v2796
        %3026 = vmatpush1.bf16.msra.mxu0 %v2795
        %3027 = vmatprep.subr.bf16.mxu0 %v2800
        %3028 = vmatpush1.bf16.msra.mxu0 %v2799
        %3029 = vmatprep.subr.bf16.mxu0 %v2804
        %3030 = vmatpush1.bf16.msra.mxu0 %v2803
        %3031 = vmatprep.mubr.bf16.mxu0 %v282
        %3032 = vmatmul.mubr.bf16.gmra.mrb[0].mxu0 %v281
        %v3033 = vpop.f32.mrb[0].mxu0
        %v3034 = vadd.f32 %v2342, %v3033
        %v3035 = vpop.f32.mrb[0].mxu0
        %v3036 = vadd.f32 %v2346, %v3035
        %v3037 = vpop.f32.mrb[0].mxu0
        %v3038 = vpop.f32.mrb[0].mxu0
        %3039 = vdwg.mxu0
        %3040 = vmatprep.subr.bf16.mxu0 %v2808
        %3041 = vmatpush1.bf16.msra.mxu0 %v2807
        %3042 = vmatprep.subr.bf16.mxu0 %v2812
        %3043 = vmatpush1.bf16.msra.mxu0 %v2811
        %3044 = vmatprep.subr.bf16.mxu0 %v2816
        %3045 = vmatpush1.bf16.msra.mxu0 %v2815
        %3046 = vmatprep.subr.bf16.mxu0 %v2820
        %3047 = vmatpush1.bf16.msra.mxu0 %v2819
        %3048 = vmatprep.subr.bf16.mxu0 %v2824
        %3049 = vmatpush1.bf16.msra.mxu0 %v2823
        %3050 = vmatprep.subr.bf16.mxu0 %v2828
        %3051 = vmatpush1.bf16.msra.mxu0 %v2827
        %3052 = vmatprep.subr.bf16.mxu0 %v2832
        %3053 = vmatpush1.bf16.msra.mxu0 %v2831
        %3054 = vmatprep.subr.bf16.mxu0 %v2836
        %3055 = vmatpush1.bf16.msra.mxu0 %v2835
        %3056 = vmatprep.subr.bf16.mxu0 %v2840
        %3057 = vmatpush1.bf16.msra.mxu0 %v2839
        %3058 = vmatprep.subr.bf16.mxu0 %v2844
        %3059 = vmatpush1.bf16.msra.mxu0 %v2843
        %3060 = vmatprep.subr.bf16.mxu0 %v2848
        %3061 = vmatpush1.bf16.msra.mxu0 %v2847
        %3062 = vmatprep.subr.bf16.mxu0 %v2852
        %3063 = vmatpush1.bf16.msra.mxu0 %v2851
        %3064 = vmatprep.subr.bf16.mxu0 %v2856
        %3065 = vmatpush1.bf16.msra.mxu0 %v2855
        %3066 = vmatprep.subr.bf16.mxu0 %v2860
        %3067 = vmatpush1.bf16.msra.mxu0 %v2859
        %3068 = vmatprep.subr.bf16.mxu0 %v2864
        %3069 = vmatpush1.bf16.msra.mxu0 %v2863
        %3070 = vmatprep.subr.bf16.mxu0 %v2868
        %3071 = vmatpush1.bf16.msra.mxu0 %v2867
        %3072 = vmatprep.mubr.bf16.mxu0 %v284
        %3073 = vmatmul.mubr.bf16.gmra.mrb[0].mxu0 %v283
        %v3074 = vpop.f32.mrb[0].mxu0
        %v3075 = vadd.f32 %v3034, %v3074
        %v3076 = vpop.f32.mrb[0].mxu0
        %v3077 = vadd.f32 %v3036, %v3076
        %v3078 = vpop.f32.mrb[0].mxu0
        %v3079 = vpop.f32.mrb[0].mxu0
        %3080 = vdwg.mxu0
        %3081 = vmatprep.subr.bf16.mxu0 %v2746
        %3082 = vmatpush1.bf16.msra.mxu0 %v2745
        %3083 = vmatprep.subr.bf16.mxu0 %v2750
        %3084 = vmatpush1.bf16.msra.mxu0 %v2749
        %3085 = vmatprep.subr.bf16.mxu0 %v2754
        %3086 = vmatpush1.bf16.msra.mxu0 %v2753
        %3087 = vmatprep.subr.bf16.mxu0 %v2758
        %3088 = vmatpush1.bf16.msra.mxu0 %v2757
        %3089 = vmatprep.subr.bf16.mxu0 %v2762
        %3090 = vmatpush1.bf16.msra.mxu0 %v2761
        %3091 = vmatprep.subr.bf16.mxu0 %v2766
        %3092 = vmatpush1.bf16.msra.mxu0 %v2765
        %3093 = vmatprep.subr.bf16.mxu0 %v2770
        %3094 = vmatpush1.bf16.msra.mxu0 %v2769
        %3095 = vmatprep.subr.bf16.mxu0 %v2774
        %3096 = vmatpush1.bf16.msra.mxu0 %v2773
        %3097 = vmatprep.subr.bf16.mxu0 %v2778
        %3098 = vmatpush1.bf16.msra.mxu0 %v2777
        %3099 = vmatprep.subr.bf16.mxu0 %v2782
        %3100 = vmatpush1.bf16.msra.mxu0 %v2781
        %3101 = vmatprep.subr.bf16.mxu0 %v2786
        %3102 = vmatpush1.bf16.msra.mxu0 %v2785
        %3103 = vmatprep.subr.bf16.mxu0 %v2790
        %3104 = vmatpush1.bf16.msra.mxu0 %v2789
        %3105 = vmatprep.subr.bf16.mxu0 %v2794
        %3106 = vmatpush1.bf16.msra.mxu0 %v2793
        %3107 = vmatprep.subr.bf16.mxu0 %v2798
        %3108 = vmatpush1.bf16.msra.mxu0 %v2797
        %3109 = vmatprep.subr.bf16.mxu0 %v2802
        %3110 = vmatpush1.bf16.msra.mxu0 %v2801
        %3111 = vmatprep.subr.bf16.mxu0 %v2806
        %3112 = vmatpush1.bf16.msra.mxu0 %v2805
        %3113 = vmatprep.mubr.bf16.mxu0 %v282
        %3114 = vmatmul.mubr.bf16.gmra.mrb[0].mxu0 %v281
        %v3115 = vpop.f32.mrb[0].mxu0
        %v3116 = vadd.f32 %v2350, %v3115
        %v3117 = vpop.f32.mrb[0].mxu0
        %v3118 = vadd.f32 %v2354, %v3117
        %v3119 = vpop.f32.mrb[0].mxu0
        %v3120 = vpop.f32.mrb[0].mxu0
        %3121 = vdwg.mxu0
        %3122 = vmatprep.subr.bf16.mxu0 %v2810
        %3123 = vmatpush1.bf16.msra.mxu0 %v2809
        %3124 = vmatprep.subr.bf16.mxu0 %v2814
        %3125 = vmatpush1.bf16.msra.mxu0 %v2813
        %3126 = vmatprep.subr.bf16.mxu0 %v2818
        %3127 = vmatpush1.bf16.msra.mxu0 %v2817
        %3128 = vmatprep.subr.bf16.mxu0 %v2822
        %3129 = vmatpush1.bf16.msra.mxu0 %v2821
        %3130 = vmatprep.subr.bf16.mxu0 %v2826
        %3131 = vmatpush1.bf16.msra.mxu0 %v2825
        %3132 = vmatprep.subr.bf16.mxu0 %v2830
        %3133 = vmatpush1.bf16.msra.mxu0 %v2829
        %3134 = vmatprep.subr.bf16.mxu0 %v2834
        %3135 = vmatpush1.bf16.msra.mxu0 %v2833
        %3136 = vmatprep.subr.bf16.mxu0 %v2838
        %3137 = vmatpush1.bf16.msra.mxu0 %v2837
        %3138 = vmatprep.subr.bf16.mxu0 %v2842
        %3139 = vmatpush1.bf16.msra.mxu0 %v2841
        %3140 = vmatprep.subr.bf16.mxu0 %v2846
        %3141 = vmatpush1.bf16.msra.mxu0 %v2845
        %3142 = vmatprep.subr.bf16.mxu0 %v2850
        %3143 = vmatpush1.bf16.msra.mxu0 %v2849
        %3144 = vmatprep.subr.bf16.mxu0 %v2854
        %3145 = vmatpush1.bf16.msra.mxu0 %v2853
        %3146 = vmatprep.subr.bf16.mxu0 %v2858
        %3147 = vmatpush1.bf16.msra.mxu0 %v2857
        %3148 = vmatprep.subr.bf16.mxu0 %v2862
        %3149 = vmatpush1.bf16.msra.mxu0 %v2861
        %3150 = vmatprep.subr.bf16.mxu0 %v2866
        %3151 = vmatpush1.bf16.msra.mxu0 %v2865
        %3152 = vmatprep.subr.bf16.mxu0 %v2870
        %3153 = vmatpush1.bf16.msra.mxu0 %v2869
        %3154 = vmatprep.mubr.bf16.mxu0 %v284
        %3155 = vmatmul.mubr.bf16.gmra.mrb[0].mxu0 %v283
        %v3156 = vpop.f32.mrb[0].mxu0
        %v3157 = vadd.f32 %v3116, %v3156
        %v3158 = vpop.f32.mrb[0].mxu0
        %v3159 = vadd.f32 %v3118, %v3158
        %v3160 = vpop.f32.mrb[0].mxu0
        %v3161 = vpop.f32.mrb[0].mxu0
        %3162 = vdwg.mxu0
        %v3163 = vmax.f32 %v3075, 0.0
        %v3164 = vmax.f32 %v3077, 0.0
        %v3165 = vmax.f32 %v3157, 0.0
        %v3166 = vmax.f32 %v3159, 0.0
        %v3167 = vpack.c.bf16 %v3163, %v3163
        %v3168 = vpack.c.bf16 %v3164, %v3164
        %v3169 = vpack.c.bf16 %v3165, %v3165
        %v3170 = vpack.c.bf16 %v3166, %v3166
        %v3171 = vld [vmem:[%s3 + $0x400] sm:$0xff]
        %v3172 = vld [vmem:[%s3 + $0x408] sm:$0xff]
        %v3173 = vld [vmem:[%s3 + $0x410] sm:$0xff]
        %v3174 = vld [vmem:[%s3 + $0x418] sm:$0xff]
        %v3175 = vld [vmem:[%s3 + $0x420] sm:$0xff]
        %v3176 = vld [vmem:[%s3 + $0x428] sm:$0xff]
        %v3177 = vld [vmem:[%s3 + $0x430] sm:$0xff]
        %v3178 = vld [vmem:[%s3 + $0x438] sm:$0xff]
        %v3179 = vld [vmem:[%s3 + $0x440] sm:$0xff]
        %v3180 = vld [vmem:[%s3 + $0x448] sm:$0xff]
        %v3181 = vld [vmem:[%s3 + $0x450] sm:$0xff]
        %v3182 = vld [vmem:[%s3 + $0x458] sm:$0xff]
        %v3183 = vld [vmem:[%s3 + $0x460] sm:$0xff]
        %v3184 = vld [vmem:[%s3 + $0x468] sm:$0xff]
        %v3185 = vld [vmem:[%s3 + $0x470] sm:$0xff]
        %v3186 = vld [vmem:[%s3 + $0x478] sm:$0xff]
        %v3187 = vld [vmem:[%s3 + $0x480] sm:$0xff]
        %v3188 = vld [vmem:[%s3 + $0x488] sm:$0xff]
        %v3189 = vld [vmem:[%s3 + $0x490] sm:$0xff]
        %v3190 = vld [vmem:[%s3 + $0x498] sm:$0xff]
        %v3191 = vld [vmem:[%s3 + $0x4a0] sm:$0xff]
        %v3192 = vld [vmem:[%s3 + $0x4a8] sm:$0xff]
        %v3193 = vld [vmem:[%s3 + $0x4b0] sm:$0xff]
        %v3194 = vld [vmem:[%s3 + $0x4b8] sm:$0xff]
        %v3195 = vld [vmem:[%s3 + $0x4c0] sm:$0xff]
        %v3196 = vld [vmem:[%s3 + $0x4c8] sm:$0xff]
        %v3197 = vld [vmem:[%s3 + $0x4d0] sm:$0xff]
        %v3198 = vld [vmem:[%s3 + $0x4d8] sm:$0xff]
        %v3199 = vld [vmem:[%s3 + $0x4e0] sm:$0xff]
        %v3200 = vld [vmem:[%s3 + $0x4e8] sm:$0xff]
        %v3201 = vld [vmem:[%s3 + $0x4f0] sm:$0xff]
        %v3202 = vld [vmem:[%s3 + $0x4f8] sm:$0xff]
        %v3203 = vld [vmem:[%s3 + $0x500] sm:$0xff]
        %v3204 = vld [vmem:[%s3 + $0x508] sm:$0xff]
        %v3205 = vld [vmem:[%s3 + $0x510] sm:$0xff]
        %v3206 = vld [vmem:[%s3 + $0x518] sm:$0xff]
        %v3207 = vld [vmem:[%s3 + $0x520] sm:$0xff]
        %v3208 = vld [vmem:[%s3 + $0x528] sm:$0xff]
        %v3209 = vld [vmem:[%s3 + $0x530] sm:$0xff]
        %v3210 = vld [vmem:[%s3 + $0x538] sm:$0xff]
        %v3211 = vld [vmem:[%s3 + $0x540] sm:$0xff]
        %v3212 = vld [vmem:[%s3 + $0x548] sm:$0xff]
        %v3213 = vld [vmem:[%s3 + $0x550] sm:$0xff]
        %v3214 = vld [vmem:[%s3 + $0x558] sm:$0xff]
        %v3215 = vld [vmem:[%s3 + $0x560] sm:$0xff]
        %v3216 = vld [vmem:[%s3 + $0x568] sm:$0xff]
        %v3217 = vld [vmem:[%s3 + $0x570] sm:$0xff]
        %v3218 = vld [vmem:[%s3 + $0x578] sm:$0xff]
        %v3219 = vld [vmem:[%s3 + $0x580] sm:$0xff]
        %v3220 = vld [vmem:[%s3 + $0x588] sm:$0xff]
        %v3221 = vld [vmem:[%s3 + $0x590] sm:$0xff]
        %v3222 = vld [vmem:[%s3 + $0x598] sm:$0xff]
        %v3223 = vld [vmem:[%s3 + $0x5a0] sm:$0xff]
        %v3224 = vld [vmem:[%s3 + $0x5a8] sm:$0xff]
        %v3225 = vld [vmem:[%s3 + $0x5b0] sm:$0xff]
        %v3226 = vld [vmem:[%s3 + $0x5b8] sm:$0xff]
        %v3227 = vld [vmem:[%s3 + $0x5c0] sm:$0xff]
        %v3228 = vld [vmem:[%s3 + $0x5c8] sm:$0xff]
        %v3229 = vld [vmem:[%s3 + $0x5d0] sm:$0xff]
        %v3230 = vld [vmem:[%s3 + $0x5d8] sm:$0xff]
        %v3231 = vld [vmem:[%s3 + $0x5e0] sm:$0xff]
        %v3232 = vld [vmem:[%s3 + $0x5e8] sm:$0xff]
        %v3233 = vld [vmem:[%s3 + $0x5f0] sm:$0xff]
        %v3234 = vld [vmem:[%s3 + $0x5f8] sm:$0xff]
        %v3235 = vld [vmem:[%s3 + $0x600] sm:$0xff]
        %v3236 = vld [vmem:[%s3 + $0x608] sm:$0xff]
        %v3237 = vld [vmem:[%s3 + $0x610] sm:$0xff]
        %v3238 = vld [vmem:[%s3 + $0x618] sm:$0xff]
        %v3239 = vld [vmem:[%s3 + $0x620] sm:$0xff]
        %v3240 = vld [vmem:[%s3 + $0x628] sm:$0xff]
        %v3241 = vld [vmem:[%s3 + $0x630] sm:$0xff]
        %v3242 = vld [vmem:[%s3 + $0x638] sm:$0xff]
        %v3243 = vld [vmem:[%s3 + $0x640] sm:$0xff]
        %v3244 = vld [vmem:[%s3 + $0x648] sm:$0xff]
        %v3245 = vld [vmem:[%s3 + $0x650] sm:$0xff]
        %v3246 = vld [vmem:[%s3 + $0x658] sm:$0xff]
        %v3247 = vld [vmem:[%s3 + $0x660] sm:$0xff]
        %v3248 = vld [vmem:[%s3 + $0x668] sm:$0xff]
        %v3249 = vld [vmem:[%s3 + $0x670] sm:$0xff]
        %v3250 = vld [vmem:[%s3 + $0x678] sm:$0xff]
        %v3251 = vld [vmem:[%s3 + $0x680] sm:$0xff]
        %v3252 = vld [vmem:[%s3 + $0x688] sm:$0xff]
        %v3253 = vld [vmem:[%s3 + $0x690] sm:$0xff]
        %v3254 = vld [vmem:[%s3 + $0x698] sm:$0xff]
        %v3255 = vld [vmem:[%s3 + $0x6a0] sm:$0xff]
        %v3256 = vld [vmem:[%s3 + $0x6a8] sm:$0xff]
        %v3257 = vld [vmem:[%s3 + $0x6b0] sm:$0xff]
        %v3258 = vld [vmem:[%s3 + $0x6b8] sm:$0xff]
        %v3259 = vld [vmem:[%s3 + $0x6c0] sm:$0xff]
        %v3260 = vld [vmem:[%s3 + $0x6c8] sm:$0xff]
        %v3261 = vld [vmem:[%s3 + $0x6d0] sm:$0xff]
        %v3262 = vld [vmem:[%s3 + $0x6d8] sm:$0xff]
        %v3263 = vld [vmem:[%s3 + $0x6e0] sm:$0xff]
        %v3264 = vld [vmem:[%s3 + $0x6e8] sm:$0xff]
        %v3265 = vld [vmem:[%s3 + $0x6f0] sm:$0xff]
        %v3266 = vld [vmem:[%s3 + $0x6f8] sm:$0xff]
        %v3267 = vld [vmem:[%s3 + $0x700] sm:$0xff]
        %v3268 = vld [vmem:[%s3 + $0x708] sm:$0xff]
        %v3269 = vld [vmem:[%s3 + $0x710] sm:$0xff]
        %v3270 = vld [vmem:[%s3 + $0x718] sm:$0xff]
        %v3271 = vld [vmem:[%s3 + $0x720] sm:$0xff]
        %v3272 = vld [vmem:[%s3 + $0x728] sm:$0xff]
        %v3273 = vld [vmem:[%s3 + $0x730] sm:$0xff]
        %v3274 = vld [vmem:[%s3 + $0x738] sm:$0xff]
        %v3275 = vld [vmem:[%s3 + $0x740] sm:$0xff]
        %v3276 = vld [vmem:[%s3 + $0x748] sm:$0xff]
        %v3277 = vld [vmem:[%s3 + $0x750] sm:$0xff]
        %v3278 = vld [vmem:[%s3 + $0x758] sm:$0xff]
        %v3279 = vld [vmem:[%s3 + $0x760] sm:$0xff]
        %v3280 = vld [vmem:[%s3 + $0x768] sm:$0xff]
        %v3281 = vld [vmem:[%s3 + $0x770] sm:$0xff]
        %v3282 = vld [vmem:[%s3 + $0x778] sm:$0xff]
        %v3283 = vld [vmem:[%s3 + $0x780] sm:$0xff]
        %v3284 = vld [vmem:[%s3 + $0x788] sm:$0xff]
        %v3285 = vld [vmem:[%s3 + $0x790] sm:$0xff]
        %v3286 = vld [vmem:[%s3 + $0x798] sm:$0xff]
        %v3287 = vld [vmem:[%s3 + $0x7a0] sm:$0xff]
        %v3288 = vld [vmem:[%s3 + $0x7a8] sm:$0xff]
        %v3289 = vld [vmem:[%s3 + $0x7b0] sm:$0xff]
        %v3290 = vld [vmem:[%s3 + $0x7b8] sm:$0xff]
        %v3291 = vld [vmem:[%s3 + $0x7c0] sm:$0xff]
        %v3292 = vld [vmem:[%s3 + $0x7c8] sm:$0xff]
        %v3293 = vld [vmem:[%s3 + $0x7d0] sm:$0xff]
        %v3294 = vld [vmem:[%s3 + $0x7d8] sm:$0xff]
        %v3295 = vld [vmem:[%s3 + $0x7e0] sm:$0xff]
        %v3296 = vld [vmem:[%s3 + $0x7e8] sm:$0xff]
        %v3297 = vld [vmem:[%s3 + $0x7f0] sm:$0xff]
        %v3298 = vld [vmem:[%s3 + $0x7f8] sm:$0xff]
        %v3427 = vunpack.c.l.b16 %v3171
        %v3428 = vunpack.c.h.b16 %v3171
        %v3429 = vunpack.c.l.b16 %v3172
        %v3430 = vunpack.c.h.b16 %v3172
        %v3431 = vunpack.c.l.b16 %v3173
        %v3432 = vunpack.c.h.b16 %v3173
        %v3433 = vunpack.c.l.b16 %v3174
        %v3434 = vunpack.c.h.b16 %v3174
        %v3435 = vunpack.c.l.b16 %v3175
        %v3436 = vunpack.c.h.b16 %v3175
        %v3437 = vunpack.c.l.b16 %v3176
        %v3438 = vunpack.c.h.b16 %v3176
        %v3439 = vunpack.c.l.b16 %v3177
        %v3440 = vunpack.c.h.b16 %v3177
        %v3441 = vunpack.c.l.b16 %v3178
        %v3442 = vunpack.c.h.b16 %v3178
        %v3443 = vunpack.c.l.b16 %v3179
        %v3444 = vunpack.c.h.b16 %v3179
        %v3445 = vunpack.c.l.b16 %v3180
        %v3446 = vunpack.c.h.b16 %v3180
        %v3447 = vunpack.c.l.b16 %v3181
        %v3448 = vunpack.c.h.b16 %v3181
        %v3449 = vunpack.c.l.b16 %v3182
        %v3450 = vunpack.c.h.b16 %v3182
        %v3451 = vunpack.c.l.b16 %v3183
        %v3452 = vunpack.c.h.b16 %v3183
        %v3453 = vunpack.c.l.b16 %v3184
        %v3454 = vunpack.c.h.b16 %v3184
        %v3455 = vunpack.c.l.b16 %v3185
        %v3456 = vunpack.c.h.b16 %v3185
        %v3457 = vunpack.c.l.b16 %v3186
        %v3458 = vunpack.c.h.b16 %v3186
        %v3459 = vunpack.c.l.b16 %v3187
        %v3460 = vunpack.c.h.b16 %v3187
        %v3461 = vunpack.c.l.b16 %v3188
        %v3462 = vunpack.c.h.b16 %v3188
        %v3463 = vunpack.c.l.b16 %v3189
        %v3464 = vunpack.c.h.b16 %v3189
        %v3465 = vunpack.c.l.b16 %v3190
        %v3466 = vunpack.c.h.b16 %v3190
        %v3467 = vunpack.c.l.b16 %v3191
        %v3468 = vunpack.c.h.b16 %v3191
        %v3469 = vunpack.c.l.b16 %v3192
        %v3470 = vunpack.c.h.b16 %v3192
        %v3471 = vunpack.c.l.b16 %v3193
        %v3472 = vunpack.c.h.b16 %v3193
        %v3473 = vunpack.c.l.b16 %v3194
        %v3474 = vunpack.c.h.b16 %v3194
        %v3475 = vunpack.c.l.b16 %v3195
        %v3476 = vunpack.c.h.b16 %v3195
        %v3477 = vunpack.c.l.b16 %v3196
        %v3478 = vunpack.c.h.b16 %v3196
        %v3479 = vunpack.c.l.b16 %v3197
        %v3480 = vunpack.c.h.b16 %v3197
        %v3481 = vunpack.c.l.b16 %v3198
        %v3482 = vunpack.c.h.b16 %v3198
        %v3483 = vunpack.c.l.b16 %v3199
        %v3484 = vunpack.c.h.b16 %v3199
        %v3485 = vunpack.c.l.b16 %v3200
        %v3486 = vunpack.c.h.b16 %v3200
        %v3487 = vunpack.c.l.b16 %v3201
        %v3488 = vunpack.c.h.b16 %v3201
        %v3489 = vunpack.c.l.b16 %v3202
        %v3490 = vunpack.c.h.b16 %v3202
        %v3491 = vunpack.c.l.b16 %v3203
        %v3492 = vunpack.c.h.b16 %v3203
        %v3493 = vunpack.c.l.b16 %v3204
        %v3494 = vunpack.c.h.b16 %v3204
        %v3495 = vunpack.c.l.b16 %v3205
        %v3496 = vunpack.c.h.b16 %v3205
        %v3497 = vunpack.c.l.b16 %v3206
        %v3498 = vunpack.c.h.b16 %v3206
        %v3499 = vunpack.c.l.b16 %v3207
        %v3500 = vunpack.c.h.b16 %v3207
        %v3501 = vunpack.c.l.b16 %v3208
        %v3502 = vunpack.c.h.b16 %v3208
        %v3503 = vunpack.c.l.b16 %v3209
        %v3504 = vunpack.c.h.b16 %v3209
        %v3505 = vunpack.c.l.b16 %v3210
        %v3506 = vunpack.c.h.b16 %v3210
        %v3507 = vunpack.c.l.b16 %v3211
        %v3508 = vunpack.c.h.b16 %v3211
        %v3509 = vunpack.c.l.b16 %v3212
        %v3510 = vunpack.c.h.b16 %v3212
        %v3511 = vunpack.c.l.b16 %v3213
        %v3512 = vunpack.c.h.b16 %v3213
        %v3513 = vunpack.c.l.b16 %v3214
        %v3514 = vunpack.c.h.b16 %v3214
        %v3515 = vunpack.c.l.b16 %v3215
        %v3516 = vunpack.c.h.b16 %v3215
        %v3517 = vunpack.c.l.b16 %v3216
        %v3518 = vunpack.c.h.b16 %v3216
        %v3519 = vunpack.c.l.b16 %v3217
        %v3520 = vunpack.c.h.b16 %v3217
        %v3521 = vunpack.c.l.b16 %v3218
        %v3522 = vunpack.c.h.b16 %v3218
        %v3523 = vunpack.c.l.b16 %v3219
        %v3524 = vunpack.c.h.b16 %v3219
        %v3525 = vunpack.c.l.b16 %v3220
        %v3526 = vunpack.c.h.b16 %v3220
        %v3527 = vunpack.c.l.b16 %v3221
        %v3528 = vunpack.c.h.b16 %v3221
        %v3529 = vunpack.c.l.b16 %v3222
        %v3530 = vunpack.c.h.b16 %v3222
        %v3531 = vunpack.c.l.b16 %v3223
        %v3532 = vunpack.c.h.b16 %v3223
        %v3533 = vunpack.c.l.b16 %v3224
        %v3534 = vunpack.c.h.b16 %v3224
        %v3535 = vunpack.c.l.b16 %v3225
        %v3536 = vunpack.c.h.b16 %v3225
        %v3537 = vunpack.c.l.b16 %v3226
        %v3538 = vunpack.c.h.b16 %v3226
        %v3539 = vunpack.c.l.b16 %v3227
        %v3540 = vunpack.c.h.b16 %v3227
        %v3541 = vunpack.c.l.b16 %v3228
        %v3542 = vunpack.c.h.b16 %v3228
        %v3543 = vunpack.c.l.b16 %v3229
        %v3544 = vunpack.c.h.b16 %v3229
        %v3545 = vunpack.c.l.b16 %v3230
        %v3546 = vunpack.c.h.b16 %v3230
        %v3547 = vunpack.c.l.b16 %v3231
        %v3548 = vunpack.c.h.b16 %v3231
        %v3549 = vunpack.c.l.b16 %v3232
        %v3550 = vunpack.c.h.b16 %v3232
        %v3551 = vunpack.c.l.b16 %v3233
        %v3552 = vunpack.c.h.b16 %v3233
        %v3553 = vunpack.c.l.b16 %v3234
        %v3554 = vunpack.c.h.b16 %v3234
        %v3555 = vunpack.c.l.b16 %v3235
        %v3556 = vunpack.c.h.b16 %v3235
        %v3557 = vunpack.c.l.b16 %v3236
        %v3558 = vunpack.c.h.b16 %v3236
        %v3559 = vunpack.c.l.b16 %v3237
        %v3560 = vunpack.c.h.b16 %v3237
        %v3561 = vunpack.c.l.b16 %v3238
        %v3562 = vunpack.c.h.b16 %v3238
        %v3563 = vunpack.c.l.b16 %v3239
        %v3564 = vunpack.c.h.b16 %v3239
        %v3565 = vunpack.c.l.b16 %v3240
        %v3566 = vunpack.c.h.b16 %v3240
        %v3567 = vunpack.c.l.b16 %v3241
        %v3568 = vunpack.c.h.b16 %v3241
        %v3569 = vunpack.c.l.b16 %v3242
        %v3570 = vunpack.c.h.b16 %v3242
        %v3571 = vunpack.c.l.b16 %v3243
        %v3572 = vunpack.c.h.b16 %v3243
        %v3573 = vunpack.c.l.b16 %v3244
        %v3574 = vunpack.c.h.b16 %v3244
        %v3575 = vunpack.c.l.b16 %v3245
        %v3576 = vunpack.c.h.b16 %v3245
        %v3577 = vunpack.c.l.b16 %v3246
        %v3578 = vunpack.c.h.b16 %v3246
        %v3579 = vunpack.c.l.b16 %v3247
        %v3580 = vunpack.c.h.b16 %v3247
        %v3581 = vunpack.c.l.b16 %v3248
        %v3582 = vunpack.c.h.b16 %v3248
        %v3583 = vunpack.c.l.b16 %v3249
        %v3584 = vunpack.c.h.b16 %v3249
        %v3585 = vunpack.c.l.b16 %v3250
        %v3586 = vunpack.c.h.b16 %v3250
        %v3587 = vunpack.c.l.b16 %v3251
        %v3588 = vunpack.c.h.b16 %v3251
        %v3589 = vunpack.c.l.b16 %v3252
        %v3590 = vunpack.c.h.b16 %v3252
        %v3591 = vunpack.c.l.b16 %v3253
        %v3592 = vunpack.c.h.b16 %v3253
        %v3593 = vunpack.c.l.b16 %v3254
        %v3594 = vunpack.c.h.b16 %v3254
        %v3595 = vunpack.c.l.b16 %v3255
        %v3596 = vunpack.c.h.b16 %v3255
        %v3597 = vunpack.c.l.b16 %v3256
        %v3598 = vunpack.c.h.b16 %v3256
        %v3599 = vunpack.c.l.b16 %v3257
        %v3600 = vunpack.c.h.b16 %v3257
        %v3601 = vunpack.c.l.b16 %v3258
        %v3602 = vunpack.c.h.b16 %v3258
        %v3603 = vunpack.c.l.b16 %v3259
        %v3604 = vunpack.c.h.b16 %v3259
        %v3605 = vunpack.c.l.b16 %v3260
        %v3606 = vunpack.c.h.b16 %v3260
        %v3607 = vunpack.c.l.b16 %v3261
        %v3608 = vunpack.c.h.b16 %v3261
        %v3609 = vunpack.c.l.b16 %v3262
        %v3610 = vunpack.c.h.b16 %v3262
        %v3611 = vunpack.c.l.b16 %v3263
        %v3612 = vunpack.c.h.b16 %v3263
        %v3613 = vunpack.c.l.b16 %v3264
        %v3614 = vunpack.c.h.b16 %v3264
        %v3615 = vunpack.c.l.b16 %v3265
        %v3616 = vunpack.c.h.b16 %v3265
        %v3617 = vunpack.c.l.b16 %v3266
        %v3618 = vunpack.c.h.b16 %v3266
        %v3619 = vunpack.c.l.b16 %v3267
        %v3620 = vunpack.c.h.b16 %v3267
        %v3621 = vunpack.c.l.b16 %v3268
        %v3622 = vunpack.c.h.b16 %v3268
        %v3623 = vunpack.c.l.b16 %v3269
        %v3624 = vunpack.c.h.b16 %v3269
        %v3625 = vunpack.c.l.b16 %v3270
        %v3626 = vunpack.c.h.b16 %v3270
        %v3627 = vunpack.c.l.b16 %v3271
        %v3628 = vunpack.c.h.b16 %v3271
        %v3629 = vunpack.c.l.b16 %v3272
        %v3630 = vunpack.c.h.b16 %v3272
        %v3631 = vunpack.c.l.b16 %v3273
        %v3632 = vunpack.c.h.b16 %v3273
        %v3633 = vunpack.c.l.b16 %v3274
        %v3634 = vunpack.c.h.b16 %v3274
        %v3635 = vunpack.c.l.b16 %v3275
        %v3636 = vunpack.c.h.b16 %v3275
        %v3637 = vunpack.c.l.b16 %v3276
        %v3638 = vunpack.c.h.b16 %v3276
        %v3639 = vunpack.c.l.b16 %v3277
        %v3640 = vunpack.c.h.b16 %v3277
        %v3641 = vunpack.c.l.b16 %v3278
        %v3642 = vunpack.c.h.b16 %v3278
        %v3643 = vunpack.c.l.b16 %v3279
        %v3644 = vunpack.c.h.b16 %v3279
        %v3645 = vunpack.c.l.b16 %v3280
        %v3646 = vunpack.c.h.b16 %v3280
        %v3647 = vunpack.c.l.b16 %v3281
        %v3648 = vunpack.c.h.b16 %v3281
        %v3649 = vunpack.c.l.b16 %v3282
        %v3650 = vunpack.c.h.b16 %v3282
        %v3651 = vunpack.c.l.b16 %v3283
        %v3652 = vunpack.c.h.b16 %v3283
        %v3653 = vunpack.c.l.b16 %v3284
        %v3654 = vunpack.c.h.b16 %v3284
        %v3655 = vunpack.c.l.b16 %v3285
        %v3656 = vunpack.c.h.b16 %v3285
        %v3657 = vunpack.c.l.b16 %v3286
        %v3658 = vunpack.c.h.b16 %v3286
        %v3659 = vunpack.c.l.b16 %v3287
        %v3660 = vunpack.c.h.b16 %v3287
        %v3661 = vunpack.c.l.b16 %v3288
        %v3662 = vunpack.c.h.b16 %v3288
        %v3663 = vunpack.c.l.b16 %v3289
        %v3664 = vunpack.c.h.b16 %v3289
        %v3665 = vunpack.c.l.b16 %v3290
        %v3666 = vunpack.c.h.b16 %v3290
        %v3667 = vunpack.c.l.b16 %v3291
        %v3668 = vunpack.c.h.b16 %v3291
        %v3669 = vunpack.c.l.b16 %v3292
        %v3670 = vunpack.c.h.b16 %v3292
        %v3671 = vunpack.c.l.b16 %v3293
        %v3672 = vunpack.c.h.b16 %v3293
        %v3673 = vunpack.c.l.b16 %v3294
        %v3674 = vunpack.c.h.b16 %v3294
        %v3675 = vunpack.c.l.b16 %v3295
        %v3676 = vunpack.c.h.b16 %v3295
        %v3677 = vunpack.c.l.b16 %v3296
        %v3678 = vunpack.c.h.b16 %v3296
        %v3679 = vunpack.c.l.b16 %v3297
        %v3680 = vunpack.c.h.b16 %v3297
        %v3681 = vunpack.c.l.b16 %v3298
        %v3682 = vunpack.c.h.b16 %v3298
        %v3683 = vpack.c.b16 %v3431, %v3427
        %v3684 = vpack.c.b16 %v3432, %v3428
        %v3685 = vpack.c.b16 %v3433, %v3429
        %v3686 = vpack.c.b16 %v3434, %v3430
        %v3687 = vpack.c.b16 %v3439, %v3435
        %v3688 = vpack.c.b16 %v3440, %v3436
        %v3689 = vpack.c.b16 %v3441, %v3437
        %v3690 = vpack.c.b16 %v3442, %v3438
        %v3691 = vpack.c.b16 %v3447, %v3443
        %v3692 = vpack.c.b16 %v3448, %v3444
        %v3693 = vpack.c.b16 %v3449, %v3445
        %v3694 = vpack.c.b16 %v3450, %v3446
        %v3695 = vpack.c.b16 %v3455, %v3451
        %v3696 = vpack.c.b16 %v3456, %v3452
        %v3697 = vpack.c.b16 %v3457, %v3453
        %v3698 = vpack.c.b16 %v3458, %v3454
        %v3699 = vpack.c.b16 %v3463, %v3459
        %v3700 = vpack.c.b16 %v3464, %v3460
        %v3701 = vpack.c.b16 %v3465, %v3461
        %v3702 = vpack.c.b16 %v3466, %v3462
        %v3703 = vpack.c.b16 %v3471, %v3467
        %v3704 = vpack.c.b16 %v3472, %v3468
        %v3705 = vpack.c.b16 %v3473, %v3469
        %v3706 = vpack.c.b16 %v3474, %v3470
        %v3707 = vpack.c.b16 %v3479, %v3475
        %v3708 = vpack.c.b16 %v3480, %v3476
        %v3709 = vpack.c.b16 %v3481, %v3477
        %v3710 = vpack.c.b16 %v3482, %v3478
        %v3711 = vpack.c.b16 %v3487, %v3483
        %v3712 = vpack.c.b16 %v3488, %v3484
        %v3713 = vpack.c.b16 %v3489, %v3485
        %v3714 = vpack.c.b16 %v3490, %v3486
        %v3715 = vpack.c.b16 %v3495, %v3491
        %v3716 = vpack.c.b16 %v3496, %v3492
        %v3717 = vpack.c.b16 %v3497, %v3493
        %v3718 = vpack.c.b16 %v3498, %v3494
        %v3719 = vpack.c.b16 %v3503, %v3499
        %v3720 = vpack.c.b16 %v3504, %v3500
        %v3721 = vpack.c.b16 %v3505, %v3501
        %v3722 = vpack.c.b16 %v3506, %v3502
        %v3723 = vpack.c.b16 %v3511, %v3507
        %v3724 = vpack.c.b16 %v3512, %v3508
        %v3725 = vpack.c.b16 %v3513, %v3509
        %v3726 = vpack.c.b16 %v3514, %v3510
        %v3727 = vpack.c.b16 %v3519, %v3515
        %v3728 = vpack.c.b16 %v3520, %v3516
        %v3729 = vpack.c.b16 %v3521, %v3517
        %v3730 = vpack.c.b16 %v3522, %v3518
        %v3731 = vpack.c.b16 %v3527, %v3523
        %v3732 = vpack.c.b16 %v3528, %v3524
        %v3733 = vpack.c.b16 %v3529, %v3525
        %v3734 = vpack.c.b16 %v3530, %v3526
        %v3735 = vpack.c.b16 %v3535, %v3531
        %v3736 = vpack.c.b16 %v3536, %v3532
        %v3737 = vpack.c.b16 %v3537, %v3533
        %v3738 = vpack.c.b16 %v3538, %v3534
        %v3739 = vpack.c.b16 %v3543, %v3539
        %v3740 = vpack.c.b16 %v3544, %v3540
        %v3741 = vpack.c.b16 %v3545, %v3541
        %v3742 = vpack.c.b16 %v3546, %v3542
        %v3743 = vpack.c.b16 %v3551, %v3547
        %v3744 = vpack.c.b16 %v3552, %v3548
        %v3745 = vpack.c.b16 %v3553, %v3549
        %v3746 = vpack.c.b16 %v3554, %v3550
        %v3747 = vpack.c.b16 %v3559, %v3555
        %v3748 = vpack.c.b16 %v3560, %v3556
        %v3749 = vpack.c.b16 %v3561, %v3557
        %v3750 = vpack.c.b16 %v3562, %v3558
        %v3751 = vpack.c.b16 %v3567, %v3563
        %v3752 = vpack.c.b16 %v3568, %v3564
        %v3753 = vpack.c.b16 %v3569, %v3565
        %v3754 = vpack.c.b16 %v3570, %v3566
        %v3755 = vpack.c.b16 %v3575, %v3571
        %v3756 = vpack.c.b16 %v3576, %v3572
        %v3757 = vpack.c.b16 %v3577, %v3573
        %v3758 = vpack.c.b16 %v3578, %v3574
        %v3759 = vpack.c.b16 %v3583, %v3579
        %v3760 = vpack.c.b16 %v3584, %v3580
        %v3761 = vpack.c.b16 %v3585, %v3581
        %v3762 = vpack.c.b16 %v3586, %v3582
        %v3763 = vpack.c.b16 %v3591, %v3587
        %v3764 = vpack.c.b16 %v3592, %v3588
        %v3765 = vpack.c.b16 %v3593, %v3589
        %v3766 = vpack.c.b16 %v3594, %v3590
        %v3767 = vpack.c.b16 %v3599, %v3595
        %v3768 = vpack.c.b16 %v3600, %v3596
        %v3769 = vpack.c.b16 %v3601, %v3597
        %v3770 = vpack.c.b16 %v3602, %v3598
        %v3771 = vpack.c.b16 %v3607, %v3603
        %v3772 = vpack.c.b16 %v3608, %v3604
        %v3773 = vpack.c.b16 %v3609, %v3605
        %v3774 = vpack.c.b16 %v3610, %v3606
        %v3775 = vpack.c.b16 %v3615, %v3611
        %v3776 = vpack.c.b16 %v3616, %v3612
        %v3777 = vpack.c.b16 %v3617, %v3613
        %v3778 = vpack.c.b16 %v3618, %v3614
        %v3779 = vpack.c.b16 %v3623, %v3619
        %v3780 = vpack.c.b16 %v3624, %v3620
        %v3781 = vpack.c.b16 %v3625, %v3621
        %v3782 = vpack.c.b16 %v3626, %v3622
        %v3783 = vpack.c.b16 %v3631, %v3627
        %v3784 = vpack.c.b16 %v3632, %v3628
        %v3785 = vpack.c.b16 %v3633, %v3629
        %v3786 = vpack.c.b16 %v3634, %v3630
        %v3787 = vpack.c.b16 %v3639, %v3635
        %v3788 = vpack.c.b16 %v3640, %v3636
        %v3789 = vpack.c.b16 %v3641, %v3637
        %v3790 = vpack.c.b16 %v3642, %v3638
        %v3791 = vpack.c.b16 %v3647, %v3643
        %v3792 = vpack.c.b16 %v3648, %v3644
        %v3793 = vpack.c.b16 %v3649, %v3645
        %v3794 = vpack.c.b16 %v3650, %v3646
        %v3795 = vpack.c.b16 %v3655, %v3651
        %v3796 = vpack.c.b16 %v3656, %v3652
        %v3797 = vpack.c.b16 %v3657, %v3653
        %v3798 = vpack.c.b16 %v3658, %v3654
        %v3799 = vpack.c.b16 %v3663, %v3659
        %v3800 = vpack.c.b16 %v3664, %v3660
        %v3801 = vpack.c.b16 %v3665, %v3661
        %v3802 = vpack.c.b16 %v3666, %v3662
        %v3803 = vpack.c.b16 %v3671, %v3667
        %v3804 = vpack.c.b16 %v3672, %v3668
        %v3805 = vpack.c.b16 %v3673, %v3669
        %v3806 = vpack.c.b16 %v3674, %v3670
        %v3807 = vpack.c.b16 %v3679, %v3675
        %v3808 = vpack.c.b16 %v3680, %v3676
        %v3809 = vpack.c.b16 %v3681, %v3677
        %v3810 = vpack.c.b16 %v3682, %v3678
        %3939 = vmatprep.subr.bf16.mxu0 %v3684
        %3940 = vmatpush1.bf16.msra.mxu0 %v3683
        %3941 = vmatprep.subr.bf16.mxu0 %v3688
        %3942 = vmatpush1.bf16.msra.mxu0 %v3687
        %3943 = vmatprep.subr.bf16.mxu0 %v3692
        %3944 = vmatpush1.bf16.msra.mxu0 %v3691
        %3945 = vmatprep.subr.bf16.mxu0 %v3696
        %3946 = vmatpush1.bf16.msra.mxu0 %v3695
        %3947 = vmatprep.subr.bf16.mxu0 %v3700
        %3948 = vmatpush1.bf16.msra.mxu0 %v3699
        %3949 = vmatprep.subr.bf16.mxu0 %v3704
        %3950 = vmatpush1.bf16.msra.mxu0 %v3703
        %3951 = vmatprep.subr.bf16.mxu0 %v3708
        %3952 = vmatpush1.bf16.msra.mxu0 %v3707
        %3953 = vmatprep.subr.bf16.mxu0 %v3712
        %3954 = vmatpush1.bf16.msra.mxu0 %v3711
        %3955 = vmatprep.subr.bf16.mxu0 %v3716
        %3956 = vmatpush1.bf16.msra.mxu0 %v3715
        %3957 = vmatprep.subr.bf16.mxu0 %v3720
        %3958 = vmatpush1.bf16.msra.mxu0 %v3719
        %3959 = vmatprep.subr.bf16.mxu0 %v3724
        %3960 = vmatpush1.bf16.msra.mxu0 %v3723
        %3961 = vmatprep.subr.bf16.mxu0 %v3728
        %3962 = vmatpush1.bf16.msra.mxu0 %v3727
        %3963 = vmatprep.subr.bf16.mxu0 %v3732
        %3964 = vmatpush1.bf16.msra.mxu0 %v3731
        %3965 = vmatprep.subr.bf16.mxu0 %v3736
        %3966 = vmatpush1.bf16.msra.mxu0 %v3735
        %3967 = vmatprep.subr.bf16.mxu0 %v3740
        %3968 = vmatpush1.bf16.msra.mxu0 %v3739
        %3969 = vmatprep.subr.bf16.mxu0 %v3744
        %3970 = vmatpush1.bf16.msra.mxu0 %v3743
        %3971 = vmatprep.mubr.bf16.mxu0 %v3168
        %3972 = vmatmul.mubr.bf16.gmra.mrb[0].mxu0 %v3167
        %v3973 = vpop.f32.mrb[0].mxu0
        %v3974 = vadd.f32 0.0, %v3973
        %v3975 = vpop.f32.mrb[0].mxu0
        %v3976 = vadd.f32 0.0, %v3975
        %v3977 = vpop.f32.mrb[0].mxu0
        %v3978 = vpop.f32.mrb[0].mxu0
        %3979 = vdwg.mxu0
        %3980 = vmatprep.subr.bf16.mxu0 %v3748
        %3981 = vmatpush1.bf16.msra.mxu0 %v3747
        %3982 = vmatprep.subr.bf16.mxu0 %v3752
        %3983 = vmatpush1.bf16.msra.mxu0 %v3751
        %3984 = vmatprep.subr.bf16.mxu0 %v3756
        %3985 = vmatpush1.bf16.msra.mxu0 %v3755
        %3986 = vmatprep.subr.bf16.mxu0 %v3760
        %3987 = vmatpush1.bf16.msra.mxu0 %v3759
        %3988 = vmatprep.subr.bf16.mxu0 %v3764
        %3989 = vmatpush1.bf16.msra.mxu0 %v3763
        %3990 = vmatprep.subr.bf16.mxu0 %v3768
        %3991 = vmatpush1.bf16.msra.mxu0 %v3767
        %3992 = vmatprep.subr.bf16.mxu0 %v3772
        %3993 = vmatpush1.bf16.msra.mxu0 %v3771
        %3994 = vmatprep.subr.bf16.mxu0 %v3776
        %3995 = vmatpush1.bf16.msra.mxu0 %v3775
        %3996 = vmatprep.subr.bf16.mxu0 %v3780
        %3997 = vmatpush1.bf16.msra.mxu0 %v3779
        %3998 = vmatprep.subr.bf16.mxu0 %v3784
        %3999 = vmatpush1.bf16.msra.mxu0 %v3783
        %4000 = vmatprep.subr.bf16.mxu0 %v3788
        %4001 = vmatpush1.bf16.msra.mxu0 %v3787
        %4002 = vmatprep.subr.bf16.mxu0 %v3792
        %4003 = vmatpush1.bf16.msra.mxu0 %v3791
        %4004 = vmatprep.subr.bf16.mxu0 %v3796
        %4005 = vmatpush1.bf16.msra.mxu0 %v3795
        %4006 = vmatprep.subr.bf16.mxu0 %v3800
        %4007 = vmatpush1.bf16.msra.mxu0 %v3799
        %4008 = vmatprep.subr.bf16.mxu0 %v3804
        %4009 = vmatpush1.bf16.msra.mxu0 %v3803
        %4010 = vmatprep.subr.bf16.mxu0 %v3808
        %4011 = vmatpush1.bf16.msra.mxu0 %v3807
        %4012 = vmatprep.mubr.bf16.mxu0 %v3170
        %4013 = vmatmul.mubr.bf16.gmra.mrb[0].mxu0 %v3169
        %v4014 = vpop.f32.mrb[0].mxu0
        %v4015 = vadd.f32 %v3974, %v4014
        %v4016 = vpop.f32.mrb[0].mxu0
        %v4017 = vadd.f32 %v3976, %v4016
        %v4018 = vpop.f32.mrb[0].mxu0
        %v4019 = vpop.f32.mrb[0].mxu0
        %4020 = vdwg.mxu0
        %4021 = vmatprep.subr.bf16.mxu0 %v3686
        %4022 = vmatpush1.bf16.msra.mxu0 %v3685
        %4023 = vmatprep.subr.bf16.mxu0 %v3690
        %4024 = vmatpush1.bf16.msra.mxu0 %v3689
        %4025 = vmatprep.subr.bf16.mxu0 %v3694
        %4026 = vmatpush1.bf16.msra.mxu0 %v3693
        %4027 = vmatprep.subr.bf16.mxu0 %v3698
        %4028 = vmatpush1.bf16.msra.mxu0 %v3697
        %4029 = vmatprep.subr.bf16.mxu0 %v3702
        %4030 = vmatpush1.bf16.msra.mxu0 %v3701
        %4031 = vmatprep.subr.bf16.mxu0 %v3706
        %4032 = vmatpush1.bf16.msra.mxu0 %v3705
        %4033 = vmatprep.subr.bf16.mxu0 %v3710
        %4034 = vmatpush1.bf16.msra.mxu0 %v3709
        %4035 = vmatprep.subr.bf16.mxu0 %v3714
        %4036 = vmatpush1.bf16.msra.mxu0 %v3713
        %4037 = vmatprep.subr.bf16.mxu0 %v3718
        %4038 = vmatpush1.bf16.msra.mxu0 %v3717
        %4039 = vmatprep.subr.bf16.mxu0 %v3722
        %4040 = vmatpush1.bf16.msra.mxu0 %v3721
        %4041 = vmatprep.subr.bf16.mxu0 %v3726
        %4042 = vmatpush1.bf16.msra.mxu0 %v3725
        %4043 = vmatprep.subr.bf16.mxu0 %v3730
        %4044 = vmatpush1.bf16.msra.mxu0 %v3729
        %4045 = vmatprep.subr.bf16.mxu0 %v3734
        %4046 = vmatpush1.bf16.msra.mxu0 %v3733
        %4047 = vmatprep.subr.bf16.mxu0 %v3738
        %4048 = vmatpush1.bf16.msra.mxu0 %v3737
        %4049 = vmatprep.subr.bf16.mxu0 %v3742
        %4050 = vmatpush1.bf16.msra.mxu0 %v3741
        %4051 = vmatprep.subr.bf16.mxu0 %v3746
        %4052 = vmatpush1.bf16.msra.mxu0 %v3745
        %4053 = vmatprep.mubr.bf16.mxu0 %v3168
        %4054 = vmatmul.mubr.bf16.gmra.mrb[0].mxu0 %v3167
        %v4055 = vpop.f32.mrb[0].mxu0
        %v4056 = vadd.f32 0.0, %v4055
        %v4057 = vpop.f32.mrb[0].mxu0
        %v4058 = vadd.f32 0.0, %v4057
        %v4059 = vpop.f32.mrb[0].mxu0
        %v4060 = vpop.f32.mrb[0].mxu0
        %4061 = vdwg.mxu0
        %4062 = vmatprep.subr.bf16.mxu0 %v3750
        %4063 = vmatpush1.bf16.msra.mxu0 %v3749
        %4064 = vmatprep.subr.bf16.mxu0 %v3754
        %4065 = vmatpush1.bf16.msra.mxu0 %v3753
        %4066 = vmatprep.subr.bf16.mxu0 %v3758
        %4067 = vmatpush1.bf16.msra.mxu0 %v3757
        %4068 = vmatprep.subr.bf16.mxu0 %v3762
        %4069 = vmatpush1.bf16.msra.mxu0 %v3761
        %4070 = vmatprep.subr.bf16.mxu0 %v3766
        %4071 = vmatpush1.bf16.msra.mxu0 %v3765
        %4072 = vmatprep.subr.bf16.mxu0 %v3770
        %4073 = vmatpush1.bf16.msra.mxu0 %v3769
        %4074 = vmatprep.subr.bf16.mxu0 %v3774
        %4075 = vmatpush1.bf16.msra.mxu0 %v3773
        %4076 = vmatprep.subr.bf16.mxu0 %v3778
        %4077 = vmatpush1.bf16.msra.mxu0 %v3777
        %4078 = vmatprep.subr.bf16.mxu0 %v3782
        %4079 = vmatpush1.bf16.msra.mxu0 %v3781
        %4080 = vmatprep.subr.bf16.mxu0 %v3786
        %4081 = vmatpush1.bf16.msra.mxu0 %v3785
        %4082 = vmatprep.subr.bf16.mxu0 %v3790
        %4083 = vmatpush1.bf16.msra.mxu0 %v3789
        %4084 = vmatprep.subr.bf16.mxu0 %v3794
        %4085 = vmatpush1.bf16.msra.mxu0 %v3793
        %4086 = vmatprep.subr.bf16.mxu0 %v3798
        %4087 = vmatpush1.bf16.msra.mxu0 %v3797
        %4088 = vmatprep.subr.bf16.mxu0 %v3802
        %4089 = vmatpush1.bf16.msra.mxu0 %v3801
        %4090 = vmatprep.subr.bf16.mxu0 %v3806
        %4091 = vmatpush1.bf16.msra.mxu0 %v3805
        %4092 = vmatprep.subr.bf16.mxu0 %v3810
        %4093 = vmatpush1.bf16.msra.mxu0 %v3809
        %4094 = vmatprep.mubr.bf16.mxu0 %v3170
        %4095 = vmatmul.mubr.bf16.gmra.mrb[0].mxu0 %v3169
        %v4096 = vpop.f32.mrb[0].mxu0
        %v4097 = vadd.f32 %v4056, %v4096
        %v4098 = vpop.f32.mrb[0].mxu0
        %v4099 = vadd.f32 %v4058, %v4098
        %v4100 = vpop.f32.mrb[0].mxu0
        %v4101 = vpop.f32.mrb[0].mxu0
        %4102 = vdwg.mxu0
        %v4103 = vadd.f32 %v2205, %v4015
        %v4104 = vadd.f32 %v2206, %v4017
        %v4105 = vadd.f32 %v2207, %v4097
        %v4106 = vadd.f32 %v2208, %v4099
        %v4107 = vld [vmem:[%s1 + $0x20] sm:$0xff]
        %v4108 = vld [vmem:[%s1 + $0x28] sm:$0xff]
        %v4109 = vld [vmem:[%s1 + $0x60] sm:$0xff]
        %v4110 = vld [vmem:[%s1 + $0x68] sm:$0xff]
        %v4111 = vld [vmem:[%s1 + $0xa0] sm:$0xff]
        %v4112 = vld [vmem:[%s1 + $0xa8] sm:$0xff]
        %v4113 = vld [vmem:[%s1 + $0xe0] sm:$0xff]
        %v4114 = vld [vmem:[%s1 + $0xe8] sm:$0xff]
        %v4115 = vld [vmem:[%s1 + $0x120] sm:$0xff]
        %v4116 = vld [vmem:[%s1 + $0x128] sm:$0xff]
        %v4117 = vld [vmem:[%s1 + $0x160] sm:$0xff]
        %v4118 = vld [vmem:[%s1 + $0x168] sm:$0xff]
        %v4119 = vld [vmem:[%s1 + $0x1a0] sm:$0xff]
        %v4120 = vld [vmem:[%s1 + $0x1a8] sm:$0xff]
        %v4121 = vld [vmem:[%s1 + $0x1e0] sm:$0xff]
        %v4122 = vld [vmem:[%s1 + $0x1e8] sm:$0xff]
        %v4123 = vld [vmem:[%s1 + $0x220] sm:$0xff]
        %v4124 = vld [vmem:[%s1 + $0x228] sm:$0xff]
        %v4125 = vld [vmem:[%s1 + $0x260] sm:$0xff]
        %v4126 = vld [vmem:[%s1 + $0x268] sm:$0xff]
        %v4127 = vld [vmem:[%s1 + $0x2a0] sm:$0xff]
        %v4128 = vld [vmem:[%s1 + $0x2a8] sm:$0xff]
        %v4129 = vld [vmem:[%s1 + $0x2e0] sm:$0xff]
        %v4130 = vld [vmem:[%s1 + $0x2e8] sm:$0xff]
        %v4131 = vld [vmem:[%s1 + $0x320] sm:$0xff]
        %v4132 = vld [vmem:[%s1 + $0x328] sm:$0xff]
        %v4133 = vld [vmem:[%s1 + $0x360] sm:$0xff]
        %v4134 = vld [vmem:[%s1 + $0x368] sm:$0xff]
        %v4135 = vld [vmem:[%s1 + $0x3a0] sm:$0xff]
        %v4136 = vld [vmem:[%s1 + $0x3a8] sm:$0xff]
        %v4137 = vld [vmem:[%s1 + $0x3e0] sm:$0xff]
        %v4138 = vld [vmem:[%s1 + $0x3e8] sm:$0xff]
        %v4139 = vld [vmem:[%s1 + $0x420] sm:$0xff]
        %v4140 = vld [vmem:[%s1 + $0x428] sm:$0xff]
        %v4141 = vld [vmem:[%s1 + $0x460] sm:$0xff]
        %v4142 = vld [vmem:[%s1 + $0x468] sm:$0xff]
        %v4143 = vld [vmem:[%s1 + $0x4a0] sm:$0xff]
        %v4144 = vld [vmem:[%s1 + $0x4a8] sm:$0xff]
        %v4145 = vld [vmem:[%s1 + $0x4e0] sm:$0xff]
        %v4146 = vld [vmem:[%s1 + $0x4e8] sm:$0xff]
        %v4147 = vld [vmem:[%s1 + $0x520] sm:$0xff]
        %v4148 = vld [vmem:[%s1 + $0x528] sm:$0xff]
        %v4149 = vld [vmem:[%s1 + $0x560] sm:$0xff]
        %v4150 = vld [vmem:[%s1 + $0x568] sm:$0xff]
        %v4151 = vld [vmem:[%s1 + $0x5a0] sm:$0xff]
        %v4152 = vld [vmem:[%s1 + $0x5a8] sm:$0xff]
        %v4153 = vld [vmem:[%s1 + $0x5e0] sm:$0xff]
        %v4154 = vld [vmem:[%s1 + $0x5e8] sm:$0xff]
        %v4155 = vld [vmem:[%s1 + $0x620] sm:$0xff]
        %v4156 = vld [vmem:[%s1 + $0x628] sm:$0xff]
        %v4157 = vld [vmem:[%s1 + $0x660] sm:$0xff]
        %v4158 = vld [vmem:[%s1 + $0x668] sm:$0xff]
        %v4159 = vld [vmem:[%s1 + $0x6a0] sm:$0xff]
        %v4160 = vld [vmem:[%s1 + $0x6a8] sm:$0xff]
        %v4161 = vld [vmem:[%s1 + $0x6e0] sm:$0xff]
        %v4162 = vld [vmem:[%s1 + $0x6e8] sm:$0xff]
        %v4163 = vld [vmem:[%s1 + $0x720] sm:$0xff]
        %v4164 = vld [vmem:[%s1 + $0x728] sm:$0xff]
        %v4165 = vld [vmem:[%s1 + $0x760] sm:$0xff]
        %v4166 = vld [vmem:[%s1 + $0x768] sm:$0xff]
        %v4167 = vld [vmem:[%s1 + $0x7a0] sm:$0xff]
        %v4168 = vld [vmem:[%s1 + $0x7a8] sm:$0xff]
        %v4169 = vld [vmem:[%s1 + $0x7e0] sm:$0xff]
        %v4170 = vld [vmem:[%s1 + $0x7e8] sm:$0xff]
        %v4171 = vld [vmem:[%s1 + $0x820] sm:$0xff]
        %v4172 = vld [vmem:[%s1 + $0x828] sm:$0xff]
        %v4173 = vld [vmem:[%s1 + $0x860] sm:$0xff]
        %v4174 = vld [vmem:[%s1 + $0x868] sm:$0xff]
        %v4175 = vld [vmem:[%s1 + $0x8a0] sm:$0xff]
        %v4176 = vld [vmem:[%s1 + $0x8a8] sm:$0xff]
        %v4177 = vld [vmem:[%s1 + $0x8e0] sm:$0xff]
        %v4178 = vld [vmem:[%s1 + $0x8e8] sm:$0xff]
        %v4179 = vld [vmem:[%s1 + $0x920] sm:$0xff]
        %v4180 = vld [vmem:[%s1 + $0x928] sm:$0xff]
        %v4181 = vld [vmem:[%s1 + $0x960] sm:$0xff]
        %v4182 = vld [vmem:[%s1 + $0x968] sm:$0xff]
        %v4183 = vld [vmem:[%s1 + $0x9a0] sm:$0xff]
        %v4184 = vld [vmem:[%s1 + $0x9a8] sm:$0xff]
        %v4185 = vld [vmem:[%s1 + $0x9e0] sm:$0xff]
        %v4186 = vld [vmem:[%s1 + $0x9e8] sm:$0xff]
        %v4187 = vld [vmem:[%s1 + $0xa20] sm:$0xff]
        %v4188 = vld [vmem:[%s1 + $0xa28] sm:$0xff]
        %v4189 = vld [vmem:[%s1 + $0xa60] sm:$0xff]
        %v4190 = vld [vmem:[%s1 + $0xa68] sm:$0xff]
        %v4191 = vld [vmem:[%s1 + $0xaa0] sm:$0xff]
        %v4192 = vld [vmem:[%s1 + $0xaa8] sm:$0xff]
        %v4193 = vld [vmem:[%s1 + $0xae0] sm:$0xff]
        %v4194 = vld [vmem:[%s1 + $0xae8] sm:$0xff]
        %v4195 = vld [vmem:[%s1 + $0xb20] sm:$0xff]
        %v4196 = vld [vmem:[%s1 + $0xb28] sm:$0xff]
        %v4197 = vld [vmem:[%s1 + $0xb60] sm:$0xff]
        %v4198 = vld [vmem:[%s1 + $0xb68] sm:$0xff]
        %v4199 = vld [vmem:[%s1 + $0xba0] sm:$0xff]
        %v4200 = vld [vmem:[%s1 + $0xba8] sm:$0xff]
        %v4201 = vld [vmem:[%s1 + $0xbe0] sm:$0xff]
        %v4202 = vld [vmem:[%s1 + $0xbe8] sm:$0xff]
        %v4203 = vld [vmem:[%s1 + $0xc20] sm:$0xff]
        %v4204 = vld [vmem:[%s1 + $0xc28] sm:$0xff]
        %v4205 = vld [vmem:[%s1 + $0xc60] sm:$0xff]
        %v4206 = vld [vmem:[%s1 + $0xc68] sm:$0xff]
        %v4207 = vld [vmem:[%s1 + $0xca0] sm:$0xff]
        %v4208 = vld [vmem:[%s1 + $0xca8] sm:$0xff]
        %v4209 = vld [vmem:[%s1 + $0xce0] sm:$0xff]
        %v4210 = vld [vmem:[%s1 + $0xce8] sm:$0xff]
        %v4211 = vld [vmem:[%s1 + $0xd20] sm:$0xff]
        %v4212 = vld [vmem:[%s1 + $0xd28] sm:$0xff]
        %v4213 = vld [vmem:[%s1 + $0xd60] sm:$0xff]
        %v4214 = vld [vmem:[%s1 + $0xd68] sm:$0xff]
        %v4215 = vld [vmem:[%s1 + $0xda0] sm:$0xff]
        %v4216 = vld [vmem:[%s1 + $0xda8] sm:$0xff]
        %v4217 = vld [vmem:[%s1 + $0xde0] sm:$0xff]
        %v4218 = vld [vmem:[%s1 + $0xde8] sm:$0xff]
        %v4219 = vld [vmem:[%s1 + $0xe20] sm:$0xff]
        %v4220 = vld [vmem:[%s1 + $0xe28] sm:$0xff]
        %v4221 = vld [vmem:[%s1 + $0xe60] sm:$0xff]
        %v4222 = vld [vmem:[%s1 + $0xe68] sm:$0xff]
        %v4223 = vld [vmem:[%s1 + $0xea0] sm:$0xff]
        %v4224 = vld [vmem:[%s1 + $0xea8] sm:$0xff]
        %v4225 = vld [vmem:[%s1 + $0xee0] sm:$0xff]
        %v4226 = vld [vmem:[%s1 + $0xee8] sm:$0xff]
        %v4227 = vld [vmem:[%s1 + $0xf20] sm:$0xff]
        %v4228 = vld [vmem:[%s1 + $0xf28] sm:$0xff]
        %v4229 = vld [vmem:[%s1 + $0xf60] sm:$0xff]
        %v4230 = vld [vmem:[%s1 + $0xf68] sm:$0xff]
        %v4231 = vld [vmem:[%s1 + $0xfa0] sm:$0xff]
        %v4232 = vld [vmem:[%s1 + $0xfa8] sm:$0xff]
        %v4233 = vld [vmem:[%s1 + $0xfe0] sm:$0xff]
        %v4234 = vld [vmem:[%s1 + $0xfe8] sm:$0xff]
        %v4235 = vld [vmem:[%s2 + $0x8] sm:$0xf]
        %v4237 = vlaneseq
        %v4238 = vshrl.u32 %v4237, 7
        %v4239 = vsub.s32 0, %v4238
        %v4240 = vrot.slane %v4235, %v4239
        %v4241 = vlaneseq
        %v4242 = vshrl.u32 %v4241, 7
        %v4243 = vsub.s32 1, %v4242
        %v4244 = vrot.slane %v4235, %v4243
        %v4245 = vlaneseq
        %v4246 = vshrl.u32 %v4245, 7
        %v4247 = vsub.s32 2, %v4246
        %v4248 = vrot.slane %v4235, %v4247
        %v4249 = vlaneseq
        %v4250 = vshrl.u32 %v4249, 7
        %v4251 = vsub.s32 3, %v4250
        %v4252 = vrot.slane %v4235, %v4251
        %v4385 = vunpack.c.l.b16 %v4107
        %v4386 = vunpack.c.h.b16 %v4107
        %v4387 = vunpack.c.l.b16 %v4108
        %v4388 = vunpack.c.h.b16 %v4108
        %v4389 = vunpack.c.l.b16 %v4109
        %v4390 = vunpack.c.h.b16 %v4109
        %v4391 = vunpack.c.l.b16 %v4110
        %v4392 = vunpack.c.h.b16 %v4110
        %v4393 = vunpack.c.l.b16 %v4111
        %v4394 = vunpack.c.h.b16 %v4111
        %v4395 = vunpack.c.l.b16 %v4112
        %v4396 = vunpack.c.h.b16 %v4112
        %v4397 = vunpack.c.l.b16 %v4113
        %v4398 = vunpack.c.h.b16 %v4113
        %v4399 = vunpack.c.l.b16 %v4114
        %v4400 = vunpack.c.h.b16 %v4114
        %v4401 = vunpack.c.l.b16 %v4115
        %v4402 = vunpack.c.h.b16 %v4115
        %v4403 = vunpack.c.l.b16 %v4116
        %v4404 = vunpack.c.h.b16 %v4116
        %v4405 = vunpack.c.l.b16 %v4117
        %v4406 = vunpack.c.h.b16 %v4117
        %v4407 = vunpack.c.l.b16 %v4118
        %v4408 = vunpack.c.h.b16 %v4118
        %v4409 = vunpack.c.l.b16 %v4119
        %v4410 = vunpack.c.h.b16 %v4119
        %v4411 = vunpack.c.l.b16 %v4120
        %v4412 = vunpack.c.h.b16 %v4120
        %v4413 = vunpack.c.l.b16 %v4121
        %v4414 = vunpack.c.h.b16 %v4121
        %v4415 = vunpack.c.l.b16 %v4122
        %v4416 = vunpack.c.h.b16 %v4122
        %v4417 = vunpack.c.l.b16 %v4123
        %v4418 = vunpack.c.h.b16 %v4123
        %v4419 = vunpack.c.l.b16 %v4124
        %v4420 = vunpack.c.h.b16 %v4124
        %v4421 = vunpack.c.l.b16 %v4125
        %v4422 = vunpack.c.h.b16 %v4125
        %v4423 = vunpack.c.l.b16 %v4126
        %v4424 = vunpack.c.h.b16 %v4126
        %v4425 = vunpack.c.l.b16 %v4127
        %v4426 = vunpack.c.h.b16 %v4127
        %v4427 = vunpack.c.l.b16 %v4128
        %v4428 = vunpack.c.h.b16 %v4128
        %v4429 = vunpack.c.l.b16 %v4129
        %v4430 = vunpack.c.h.b16 %v4129
        %v4431 = vunpack.c.l.b16 %v4130
        %v4432 = vunpack.c.h.b16 %v4130
        %v4433 = vunpack.c.l.b16 %v4131
        %v4434 = vunpack.c.h.b16 %v4131
        %v4435 = vunpack.c.l.b16 %v4132
        %v4436 = vunpack.c.h.b16 %v4132
        %v4437 = vunpack.c.l.b16 %v4133
        %v4438 = vunpack.c.h.b16 %v4133
        %v4439 = vunpack.c.l.b16 %v4134
        %v4440 = vunpack.c.h.b16 %v4134
        %v4441 = vunpack.c.l.b16 %v4135
        %v4442 = vunpack.c.h.b16 %v4135
        %v4443 = vunpack.c.l.b16 %v4136
        %v4444 = vunpack.c.h.b16 %v4136
        %v4445 = vunpack.c.l.b16 %v4137
        %v4446 = vunpack.c.h.b16 %v4137
        %v4447 = vunpack.c.l.b16 %v4138
        %v4448 = vunpack.c.h.b16 %v4138
        %v4449 = vunpack.c.l.b16 %v4139
        %v4450 = vunpack.c.h.b16 %v4139
        %v4451 = vunpack.c.l.b16 %v4140
        %v4452 = vunpack.c.h.b16 %v4140
        %v4453 = vunpack.c.l.b16 %v4141
        %v4454 = vunpack.c.h.b16 %v4141
        %v4455 = vunpack.c.l.b16 %v4142
        %v4456 = vunpack.c.h.b16 %v4142
        %v4457 = vunpack.c.l.b16 %v4143
        %v4458 = vunpack.c.h.b16 %v4143
        %v4459 = vunpack.c.l.b16 %v4144
        %v4460 = vunpack.c.h.b16 %v4144
        %v4461 = vunpack.c.l.b16 %v4145
        %v4462 = vunpack.c.h.b16 %v4145
        %v4463 = vunpack.c.l.b16 %v4146
        %v4464 = vunpack.c.h.b16 %v4146
        %v4465 = vunpack.c.l.b16 %v4147
        %v4466 = vunpack.c.h.b16 %v4147
        %v4467 = vunpack.c.l.b16 %v4148
        %v4468 = vunpack.c.h.b16 %v4148
        %v4469 = vunpack.c.l.b16 %v4149
        %v4470 = vunpack.c.h.b16 %v4149
        %v4471 = vunpack.c.l.b16 %v4150
        %v4472 = vunpack.c.h.b16 %v4150
        %v4473 = vunpack.c.l.b16 %v4151
        %v4474 = vunpack.c.h.b16 %v4151
        %v4475 = vunpack.c.l.b16 %v4152
        %v4476 = vunpack.c.h.b16 %v4152
        %v4477 = vunpack.c.l.b16 %v4153
        %v4478 = vunpack.c.h.b16 %v4153
        %v4479 = vunpack.c.l.b16 %v4154
        %v4480 = vunpack.c.h.b16 %v4154
        %v4481 = vunpack.c.l.b16 %v4155
        %v4482 = vunpack.c.h.b16 %v4155
        %v4483 = vunpack.c.l.b16 %v4156
        %v4484 = vunpack.c.h.b16 %v4156
        %v4485 = vunpack.c.l.b16 %v4157
        %v4486 = vunpack.c.h.b16 %v4157
        %v4487 = vunpack.c.l.b16 %v4158
        %v4488 = vunpack.c.h.b16 %v4158
        %v4489 = vunpack.c.l.b16 %v4159
        %v4490 = vunpack.c.h.b16 %v4159
        %v4491 = vunpack.c.l.b16 %v4160
        %v4492 = vunpack.c.h.b16 %v4160
        %v4493 = vunpack.c.l.b16 %v4161
        %v4494 = vunpack.c.h.b16 %v4161
        %v4495 = vunpack.c.l.b16 %v4162
        %v4496 = vunpack.c.h.b16 %v4162
        %v4497 = vunpack.c.l.b16 %v4163
        %v4498 = vunpack.c.h.b16 %v4163
        %v4499 = vunpack.c.l.b16 %v4164
        %v4500 = vunpack.c.h.b16 %v4164
        %v4501 = vunpack.c.l.b16 %v4165
        %v4502 = vunpack.c.h.b16 %v4165
        %v4503 = vunpack.c.l.b16 %v4166
        %v4504 = vunpack.c.h.b16 %v4166
        %v4505 = vunpack.c.l.b16 %v4167
        %v4506 = vunpack.c.h.b16 %v4167
        %v4507 = vunpack.c.l.b16 %v4168
        %v4508 = vunpack.c.h.b16 %v4168
        %v4509 = vunpack.c.l.b16 %v4169
        %v4510 = vunpack.c.h.b16 %v4169
        %v4511 = vunpack.c.l.b16 %v4170
        %v4512 = vunpack.c.h.b16 %v4170
        %v4513 = vunpack.c.l.b16 %v4171
        %v4514 = vunpack.c.h.b16 %v4171
        %v4515 = vunpack.c.l.b16 %v4172
        %v4516 = vunpack.c.h.b16 %v4172
        %v4517 = vunpack.c.l.b16 %v4173
        %v4518 = vunpack.c.h.b16 %v4173
        %v4519 = vunpack.c.l.b16 %v4174
        %v4520 = vunpack.c.h.b16 %v4174
        %v4521 = vunpack.c.l.b16 %v4175
        %v4522 = vunpack.c.h.b16 %v4175
        %v4523 = vunpack.c.l.b16 %v4176
        %v4524 = vunpack.c.h.b16 %v4176
        %v4525 = vunpack.c.l.b16 %v4177
        %v4526 = vunpack.c.h.b16 %v4177
        %v4527 = vunpack.c.l.b16 %v4178
        %v4528 = vunpack.c.h.b16 %v4178
        %v4529 = vunpack.c.l.b16 %v4179
        %v4530 = vunpack.c.h.b16 %v4179
        %v4531 = vunpack.c.l.b16 %v4180
        %v4532 = vunpack.c.h.b16 %v4180
        %v4533 = vunpack.c.l.b16 %v4181
        %v4534 = vunpack.c.h.b16 %v4181
        %v4535 = vunpack.c.l.b16 %v4182
        %v4536 = vunpack.c.h.b16 %v4182
        %v4537 = vunpack.c.l.b16 %v4183
        %v4538 = vunpack.c.h.b16 %v4183
        %v4539 = vunpack.c.l.b16 %v4184
        %v4540 = vunpack.c.h.b16 %v4184
        %v4541 = vunpack.c.l.b16 %v4185
        %v4542 = vunpack.c.h.b16 %v4185
        %v4543 = vunpack.c.l.b16 %v4186
        %v4544 = vunpack.c.h.b16 %v4186
        %v4545 = vunpack.c.l.b16 %v4187
        %v4546 = vunpack.c.h.b16 %v4187
        %v4547 = vunpack.c.l.b16 %v4188
        %v4548 = vunpack.c.h.b16 %v4188
        %v4549 = vunpack.c.l.b16 %v4189
        %v4550 = vunpack.c.h.b16 %v4189
        %v4551 = vunpack.c.l.b16 %v4190
        %v4552 = vunpack.c.h.b16 %v4190
        %v4553 = vunpack.c.l.b16 %v4191
        %v4554 = vunpack.c.h.b16 %v4191
        %v4555 = vunpack.c.l.b16 %v4192
        %v4556 = vunpack.c.h.b16 %v4192
        %v4557 = vunpack.c.l.b16 %v4193
        %v4558 = vunpack.c.h.b16 %v4193
        %v4559 = vunpack.c.l.b16 %v4194
        %v4560 = vunpack.c.h.b16 %v4194
        %v4561 = vunpack.c.l.b16 %v4195
        %v4562 = vunpack.c.h.b16 %v4195
        %v4563 = vunpack.c.l.b16 %v4196
        %v4564 = vunpack.c.h.b16 %v4196
        %v4565 = vunpack.c.l.b16 %v4197
        %v4566 = vunpack.c.h.b16 %v4197
        %v4567 = vunpack.c.l.b16 %v4198
        %v4568 = vunpack.c.h.b16 %v4198
        %v4569 = vunpack.c.l.b16 %v4199
        %v4570 = vunpack.c.h.b16 %v4199
        %v4571 = vunpack.c.l.b16 %v4200
        %v4572 = vunpack.c.h.b16 %v4200
        %v4573 = vunpack.c.l.b16 %v4201
        %v4574 = vunpack.c.h.b16 %v4201
        %v4575 = vunpack.c.l.b16 %v4202
        %v4576 = vunpack.c.h.b16 %v4202
        %v4577 = vunpack.c.l.b16 %v4203
        %v4578 = vunpack.c.h.b16 %v4203
        %v4579 = vunpack.c.l.b16 %v4204
        %v4580 = vunpack.c.h.b16 %v4204
        %v4581 = vunpack.c.l.b16 %v4205
        %v4582 = vunpack.c.h.b16 %v4205
        %v4583 = vunpack.c.l.b16 %v4206
        %v4584 = vunpack.c.h.b16 %v4206
        %v4585 = vunpack.c.l.b16 %v4207
        %v4586 = vunpack.c.h.b16 %v4207
        %v4587 = vunpack.c.l.b16 %v4208
        %v4588 = vunpack.c.h.b16 %v4208
        %v4589 = vunpack.c.l.b16 %v4209
        %v4590 = vunpack.c.h.b16 %v4209
        %v4591 = vunpack.c.l.b16 %v4210
        %v4592 = vunpack.c.h.b16 %v4210
        %v4593 = vunpack.c.l.b16 %v4211
        %v4594 = vunpack.c.h.b16 %v4211
        %v4595 = vunpack.c.l.b16 %v4212
        %v4596 = vunpack.c.h.b16 %v4212
        %v4597 = vunpack.c.l.b16 %v4213
        %v4598 = vunpack.c.h.b16 %v4213
        %v4599 = vunpack.c.l.b16 %v4214
        %v4600 = vunpack.c.h.b16 %v4214
        %v4601 = vunpack.c.l.b16 %v4215
        %v4602 = vunpack.c.h.b16 %v4215
        %v4603 = vunpack.c.l.b16 %v4216
        %v4604 = vunpack.c.h.b16 %v4216
        %v4605 = vunpack.c.l.b16 %v4217
        %v4606 = vunpack.c.h.b16 %v4217
        %v4607 = vunpack.c.l.b16 %v4218
        %v4608 = vunpack.c.h.b16 %v4218
        %v4609 = vunpack.c.l.b16 %v4219
        %v4610 = vunpack.c.h.b16 %v4219
        %v4611 = vunpack.c.l.b16 %v4220
        %v4612 = vunpack.c.h.b16 %v4220
        %v4613 = vunpack.c.l.b16 %v4221
        %v4614 = vunpack.c.h.b16 %v4221
        %v4615 = vunpack.c.l.b16 %v4222
        %v4616 = vunpack.c.h.b16 %v4222
        %v4617 = vunpack.c.l.b16 %v4223
        %v4618 = vunpack.c.h.b16 %v4223
        %v4619 = vunpack.c.l.b16 %v4224
        %v4620 = vunpack.c.h.b16 %v4224
        %v4621 = vunpack.c.l.b16 %v4225
        %v4622 = vunpack.c.h.b16 %v4225
        %v4623 = vunpack.c.l.b16 %v4226
        %v4624 = vunpack.c.h.b16 %v4226
        %v4625 = vunpack.c.l.b16 %v4227
        %v4626 = vunpack.c.h.b16 %v4227
        %v4627 = vunpack.c.l.b16 %v4228
        %v4628 = vunpack.c.h.b16 %v4228
        %v4629 = vunpack.c.l.b16 %v4229
        %v4630 = vunpack.c.h.b16 %v4229
        %v4631 = vunpack.c.l.b16 %v4230
        %v4632 = vunpack.c.h.b16 %v4230
        %v4633 = vunpack.c.l.b16 %v4231
        %v4634 = vunpack.c.h.b16 %v4231
        %v4635 = vunpack.c.l.b16 %v4232
        %v4636 = vunpack.c.h.b16 %v4232
        %v4637 = vunpack.c.l.b16 %v4233
        %v4638 = vunpack.c.h.b16 %v4233
        %v4639 = vunpack.c.l.b16 %v4234
        %v4640 = vunpack.c.h.b16 %v4234
        %v4641 = vpack.c.b16 %v4389, %v4385
        %v4642 = vpack.c.b16 %v4390, %v4386
        %v4643 = vpack.c.b16 %v4391, %v4387
        %v4644 = vpack.c.b16 %v4392, %v4388
        %v4645 = vpack.c.b16 %v4397, %v4393
        %v4646 = vpack.c.b16 %v4398, %v4394
        %v4647 = vpack.c.b16 %v4399, %v4395
        %v4648 = vpack.c.b16 %v4400, %v4396
        %v4649 = vpack.c.b16 %v4405, %v4401
        %v4650 = vpack.c.b16 %v4406, %v4402
        %v4651 = vpack.c.b16 %v4407, %v4403
        %v4652 = vpack.c.b16 %v4408, %v4404
        %v4653 = vpack.c.b16 %v4413, %v4409
        %v4654 = vpack.c.b16 %v4414, %v4410
        %v4655 = vpack.c.b16 %v4415, %v4411
        %v4656 = vpack.c.b16 %v4416, %v4412
        %v4657 = vpack.c.b16 %v4421, %v4417
        %v4658 = vpack.c.b16 %v4422, %v4418
        %v4659 = vpack.c.b16 %v4423, %v4419
        %v4660 = vpack.c.b16 %v4424, %v4420
        %v4661 = vpack.c.b16 %v4429, %v4425
        %v4662 = vpack.c.b16 %v4430, %v4426
        %v4663 = vpack.c.b16 %v4431, %v4427
        %v4664 = vpack.c.b16 %v4432, %v4428
        %v4665 = vpack.c.b16 %v4437, %v4433
        %v4666 = vpack.c.b16 %v4438, %v4434
        %v4667 = vpack.c.b16 %v4439, %v4435
        %v4668 = vpack.c.b16 %v4440, %v4436
        %v4669 = vpack.c.b16 %v4445, %v4441
        %v4670 = vpack.c.b16 %v4446, %v4442
        %v4671 = vpack.c.b16 %v4447, %v4443
        %v4672 = vpack.c.b16 %v4448, %v4444
        %v4673 = vpack.c.b16 %v4453, %v4449
        %v4674 = vpack.c.b16 %v4454, %v4450
        %v4675 = vpack.c.b16 %v4455, %v4451
        %v4676 = vpack.c.b16 %v4456, %v4452
        %v4677 = vpack.c.b16 %v4461, %v4457
        %v4678 = vpack.c.b16 %v4462, %v4458
        %v4679 = vpack.c.b16 %v4463, %v4459
        %v4680 = vpack.c.b16 %v4464, %v4460
        %v4681 = vpack.c.b16 %v4469, %v4465
        %v4682 = vpack.c.b16 %v4470, %v4466
        %v4683 = vpack.c.b16 %v4471, %v4467
        %v4684 = vpack.c.b16 %v4472, %v4468
        %v4685 = vpack.c.b16 %v4477, %v4473
        %v4686 = vpack.c.b16 %v4478, %v4474
        %v4687 = vpack.c.b16 %v4479, %v4475
        %v4688 = vpack.c.b16 %v4480, %v4476
        %v4689 = vpack.c.b16 %v4485, %v4481
        %v4690 = vpack.c.b16 %v4486, %v4482
        %v4691 = vpack.c.b16 %v4487, %v4483
        %v4692 = vpack.c.b16 %v4488, %v4484
        %v4693 = vpack.c.b16 %v4493, %v4489
        %v4694 = vpack.c.b16 %v4494, %v4490
        %v4695 = vpack.c.b16 %v4495, %v4491
        %v4696 = vpack.c.b16 %v4496, %v4492
        %v4697 = vpack.c.b16 %v4501, %v4497
        %v4698 = vpack.c.b16 %v4502, %v4498
        %v4699 = vpack.c.b16 %v4503, %v4499
        %v4700 = vpack.c.b16 %v4504, %v4500
        %v4701 = vpack.c.b16 %v4509, %v4505
        %v4702 = vpack.c.b16 %v4510, %v4506
        %v4703 = vpack.c.b16 %v4511, %v4507
        %v4704 = vpack.c.b16 %v4512, %v4508
        %v4705 = vpack.c.b16 %v4517, %v4513
        %v4706 = vpack.c.b16 %v4518, %v4514
        %v4707 = vpack.c.b16 %v4519, %v4515
        %v4708 = vpack.c.b16 %v4520, %v4516
        %v4709 = vpack.c.b16 %v4525, %v4521
        %v4710 = vpack.c.b16 %v4526, %v4522
        %v4711 = vpack.c.b16 %v4527, %v4523
        %v4712 = vpack.c.b16 %v4528, %v4524
        %v4713 = vpack.c.b16 %v4533, %v4529
        %v4714 = vpack.c.b16 %v4534, %v4530
        %v4715 = vpack.c.b16 %v4535, %v4531
        %v4716 = vpack.c.b16 %v4536, %v4532
        %v4717 = vpack.c.b16 %v4541, %v4537
        %v4718 = vpack.c.b16 %v4542, %v4538
        %v4719 = vpack.c.b16 %v4543, %v4539
        %v4720 = vpack.c.b16 %v4544, %v4540
        %v4721 = vpack.c.b16 %v4549, %v4545
        %v4722 = vpack.c.b16 %v4550, %v4546
        %v4723 = vpack.c.b16 %v4551, %v4547
        %v4724 = vpack.c.b16 %v4552, %v4548
        %v4725 = vpack.c.b16 %v4557, %v4553
        %v4726 = vpack.c.b16 %v4558, %v4554
        %v4727 = vpack.c.b16 %v4559, %v4555
        %v4728 = vpack.c.b16 %v4560, %v4556
        %v4729 = vpack.c.b16 %v4565, %v4561
        %v4730 = vpack.c.b16 %v4566, %v4562
        %v4731 = vpack.c.b16 %v4567, %v4563
        %v4732 = vpack.c.b16 %v4568, %v4564
        %v4733 = vpack.c.b16 %v4573, %v4569
        %v4734 = vpack.c.b16 %v4574, %v4570
        %v4735 = vpack.c.b16 %v4575, %v4571
        %v4736 = vpack.c.b16 %v4576, %v4572
        %v4737 = vpack.c.b16 %v4581, %v4577
        %v4738 = vpack.c.b16 %v4582, %v4578
        %v4739 = vpack.c.b16 %v4583, %v4579
        %v4740 = vpack.c.b16 %v4584, %v4580
        %v4741 = vpack.c.b16 %v4589, %v4585
        %v4742 = vpack.c.b16 %v4590, %v4586
        %v4743 = vpack.c.b16 %v4591, %v4587
        %v4744 = vpack.c.b16 %v4592, %v4588
        %v4745 = vpack.c.b16 %v4597, %v4593
        %v4746 = vpack.c.b16 %v4598, %v4594
        %v4747 = vpack.c.b16 %v4599, %v4595
        %v4748 = vpack.c.b16 %v4600, %v4596
        %v4749 = vpack.c.b16 %v4605, %v4601
        %v4750 = vpack.c.b16 %v4606, %v4602
        %v4751 = vpack.c.b16 %v4607, %v4603
        %v4752 = vpack.c.b16 %v4608, %v4604
        %v4753 = vpack.c.b16 %v4613, %v4609
        %v4754 = vpack.c.b16 %v4614, %v4610
        %v4755 = vpack.c.b16 %v4615, %v4611
        %v4756 = vpack.c.b16 %v4616, %v4612
        %v4757 = vpack.c.b16 %v4621, %v4617
        %v4758 = vpack.c.b16 %v4622, %v4618
        %v4759 = vpack.c.b16 %v4623, %v4619
        %v4760 = vpack.c.b16 %v4624, %v4620
        %v4761 = vpack.c.b16 %v4629, %v4625
        %v4762 = vpack.c.b16 %v4630, %v4626
        %v4763 = vpack.c.b16 %v4631, %v4627
        %v4764 = vpack.c.b16 %v4632, %v4628
        %v4765 = vpack.c.b16 %v4637, %v4633
        %v4766 = vpack.c.b16 %v4638, %v4634
        %v4767 = vpack.c.b16 %v4639, %v4635
        %v4768 = vpack.c.b16 %v4640, %v4636
        %4897 = vmatprep.subr.bf16.mxu0 %v4642
        %4898 = vmatpush1.bf16.msra.mxu0 %v4641
        %4899 = vmatprep.subr.bf16.mxu0 %v4646
        %4900 = vmatpush1.bf16.msra.mxu0 %v4645
        %4901 = vmatprep.subr.bf16.mxu0 %v4650
        %4902 = vmatpush1.bf16.msra.mxu0 %v4649
        %4903 = vmatprep.subr.bf16.mxu0 %v4654
        %4904 = vmatpush1.bf16.msra.mxu0 %v4653
        %4905 = vmatprep.subr.bf16.mxu0 %v4658
        %4906 = vmatpush1.bf16.msra.mxu0 %v4657
        %4907 = vmatprep.subr.bf16.mxu0 %v4662
        %4908 = vmatpush1.bf16.msra.mxu0 %v4661
        %4909 = vmatprep.subr.bf16.mxu0 %v4666
        %4910 = vmatpush1.bf16.msra.mxu0 %v4665
        %4911 = vmatprep.subr.bf16.mxu0 %v4670
        %4912 = vmatpush1.bf16.msra.mxu0 %v4669
        %4913 = vmatprep.subr.bf16.mxu0 %v4674
        %4914 = vmatpush1.bf16.msra.mxu0 %v4673
        %4915 = vmatprep.subr.bf16.mxu0 %v4678
        %4916 = vmatpush1.bf16.msra.mxu0 %v4677
        %4917 = vmatprep.subr.bf16.mxu0 %v4682
        %4918 = vmatpush1.bf16.msra.mxu0 %v4681
        %4919 = vmatprep.subr.bf16.mxu0 %v4686
        %4920 = vmatpush1.bf16.msra.mxu0 %v4685
        %4921 = vmatprep.subr.bf16.mxu0 %v4690
        %4922 = vmatpush1.bf16.msra.mxu0 %v4689
        %4923 = vmatprep.subr.bf16.mxu0 %v4694
        %4924 = vmatpush1.bf16.msra.mxu0 %v4693
        %4925 = vmatprep.subr.bf16.mxu0 %v4698
        %4926 = vmatpush1.bf16.msra.mxu0 %v4697
        %4927 = vmatprep.subr.bf16.mxu0 %v4702
        %4928 = vmatpush1.bf16.msra.mxu0 %v4701
        %4929 = vmatprep.mubr.bf16.mxu0 %v282
        %4930 = vmatmul.mubr.bf16.gmra.mrb[0].mxu0 %v281
        %v4931 = vpop.f32.mrb[0].mxu0
        %v4932 = vadd.f32 %v4240, %v4931
        %v4933 = vpop.f32.mrb[0].mxu0
        %v4934 = vadd.f32 %v4244, %v4933
        %v4935 = vpop.f32.mrb[0].mxu0
        %v4936 = vpop.f32.mrb[0].mxu0
        %4937 = vdwg.mxu0
        %4938 = vmatprep.subr.bf16.mxu0 %v4706
        %4939 = vmatpush1.bf16.msra.mxu0 %v4705
        %4940 = vmatprep.subr.bf16.mxu0 %v4710
        %4941 = vmatpush1.bf16.msra.mxu0 %v4709
        %4942 = vmatprep.subr.bf16.mxu0 %v4714
        %4943 = vmatpush1.bf16.msra.mxu0 %v4713
        %4944 = vmatprep.subr.bf16.mxu0 %v4718
        %4945 = vmatpush1.bf16.msra.mxu0 %v4717
        %4946 = vmatprep.subr.bf16.mxu0 %v4722
        %4947 = vmatpush1.bf16.msra.mxu0 %v4721
        %4948 = vmatprep.subr.bf16.mxu0 %v4726
        %4949 = vmatpush1.bf16.msra.mxu0 %v4725
        %4950 = vmatprep.subr.bf16.mxu0 %v4730
        %4951 = vmatpush1.bf16.msra.mxu0 %v4729
        %4952 = vmatprep.subr.bf16.mxu0 %v4734
        %4953 = vmatpush1.bf16.msra.mxu0 %v4733
        %4954 = vmatprep.subr.bf16.mxu0 %v4738
        %4955 = vmatpush1.bf16.msra.mxu0 %v4737
        %4956 = vmatprep.subr.bf16.mxu0 %v4742
        %4957 = vmatpush1.bf16.msra.mxu0 %v4741
        %4958 = vmatprep.subr.bf16.mxu0 %v4746
        %4959 = vmatpush1.bf16.msra.mxu0 %v4745
        %4960 = vmatprep.subr.bf16.mxu0 %v4750
        %4961 = vmatpush1.bf16.msra.mxu0 %v4749
        %4962 = vmatprep.subr.bf16.mxu0 %v4754
        %4963 = vmatpush1.bf16.msra.mxu0 %v4753
        %4964 = vmatprep.subr.bf16.mxu0 %v4758
        %4965 = vmatpush1.bf16.msra.mxu0 %v4757
        %4966 = vmatprep.subr.bf16.mxu0 %v4762
        %4967 = vmatpush1.bf16.msra.mxu0 %v4761
        %4968 = vmatprep.subr.bf16.mxu0 %v4766
        %4969 = vmatpush1.bf16.msra.mxu0 %v4765
        %4970 = vmatprep.mubr.bf16.mxu0 %v284
        %4971 = vmatmul.mubr.bf16.gmra.mrb[0].mxu0 %v283
        %v4972 = vpop.f32.mrb[0].mxu0
        %v4973 = vadd.f32 %v4932, %v4972
        %v4974 = vpop.f32.mrb[0].mxu0
        %v4975 = vadd.f32 %v4934, %v4974
        %v4976 = vpop.f32.mrb[0].mxu0
        %v4977 = vpop.f32.mrb[0].mxu0
        %4978 = vdwg.mxu0
        %4979 = vmatprep.subr.bf16.mxu0 %v4644
        %4980 = vmatpush1.bf16.msra.mxu0 %v4643
        %4981 = vmatprep.subr.bf16.mxu0 %v4648
        %4982 = vmatpush1.bf16.msra.mxu0 %v4647
        %4983 = vmatprep.subr.bf16.mxu0 %v4652
        %4984 = vmatpush1.bf16.msra.mxu0 %v4651
        %4985 = vmatprep.subr.bf16.mxu0 %v4656
        %4986 = vmatpush1.bf16.msra.mxu0 %v4655
        %4987 = vmatprep.subr.bf16.mxu0 %v4660
        %4988 = vmatpush1.bf16.msra.mxu0 %v4659
        %4989 = vmatprep.subr.bf16.mxu0 %v4664
        %4990 = vmatpush1.bf16.msra.mxu0 %v4663
        %4991 = vmatprep.subr.bf16.mxu0 %v4668
        %4992 = vmatpush1.bf16.msra.mxu0 %v4667
        %4993 = vmatprep.subr.bf16.mxu0 %v4672
        %4994 = vmatpush1.bf16.msra.mxu0 %v4671
        %4995 = vmatprep.subr.bf16.mxu0 %v4676
        %4996 = vmatpush1.bf16.msra.mxu0 %v4675
        %4997 = vmatprep.subr.bf16.mxu0 %v4680
        %4998 = vmatpush1.bf16.msra.mxu0 %v4679
        %4999 = vmatprep.subr.bf16.mxu0 %v4684
        %5000 = vmatpush1.bf16.msra.mxu0 %v4683
        %5001 = vmatprep.subr.bf16.mxu0 %v4688
        %5002 = vmatpush1.bf16.msra.mxu0 %v4687
        %5003 = vmatprep.subr.bf16.mxu0 %v4692
        %5004 = vmatpush1.bf16.msra.mxu0 %v4691
        %5005 = vmatprep.subr.bf16.mxu0 %v4696
        %5006 = vmatpush1.bf16.msra.mxu0 %v4695
        %5007 = vmatprep.subr.bf16.mxu0 %v4700
        %5008 = vmatpush1.bf16.msra.mxu0 %v4699
        %5009 = vmatprep.subr.bf16.mxu0 %v4704
        %5010 = vmatpush1.bf16.msra.mxu0 %v4703
        %5011 = vmatprep.mubr.bf16.mxu0 %v282
        %5012 = vmatmul.mubr.bf16.gmra.mrb[0].mxu0 %v281
        %v5013 = vpop.f32.mrb[0].mxu0
        %v5014 = vadd.f32 %v4248, %v5013
        %v5015 = vpop.f32.mrb[0].mxu0
        %v5016 = vadd.f32 %v4252, %v5015
        %v5017 = vpop.f32.mrb[0].mxu0
        %v5018 = vpop.f32.mrb[0].mxu0
        %5019 = vdwg.mxu0
        %5020 = vmatprep.subr.bf16.mxu0 %v4708
        %5021 = vmatpush1.bf16.msra.mxu0 %v4707
        %5022 = vmatprep.subr.bf16.mxu0 %v4712
        %5023 = vmatpush1.bf16.msra.mxu0 %v4711
        %5024 = vmatprep.subr.bf16.mxu0 %v4716
        %5025 = vmatpush1.bf16.msra.mxu0 %v4715
        %5026 = vmatprep.subr.bf16.mxu0 %v4720
        %5027 = vmatpush1.bf16.msra.mxu0 %v4719
        %5028 = vmatprep.subr.bf16.mxu0 %v4724
        %5029 = vmatpush1.bf16.msra.mxu0 %v4723
        %5030 = vmatprep.subr.bf16.mxu0 %v4728
        %5031 = vmatpush1.bf16.msra.mxu0 %v4727
        %5032 = vmatprep.subr.bf16.mxu0 %v4732
        %5033 = vmatpush1.bf16.msra.mxu0 %v4731
        %5034 = vmatprep.subr.bf16.mxu0 %v4736
        %5035 = vmatpush1.bf16.msra.mxu0 %v4735
        %5036 = vmatprep.subr.bf16.mxu0 %v4740
        %5037 = vmatpush1.bf16.msra.mxu0 %v4739
        %5038 = vmatprep.subr.bf16.mxu0 %v4744
        %5039 = vmatpush1.bf16.msra.mxu0 %v4743
        %5040 = vmatprep.subr.bf16.mxu0 %v4748
        %5041 = vmatpush1.bf16.msra.mxu0 %v4747
        %5042 = vmatprep.subr.bf16.mxu0 %v4752
        %5043 = vmatpush1.bf16.msra.mxu0 %v4751
        %5044 = vmatprep.subr.bf16.mxu0 %v4756
        %5045 = vmatpush1.bf16.msra.mxu0 %v4755
        %5046 = vmatprep.subr.bf16.mxu0 %v4760
        %5047 = vmatpush1.bf16.msra.mxu0 %v4759
        %5048 = vmatprep.subr.bf16.mxu0 %v4764
        %5049 = vmatpush1.bf16.msra.mxu0 %v4763
        %5050 = vmatprep.subr.bf16.mxu0 %v4768
        %5051 = vmatpush1.bf16.msra.mxu0 %v4767
        %5052 = vmatprep.mubr.bf16.mxu0 %v284
        %5053 = vmatmul.mubr.bf16.gmra.mrb[0].mxu0 %v283
        %v5054 = vpop.f32.mrb[0].mxu0
        %v5055 = vadd.f32 %v5014, %v5054
        %v5056 = vpop.f32.mrb[0].mxu0
        %v5057 = vadd.f32 %v5016, %v5056
        %v5058 = vpop.f32.mrb[0].mxu0
        %v5059 = vpop.f32.mrb[0].mxu0
        %5060 = vdwg.mxu0
        %v5061 = vmax.f32 %v4973, 0.0
        %v5062 = vmax.f32 %v4975, 0.0
        %v5063 = vmax.f32 %v5055, 0.0
        %v5064 = vmax.f32 %v5057, 0.0
        %v5065 = vpack.c.bf16 %v5061, %v5061
        %v5066 = vpack.c.bf16 %v5062, %v5062
        %v5067 = vpack.c.bf16 %v5063, %v5063
        %v5068 = vpack.c.bf16 %v5064, %v5064
        %v5069 = vld [vmem:[%s3 + $0x800] sm:$0xff]
        %v5070 = vld [vmem:[%s3 + $0x808] sm:$0xff]
        %v5071 = vld [vmem:[%s3 + $0x810] sm:$0xff]
        %v5072 = vld [vmem:[%s3 + $0x818] sm:$0xff]
        %v5073 = vld [vmem:[%s3 + $0x820] sm:$0xff]
        %v5074 = vld [vmem:[%s3 + $0x828] sm:$0xff]
        %v5075 = vld [vmem:[%s3 + $0x830] sm:$0xff]
        %v5076 = vld [vmem:[%s3 + $0x838] sm:$0xff]
        %v5077 = vld [vmem:[%s3 + $0x840] sm:$0xff]
        %v5078 = vld [vmem:[%s3 + $0x848] sm:$0xff]
        %v5079 = vld [vmem:[%s3 + $0x850] sm:$0xff]
        %v5080 = vld [vmem:[%s3 + $0x858] sm:$0xff]
        %v5081 = vld [vmem:[%s3 + $0x860] sm:$0xff]
        %v5082 = vld [vmem:[%s3 + $0x868] sm:$0xff]
        %v5083 = vld [vmem:[%s3 + $0x870] sm:$0xff]
        %v5084 = vld [vmem:[%s3 + $0x878] sm:$0xff]
        %v5085 = vld [vmem:[%s3 + $0x880] sm:$0xff]
        %v5086 = vld [vmem:[%s3 + $0x888] sm:$0xff]
        %v5087 = vld [vmem:[%s3 + $0x890] sm:$0xff]
        %v5088 = vld [vmem:[%s3 + $0x898] sm:$0xff]
        %v5089 = vld [vmem:[%s3 + $0x8a0] sm:$0xff]
        %v5090 = vld [vmem:[%s3 + $0x8a8] sm:$0xff]
        %v5091 = vld [vmem:[%s3 + $0x8b0] sm:$0xff]
        %v5092 = vld [vmem:[%s3 + $0x8b8] sm:$0xff]
        %v5093 = vld [vmem:[%s3 + $0x8c0] sm:$0xff]
        %v5094 = vld [vmem:[%s3 + $0x8c8] sm:$0xff]
        %v5095 = vld [vmem:[%s3 + $0x8d0] sm:$0xff]
        %v5096 = vld [vmem:[%s3 + $0x8d8] sm:$0xff]
        %v5097 = vld [vmem:[%s3 + $0x8e0] sm:$0xff]
        %v5098 = vld [vmem:[%s3 + $0x8e8] sm:$0xff]
        %v5099 = vld [vmem:[%s3 + $0x8f0] sm:$0xff]
        %v5100 = vld [vmem:[%s3 + $0x8f8] sm:$0xff]
        %v5101 = vld [vmem:[%s3 + $0x900] sm:$0xff]
        %v5102 = vld [vmem:[%s3 + $0x908] sm:$0xff]
        %v5103 = vld [vmem:[%s3 + $0x910] sm:$0xff]
        %v5104 = vld [vmem:[%s3 + $0x918] sm:$0xff]
        %v5105 = vld [vmem:[%s3 + $0x920] sm:$0xff]
        %v5106 = vld [vmem:[%s3 + $0x928] sm:$0xff]
        %v5107 = vld [vmem:[%s3 + $0x930] sm:$0xff]
        %v5108 = vld [vmem:[%s3 + $0x938] sm:$0xff]
        %v5109 = vld [vmem:[%s3 + $0x940] sm:$0xff]
        %v5110 = vld [vmem:[%s3 + $0x948] sm:$0xff]
        %v5111 = vld [vmem:[%s3 + $0x950] sm:$0xff]
        %v5112 = vld [vmem:[%s3 + $0x958] sm:$0xff]
        %v5113 = vld [vmem:[%s3 + $0x960] sm:$0xff]
        %v5114 = vld [vmem:[%s3 + $0x968] sm:$0xff]
        %v5115 = vld [vmem:[%s3 + $0x970] sm:$0xff]
        %v5116 = vld [vmem:[%s3 + $0x978] sm:$0xff]
        %v5117 = vld [vmem:[%s3 + $0x980] sm:$0xff]
        %v5118 = vld [vmem:[%s3 + $0x988] sm:$0xff]
        %v5119 = vld [vmem:[%s3 + $0x990] sm:$0xff]
        %v5120 = vld [vmem:[%s3 + $0x998] sm:$0xff]
        %v5121 = vld [vmem:[%s3 + $0x9a0] sm:$0xff]
        %v5122 = vld [vmem:[%s3 + $0x9a8] sm:$0xff]
        %v5123 = vld [vmem:[%s3 + $0x9b0] sm:$0xff]
        %v5124 = vld [vmem:[%s3 + $0x9b8] sm:$0xff]
        %v5125 = vld [vmem:[%s3 + $0x9c0] sm:$0xff]
        %v5126 = vld [vmem:[%s3 + $0x9c8] sm:$0xff]
        %v5127 = vld [vmem:[%s3 + $0x9d0] sm:$0xff]
        %v5128 = vld [vmem:[%s3 + $0x9d8] sm:$0xff]
        %v5129 = vld [vmem:[%s3 + $0x9e0] sm:$0xff]
        %v5130 = vld [vmem:[%s3 + $0x9e8] sm:$0xff]
        %v5131 = vld [vmem:[%s3 + $0x9f0] sm:$0xff]
        %v5132 = vld [vmem:[%s3 + $0x9f8] sm:$0xff]
        %v5133 = vld [vmem:[%s3 + $0xa00] sm:$0xff]
        %v5134 = vld [vmem:[%s3 + $0xa08] sm:$0xff]
        %v5135 = vld [vmem:[%s3 + $0xa10] sm:$0xff]
        %v5136 = vld [vmem:[%s3 + $0xa18] sm:$0xff]
        %v5137 = vld [vmem:[%s3 + $0xa20] sm:$0xff]
        %v5138 = vld [vmem:[%s3 + $0xa28] sm:$0xff]
        %v5139 = vld [vmem:[%s3 + $0xa30] sm:$0xff]
        %v5140 = vld [vmem:[%s3 + $0xa38] sm:$0xff]
        %v5141 = vld [vmem:[%s3 + $0xa40] sm:$0xff]
        %v5142 = vld [vmem:[%s3 + $0xa48] sm:$0xff]
        %v5143 = vld [vmem:[%s3 + $0xa50] sm:$0xff]
        %v5144 = vld [vmem:[%s3 + $0xa58] sm:$0xff]
        %v5145 = vld [vmem:[%s3 + $0xa60] sm:$0xff]
        %v5146 = vld [vmem:[%s3 + $0xa68] sm:$0xff]
        %v5147 = vld [vmem:[%s3 + $0xa70] sm:$0xff]
        %v5148 = vld [vmem:[%s3 + $0xa78] sm:$0xff]
        %v5149 = vld [vmem:[%s3 + $0xa80] sm:$0xff]
        %v5150 = vld [vmem:[%s3 + $0xa88] sm:$0xff]
        %v5151 = vld [vmem:[%s3 + $0xa90] sm:$0xff]
        %v5152 = vld [vmem:[%s3 + $0xa98] sm:$0xff]
        %v5153 = vld [vmem:[%s3 + $0xaa0] sm:$0xff]
        %v5154 = vld [vmem:[%s3 + $0xaa8] sm:$0xff]
        %v5155 = vld [vmem:[%s3 + $0xab0] sm:$0xff]
        %v5156 = vld [vmem:[%s3 + $0xab8] sm:$0xff]
        %v5157 = vld [vmem:[%s3 + $0xac0] sm:$0xff]
        %v5158 = vld [vmem:[%s3 + $0xac8] sm:$0xff]
        %v5159 = vld [vmem:[%s3 + $0xad0] sm:$0xff]
        %v5160 = vld [vmem:[%s3 + $0xad8] sm:$0xff]
        %v5161 = vld [vmem:[%s3 + $0xae0] sm:$0xff]
        %v5162 = vld [vmem:[%s3 + $0xae8] sm:$0xff]
        %v5163 = vld [vmem:[%s3 + $0xaf0] sm:$0xff]
        %v5164 = vld [vmem:[%s3 + $0xaf8] sm:$0xff]
        %v5165 = vld [vmem:[%s3 + $0xb00] sm:$0xff]
        %v5166 = vld [vmem:[%s3 + $0xb08] sm:$0xff]
        %v5167 = vld [vmem:[%s3 + $0xb10] sm:$0xff]
        %v5168 = vld [vmem:[%s3 + $0xb18] sm:$0xff]
        %v5169 = vld [vmem:[%s3 + $0xb20] sm:$0xff]
        %v5170 = vld [vmem:[%s3 + $0xb28] sm:$0xff]
        %v5171 = vld [vmem:[%s3 + $0xb30] sm:$0xff]
        %v5172 = vld [vmem:[%s3 + $0xb38] sm:$0xff]
        %v5173 = vld [vmem:[%s3 + $0xb40] sm:$0xff]
        %v5174 = vld [vmem:[%s3 + $0xb48] sm:$0xff]
        %v5175 = vld [vmem:[%s3 + $0xb50] sm:$0xff]
        %v5176 = vld [vmem:[%s3 + $0xb58] sm:$0xff]
        %v5177 = vld [vmem:[%s3 + $0xb60] sm:$0xff]
        %v5178 = vld [vmem:[%s3 + $0xb68] sm:$0xff]
        %v5179 = vld [vmem:[%s3 + $0xb70] sm:$0xff]
        %v5180 = vld [vmem:[%s3 + $0xb78] sm:$0xff]
        %v5181 = vld [vmem:[%s3 + $0xb80] sm:$0xff]
        %v5182 = vld [vmem:[%s3 + $0xb88] sm:$0xff]
        %v5183 = vld [vmem:[%s3 + $0xb90] sm:$0xff]
        %v5184 = vld [vmem:[%s3 + $0xb98] sm:$0xff]
        %v5185 = vld [vmem:[%s3 + $0xba0] sm:$0xff]
        %v5186 = vld [vmem:[%s3 + $0xba8] sm:$0xff]
        %v5187 = vld [vmem:[%s3 + $0xbb0] sm:$0xff]
        %v5188 = vld [vmem:[%s3 + $0xbb8] sm:$0xff]
        %v5189 = vld [vmem:[%s3 + $0xbc0] sm:$0xff]
        %v5190 = vld [vmem:[%s3 + $0xbc8] sm:$0xff]
        %v5191 = vld [vmem:[%s3 + $0xbd0] sm:$0xff]
        %v5192 = vld [vmem:[%s3 + $0xbd8] sm:$0xff]
        %v5193 = vld [vmem:[%s3 + $0xbe0] sm:$0xff]
        %v5194 = vld [vmem:[%s3 + $0xbe8] sm:$0xff]
        %v5195 = vld [vmem:[%s3 + $0xbf0] sm:$0xff]
        %v5196 = vld [vmem:[%s3 + $0xbf8] sm:$0xff]
        %v5325 = vunpack.c.l.b16 %v5069
        %v5326 = vunpack.c.h.b16 %v5069
        %v5327 = vunpack.c.l.b16 %v5070
        %v5328 = vunpack.c.h.b16 %v5070
        %v5329 = vunpack.c.l.b16 %v5071
        %v5330 = vunpack.c.h.b16 %v5071
        %v5331 = vunpack.c.l.b16 %v5072
        %v5332 = vunpack.c.h.b16 %v5072
        %v5333 = vunpack.c.l.b16 %v5073
        %v5334 = vunpack.c.h.b16 %v5073
        %v5335 = vunpack.c.l.b16 %v5074
        %v5336 = vunpack.c.h.b16 %v5074
        %v5337 = vunpack.c.l.b16 %v5075
        %v5338 = vunpack.c.h.b16 %v5075
        %v5339 = vunpack.c.l.b16 %v5076
        %v5340 = vunpack.c.h.b16 %v5076
        %v5341 = vunpack.c.l.b16 %v5077
        %v5342 = vunpack.c.h.b16 %v5077
        %v5343 = vunpack.c.l.b16 %v5078
        %v5344 = vunpack.c.h.b16 %v5078
        %v5345 = vunpack.c.l.b16 %v5079
        %v5346 = vunpack.c.h.b16 %v5079
        %v5347 = vunpack.c.l.b16 %v5080
        %v5348 = vunpack.c.h.b16 %v5080
        %v5349 = vunpack.c.l.b16 %v5081
        %v5350 = vunpack.c.h.b16 %v5081
        %v5351 = vunpack.c.l.b16 %v5082
        %v5352 = vunpack.c.h.b16 %v5082
        %v5353 = vunpack.c.l.b16 %v5083
        %v5354 = vunpack.c.h.b16 %v5083
        %v5355 = vunpack.c.l.b16 %v5084
        %v5356 = vunpack.c.h.b16 %v5084
        %v5357 = vunpack.c.l.b16 %v5085
        %v5358 = vunpack.c.h.b16 %v5085
        %v5359 = vunpack.c.l.b16 %v5086
        %v5360 = vunpack.c.h.b16 %v5086
        %v5361 = vunpack.c.l.b16 %v5087
        %v5362 = vunpack.c.h.b16 %v5087
        %v5363 = vunpack.c.l.b16 %v5088
        %v5364 = vunpack.c.h.b16 %v5088
        %v5365 = vunpack.c.l.b16 %v5089
        %v5366 = vunpack.c.h.b16 %v5089
        %v5367 = vunpack.c.l.b16 %v5090
        %v5368 = vunpack.c.h.b16 %v5090
        %v5369 = vunpack.c.l.b16 %v5091
        %v5370 = vunpack.c.h.b16 %v5091
        %v5371 = vunpack.c.l.b16 %v5092
        %v5372 = vunpack.c.h.b16 %v5092
        %v5373 = vunpack.c.l.b16 %v5093
        %v5374 = vunpack.c.h.b16 %v5093
        %v5375 = vunpack.c.l.b16 %v5094
        %v5376 = vunpack.c.h.b16 %v5094
        %v5377 = vunpack.c.l.b16 %v5095
        %v5378 = vunpack.c.h.b16 %v5095
        %v5379 = vunpack.c.l.b16 %v5096
        %v5380 = vunpack.c.h.b16 %v5096
        %v5381 = vunpack.c.l.b16 %v5097
        %v5382 = vunpack.c.h.b16 %v5097
        %v5383 = vunpack.c.l.b16 %v5098
        %v5384 = vunpack.c.h.b16 %v5098
        %v5385 = vunpack.c.l.b16 %v5099
        %v5386 = vunpack.c.h.b16 %v5099
        %v5387 = vunpack.c.l.b16 %v5100
        %v5388 = vunpack.c.h.b16 %v5100
        %v5389 = vunpack.c.l.b16 %v5101
        %v5390 = vunpack.c.h.b16 %v5101
        %v5391 = vunpack.c.l.b16 %v5102
        %v5392 = vunpack.c.h.b16 %v5102
        %v5393 = vunpack.c.l.b16 %v5103
        %v5394 = vunpack.c.h.b16 %v5103
        %v5395 = vunpack.c.l.b16 %v5104
        %v5396 = vunpack.c.h.b16 %v5104
        %v5397 = vunpack.c.l.b16 %v5105
        %v5398 = vunpack.c.h.b16 %v5105
        %v5399 = vunpack.c.l.b16 %v5106
        %v5400 = vunpack.c.h.b16 %v5106
        %v5401 = vunpack.c.l.b16 %v5107
        %v5402 = vunpack.c.h.b16 %v5107
        %v5403 = vunpack.c.l.b16 %v5108
        %v5404 = vunpack.c.h.b16 %v5108
        %v5405 = vunpack.c.l.b16 %v5109
        %v5406 = vunpack.c.h.b16 %v5109
        %v5407 = vunpack.c.l.b16 %v5110
        %v5408 = vunpack.c.h.b16 %v5110
        %v5409 = vunpack.c.l.b16 %v5111
        %v5410 = vunpack.c.h.b16 %v5111
        %v5411 = vunpack.c.l.b16 %v5112
        %v5412 = vunpack.c.h.b16 %v5112
        %v5413 = vunpack.c.l.b16 %v5113
        %v5414 = vunpack.c.h.b16 %v5113
        %v5415 = vunpack.c.l.b16 %v5114
        %v5416 = vunpack.c.h.b16 %v5114
        %v5417 = vunpack.c.l.b16 %v5115
        %v5418 = vunpack.c.h.b16 %v5115
        %v5419 = vunpack.c.l.b16 %v5116
        %v5420 = vunpack.c.h.b16 %v5116
        %v5421 = vunpack.c.l.b16 %v5117
        %v5422 = vunpack.c.h.b16 %v5117
        %v5423 = vunpack.c.l.b16 %v5118
        %v5424 = vunpack.c.h.b16 %v5118
        %v5425 = vunpack.c.l.b16 %v5119
        %v5426 = vunpack.c.h.b16 %v5119
        %v5427 = vunpack.c.l.b16 %v5120
        %v5428 = vunpack.c.h.b16 %v5120
        %v5429 = vunpack.c.l.b16 %v5121
        %v5430 = vunpack.c.h.b16 %v5121
        %v5431 = vunpack.c.l.b16 %v5122
        %v5432 = vunpack.c.h.b16 %v5122
        %v5433 = vunpack.c.l.b16 %v5123
        %v5434 = vunpack.c.h.b16 %v5123
        %v5435 = vunpack.c.l.b16 %v5124
        %v5436 = vunpack.c.h.b16 %v5124
        %v5437 = vunpack.c.l.b16 %v5125
        %v5438 = vunpack.c.h.b16 %v5125
        %v5439 = vunpack.c.l.b16 %v5126
        %v5440 = vunpack.c.h.b16 %v5126
        %v5441 = vunpack.c.l.b16 %v5127
        %v5442 = vunpack.c.h.b16 %v5127
        %v5443 = vunpack.c.l.b16 %v5128
        %v5444 = vunpack.c.h.b16 %v5128
        %v5445 = vunpack.c.l.b16 %v5129
        %v5446 = vunpack.c.h.b16 %v5129
        %v5447 = vunpack.c.l.b16 %v5130
        %v5448 = vunpack.c.h.b16 %v5130
        %v5449 = vunpack.c.l.b16 %v5131
        %v5450 = vunpack.c.h.b16 %v5131
        %v5451 = vunpack.c.l.b16 %v5132
        %v5452 = vunpack.c.h.b16 %v5132
        %v5453 = vunpack.c.l.b16 %v5133
        %v5454 = vunpack.c.h.b16 %v5133
        %v5455 = vunpack.c.l.b16 %v5134
        %v5456 = vunpack.c.h.b16 %v5134
        %v5457 = vunpack.c.l.b16 %v5135
        %v5458 = vunpack.c.h.b16 %v5135
        %v5459 = vunpack.c.l.b16 %v5136
        %v5460 = vunpack.c.h.b16 %v5136
        %v5461 = vunpack.c.l.b16 %v5137
        %v5462 = vunpack.c.h.b16 %v5137
        %v5463 = vunpack.c.l.b16 %v5138
        %v5464 = vunpack.c.h.b16 %v5138
        %v5465 = vunpack.c.l.b16 %v5139
        %v5466 = vunpack.c.h.b16 %v5139
        %v5467 = vunpack.c.l.b16 %v5140
        %v5468 = vunpack.c.h.b16 %v5140
        %v5469 = vunpack.c.l.b16 %v5141
        %v5470 = vunpack.c.h.b16 %v5141
        %v5471 = vunpack.c.l.b16 %v5142
        %v5472 = vunpack.c.h.b16 %v5142
        %v5473 = vunpack.c.l.b16 %v5143
        %v5474 = vunpack.c.h.b16 %v5143
        %v5475 = vunpack.c.l.b16 %v5144
        %v5476 = vunpack.c.h.b16 %v5144
        %v5477 = vunpack.c.l.b16 %v5145
        %v5478 = vunpack.c.h.b16 %v5145
        %v5479 = vunpack.c.l.b16 %v5146
        %v5480 = vunpack.c.h.b16 %v5146
        %v5481 = vunpack.c.l.b16 %v5147
        %v5482 = vunpack.c.h.b16 %v5147
        %v5483 = vunpack.c.l.b16 %v5148
        %v5484 = vunpack.c.h.b16 %v5148
        %v5485 = vunpack.c.l.b16 %v5149
        %v5486 = vunpack.c.h.b16 %v5149
        %v5487 = vunpack.c.l.b16 %v5150
        %v5488 = vunpack.c.h.b16 %v5150
        %v5489 = vunpack.c.l.b16 %v5151
        %v5490 = vunpack.c.h.b16 %v5151
        %v5491 = vunpack.c.l.b16 %v5152
        %v5492 = vunpack.c.h.b16 %v5152
        %v5493 = vunpack.c.l.b16 %v5153
        %v5494 = vunpack.c.h.b16 %v5153
        %v5495 = vunpack.c.l.b16 %v5154
        %v5496 = vunpack.c.h.b16 %v5154
        %v5497 = vunpack.c.l.b16 %v5155
        %v5498 = vunpack.c.h.b16 %v5155
        %v5499 = vunpack.c.l.b16 %v5156
        %v5500 = vunpack.c.h.b16 %v5156
        %v5501 = vunpack.c.l.b16 %v5157
        %v5502 = vunpack.c.h.b16 %v5157
        %v5503 = vunpack.c.l.b16 %v5158
        %v5504 = vunpack.c.h.b16 %v5158
        %v5505 = vunpack.c.l.b16 %v5159
        %v5506 = vunpack.c.h.b16 %v5159
        %v5507 = vunpack.c.l.b16 %v5160
        %v5508 = vunpack.c.h.b16 %v5160
        %v5509 = vunpack.c.l.b16 %v5161
        %v5510 = vunpack.c.h.b16 %v5161
        %v5511 = vunpack.c.l.b16 %v5162
        %v5512 = vunpack.c.h.b16 %v5162
        %v5513 = vunpack.c.l.b16 %v5163
        %v5514 = vunpack.c.h.b16 %v5163
        %v5515 = vunpack.c.l.b16 %v5164
        %v5516 = vunpack.c.h.b16 %v5164
        %v5517 = vunpack.c.l.b16 %v5165
        %v5518 = vunpack.c.h.b16 %v5165
        %v5519 = vunpack.c.l.b16 %v5166
        %v5520 = vunpack.c.h.b16 %v5166
        %v5521 = vunpack.c.l.b16 %v5167
        %v5522 = vunpack.c.h.b16 %v5167
        %v5523 = vunpack.c.l.b16 %v5168
        %v5524 = vunpack.c.h.b16 %v5168
        %v5525 = vunpack.c.l.b16 %v5169
        %v5526 = vunpack.c.h.b16 %v5169
        %v5527 = vunpack.c.l.b16 %v5170
        %v5528 = vunpack.c.h.b16 %v5170
        %v5529 = vunpack.c.l.b16 %v5171
        %v5530 = vunpack.c.h.b16 %v5171
        %v5531 = vunpack.c.l.b16 %v5172
        %v5532 = vunpack.c.h.b16 %v5172
        %v5533 = vunpack.c.l.b16 %v5173
        %v5534 = vunpack.c.h.b16 %v5173
        %v5535 = vunpack.c.l.b16 %v5174
        %v5536 = vunpack.c.h.b16 %v5174
        %v5537 = vunpack.c.l.b16 %v5175
        %v5538 = vunpack.c.h.b16 %v5175
        %v5539 = vunpack.c.l.b16 %v5176
        %v5540 = vunpack.c.h.b16 %v5176
        %v5541 = vunpack.c.l.b16 %v5177
        %v5542 = vunpack.c.h.b16 %v5177
        %v5543 = vunpack.c.l.b16 %v5178
        %v5544 = vunpack.c.h.b16 %v5178
        %v5545 = vunpack.c.l.b16 %v5179
        %v5546 = vunpack.c.h.b16 %v5179
        %v5547 = vunpack.c.l.b16 %v5180
        %v5548 = vunpack.c.h.b16 %v5180
        %v5549 = vunpack.c.l.b16 %v5181
        %v5550 = vunpack.c.h.b16 %v5181
        %v5551 = vunpack.c.l.b16 %v5182
        %v5552 = vunpack.c.h.b16 %v5182
        %v5553 = vunpack.c.l.b16 %v5183
        %v5554 = vunpack.c.h.b16 %v5183
        %v5555 = vunpack.c.l.b16 %v5184
        %v5556 = vunpack.c.h.b16 %v5184
        %v5557 = vunpack.c.l.b16 %v5185
        %v5558 = vunpack.c.h.b16 %v5185
        %v5559 = vunpack.c.l.b16 %v5186
        %v5560 = vunpack.c.h.b16 %v5186
        %v5561 = vunpack.c.l.b16 %v5187
        %v5562 = vunpack.c.h.b16 %v5187
        %v5563 = vunpack.c.l.b16 %v5188
        %v5564 = vunpack.c.h.b16 %v5188
        %v5565 = vunpack.c.l.b16 %v5189
        %v5566 = vunpack.c.h.b16 %v5189
        %v5567 = vunpack.c.l.b16 %v5190
        %v5568 = vunpack.c.h.b16 %v5190
        %v5569 = vunpack.c.l.b16 %v5191
        %v5570 = vunpack.c.h.b16 %v5191
        %v5571 = vunpack.c.l.b16 %v5192
        %v5572 = vunpack.c.h.b16 %v5192
        %v5573 = vunpack.c.l.b16 %v5193
        %v5574 = vunpack.c.h.b16 %v5193
        %v5575 = vunpack.c.l.b16 %v5194
        %v5576 = vunpack.c.h.b16 %v5194
        %v5577 = vunpack.c.l.b16 %v5195
        %v5578 = vunpack.c.h.b16 %v5195
        %v5579 = vunpack.c.l.b16 %v5196
        %v5580 = vunpack.c.h.b16 %v5196
        %v5581 = vpack.c.b16 %v5329, %v5325
        %v5582 = vpack.c.b16 %v5330, %v5326
        %v5583 = vpack.c.b16 %v5331, %v5327
        %v5584 = vpack.c.b16 %v5332, %v5328
        %v5585 = vpack.c.b16 %v5337, %v5333
        %v5586 = vpack.c.b16 %v5338, %v5334
        %v5587 = vpack.c.b16 %v5339, %v5335
        %v5588 = vpack.c.b16 %v5340, %v5336
        %v5589 = vpack.c.b16 %v5345, %v5341
        %v5590 = vpack.c.b16 %v5346, %v5342
        %v5591 = vpack.c.b16 %v5347, %v5343
        %v5592 = vpack.c.b16 %v5348, %v5344
        %v5593 = vpack.c.b16 %v5353, %v5349
        %v5594 = vpack.c.b16 %v5354, %v5350
        %v5595 = vpack.c.b16 %v5355, %v5351
        %v5596 = vpack.c.b16 %v5356, %v5352
        %v5597 = vpack.c.b16 %v5361, %v5357
        %v5598 = vpack.c.b16 %v5362, %v5358
        %v5599 = vpack.c.b16 %v5363, %v5359
        %v5600 = vpack.c.b16 %v5364, %v5360
        %v5601 = vpack.c.b16 %v5369, %v5365
        %v5602 = vpack.c.b16 %v5370, %v5366
        %v5603 = vpack.c.b16 %v5371, %v5367
        %v5604 = vpack.c.b16 %v5372, %v5368
        %v5605 = vpack.c.b16 %v5377, %v5373
        %v5606 = vpack.c.b16 %v5378, %v5374
        %v5607 = vpack.c.b16 %v5379, %v5375
        %v5608 = vpack.c.b16 %v5380, %v5376
        %v5609 = vpack.c.b16 %v5385, %v5381
        %v5610 = vpack.c.b16 %v5386, %v5382
        %v5611 = vpack.c.b16 %v5387, %v5383
        %v5612 = vpack.c.b16 %v5388, %v5384
        %v5613 = vpack.c.b16 %v5393, %v5389
        %v5614 = vpack.c.b16 %v5394, %v5390
        %v5615 = vpack.c.b16 %v5395, %v5391
        %v5616 = vpack.c.b16 %v5396, %v5392
        %v5617 = vpack.c.b16 %v5401, %v5397
        %v5618 = vpack.c.b16 %v5402, %v5398
        %v5619 = vpack.c.b16 %v5403, %v5399
        %v5620 = vpack.c.b16 %v5404, %v5400
        %v5621 = vpack.c.b16 %v5409, %v5405
        %v5622 = vpack.c.b16 %v5410, %v5406
        %v5623 = vpack.c.b16 %v5411, %v5407
        %v5624 = vpack.c.b16 %v5412, %v5408
        %v5625 = vpack.c.b16 %v5417, %v5413
        %v5626 = vpack.c.b16 %v5418, %v5414
        %v5627 = vpack.c.b16 %v5419, %v5415
        %v5628 = vpack.c.b16 %v5420, %v5416
        %v5629 = vpack.c.b16 %v5425, %v5421
        %v5630 = vpack.c.b16 %v5426, %v5422
        %v5631 = vpack.c.b16 %v5427, %v5423
        %v5632 = vpack.c.b16 %v5428, %v5424
        %v5633 = vpack.c.b16 %v5433, %v5429
        %v5634 = vpack.c.b16 %v5434, %v5430
        %v5635 = vpack.c.b16 %v5435, %v5431
        %v5636 = vpack.c.b16 %v5436, %v5432
        %v5637 = vpack.c.b16 %v5441, %v5437
        %v5638 = vpack.c.b16 %v5442, %v5438
        %v5639 = vpack.c.b16 %v5443, %v5439
        %v5640 = vpack.c.b16 %v5444, %v5440
        %v5641 = vpack.c.b16 %v5449, %v5445
        %v5642 = vpack.c.b16 %v5450, %v5446
        %v5643 = vpack.c.b16 %v5451, %v5447
        %v5644 = vpack.c.b16 %v5452, %v5448
        %v5645 = vpack.c.b16 %v5457, %v5453
        %v5646 = vpack.c.b16 %v5458, %v5454
        %v5647 = vpack.c.b16 %v5459, %v5455
        %v5648 = vpack.c.b16 %v5460, %v5456
        %v5649 = vpack.c.b16 %v5465, %v5461
        %v5650 = vpack.c.b16 %v5466, %v5462
        %v5651 = vpack.c.b16 %v5467, %v5463
        %v5652 = vpack.c.b16 %v5468, %v5464
        %v5653 = vpack.c.b16 %v5473, %v5469
        %v5654 = vpack.c.b16 %v5474, %v5470
        %v5655 = vpack.c.b16 %v5475, %v5471
        %v5656 = vpack.c.b16 %v5476, %v5472
        %v5657 = vpack.c.b16 %v5481, %v5477
        %v5658 = vpack.c.b16 %v5482, %v5478
        %v5659 = vpack.c.b16 %v5483, %v5479
        %v5660 = vpack.c.b16 %v5484, %v5480
        %v5661 = vpack.c.b16 %v5489, %v5485
        %v5662 = vpack.c.b16 %v5490, %v5486
        %v5663 = vpack.c.b16 %v5491, %v5487
        %v5664 = vpack.c.b16 %v5492, %v5488
        %v5665 = vpack.c.b16 %v5497, %v5493
        %v5666 = vpack.c.b16 %v5498, %v5494
        %v5667 = vpack.c.b16 %v5499, %v5495
        %v5668 = vpack.c.b16 %v5500, %v5496
        %v5669 = vpack.c.b16 %v5505, %v5501
        %v5670 = vpack.c.b16 %v5506, %v5502
        %v5671 = vpack.c.b16 %v5507, %v5503
        %v5672 = vpack.c.b16 %v5508, %v5504
        %v5673 = vpack.c.b16 %v5513, %v5509
        %v5674 = vpack.c.b16 %v5514, %v5510
        %v5675 = vpack.c.b16 %v5515, %v5511
        %v5676 = vpack.c.b16 %v5516, %v5512
        %v5677 = vpack.c.b16 %v5521, %v5517
        %v5678 = vpack.c.b16 %v5522, %v5518
        %v5679 = vpack.c.b16 %v5523, %v5519
        %v5680 = vpack.c.b16 %v5524, %v5520
        %v5681 = vpack.c.b16 %v5529, %v5525
        %v5682 = vpack.c.b16 %v5530, %v5526
        %v5683 = vpack.c.b16 %v5531, %v5527
        %v5684 = vpack.c.b16 %v5532, %v5528
        %v5685 = vpack.c.b16 %v5537, %v5533
        %v5686 = vpack.c.b16 %v5538, %v5534
        %v5687 = vpack.c.b16 %v5539, %v5535
        %v5688 = vpack.c.b16 %v5540, %v5536
        %v5689 = vpack.c.b16 %v5545, %v5541
        %v5690 = vpack.c.b16 %v5546, %v5542
        %v5691 = vpack.c.b16 %v5547, %v5543
        %v5692 = vpack.c.b16 %v5548, %v5544
        %v5693 = vpack.c.b16 %v5553, %v5549
        %v5694 = vpack.c.b16 %v5554, %v5550
        %v5695 = vpack.c.b16 %v5555, %v5551
        %v5696 = vpack.c.b16 %v5556, %v5552
        %v5697 = vpack.c.b16 %v5561, %v5557
        %v5698 = vpack.c.b16 %v5562, %v5558
        %v5699 = vpack.c.b16 %v5563, %v5559
        %v5700 = vpack.c.b16 %v5564, %v5560
        %v5701 = vpack.c.b16 %v5569, %v5565
        %v5702 = vpack.c.b16 %v5570, %v5566
        %v5703 = vpack.c.b16 %v5571, %v5567
        %v5704 = vpack.c.b16 %v5572, %v5568
        %v5705 = vpack.c.b16 %v5577, %v5573
        %v5706 = vpack.c.b16 %v5578, %v5574
        %v5707 = vpack.c.b16 %v5579, %v5575
        %v5708 = vpack.c.b16 %v5580, %v5576
        %5837 = vmatprep.subr.bf16.mxu0 %v5582
        %5838 = vmatpush1.bf16.msra.mxu0 %v5581
        %5839 = vmatprep.subr.bf16.mxu0 %v5586
        %5840 = vmatpush1.bf16.msra.mxu0 %v5585
        %5841 = vmatprep.subr.bf16.mxu0 %v5590
        %5842 = vmatpush1.bf16.msra.mxu0 %v5589
        %5843 = vmatprep.subr.bf16.mxu0 %v5594
        %5844 = vmatpush1.bf16.msra.mxu0 %v5593
        %5845 = vmatprep.subr.bf16.mxu0 %v5598
        %5846 = vmatpush1.bf16.msra.mxu0 %v5597
        %5847 = vmatprep.subr.bf16.mxu0 %v5602
        %5848 = vmatpush1.bf16.msra.mxu0 %v5601
        %5849 = vmatprep.subr.bf16.mxu0 %v5606
        %5850 = vmatpush1.bf16.msra.mxu0 %v5605
        %5851 = vmatprep.subr.bf16.mxu0 %v5610
        %5852 = vmatpush1.bf16.msra.mxu0 %v5609
        %5853 = vmatprep.subr.bf16.mxu0 %v5614
        %5854 = vmatpush1.bf16.msra.mxu0 %v5613
        %5855 = vmatprep.subr.bf16.mxu0 %v5618
        %5856 = vmatpush1.bf16.msra.mxu0 %v5617
        %5857 = vmatprep.subr.bf16.mxu0 %v5622
        %5858 = vmatpush1.bf16.msra.mxu0 %v5621
        %5859 = vmatprep.subr.bf16.mxu0 %v5626
        %5860 = vmatpush1.bf16.msra.mxu0 %v5625
        %5861 = vmatprep.subr.bf16.mxu0 %v5630
        %5862 = vmatpush1.bf16.msra.mxu0 %v5629
        %5863 = vmatprep.subr.bf16.mxu0 %v5634
        %5864 = vmatpush1.bf16.msra.mxu0 %v5633
        %5865 = vmatprep.subr.bf16.mxu0 %v5638
        %5866 = vmatpush1.bf16.msra.mxu0 %v5637
        %5867 = vmatprep.subr.bf16.mxu0 %v5642
        %5868 = vmatpush1.bf16.msra.mxu0 %v5641
        %5869 = vmatprep.mubr.bf16.mxu0 %v5066
        %5870 = vmatmul.mubr.bf16.gmra.mrb[0].mxu0 %v5065
        %v5871 = vpop.f32.mrb[0].mxu0
        %v5872 = vadd.f32 0.0, %v5871
        %v5873 = vpop.f32.mrb[0].mxu0
        %v5874 = vadd.f32 0.0, %v5873
        %v5875 = vpop.f32.mrb[0].mxu0
        %v5876 = vpop.f32.mrb[0].mxu0
        %5877 = vdwg.mxu0
        %5878 = vmatprep.subr.bf16.mxu0 %v5646
        %5879 = vmatpush1.bf16.msra.mxu0 %v5645
        %5880 = vmatprep.subr.bf16.mxu0 %v5650
        %5881 = vmatpush1.bf16.msra.mxu0 %v5649
        %5882 = vmatprep.subr.bf16.mxu0 %v5654
        %5883 = vmatpush1.bf16.msra.mxu0 %v5653
        %5884 = vmatprep.subr.bf16.mxu0 %v5658
        %5885 = vmatpush1.bf16.msra.mxu0 %v5657
        %5886 = vmatprep.subr.bf16.mxu0 %v5662
        %5887 = vmatpush1.bf16.msra.mxu0 %v5661
        %5888 = vmatprep.subr.bf16.mxu0 %v5666
        %5889 = vmatpush1.bf16.msra.mxu0 %v5665
        %5890 = vmatprep.subr.bf16.mxu0 %v5670
        %5891 = vmatpush1.bf16.msra.mxu0 %v5669
        %5892 = vmatprep.subr.bf16.mxu0 %v5674
        %5893 = vmatpush1.bf16.msra.mxu0 %v5673
        %5894 = vmatprep.subr.bf16.mxu0 %v5678
        %5895 = vmatpush1.bf16.msra.mxu0 %v5677
        %5896 = vmatprep.subr.bf16.mxu0 %v5682
        %5897 = vmatpush1.bf16.msra.mxu0 %v5681
        %5898 = vmatprep.subr.bf16.mxu0 %v5686
        %5899 = vmatpush1.bf16.msra.mxu0 %v5685
        %5900 = vmatprep.subr.bf16.mxu0 %v5690
        %5901 = vmatpush1.bf16.msra.mxu0 %v5689
        %5902 = vmatprep.subr.bf16.mxu0 %v5694
        %5903 = vmatpush1.bf16.msra.mxu0 %v5693
        %5904 = vmatprep.subr.bf16.mxu0 %v5698
        %5905 = vmatpush1.bf16.msra.mxu0 %v5697
        %5906 = vmatprep.subr.bf16.mxu0 %v5702
        %5907 = vmatpush1.bf16.msra.mxu0 %v5701
        %5908 = vmatprep.subr.bf16.mxu0 %v5706
        %5909 = vmatpush1.bf16.msra.mxu0 %v5705
        %5910 = vmatprep.mubr.bf16.mxu0 %v5068
        %5911 = vmatmul.mubr.bf16.gmra.mrb[0].mxu0 %v5067
        %v5912 = vpop.f32.mrb[0].mxu0
        %v5913 = vadd.f32 %v5872, %v5912
        %v5914 = vpop.f32.mrb[0].mxu0
        %v5915 = vadd.f32 %v5874, %v5914
        %v5916 = vpop.f32.mrb[0].mxu0
        %v5917 = vpop.f32.mrb[0].mxu0
        %5918 = vdwg.mxu0
        %5919 = vmatprep.subr.bf16.mxu0 %v5584
        %5920 = vmatpush1.bf16.msra.mxu0 %v5583
        %5921 = vmatprep.subr.bf16.mxu0 %v5588
        %5922 = vmatpush1.bf16.msra.mxu0 %v5587
        %5923 = vmatprep.subr.bf16.mxu0 %v5592
        %5924 = vmatpush1.bf16.msra.mxu0 %v5591
        %5925 = vmatprep.subr.bf16.mxu0 %v5596
        %5926 = vmatpush1.bf16.msra.mxu0 %v5595
        %5927 = vmatprep.subr.bf16.mxu0 %v5600
        %5928 = vmatpush1.bf16.msra.mxu0 %v5599
        %5929 = vmatprep.subr.bf16.mxu0 %v5604
        %5930 = vmatpush1.bf16.msra.mxu0 %v5603
        %5931 = vmatprep.subr.bf16.mxu0 %v5608
        %5932 = vmatpush1.bf16.msra.mxu0 %v5607
        %5933 = vmatprep.subr.bf16.mxu0 %v5612
        %5934 = vmatpush1.bf16.msra.mxu0 %v5611
        %5935 = vmatprep.subr.bf16.mxu0 %v5616
        %5936 = vmatpush1.bf16.msra.mxu0 %v5615
        %5937 = vmatprep.subr.bf16.mxu0 %v5620
        %5938 = vmatpush1.bf16.msra.mxu0 %v5619
        %5939 = vmatprep.subr.bf16.mxu0 %v5624
        %5940 = vmatpush1.bf16.msra.mxu0 %v5623
        %5941 = vmatprep.subr.bf16.mxu0 %v5628
        %5942 = vmatpush1.bf16.msra.mxu0 %v5627
        %5943 = vmatprep.subr.bf16.mxu0 %v5632
        %5944 = vmatpush1.bf16.msra.mxu0 %v5631
        %5945 = vmatprep.subr.bf16.mxu0 %v5636
        %5946 = vmatpush1.bf16.msra.mxu0 %v5635
        %5947 = vmatprep.subr.bf16.mxu0 %v5640
        %5948 = vmatpush1.bf16.msra.mxu0 %v5639
        %5949 = vmatprep.subr.bf16.mxu0 %v5644
        %5950 = vmatpush1.bf16.msra.mxu0 %v5643
        %5951 = vmatprep.mubr.bf16.mxu0 %v5066
        %5952 = vmatmul.mubr.bf16.gmra.mrb[0].mxu0 %v5065
        %v5953 = vpop.f32.mrb[0].mxu0
        %v5954 = vadd.f32 0.0, %v5953
        %v5955 = vpop.f32.mrb[0].mxu0
        %v5956 = vadd.f32 0.0, %v5955
        %v5957 = vpop.f32.mrb[0].mxu0
        %v5958 = vpop.f32.mrb[0].mxu0
        %5959 = vdwg.mxu0
        %5960 = vmatprep.subr.bf16.mxu0 %v5648
        %5961 = vmatpush1.bf16.msra.mxu0 %v5647
        %5962 = vmatprep.subr.bf16.mxu0 %v5652
        %5963 = vmatpush1.bf16.msra.mxu0 %v5651
        %5964 = vmatprep.subr.bf16.mxu0 %v5656
        %5965 = vmatpush1.bf16.msra.mxu0 %v5655
        %5966 = vmatprep.subr.bf16.mxu0 %v5660
        %5967 = vmatpush1.bf16.msra.mxu0 %v5659
        %5968 = vmatprep.subr.bf16.mxu0 %v5664
        %5969 = vmatpush1.bf16.msra.mxu0 %v5663
        %5970 = vmatprep.subr.bf16.mxu0 %v5668
        %5971 = vmatpush1.bf16.msra.mxu0 %v5667
        %5972 = vmatprep.subr.bf16.mxu0 %v5672
        %5973 = vmatpush1.bf16.msra.mxu0 %v5671
        %5974 = vmatprep.subr.bf16.mxu0 %v5676
        %5975 = vmatpush1.bf16.msra.mxu0 %v5675
        %5976 = vmatprep.subr.bf16.mxu0 %v5680
        %5977 = vmatpush1.bf16.msra.mxu0 %v5679
        %5978 = vmatprep.subr.bf16.mxu0 %v5684
        %5979 = vmatpush1.bf16.msra.mxu0 %v5683
        %5980 = vmatprep.subr.bf16.mxu0 %v5688
        %5981 = vmatpush1.bf16.msra.mxu0 %v5687
        %5982 = vmatprep.subr.bf16.mxu0 %v5692
        %5983 = vmatpush1.bf16.msra.mxu0 %v5691
        %5984 = vmatprep.subr.bf16.mxu0 %v5696
        %5985 = vmatpush1.bf16.msra.mxu0 %v5695
        %5986 = vmatprep.subr.bf16.mxu0 %v5700
        %5987 = vmatpush1.bf16.msra.mxu0 %v5699
        %5988 = vmatprep.subr.bf16.mxu0 %v5704
        %5989 = vmatpush1.bf16.msra.mxu0 %v5703
        %5990 = vmatprep.subr.bf16.mxu0 %v5708
        %5991 = vmatpush1.bf16.msra.mxu0 %v5707
        %5992 = vmatprep.mubr.bf16.mxu0 %v5068
        %5993 = vmatmul.mubr.bf16.gmra.mrb[0].mxu0 %v5067
        %v5994 = vpop.f32.mrb[0].mxu0
        %v5995 = vadd.f32 %v5954, %v5994
        %v5996 = vpop.f32.mrb[0].mxu0
        %v5997 = vadd.f32 %v5956, %v5996
        %v5998 = vpop.f32.mrb[0].mxu0
        %v5999 = vpop.f32.mrb[0].mxu0
        %6000 = vdwg.mxu0
        %v6001 = vadd.f32 %v4103, %v5913
        %v6002 = vadd.f32 %v4104, %v5915
        %v6003 = vadd.f32 %v4105, %v5995
        %v6004 = vadd.f32 %v4106, %v5997
        %v6005 = vld [vmem:[%s1 + $0x30] sm:$0xff]
        %v6006 = vld [vmem:[%s1 + $0x38] sm:$0xff]
        %v6007 = vld [vmem:[%s1 + $0x70] sm:$0xff]
        %v6008 = vld [vmem:[%s1 + $0x78] sm:$0xff]
        %v6009 = vld [vmem:[%s1 + $0xb0] sm:$0xff]
        %v6010 = vld [vmem:[%s1 + $0xb8] sm:$0xff]
        %v6011 = vld [vmem:[%s1 + $0xf0] sm:$0xff]
        %v6012 = vld [vmem:[%s1 + $0xf8] sm:$0xff]
        %v6013 = vld [vmem:[%s1 + $0x130] sm:$0xff]
        %v6014 = vld [vmem:[%s1 + $0x138] sm:$0xff]
        %v6015 = vld [vmem:[%s1 + $0x170] sm:$0xff]
        %v6016 = vld [vmem:[%s1 + $0x178] sm:$0xff]
        %v6017 = vld [vmem:[%s1 + $0x1b0] sm:$0xff]
        %v6018 = vld [vmem:[%s1 + $0x1b8] sm:$0xff]
        %v6019 = vld [vmem:[%s1 + $0x1f0] sm:$0xff]
        %v6020 = vld [vmem:[%s1 + $0x1f8] sm:$0xff]
        %v6021 = vld [vmem:[%s1 + $0x230] sm:$0xff]
        %v6022 = vld [vmem:[%s1 + $0x238] sm:$0xff]
        %v6023 = vld [vmem:[%s1 + $0x270] sm:$0xff]
        %v6024 = vld [vmem:[%s1 + $0x278] sm:$0xff]
        %v6025 = vld [vmem:[%s1 + $0x2b0] sm:$0xff]
        %v6026 = vld [vmem:[%s1 + $0x2b8] sm:$0xff]
        %v6027 = vld [vmem:[%s1 + $0x2f0] sm:$0xff]
        %v6028 = vld [vmem:[%s1 + $0x2f8] sm:$0xff]
        %v6029 = vld [vmem:[%s1 + $0x330] sm:$0xff]
        %v6030 = vld [vmem:[%s1 + $0x338] sm:$0xff]
        %v6031 = vld [vmem:[%s1 + $0x370] sm:$0xff]
        %v6032 = vld [vmem:[%s1 + $0x378] sm:$0xff]
        %v6033 = vld [vmem:[%s1 + $0x3b0] sm:$0xff]
        %v6034 = vld [vmem:[%s1 + $0x3b8] sm:$0xff]
        %v6035 = vld [vmem:[%s1 + $0x3f0] sm:$0xff]
        %v6036 = vld [vmem:[%s1 + $0x3f8] sm:$0xff]
        %v6037 = vld [vmem:[%s1 + $0x430] sm:$0xff]
        %v6038 = vld [vmem:[%s1 + $0x438] sm:$0xff]
        %v6039 = vld [vmem:[%s1 + $0x470] sm:$0xff]
        %v6040 = vld [vmem:[%s1 + $0x478] sm:$0xff]
        %v6041 = vld [vmem:[%s1 + $0x4b0] sm:$0xff]
        %v6042 = vld [vmem:[%s1 + $0x4b8] sm:$0xff]
        %v6043 = vld [vmem:[%s1 + $0x4f0] sm:$0xff]
        %v6044 = vld [vmem:[%s1 + $0x4f8] sm:$0xff]
        %v6045 = vld [vmem:[%s1 + $0x530] sm:$0xff]
        %v6046 = vld [vmem:[%s1 + $0x538] sm:$0xff]
        %v6047 = vld [vmem:[%s1 + $0x570] sm:$0xff]
        %v6048 = vld [vmem:[%s1 + $0x578] sm:$0xff]
        %v6049 = vld [vmem:[%s1 + $0x5b0] sm:$0xff]
        %v6050 = vld [vmem:[%s1 + $0x5b8] sm:$0xff]
        %v6051 = vld [vmem:[%s1 + $0x5f0] sm:$0xff]
        %v6052 = vld [vmem:[%s1 + $0x5f8] sm:$0xff]
        %v6053 = vld [vmem:[%s1 + $0x630] sm:$0xff]
        %v6054 = vld [vmem:[%s1 + $0x638] sm:$0xff]
        %v6055 = vld [vmem:[%s1 + $0x670] sm:$0xff]
        %v6056 = vld [vmem:[%s1 + $0x678] sm:$0xff]
        %v6057 = vld [vmem:[%s1 + $0x6b0] sm:$0xff]
        %v6058 = vld [vmem:[%s1 + $0x6b8] sm:$0xff]
        %v6059 = vld [vmem:[%s1 + $0x6f0] sm:$0xff]
        %v6060 = vld [vmem:[%s1 + $0x6f8] sm:$0xff]
        %v6061 = vld [vmem:[%s1 + $0x730] sm:$0xff]
        %v6062 = vld [vmem:[%s1 + $0x738] sm:$0xff]
        %v6063 = vld [vmem:[%s1 + $0x770] sm:$0xff]
        %v6064 = vld [vmem:[%s1 + $0x778] sm:$0xff]
        %v6065 = vld [vmem:[%s1 + $0x7b0] sm:$0xff]
        %v6066 = vld [vmem:[%s1 + $0x7b8] sm:$0xff]
        %v6067 = vld [vmem:[%s1 + $0x7f0] sm:$0xff]
        %v6068 = vld [vmem:[%s1 + $0x7f8] sm:$0xff]
        %v6069 = vld [vmem:[%s1 + $0x830] sm:$0xff]
        %v6070 = vld [vmem:[%s1 + $0x838] sm:$0xff]
        %v6071 = vld [vmem:[%s1 + $0x870] sm:$0xff]
        %v6072 = vld [vmem:[%s1 + $0x878] sm:$0xff]
        %v6073 = vld [vmem:[%s1 + $0x8b0] sm:$0xff]
        %v6074 = vld [vmem:[%s1 + $0x8b8] sm:$0xff]
        %v6075 = vld [vmem:[%s1 + $0x8f0] sm:$0xff]
        %v6076 = vld [vmem:[%s1 + $0x8f8] sm:$0xff]
        %v6077 = vld [vmem:[%s1 + $0x930] sm:$0xff]
        %v6078 = vld [vmem:[%s1 + $0x938] sm:$0xff]
        %v6079 = vld [vmem:[%s1 + $0x970] sm:$0xff]
        %v6080 = vld [vmem:[%s1 + $0x978] sm:$0xff]
        %v6081 = vld [vmem:[%s1 + $0x9b0] sm:$0xff]
        %v6082 = vld [vmem:[%s1 + $0x9b8] sm:$0xff]
        %v6083 = vld [vmem:[%s1 + $0x9f0] sm:$0xff]
        %v6084 = vld [vmem:[%s1 + $0x9f8] sm:$0xff]
        %v6085 = vld [vmem:[%s1 + $0xa30] sm:$0xff]
        %v6086 = vld [vmem:[%s1 + $0xa38] sm:$0xff]
        %v6087 = vld [vmem:[%s1 + $0xa70] sm:$0xff]
        %v6088 = vld [vmem:[%s1 + $0xa78] sm:$0xff]
        %v6089 = vld [vmem:[%s1 + $0xab0] sm:$0xff]
        %v6090 = vld [vmem:[%s1 + $0xab8] sm:$0xff]
        %v6091 = vld [vmem:[%s1 + $0xaf0] sm:$0xff]
        %v6092 = vld [vmem:[%s1 + $0xaf8] sm:$0xff]
        %v6093 = vld [vmem:[%s1 + $0xb30] sm:$0xff]
        %v6094 = vld [vmem:[%s1 + $0xb38] sm:$0xff]
        %v6095 = vld [vmem:[%s1 + $0xb70] sm:$0xff]
        %v6096 = vld [vmem:[%s1 + $0xb78] sm:$0xff]
        %v6097 = vld [vmem:[%s1 + $0xbb0] sm:$0xff]
        %v6098 = vld [vmem:[%s1 + $0xbb8] sm:$0xff]
        %v6099 = vld [vmem:[%s1 + $0xbf0] sm:$0xff]
        %v6100 = vld [vmem:[%s1 + $0xbf8] sm:$0xff]
        %v6101 = vld [vmem:[%s1 + $0xc30] sm:$0xff]
        %v6102 = vld [vmem:[%s1 + $0xc38] sm:$0xff]
        %v6103 = vld [vmem:[%s1 + $0xc70] sm:$0xff]
        %v6104 = vld [vmem:[%s1 + $0xc78] sm:$0xff]
        %v6105 = vld [vmem:[%s1 + $0xcb0] sm:$0xff]
        %v6106 = vld [vmem:[%s1 + $0xcb8] sm:$0xff]
        %v6107 = vld [vmem:[%s1 + $0xcf0] sm:$0xff]
        %v6108 = vld [vmem:[%s1 + $0xcf8] sm:$0xff]
        %v6109 = vld [vmem:[%s1 + $0xd30] sm:$0xff]
        %v6110 = vld [vmem:[%s1 + $0xd38] sm:$0xff]
        %v6111 = vld [vmem:[%s1 + $0xd70] sm:$0xff]
        %v6112 = vld [vmem:[%s1 + $0xd78] sm:$0xff]
        %v6113 = vld [vmem:[%s1 + $0xdb0] sm:$0xff]
        %v6114 = vld [vmem:[%s1 + $0xdb8] sm:$0xff]
        %v6115 = vld [vmem:[%s1 + $0xdf0] sm:$0xff]
        %v6116 = vld [vmem:[%s1 + $0xdf8] sm:$0xff]
        %v6117 = vld [vmem:[%s1 + $0xe30] sm:$0xff]
        %v6118 = vld [vmem:[%s1 + $0xe38] sm:$0xff]
        %v6119 = vld [vmem:[%s1 + $0xe70] sm:$0xff]
        %v6120 = vld [vmem:[%s1 + $0xe78] sm:$0xff]
        %v6121 = vld [vmem:[%s1 + $0xeb0] sm:$0xff]
        %v6122 = vld [vmem:[%s1 + $0xeb8] sm:$0xff]
        %v6123 = vld [vmem:[%s1 + $0xef0] sm:$0xff]
        %v6124 = vld [vmem:[%s1 + $0xef8] sm:$0xff]
        %v6125 = vld [vmem:[%s1 + $0xf30] sm:$0xff]
        %v6126 = vld [vmem:[%s1 + $0xf38] sm:$0xff]
        %v6127 = vld [vmem:[%s1 + $0xf70] sm:$0xff]
        %v6128 = vld [vmem:[%s1 + $0xf78] sm:$0xff]
        %v6129 = vld [vmem:[%s1 + $0xfb0] sm:$0xff]
        %v6130 = vld [vmem:[%s1 + $0xfb8] sm:$0xff]
        %v6131 = vld [vmem:[%s1 + $0xff0] sm:$0xff]
        %v6132 = vld [vmem:[%s1 + $0xff8] sm:$0xff]
        %v6133 = vld [vmem:[%s2 + $0xc] sm:$0xf]
        %v6135 = vlaneseq
        %v6136 = vshrl.u32 %v6135, 7
        %v6137 = vsub.s32 0, %v6136
        %v6138 = vrot.slane %v6133, %v6137
        %v6139 = vlaneseq
        %v6140 = vshrl.u32 %v6139, 7
        %v6141 = vsub.s32 1, %v6140
        %v6142 = vrot.slane %v6133, %v6141
        %v6143 = vlaneseq
        %v6144 = vshrl.u32 %v6143, 7
        %v6145 = vsub.s32 2, %v6144
        %v6146 = vrot.slane %v6133, %v6145
        %v6147 = vlaneseq
        %v6148 = vshrl.u32 %v6147, 7
        %v6149 = vsub.s32 3, %v6148
        %v6150 = vrot.slane %v6133, %v6149
        %v6283 = vunpack.c.l.b16 %v6005
        %v6284 = vunpack.c.h.b16 %v6005
        %v6285 = vunpack.c.l.b16 %v6006
        %v6286 = vunpack.c.h.b16 %v6006
        %v6287 = vunpack.c.l.b16 %v6007
        %v6288 = vunpack.c.h.b16 %v6007
        %v6289 = vunpack.c.l.b16 %v6008
        %v6290 = vunpack.c.h.b16 %v6008
        %v6291 = vunpack.c.l.b16 %v6009
        %v6292 = vunpack.c.h.b16 %v6009
        %v6293 = vunpack.c.l.b16 %v6010
        %v6294 = vunpack.c.h.b16 %v6010
        %v6295 = vunpack.c.l.b16 %v6011
        %v6296 = vunpack.c.h.b16 %v6011
        %v6297 = vunpack.c.l.b16 %v6012
        %v6298 = vunpack.c.h.b16 %v6012
        %v6299 = vunpack.c.l.b16 %v6013
        %v6300 = vunpack.c.h.b16 %v6013
        %v6301 = vunpack.c.l.b16 %v6014
        %v6302 = vunpack.c.h.b16 %v6014
        %v6303 = vunpack.c.l.b16 %v6015
        %v6304 = vunpack.c.h.b16 %v6015
        %v6305 = vunpack.c.l.b16 %v6016
        %v6306 = vunpack.c.h.b16 %v6016
        %v6307 = vunpack.c.l.b16 %v6017
        %v6308 = vunpack.c.h.b16 %v6017
        %v6309 = vunpack.c.l.b16 %v6018
        %v6310 = vunpack.c.h.b16 %v6018
        %v6311 = vunpack.c.l.b16 %v6019
        %v6312 = vunpack.c.h.b16 %v6019
        %v6313 = vunpack.c.l.b16 %v6020
        %v6314 = vunpack.c.h.b16 %v6020
        %v6315 = vunpack.c.l.b16 %v6021
        %v6316 = vunpack.c.h.b16 %v6021
        %v6317 = vunpack.c.l.b16 %v6022
        %v6318 = vunpack.c.h.b16 %v6022
        %v6319 = vunpack.c.l.b16 %v6023
        %v6320 = vunpack.c.h.b16 %v6023
        %v6321 = vunpack.c.l.b16 %v6024
        %v6322 = vunpack.c.h.b16 %v6024
        %v6323 = vunpack.c.l.b16 %v6025
        %v6324 = vunpack.c.h.b16 %v6025
        %v6325 = vunpack.c.l.b16 %v6026
        %v6326 = vunpack.c.h.b16 %v6026
        %v6327 = vunpack.c.l.b16 %v6027
        %v6328 = vunpack.c.h.b16 %v6027
        %v6329 = vunpack.c.l.b16 %v6028
        %v6330 = vunpack.c.h.b16 %v6028
        %v6331 = vunpack.c.l.b16 %v6029
        %v6332 = vunpack.c.h.b16 %v6029
        %v6333 = vunpack.c.l.b16 %v6030
        %v6334 = vunpack.c.h.b16 %v6030
        %v6335 = vunpack.c.l.b16 %v6031
        %v6336 = vunpack.c.h.b16 %v6031
        %v6337 = vunpack.c.l.b16 %v6032
        %v6338 = vunpack.c.h.b16 %v6032
        %v6339 = vunpack.c.l.b16 %v6033
        %v6340 = vunpack.c.h.b16 %v6033
        %v6341 = vunpack.c.l.b16 %v6034
        %v6342 = vunpack.c.h.b16 %v6034
        %v6343 = vunpack.c.l.b16 %v6035
        %v6344 = vunpack.c.h.b16 %v6035
        %v6345 = vunpack.c.l.b16 %v6036
        %v6346 = vunpack.c.h.b16 %v6036
        %v6347 = vunpack.c.l.b16 %v6037
        %v6348 = vunpack.c.h.b16 %v6037
        %v6349 = vunpack.c.l.b16 %v6038
        %v6350 = vunpack.c.h.b16 %v6038
        %v6351 = vunpack.c.l.b16 %v6039
        %v6352 = vunpack.c.h.b16 %v6039
        %v6353 = vunpack.c.l.b16 %v6040
        %v6354 = vunpack.c.h.b16 %v6040
        %v6355 = vunpack.c.l.b16 %v6041
        %v6356 = vunpack.c.h.b16 %v6041
        %v6357 = vunpack.c.l.b16 %v6042
        %v6358 = vunpack.c.h.b16 %v6042
        %v6359 = vunpack.c.l.b16 %v6043
        %v6360 = vunpack.c.h.b16 %v6043
        %v6361 = vunpack.c.l.b16 %v6044
        %v6362 = vunpack.c.h.b16 %v6044
        %v6363 = vunpack.c.l.b16 %v6045
        %v6364 = vunpack.c.h.b16 %v6045
        %v6365 = vunpack.c.l.b16 %v6046
        %v6366 = vunpack.c.h.b16 %v6046
        %v6367 = vunpack.c.l.b16 %v6047
        %v6368 = vunpack.c.h.b16 %v6047
        %v6369 = vunpack.c.l.b16 %v6048
        %v6370 = vunpack.c.h.b16 %v6048
        %v6371 = vunpack.c.l.b16 %v6049
        %v6372 = vunpack.c.h.b16 %v6049
        %v6373 = vunpack.c.l.b16 %v6050
        %v6374 = vunpack.c.h.b16 %v6050
        %v6375 = vunpack.c.l.b16 %v6051
        %v6376 = vunpack.c.h.b16 %v6051
        %v6377 = vunpack.c.l.b16 %v6052
        %v6378 = vunpack.c.h.b16 %v6052
        %v6379 = vunpack.c.l.b16 %v6053
        %v6380 = vunpack.c.h.b16 %v6053
        %v6381 = vunpack.c.l.b16 %v6054
        %v6382 = vunpack.c.h.b16 %v6054
        %v6383 = vunpack.c.l.b16 %v6055
        %v6384 = vunpack.c.h.b16 %v6055
        %v6385 = vunpack.c.l.b16 %v6056
        %v6386 = vunpack.c.h.b16 %v6056
        %v6387 = vunpack.c.l.b16 %v6057
        %v6388 = vunpack.c.h.b16 %v6057
        %v6389 = vunpack.c.l.b16 %v6058
        %v6390 = vunpack.c.h.b16 %v6058
        %v6391 = vunpack.c.l.b16 %v6059
        %v6392 = vunpack.c.h.b16 %v6059
        %v6393 = vunpack.c.l.b16 %v6060
        %v6394 = vunpack.c.h.b16 %v6060
        %v6395 = vunpack.c.l.b16 %v6061
        %v6396 = vunpack.c.h.b16 %v6061
        %v6397 = vunpack.c.l.b16 %v6062
        %v6398 = vunpack.c.h.b16 %v6062
        %v6399 = vunpack.c.l.b16 %v6063
        %v6400 = vunpack.c.h.b16 %v6063
        %v6401 = vunpack.c.l.b16 %v6064
        %v6402 = vunpack.c.h.b16 %v6064
        %v6403 = vunpack.c.l.b16 %v6065
        %v6404 = vunpack.c.h.b16 %v6065
        %v6405 = vunpack.c.l.b16 %v6066
        %v6406 = vunpack.c.h.b16 %v6066
        %v6407 = vunpack.c.l.b16 %v6067
        %v6408 = vunpack.c.h.b16 %v6067
        %v6409 = vunpack.c.l.b16 %v6068
        %v6410 = vunpack.c.h.b16 %v6068
        %v6411 = vunpack.c.l.b16 %v6069
        %v6412 = vunpack.c.h.b16 %v6069
        %v6413 = vunpack.c.l.b16 %v6070
        %v6414 = vunpack.c.h.b16 %v6070
        %v6415 = vunpack.c.l.b16 %v6071
        %v6416 = vunpack.c.h.b16 %v6071
        %v6417 = vunpack.c.l.b16 %v6072
        %v6418 = vunpack.c.h.b16 %v6072
        %v6419 = vunpack.c.l.b16 %v6073
        %v6420 = vunpack.c.h.b16 %v6073
        %v6421 = vunpack.c.l.b16 %v6074
        %v6422 = vunpack.c.h.b16 %v6074
        %v6423 = vunpack.c.l.b16 %v6075
        %v6424 = vunpack.c.h.b16 %v6075
        %v6425 = vunpack.c.l.b16 %v6076
        %v6426 = vunpack.c.h.b16 %v6076
        %v6427 = vunpack.c.l.b16 %v6077
        %v6428 = vunpack.c.h.b16 %v6077
        %v6429 = vunpack.c.l.b16 %v6078
        %v6430 = vunpack.c.h.b16 %v6078
        %v6431 = vunpack.c.l.b16 %v6079
        %v6432 = vunpack.c.h.b16 %v6079
        %v6433 = vunpack.c.l.b16 %v6080
        %v6434 = vunpack.c.h.b16 %v6080
        %v6435 = vunpack.c.l.b16 %v6081
        %v6436 = vunpack.c.h.b16 %v6081
        %v6437 = vunpack.c.l.b16 %v6082
        %v6438 = vunpack.c.h.b16 %v6082
        %v6439 = vunpack.c.l.b16 %v6083
        %v6440 = vunpack.c.h.b16 %v6083
        %v6441 = vunpack.c.l.b16 %v6084
        %v6442 = vunpack.c.h.b16 %v6084
        %v6443 = vunpack.c.l.b16 %v6085
        %v6444 = vunpack.c.h.b16 %v6085
        %v6445 = vunpack.c.l.b16 %v6086
        %v6446 = vunpack.c.h.b16 %v6086
        %v6447 = vunpack.c.l.b16 %v6087
        %v6448 = vunpack.c.h.b16 %v6087
        %v6449 = vunpack.c.l.b16 %v6088
        %v6450 = vunpack.c.h.b16 %v6088
        %v6451 = vunpack.c.l.b16 %v6089
        %v6452 = vunpack.c.h.b16 %v6089
        %v6453 = vunpack.c.l.b16 %v6090
        %v6454 = vunpack.c.h.b16 %v6090
        %v6455 = vunpack.c.l.b16 %v6091
        %v6456 = vunpack.c.h.b16 %v6091
        %v6457 = vunpack.c.l.b16 %v6092
        %v6458 = vunpack.c.h.b16 %v6092
        %v6459 = vunpack.c.l.b16 %v6093
        %v6460 = vunpack.c.h.b16 %v6093
        %v6461 = vunpack.c.l.b16 %v6094
        %v6462 = vunpack.c.h.b16 %v6094
        %v6463 = vunpack.c.l.b16 %v6095
        %v6464 = vunpack.c.h.b16 %v6095
        %v6465 = vunpack.c.l.b16 %v6096
        %v6466 = vunpack.c.h.b16 %v6096
        %v6467 = vunpack.c.l.b16 %v6097
        %v6468 = vunpack.c.h.b16 %v6097
        %v6469 = vunpack.c.l.b16 %v6098
        %v6470 = vunpack.c.h.b16 %v6098
        %v6471 = vunpack.c.l.b16 %v6099
        %v6472 = vunpack.c.h.b16 %v6099
        %v6473 = vunpack.c.l.b16 %v6100
        %v6474 = vunpack.c.h.b16 %v6100
        %v6475 = vunpack.c.l.b16 %v6101
        %v6476 = vunpack.c.h.b16 %v6101
        %v6477 = vunpack.c.l.b16 %v6102
        %v6478 = vunpack.c.h.b16 %v6102
        %v6479 = vunpack.c.l.b16 %v6103
        %v6480 = vunpack.c.h.b16 %v6103
        %v6481 = vunpack.c.l.b16 %v6104
        %v6482 = vunpack.c.h.b16 %v6104
        %v6483 = vunpack.c.l.b16 %v6105
        %v6484 = vunpack.c.h.b16 %v6105
        %v6485 = vunpack.c.l.b16 %v6106
        %v6486 = vunpack.c.h.b16 %v6106
        %v6487 = vunpack.c.l.b16 %v6107
        %v6488 = vunpack.c.h.b16 %v6107
        %v6489 = vunpack.c.l.b16 %v6108
        %v6490 = vunpack.c.h.b16 %v6108
        %v6491 = vunpack.c.l.b16 %v6109
        %v6492 = vunpack.c.h.b16 %v6109
        %v6493 = vunpack.c.l.b16 %v6110
        %v6494 = vunpack.c.h.b16 %v6110
        %v6495 = vunpack.c.l.b16 %v6111
        %v6496 = vunpack.c.h.b16 %v6111
        %v6497 = vunpack.c.l.b16 %v6112
        %v6498 = vunpack.c.h.b16 %v6112
        %v6499 = vunpack.c.l.b16 %v6113
        %v6500 = vunpack.c.h.b16 %v6113
        %v6501 = vunpack.c.l.b16 %v6114
        %v6502 = vunpack.c.h.b16 %v6114
        %v6503 = vunpack.c.l.b16 %v6115
        %v6504 = vunpack.c.h.b16 %v6115
        %v6505 = vunpack.c.l.b16 %v6116
        %v6506 = vunpack.c.h.b16 %v6116
        %v6507 = vunpack.c.l.b16 %v6117
        %v6508 = vunpack.c.h.b16 %v6117
        %v6509 = vunpack.c.l.b16 %v6118
        %v6510 = vunpack.c.h.b16 %v6118
        %v6511 = vunpack.c.l.b16 %v6119
        %v6512 = vunpack.c.h.b16 %v6119
        %v6513 = vunpack.c.l.b16 %v6120
        %v6514 = vunpack.c.h.b16 %v6120
        %v6515 = vunpack.c.l.b16 %v6121
        %v6516 = vunpack.c.h.b16 %v6121
        %v6517 = vunpack.c.l.b16 %v6122
        %v6518 = vunpack.c.h.b16 %v6122
        %v6519 = vunpack.c.l.b16 %v6123
        %v6520 = vunpack.c.h.b16 %v6123
        %v6521 = vunpack.c.l.b16 %v6124
        %v6522 = vunpack.c.h.b16 %v6124
        %v6523 = vunpack.c.l.b16 %v6125
        %v6524 = vunpack.c.h.b16 %v6125
        %v6525 = vunpack.c.l.b16 %v6126
        %v6526 = vunpack.c.h.b16 %v6126
        %v6527 = vunpack.c.l.b16 %v6127
        %v6528 = vunpack.c.h.b16 %v6127
        %v6529 = vunpack.c.l.b16 %v6128
        %v6530 = vunpack.c.h.b16 %v6128
        %v6531 = vunpack.c.l.b16 %v6129
        %v6532 = vunpack.c.h.b16 %v6129
        %v6533 = vunpack.c.l.b16 %v6130
        %v6534 = vunpack.c.h.b16 %v6130
        %v6535 = vunpack.c.l.b16 %v6131
        %v6536 = vunpack.c.h.b16 %v6131
        %v6537 = vunpack.c.l.b16 %v6132
        %v6538 = vunpack.c.h.b16 %v6132
        %v6539 = vpack.c.b16 %v6287, %v6283
        %v6540 = vpack.c.b16 %v6288, %v6284
        %v6541 = vpack.c.b16 %v6289, %v6285
        %v6542 = vpack.c.b16 %v6290, %v6286
        %v6543 = vpack.c.b16 %v6295, %v6291
        %v6544 = vpack.c.b16 %v6296, %v6292
        %v6545 = vpack.c.b16 %v6297, %v6293
        %v6546 = vpack.c.b16 %v6298, %v6294
        %v6547 = vpack.c.b16 %v6303, %v6299
        %v6548 = vpack.c.b16 %v6304, %v6300
        %v6549 = vpack.c.b16 %v6305, %v6301
        %v6550 = vpack.c.b16 %v6306, %v6302
        %v6551 = vpack.c.b16 %v6311, %v6307
        %v6552 = vpack.c.b16 %v6312, %v6308
        %v6553 = vpack.c.b16 %v6313, %v6309
        %v6554 = vpack.c.b16 %v6314, %v6310
        %v6555 = vpack.c.b16 %v6319, %v6315
        %v6556 = vpack.c.b16 %v6320, %v6316
        %v6557 = vpack.c.b16 %v6321, %v6317
        %v6558 = vpack.c.b16 %v6322, %v6318
        %v6559 = vpack.c.b16 %v6327, %v6323
        %v6560 = vpack.c.b16 %v6328, %v6324
        %v6561 = vpack.c.b16 %v6329, %v6325
        %v6562 = vpack.c.b16 %v6330, %v6326
        %v6563 = vpack.c.b16 %v6335, %v6331
        %v6564 = vpack.c.b16 %v6336, %v6332
        %v6565 = vpack.c.b16 %v6337, %v6333
        %v6566 = vpack.c.b16 %v6338, %v6334
        %v6567 = vpack.c.b16 %v6343, %v6339
        %v6568 = vpack.c.b16 %v6344, %v6340
        %v6569 = vpack.c.b16 %v6345, %v6341
        %v6570 = vpack.c.b16 %v6346, %v6342
        %v6571 = vpack.c.b16 %v6351, %v6347
        %v6572 = vpack.c.b16 %v6352, %v6348
        %v6573 = vpack.c.b16 %v6353, %v6349
        %v6574 = vpack.c.b16 %v6354, %v6350
        %v6575 = vpack.c.b16 %v6359, %v6355
        %v6576 = vpack.c.b16 %v6360, %v6356
        %v6577 = vpack.c.b16 %v6361, %v6357
        %v6578 = vpack.c.b16 %v6362, %v6358
        %v6579 = vpack.c.b16 %v6367, %v6363
        %v6580 = vpack.c.b16 %v6368, %v6364
        %v6581 = vpack.c.b16 %v6369, %v6365
        %v6582 = vpack.c.b16 %v6370, %v6366
        %v6583 = vpack.c.b16 %v6375, %v6371
        %v6584 = vpack.c.b16 %v6376, %v6372
        %v6585 = vpack.c.b16 %v6377, %v6373
        %v6586 = vpack.c.b16 %v6378, %v6374
        %v6587 = vpack.c.b16 %v6383, %v6379
        %v6588 = vpack.c.b16 %v6384, %v6380
        %v6589 = vpack.c.b16 %v6385, %v6381
        %v6590 = vpack.c.b16 %v6386, %v6382
        %v6591 = vpack.c.b16 %v6391, %v6387
        %v6592 = vpack.c.b16 %v6392, %v6388
        %v6593 = vpack.c.b16 %v6393, %v6389
        %v6594 = vpack.c.b16 %v6394, %v6390
        %v6595 = vpack.c.b16 %v6399, %v6395
        %v6596 = vpack.c.b16 %v6400, %v6396
        %v6597 = vpack.c.b16 %v6401, %v6397
        %v6598 = vpack.c.b16 %v6402, %v6398
        %v6599 = vpack.c.b16 %v6407, %v6403
        %v6600 = vpack.c.b16 %v6408, %v6404
        %v6601 = vpack.c.b16 %v6409, %v6405
        %v6602 = vpack.c.b16 %v6410, %v6406
        %v6603 = vpack.c.b16 %v6415, %v6411
        %v6604 = vpack.c.b16 %v6416, %v6412
        %v6605 = vpack.c.b16 %v6417, %v6413
        %v6606 = vpack.c.b16 %v6418, %v6414
        %v6607 = vpack.c.b16 %v6423, %v6419
        %v6608 = vpack.c.b16 %v6424, %v6420
        %v6609 = vpack.c.b16 %v6425, %v6421
        %v6610 = vpack.c.b16 %v6426, %v6422
        %v6611 = vpack.c.b16 %v6431, %v6427
        %v6612 = vpack.c.b16 %v6432, %v6428
        %v6613 = vpack.c.b16 %v6433, %v6429
        %v6614 = vpack.c.b16 %v6434, %v6430
        %v6615 = vpack.c.b16 %v6439, %v6435
        %v6616 = vpack.c.b16 %v6440, %v6436
        %v6617 = vpack.c.b16 %v6441, %v6437
        %v6618 = vpack.c.b16 %v6442, %v6438
        %v6619 = vpack.c.b16 %v6447, %v6443
        %v6620 = vpack.c.b16 %v6448, %v6444
        %v6621 = vpack.c.b16 %v6449, %v6445
        %v6622 = vpack.c.b16 %v6450, %v6446
        %v6623 = vpack.c.b16 %v6455, %v6451
        %v6624 = vpack.c.b16 %v6456, %v6452
        %v6625 = vpack.c.b16 %v6457, %v6453
        %v6626 = vpack.c.b16 %v6458, %v6454
        %v6627 = vpack.c.b16 %v6463, %v6459
        %v6628 = vpack.c.b16 %v6464, %v6460
        %v6629 = vpack.c.b16 %v6465, %v6461
        %v6630 = vpack.c.b16 %v6466, %v6462
        %v6631 = vpack.c.b16 %v6471, %v6467
        %v6632 = vpack.c.b16 %v6472, %v6468
        %v6633 = vpack.c.b16 %v6473, %v6469
        %v6634 = vpack.c.b16 %v6474, %v6470
        %v6635 = vpack.c.b16 %v6479, %v6475
        %v6636 = vpack.c.b16 %v6480, %v6476
        %v6637 = vpack.c.b16 %v6481, %v6477
        %v6638 = vpack.c.b16 %v6482, %v6478
        %v6639 = vpack.c.b16 %v6487, %v6483
        %v6640 = vpack.c.b16 %v6488, %v6484
        %v6641 = vpack.c.b16 %v6489, %v6485
        %v6642 = vpack.c.b16 %v6490, %v6486
        %v6643 = vpack.c.b16 %v6495, %v6491
        %v6644 = vpack.c.b16 %v6496, %v6492
        %v6645 = vpack.c.b16 %v6497, %v6493
        %v6646 = vpack.c.b16 %v6498, %v6494
        %v6647 = vpack.c.b16 %v6503, %v6499
        %v6648 = vpack.c.b16 %v6504, %v6500
        %v6649 = vpack.c.b16 %v6505, %v6501
        %v6650 = vpack.c.b16 %v6506, %v6502
        %v6651 = vpack.c.b16 %v6511, %v6507
        %v6652 = vpack.c.b16 %v6512, %v6508
        %v6653 = vpack.c.b16 %v6513, %v6509
        %v6654 = vpack.c.b16 %v6514, %v6510
        %v6655 = vpack.c.b16 %v6519, %v6515
        %v6656 = vpack.c.b16 %v6520, %v6516
        %v6657 = vpack.c.b16 %v6521, %v6517
        %v6658 = vpack.c.b16 %v6522, %v6518
        %v6659 = vpack.c.b16 %v6527, %v6523
        %v6660 = vpack.c.b16 %v6528, %v6524
        %v6661 = vpack.c.b16 %v6529, %v6525
        %v6662 = vpack.c.b16 %v6530, %v6526
        %v6663 = vpack.c.b16 %v6535, %v6531
        %v6664 = vpack.c.b16 %v6536, %v6532
        %v6665 = vpack.c.b16 %v6537, %v6533
        %v6666 = vpack.c.b16 %v6538, %v6534
        %6795 = vmatprep.subr.bf16.mxu0 %v6540
        %6796 = vmatpush1.bf16.msra.mxu0 %v6539
        %6797 = vmatprep.subr.bf16.mxu0 %v6544
        %6798 = vmatpush1.bf16.msra.mxu0 %v6543
        %6799 = vmatprep.subr.bf16.mxu0 %v6548
        %6800 = vmatpush1.bf16.msra.mxu0 %v6547
        %6801 = vmatprep.subr.bf16.mxu0 %v6552
        %6802 = vmatpush1.bf16.msra.mxu0 %v6551
        %6803 = vmatprep.subr.bf16.mxu0 %v6556
        %6804 = vmatpush1.bf16.msra.mxu0 %v6555
        %6805 = vmatprep.subr.bf16.mxu0 %v6560
        %6806 = vmatpush1.bf16.msra.mxu0 %v6559
        %6807 = vmatprep.subr.bf16.mxu0 %v6564
        %6808 = vmatpush1.bf16.msra.mxu0 %v6563
        %6809 = vmatprep.subr.bf16.mxu0 %v6568
        %6810 = vmatpush1.bf16.msra.mxu0 %v6567
        %6811 = vmatprep.subr.bf16.mxu0 %v6572
        %6812 = vmatpush1.bf16.msra.mxu0 %v6571
        %6813 = vmatprep.subr.bf16.mxu0 %v6576
        %6814 = vmatpush1.bf16.msra.mxu0 %v6575
        %6815 = vmatprep.subr.bf16.mxu0 %v6580
        %6816 = vmatpush1.bf16.msra.mxu0 %v6579
        %6817 = vmatprep.subr.bf16.mxu0 %v6584
        %6818 = vmatpush1.bf16.msra.mxu0 %v6583
        %6819 = vmatprep.subr.bf16.mxu0 %v6588
        %6820 = vmatpush1.bf16.msra.mxu0 %v6587
        %6821 = vmatprep.subr.bf16.mxu0 %v6592
        %6822 = vmatpush1.bf16.msra.mxu0 %v6591
        %6823 = vmatprep.subr.bf16.mxu0 %v6596
        %6824 = vmatpush1.bf16.msra.mxu0 %v6595
        %6825 = vmatprep.subr.bf16.mxu0 %v6600
        %6826 = vmatpush1.bf16.msra.mxu0 %v6599
        %6827 = vmatprep.mubr.bf16.mxu0 %v282
        %6828 = vmatmul.mubr.bf16.gmra.mrb[0].mxu0 %v281
        %v6829 = vpop.f32.mrb[0].mxu0
        %v6830 = vadd.f32 %v6138, %v6829
        %v6831 = vpop.f32.mrb[0].mxu0
        %v6832 = vadd.f32 %v6142, %v6831
        %v6833 = vpop.f32.mrb[0].mxu0
        %v6834 = vpop.f32.mrb[0].mxu0
        %6835 = vdwg.mxu0
        %6836 = vmatprep.subr.bf16.mxu0 %v6604
        %6837 = vmatpush1.bf16.msra.mxu0 %v6603
        %6838 = vmatprep.subr.bf16.mxu0 %v6608
        %6839 = vmatpush1.bf16.msra.mxu0 %v6607
        %6840 = vmatprep.subr.bf16.mxu0 %v6612
        %6841 = vmatpush1.bf16.msra.mxu0 %v6611
        %6842 = vmatprep.subr.bf16.mxu0 %v6616
        %6843 = vmatpush1.bf16.msra.mxu0 %v6615
        %6844 = vmatprep.subr.bf16.mxu0 %v6620
        %6845 = vmatpush1.bf16.msra.mxu0 %v6619
        %6846 = vmatprep.subr.bf16.mxu0 %v6624
        %6847 = vmatpush1.bf16.msra.mxu0 %v6623
        %6848 = vmatprep.subr.bf16.mxu0 %v6628
        %6849 = vmatpush1.bf16.msra.mxu0 %v6627
        %6850 = vmatprep.subr.bf16.mxu0 %v6632
        %6851 = vmatpush1.bf16.msra.mxu0 %v6631
        %6852 = vmatprep.subr.bf16.mxu0 %v6636
        %6853 = vmatpush1.bf16.msra.mxu0 %v6635
        %6854 = vmatprep.subr.bf16.mxu0 %v6640
        %6855 = vmatpush1.bf16.msra.mxu0 %v6639
        %6856 = vmatprep.subr.bf16.mxu0 %v6644
        %6857 = vmatpush1.bf16.msra.mxu0 %v6643
        %6858 = vmatprep.subr.bf16.mxu0 %v6648
        %6859 = vmatpush1.bf16.msra.mxu0 %v6647
        %6860 = vmatprep.subr.bf16.mxu0 %v6652
        %6861 = vmatpush1.bf16.msra.mxu0 %v6651
        %6862 = vmatprep.subr.bf16.mxu0 %v6656
        %6863 = vmatpush1.bf16.msra.mxu0 %v6655
        %6864 = vmatprep.subr.bf16.mxu0 %v6660
        %6865 = vmatpush1.bf16.msra.mxu0 %v6659
        %6866 = vmatprep.subr.bf16.mxu0 %v6664
        %6867 = vmatpush1.bf16.msra.mxu0 %v6663
        %6868 = vmatprep.mubr.bf16.mxu0 %v284
        %6869 = vmatmul.mubr.bf16.gmra.mrb[0].mxu0 %v283
        %v6870 = vpop.f32.mrb[0].mxu0
        %v6871 = vadd.f32 %v6830, %v6870
        %v6872 = vpop.f32.mrb[0].mxu0
        %v6873 = vadd.f32 %v6832, %v6872
        %v6874 = vpop.f32.mrb[0].mxu0
        %v6875 = vpop.f32.mrb[0].mxu0
        %6876 = vdwg.mxu0
        %6877 = vmatprep.subr.bf16.mxu0 %v6542
        %6878 = vmatpush1.bf16.msra.mxu0 %v6541
        %6879 = vmatprep.subr.bf16.mxu0 %v6546
        %6880 = vmatpush1.bf16.msra.mxu0 %v6545
        %6881 = vmatprep.subr.bf16.mxu0 %v6550
        %6882 = vmatpush1.bf16.msra.mxu0 %v6549
        %6883 = vmatprep.subr.bf16.mxu0 %v6554
        %6884 = vmatpush1.bf16.msra.mxu0 %v6553
        %6885 = vmatprep.subr.bf16.mxu0 %v6558
        %6886 = vmatpush1.bf16.msra.mxu0 %v6557
        %6887 = vmatprep.subr.bf16.mxu0 %v6562
        %6888 = vmatpush1.bf16.msra.mxu0 %v6561
        %6889 = vmatprep.subr.bf16.mxu0 %v6566
        %6890 = vmatpush1.bf16.msra.mxu0 %v6565
        %6891 = vmatprep.subr.bf16.mxu0 %v6570
        %6892 = vmatpush1.bf16.msra.mxu0 %v6569
        %6893 = vmatprep.subr.bf16.mxu0 %v6574
        %6894 = vmatpush1.bf16.msra.mxu0 %v6573
        %6895 = vmatprep.subr.bf16.mxu0 %v6578
        %6896 = vmatpush1.bf16.msra.mxu0 %v6577
        %6897 = vmatprep.subr.bf16.mxu0 %v6582
        %6898 = vmatpush1.bf16.msra.mxu0 %v6581
        %6899 = vmatprep.subr.bf16.mxu0 %v6586
        %6900 = vmatpush1.bf16.msra.mxu0 %v6585
        %6901 = vmatprep.subr.bf16.mxu0 %v6590
        %6902 = vmatpush1.bf16.msra.mxu0 %v6589
        %6903 = vmatprep.subr.bf16.mxu0 %v6594
        %6904 = vmatpush1.bf16.msra.mxu0 %v6593
        %6905 = vmatprep.subr.bf16.mxu0 %v6598
        %6906 = vmatpush1.bf16.msra.mxu0 %v6597
        %6907 = vmatprep.subr.bf16.mxu0 %v6602
        %6908 = vmatpush1.bf16.msra.mxu0 %v6601
        %6909 = vmatprep.mubr.bf16.mxu0 %v282
        %6910 = vmatmul.mubr.bf16.gmra.mrb[0].mxu0 %v281
        %v6911 = vpop.f32.mrb[0].mxu0
        %v6912 = vadd.f32 %v6146, %v6911
        %v6913 = vpop.f32.mrb[0].mxu0
        %v6914 = vadd.f32 %v6150, %v6913
        %v6915 = vpop.f32.mrb[0].mxu0
        %v6916 = vpop.f32.mrb[0].mxu0
        %6917 = vdwg.mxu0
        %6918 = vmatprep.subr.bf16.mxu0 %v6606
        %6919 = vmatpush1.bf16.msra.mxu0 %v6605
        %6920 = vmatprep.subr.bf16.mxu0 %v6610
        %6921 = vmatpush1.bf16.msra.mxu0 %v6609
        %6922 = vmatprep.subr.bf16.mxu0 %v6614
        %6923 = vmatpush1.bf16.msra.mxu0 %v6613
        %6924 = vmatprep.subr.bf16.mxu0 %v6618
        %6925 = vmatpush1.bf16.msra.mxu0 %v6617
        %6926 = vmatprep.subr.bf16.mxu0 %v6622
        %6927 = vmatpush1.bf16.msra.mxu0 %v6621
        %6928 = vmatprep.subr.bf16.mxu0 %v6626
        %6929 = vmatpush1.bf16.msra.mxu0 %v6625
        %6930 = vmatprep.subr.bf16.mxu0 %v6630
        %6931 = vmatpush1.bf16.msra.mxu0 %v6629
        %6932 = vmatprep.subr.bf16.mxu0 %v6634
        %6933 = vmatpush1.bf16.msra.mxu0 %v6633
        %6934 = vmatprep.subr.bf16.mxu0 %v6638
        %6935 = vmatpush1.bf16.msra.mxu0 %v6637
        %6936 = vmatprep.subr.bf16.mxu0 %v6642
        %6937 = vmatpush1.bf16.msra.mxu0 %v6641
        %6938 = vmatprep.subr.bf16.mxu0 %v6646
        %6939 = vmatpush1.bf16.msra.mxu0 %v6645
        %6940 = vmatprep.subr.bf16.mxu0 %v6650
        %6941 = vmatpush1.bf16.msra.mxu0 %v6649
        %6942 = vmatprep.subr.bf16.mxu0 %v6654
        %6943 = vmatpush1.bf16.msra.mxu0 %v6653
        %6944 = vmatprep.subr.bf16.mxu0 %v6658
        %6945 = vmatpush1.bf16.msra.mxu0 %v6657
        %6946 = vmatprep.subr.bf16.mxu0 %v6662
        %6947 = vmatpush1.bf16.msra.mxu0 %v6661
        %6948 = vmatprep.subr.bf16.mxu0 %v6666
        %6949 = vmatpush1.bf16.msra.mxu0 %v6665
        %6950 = vmatprep.mubr.bf16.mxu0 %v284
        %6951 = vmatmul.mubr.bf16.gmra.mrb[0].mxu0 %v283
        %v6952 = vpop.f32.mrb[0].mxu0
        %v6953 = vadd.f32 %v6912, %v6952
        %v6954 = vpop.f32.mrb[0].mxu0
        %v6955 = vadd.f32 %v6914, %v6954
        %v6956 = vpop.f32.mrb[0].mxu0
        %v6957 = vpop.f32.mrb[0].mxu0
        %6958 = vdwg.mxu0
        %v6959 = vmax.f32 %v6871, 0.0
        %v6960 = vmax.f32 %v6873, 0.0
        %v6961 = vmax.f32 %v6953, 0.0
        %v6962 = vmax.f32 %v6955, 0.0
        %v6963 = vpack.c.bf16 %v6959, %v6959
        %v6964 = vpack.c.bf16 %v6960, %v6960
        %v6965 = vpack.c.bf16 %v6961, %v6961
        %v6966 = vpack.c.bf16 %v6962, %v6962
        %v6967 = vld [vmem:[%s3 + $0xc00] sm:$0xff]
        %v6968 = vld [vmem:[%s3 + $0xc08] sm:$0xff]
        %v6969 = vld [vmem:[%s3 + $0xc10] sm:$0xff]
        %v6970 = vld [vmem:[%s3 + $0xc18] sm:$0xff]
        %v6971 = vld [vmem:[%s3 + $0xc20] sm:$0xff]
        %v6972 = vld [vmem:[%s3 + $0xc28] sm:$0xff]
        %v6973 = vld [vmem:[%s3 + $0xc30] sm:$0xff]
        %v6974 = vld [vmem:[%s3 + $0xc38] sm:$0xff]
        %v6975 = vld [vmem:[%s3 + $0xc40] sm:$0xff]
        %v6976 = vld [vmem:[%s3 + $0xc48] sm:$0xff]
        %v6977 = vld [vmem:[%s3 + $0xc50] sm:$0xff]
        %v6978 = vld [vmem:[%s3 + $0xc58] sm:$0xff]
        %v6979 = vld [vmem:[%s3 + $0xc60] sm:$0xff]
        %v6980 = vld [vmem:[%s3 + $0xc68] sm:$0xff]
        %v6981 = vld [vmem:[%s3 + $0xc70] sm:$0xff]
        %v6982 = vld [vmem:[%s3 + $0xc78] sm:$0xff]
        %v6983 = vld [vmem:[%s3 + $0xc80] sm:$0xff]
        %v6984 = vld [vmem:[%s3 + $0xc88] sm:$0xff]
        %v6985 = vld [vmem:[%s3 + $0xc90] sm:$0xff]
        %v6986 = vld [vmem:[%s3 + $0xc98] sm:$0xff]
        %v6987 = vld [vmem:[%s3 + $0xca0] sm:$0xff]
        %v6988 = vld [vmem:[%s3 + $0xca8] sm:$0xff]
        %v6989 = vld [vmem:[%s3 + $0xcb0] sm:$0xff]
        %v6990 = vld [vmem:[%s3 + $0xcb8] sm:$0xff]
        %v6991 = vld [vmem:[%s3 + $0xcc0] sm:$0xff]
        %v6992 = vld [vmem:[%s3 + $0xcc8] sm:$0xff]
        %v6993 = vld [vmem:[%s3 + $0xcd0] sm:$0xff]
        %v6994 = vld [vmem:[%s3 + $0xcd8] sm:$0xff]
        %v6995 = vld [vmem:[%s3 + $0xce0] sm:$0xff]
        %v6996 = vld [vmem:[%s3 + $0xce8] sm:$0xff]
        %v6997 = vld [vmem:[%s3 + $0xcf0] sm:$0xff]
        %v6998 = vld [vmem:[%s3 + $0xcf8] sm:$0xff]
        %v6999 = vld [vmem:[%s3 + $0xd00] sm:$0xff]
        %v7000 = vld [vmem:[%s3 + $0xd08] sm:$0xff]
        %v7001 = vld [vmem:[%s3 + $0xd10] sm:$0xff]
        %v7002 = vld [vmem:[%s3 + $0xd18] sm:$0xff]
        %v7003 = vld [vmem:[%s3 + $0xd20] sm:$0xff]
        %v7004 = vld [vmem:[%s3 + $0xd28] sm:$0xff]
        %v7005 = vld [vmem:[%s3 + $0xd30] sm:$0xff]
        %v7006 = vld [vmem:[%s3 + $0xd38] sm:$0xff]
        %v7007 = vld [vmem:[%s3 + $0xd40] sm:$0xff]
        %v7008 = vld [vmem:[%s3 + $0xd48] sm:$0xff]
        %v7009 = vld [vmem:[%s3 + $0xd50] sm:$0xff]
        %v7010 = vld [vmem:[%s3 + $0xd58] sm:$0xff]
        %v7011 = vld [vmem:[%s3 + $0xd60] sm:$0xff]
        %v7012 = vld [vmem:[%s3 + $0xd68] sm:$0xff]
        %v7013 = vld [vmem:[%s3 + $0xd70] sm:$0xff]
        %v7014 = vld [vmem:[%s3 + $0xd78] sm:$0xff]
        %v7015 = vld [vmem:[%s3 + $0xd80] sm:$0xff]
        %v7016 = vld [vmem:[%s3 + $0xd88] sm:$0xff]
        %v7017 = vld [vmem:[%s3 + $0xd90] sm:$0xff]
        %v7018 = vld [vmem:[%s3 + $0xd98] sm:$0xff]
        %v7019 = vld [vmem:[%s3 + $0xda0] sm:$0xff]
        %v7020 = vld [vmem:[%s3 + $0xda8] sm:$0xff]
        %v7021 = vld [vmem:[%s3 + $0xdb0] sm:$0xff]
        %v7022 = vld [vmem:[%s3 + $0xdb8] sm:$0xff]
        %v7023 = vld [vmem:[%s3 + $0xdc0] sm:$0xff]
        %v7024 = vld [vmem:[%s3 + $0xdc8] sm:$0xff]
        %v7025 = vld [vmem:[%s3 + $0xdd0] sm:$0xff]
        %v7026 = vld [vmem:[%s3 + $0xdd8] sm:$0xff]
        %v7027 = vld [vmem:[%s3 + $0xde0] sm:$0xff]
        %v7028 = vld [vmem:[%s3 + $0xde8] sm:$0xff]
        %v7029 = vld [vmem:[%s3 + $0xdf0] sm:$0xff]
        %v7030 = vld [vmem:[%s3 + $0xdf8] sm:$0xff]
        %v7031 = vld [vmem:[%s3 + $0xe00] sm:$0xff]
        %v7032 = vld [vmem:[%s3 + $0xe08] sm:$0xff]
        %v7033 = vld [vmem:[%s3 + $0xe10] sm:$0xff]
        %v7034 = vld [vmem:[%s3 + $0xe18] sm:$0xff]
        %v7035 = vld [vmem:[%s3 + $0xe20] sm:$0xff]
        %v7036 = vld [vmem:[%s3 + $0xe28] sm:$0xff]
        %v7037 = vld [vmem:[%s3 + $0xe30] sm:$0xff]
        %v7038 = vld [vmem:[%s3 + $0xe38] sm:$0xff]
        %v7039 = vld [vmem:[%s3 + $0xe40] sm:$0xff]
        %v7040 = vld [vmem:[%s3 + $0xe48] sm:$0xff]
        %v7041 = vld [vmem:[%s3 + $0xe50] sm:$0xff]
        %v7042 = vld [vmem:[%s3 + $0xe58] sm:$0xff]
        %v7043 = vld [vmem:[%s3 + $0xe60] sm:$0xff]
        %v7044 = vld [vmem:[%s3 + $0xe68] sm:$0xff]
        %v7045 = vld [vmem:[%s3 + $0xe70] sm:$0xff]
        %v7046 = vld [vmem:[%s3 + $0xe78] sm:$0xff]
        %v7047 = vld [vmem:[%s3 + $0xe80] sm:$0xff]
        %v7048 = vld [vmem:[%s3 + $0xe88] sm:$0xff]
        %v7049 = vld [vmem:[%s3 + $0xe90] sm:$0xff]
        %v7050 = vld [vmem:[%s3 + $0xe98] sm:$0xff]
        %v7051 = vld [vmem:[%s3 + $0xea0] sm:$0xff]
        %v7052 = vld [vmem:[%s3 + $0xea8] sm:$0xff]
        %v7053 = vld [vmem:[%s3 + $0xeb0] sm:$0xff]
        %v7054 = vld [vmem:[%s3 + $0xeb8] sm:$0xff]
        %v7055 = vld [vmem:[%s3 + $0xec0] sm:$0xff]
        %v7056 = vld [vmem:[%s3 + $0xec8] sm:$0xff]
        %v7057 = vld [vmem:[%s3 + $0xed0] sm:$0xff]
        %v7058 = vld [vmem:[%s3 + $0xed8] sm:$0xff]
        %v7059 = vld [vmem:[%s3 + $0xee0] sm:$0xff]
        %v7060 = vld [vmem:[%s3 + $0xee8] sm:$0xff]
        %v7061 = vld [vmem:[%s3 + $0xef0] sm:$0xff]
        %v7062 = vld [vmem:[%s3 + $0xef8] sm:$0xff]
        %v7063 = vld [vmem:[%s3 + $0xf00] sm:$0xff]
        %v7064 = vld [vmem:[%s3 + $0xf08] sm:$0xff]
        %v7065 = vld [vmem:[%s3 + $0xf10] sm:$0xff]
        %v7066 = vld [vmem:[%s3 + $0xf18] sm:$0xff]
        %v7067 = vld [vmem:[%s3 + $0xf20] sm:$0xff]
        %v7068 = vld [vmem:[%s3 + $0xf28] sm:$0xff]
        %v7069 = vld [vmem:[%s3 + $0xf30] sm:$0xff]
        %v7070 = vld [vmem:[%s3 + $0xf38] sm:$0xff]
        %v7071 = vld [vmem:[%s3 + $0xf40] sm:$0xff]
        %v7072 = vld [vmem:[%s3 + $0xf48] sm:$0xff]
        %v7073 = vld [vmem:[%s3 + $0xf50] sm:$0xff]
        %v7074 = vld [vmem:[%s3 + $0xf58] sm:$0xff]
        %v7075 = vld [vmem:[%s3 + $0xf60] sm:$0xff]
        %v7076 = vld [vmem:[%s3 + $0xf68] sm:$0xff]
        %v7077 = vld [vmem:[%s3 + $0xf70] sm:$0xff]
        %v7078 = vld [vmem:[%s3 + $0xf78] sm:$0xff]
        %v7079 = vld [vmem:[%s3 + $0xf80] sm:$0xff]
        %v7080 = vld [vmem:[%s3 + $0xf88] sm:$0xff]
        %v7081 = vld [vmem:[%s3 + $0xf90] sm:$0xff]
        %v7082 = vld [vmem:[%s3 + $0xf98] sm:$0xff]
        %v7083 = vld [vmem:[%s3 + $0xfa0] sm:$0xff]
        %v7084 = vld [vmem:[%s3 + $0xfa8] sm:$0xff]
        %v7085 = vld [vmem:[%s3 + $0xfb0] sm:$0xff]
        %v7086 = vld [vmem:[%s3 + $0xfb8] sm:$0xff]
        %v7087 = vld [vmem:[%s3 + $0xfc0] sm:$0xff]
        %v7088 = vld [vmem:[%s3 + $0xfc8] sm:$0xff]
        %v7089 = vld [vmem:[%s3 + $0xfd0] sm:$0xff]
        %v7090 = vld [vmem:[%s3 + $0xfd8] sm:$0xff]
        %v7091 = vld [vmem:[%s3 + $0xfe0] sm:$0xff]
        %v7092 = vld [vmem:[%s3 + $0xfe8] sm:$0xff]
        %v7093 = vld [vmem:[%s3 + $0xff0] sm:$0xff]
        %v7094 = vld [vmem:[%s3 + $0xff8] sm:$0xff]
        %v7223 = vunpack.c.l.b16 %v6967
        %v7224 = vunpack.c.h.b16 %v6967
        %v7225 = vunpack.c.l.b16 %v6968
        %v7226 = vunpack.c.h.b16 %v6968
        %v7227 = vunpack.c.l.b16 %v6969
        %v7228 = vunpack.c.h.b16 %v6969
        %v7229 = vunpack.c.l.b16 %v6970
        %v7230 = vunpack.c.h.b16 %v6970
        %v7231 = vunpack.c.l.b16 %v6971
        %v7232 = vunpack.c.h.b16 %v6971
        %v7233 = vunpack.c.l.b16 %v6972
        %v7234 = vunpack.c.h.b16 %v6972
        %v7235 = vunpack.c.l.b16 %v6973
        %v7236 = vunpack.c.h.b16 %v6973
        %v7237 = vunpack.c.l.b16 %v6974
        %v7238 = vunpack.c.h.b16 %v6974
        %v7239 = vunpack.c.l.b16 %v6975
        %v7240 = vunpack.c.h.b16 %v6975
        %v7241 = vunpack.c.l.b16 %v6976
        %v7242 = vunpack.c.h.b16 %v6976
        %v7243 = vunpack.c.l.b16 %v6977
        %v7244 = vunpack.c.h.b16 %v6977
        %v7245 = vunpack.c.l.b16 %v6978
        %v7246 = vunpack.c.h.b16 %v6978
        %v7247 = vunpack.c.l.b16 %v6979
        %v7248 = vunpack.c.h.b16 %v6979
        %v7249 = vunpack.c.l.b16 %v6980
        %v7250 = vunpack.c.h.b16 %v6980
        %v7251 = vunpack.c.l.b16 %v6981
        %v7252 = vunpack.c.h.b16 %v6981
        %v7253 = vunpack.c.l.b16 %v6982
        %v7254 = vunpack.c.h.b16 %v6982
        %v7255 = vunpack.c.l.b16 %v6983
        %v7256 = vunpack.c.h.b16 %v6983
        %v7257 = vunpack.c.l.b16 %v6984
        %v7258 = vunpack.c.h.b16 %v6984
        %v7259 = vunpack.c.l.b16 %v6985
        %v7260 = vunpack.c.h.b16 %v6985
        %v7261 = vunpack.c.l.b16 %v6986
        %v7262 = vunpack.c.h.b16 %v6986
        %v7263 = vunpack.c.l.b16 %v6987
        %v7264 = vunpack.c.h.b16 %v6987
        %v7265 = vunpack.c.l.b16 %v6988
        %v7266 = vunpack.c.h.b16 %v6988
        %v7267 = vunpack.c.l.b16 %v6989
        %v7268 = vunpack.c.h.b16 %v6989
        %v7269 = vunpack.c.l.b16 %v6990
        %v7270 = vunpack.c.h.b16 %v6990
        %v7271 = vunpack.c.l.b16 %v6991
        %v7272 = vunpack.c.h.b16 %v6991
        %v7273 = vunpack.c.l.b16 %v6992
        %v7274 = vunpack.c.h.b16 %v6992
        %v7275 = vunpack.c.l.b16 %v6993
        %v7276 = vunpack.c.h.b16 %v6993
        %v7277 = vunpack.c.l.b16 %v6994
        %v7278 = vunpack.c.h.b16 %v6994
        %v7279 = vunpack.c.l.b16 %v6995
        %v7280 = vunpack.c.h.b16 %v6995
        %v7281 = vunpack.c.l.b16 %v6996
        %v7282 = vunpack.c.h.b16 %v6996
        %v7283 = vunpack.c.l.b16 %v6997
        %v7284 = vunpack.c.h.b16 %v6997
        %v7285 = vunpack.c.l.b16 %v6998
        %v7286 = vunpack.c.h.b16 %v6998
        %v7287 = vunpack.c.l.b16 %v6999
        %v7288 = vunpack.c.h.b16 %v6999
        %v7289 = vunpack.c.l.b16 %v7000
        %v7290 = vunpack.c.h.b16 %v7000
        %v7291 = vunpack.c.l.b16 %v7001
        %v7292 = vunpack.c.h.b16 %v7001
        %v7293 = vunpack.c.l.b16 %v7002
        %v7294 = vunpack.c.h.b16 %v7002
        %v7295 = vunpack.c.l.b16 %v7003
        %v7296 = vunpack.c.h.b16 %v7003
        %v7297 = vunpack.c.l.b16 %v7004
        %v7298 = vunpack.c.h.b16 %v7004
        %v7299 = vunpack.c.l.b16 %v7005
        %v7300 = vunpack.c.h.b16 %v7005
        %v7301 = vunpack.c.l.b16 %v7006
        %v7302 = vunpack.c.h.b16 %v7006
        %v7303 = vunpack.c.l.b16 %v7007
        %v7304 = vunpack.c.h.b16 %v7007
        %v7305 = vunpack.c.l.b16 %v7008
        %v7306 = vunpack.c.h.b16 %v7008
        %v7307 = vunpack.c.l.b16 %v7009
        %v7308 = vunpack.c.h.b16 %v7009
        %v7309 = vunpack.c.l.b16 %v7010
        %v7310 = vunpack.c.h.b16 %v7010
        %v7311 = vunpack.c.l.b16 %v7011
        %v7312 = vunpack.c.h.b16 %v7011
        %v7313 = vunpack.c.l.b16 %v7012
        %v7314 = vunpack.c.h.b16 %v7012
        %v7315 = vunpack.c.l.b16 %v7013
        %v7316 = vunpack.c.h.b16 %v7013
        %v7317 = vunpack.c.l.b16 %v7014
        %v7318 = vunpack.c.h.b16 %v7014
        %v7319 = vunpack.c.l.b16 %v7015
        %v7320 = vunpack.c.h.b16 %v7015
        %v7321 = vunpack.c.l.b16 %v7016
        %v7322 = vunpack.c.h.b16 %v7016
        %v7323 = vunpack.c.l.b16 %v7017
        %v7324 = vunpack.c.h.b16 %v7017
        %v7325 = vunpack.c.l.b16 %v7018
        %v7326 = vunpack.c.h.b16 %v7018
        %v7327 = vunpack.c.l.b16 %v7019
        %v7328 = vunpack.c.h.b16 %v7019
        %v7329 = vunpack.c.l.b16 %v7020
        %v7330 = vunpack.c.h.b16 %v7020
        %v7331 = vunpack.c.l.b16 %v7021
        %v7332 = vunpack.c.h.b16 %v7021
        %v7333 = vunpack.c.l.b16 %v7022
        %v7334 = vunpack.c.h.b16 %v7022
        %v7335 = vunpack.c.l.b16 %v7023
        %v7336 = vunpack.c.h.b16 %v7023
        %v7337 = vunpack.c.l.b16 %v7024
        %v7338 = vunpack.c.h.b16 %v7024
        %v7339 = vunpack.c.l.b16 %v7025
        %v7340 = vunpack.c.h.b16 %v7025
        %v7341 = vunpack.c.l.b16 %v7026
        %v7342 = vunpack.c.h.b16 %v7026
        %v7343 = vunpack.c.l.b16 %v7027
        %v7344 = vunpack.c.h.b16 %v7027
        %v7345 = vunpack.c.l.b16 %v7028
        %v7346 = vunpack.c.h.b16 %v7028
        %v7347 = vunpack.c.l.b16 %v7029
        %v7348 = vunpack.c.h.b16 %v7029
        %v7349 = vunpack.c.l.b16 %v7030
        %v7350 = vunpack.c.h.b16 %v7030
        %v7351 = vunpack.c.l.b16 %v7031
        %v7352 = vunpack.c.h.b16 %v7031
        %v7353 = vunpack.c.l.b16 %v7032
        %v7354 = vunpack.c.h.b16 %v7032
        %v7355 = vunpack.c.l.b16 %v7033
        %v7356 = vunpack.c.h.b16 %v7033
        %v7357 = vunpack.c.l.b16 %v7034
        %v7358 = vunpack.c.h.b16 %v7034
        %v7359 = vunpack.c.l.b16 %v7035
        %v7360 = vunpack.c.h.b16 %v7035
        %v7361 = vunpack.c.l.b16 %v7036
        %v7362 = vunpack.c.h.b16 %v7036
        %v7363 = vunpack.c.l.b16 %v7037
        %v7364 = vunpack.c.h.b16 %v7037
        %v7365 = vunpack.c.l.b16 %v7038
        %v7366 = vunpack.c.h.b16 %v7038
        %v7367 = vunpack.c.l.b16 %v7039
        %v7368 = vunpack.c.h.b16 %v7039
        %v7369 = vunpack.c.l.b16 %v7040
        %v7370 = vunpack.c.h.b16 %v7040
        %v7371 = vunpack.c.l.b16 %v7041
        %v7372 = vunpack.c.h.b16 %v7041
        %v7373 = vunpack.c.l.b16 %v7042
        %v7374 = vunpack.c.h.b16 %v7042
        %v7375 = vunpack.c.l.b16 %v7043
        %v7376 = vunpack.c.h.b16 %v7043
        %v7377 = vunpack.c.l.b16 %v7044
        %v7378 = vunpack.c.h.b16 %v7044
        %v7379 = vunpack.c.l.b16 %v7045
        %v7380 = vunpack.c.h.b16 %v7045
        %v7381 = vunpack.c.l.b16 %v7046
        %v7382 = vunpack.c.h.b16 %v7046
        %v7383 = vunpack.c.l.b16 %v7047
        %v7384 = vunpack.c.h.b16 %v7047
        %v7385 = vunpack.c.l.b16 %v7048
        %v7386 = vunpack.c.h.b16 %v7048
        %v7387 = vunpack.c.l.b16 %v7049
        %v7388 = vunpack.c.h.b16 %v7049
        %v7389 = vunpack.c.l.b16 %v7050
        %v7390 = vunpack.c.h.b16 %v7050
        %v7391 = vunpack.c.l.b16 %v7051
        %v7392 = vunpack.c.h.b16 %v7051
        %v7393 = vunpack.c.l.b16 %v7052
        %v7394 = vunpack.c.h.b16 %v7052
        %v7395 = vunpack.c.l.b16 %v7053
        %v7396 = vunpack.c.h.b16 %v7053
        %v7397 = vunpack.c.l.b16 %v7054
        %v7398 = vunpack.c.h.b16 %v7054
        %v7399 = vunpack.c.l.b16 %v7055
        %v7400 = vunpack.c.h.b16 %v7055
        %v7401 = vunpack.c.l.b16 %v7056
        %v7402 = vunpack.c.h.b16 %v7056
        %v7403 = vunpack.c.l.b16 %v7057
        %v7404 = vunpack.c.h.b16 %v7057
        %v7405 = vunpack.c.l.b16 %v7058
        %v7406 = vunpack.c.h.b16 %v7058
        %v7407 = vunpack.c.l.b16 %v7059
        %v7408 = vunpack.c.h.b16 %v7059
        %v7409 = vunpack.c.l.b16 %v7060
        %v7410 = vunpack.c.h.b16 %v7060
        %v7411 = vunpack.c.l.b16 %v7061
        %v7412 = vunpack.c.h.b16 %v7061
        %v7413 = vunpack.c.l.b16 %v7062
        %v7414 = vunpack.c.h.b16 %v7062
        %v7415 = vunpack.c.l.b16 %v7063
        %v7416 = vunpack.c.h.b16 %v7063
        %v7417 = vunpack.c.l.b16 %v7064
        %v7418 = vunpack.c.h.b16 %v7064
        %v7419 = vunpack.c.l.b16 %v7065
        %v7420 = vunpack.c.h.b16 %v7065
        %v7421 = vunpack.c.l.b16 %v7066
        %v7422 = vunpack.c.h.b16 %v7066
        %v7423 = vunpack.c.l.b16 %v7067
        %v7424 = vunpack.c.h.b16 %v7067
        %v7425 = vunpack.c.l.b16 %v7068
        %v7426 = vunpack.c.h.b16 %v7068
        %v7427 = vunpack.c.l.b16 %v7069
        %v7428 = vunpack.c.h.b16 %v7069
        %v7429 = vunpack.c.l.b16 %v7070
        %v7430 = vunpack.c.h.b16 %v7070
        %v7431 = vunpack.c.l.b16 %v7071
        %v7432 = vunpack.c.h.b16 %v7071
        %v7433 = vunpack.c.l.b16 %v7072
        %v7434 = vunpack.c.h.b16 %v7072
        %v7435 = vunpack.c.l.b16 %v7073
        %v7436 = vunpack.c.h.b16 %v7073
        %v7437 = vunpack.c.l.b16 %v7074
        %v7438 = vunpack.c.h.b16 %v7074
        %v7439 = vunpack.c.l.b16 %v7075
        %v7440 = vunpack.c.h.b16 %v7075
        %v7441 = vunpack.c.l.b16 %v7076
        %v7442 = vunpack.c.h.b16 %v7076
        %v7443 = vunpack.c.l.b16 %v7077
        %v7444 = vunpack.c.h.b16 %v7077
        %v7445 = vunpack.c.l.b16 %v7078
        %v7446 = vunpack.c.h.b16 %v7078
        %v7447 = vunpack.c.l.b16 %v7079
        %v7448 = vunpack.c.h.b16 %v7079
        %v7449 = vunpack.c.l.b16 %v7080
        %v7450 = vunpack.c.h.b16 %v7080
        %v7451 = vunpack.c.l.b16 %v7081
        %v7452 = vunpack.c.h.b16 %v7081
        %v7453 = vunpack.c.l.b16 %v7082
        %v7454 = vunpack.c.h.b16 %v7082
        %v7455 = vunpack.c.l.b16 %v7083
        %v7456 = vunpack.c.h.b16 %v7083
        %v7457 = vunpack.c.l.b16 %v7084
        %v7458 = vunpack.c.h.b16 %v7084
        %v7459 = vunpack.c.l.b16 %v7085
        %v7460 = vunpack.c.h.b16 %v7085
        %v7461 = vunpack.c.l.b16 %v7086
        %v7462 = vunpack.c.h.b16 %v7086
        %v7463 = vunpack.c.l.b16 %v7087
        %v7464 = vunpack.c.h.b16 %v7087
        %v7465 = vunpack.c.l.b16 %v7088
        %v7466 = vunpack.c.h.b16 %v7088
        %v7467 = vunpack.c.l.b16 %v7089
        %v7468 = vunpack.c.h.b16 %v7089
        %v7469 = vunpack.c.l.b16 %v7090
        %v7470 = vunpack.c.h.b16 %v7090
        %v7471 = vunpack.c.l.b16 %v7091
        %v7472 = vunpack.c.h.b16 %v7091
        %v7473 = vunpack.c.l.b16 %v7092
        %v7474 = vunpack.c.h.b16 %v7092
        %v7475 = vunpack.c.l.b16 %v7093
        %v7476 = vunpack.c.h.b16 %v7093
        %v7477 = vunpack.c.l.b16 %v7094
        %v7478 = vunpack.c.h.b16 %v7094
        %v7479 = vpack.c.b16 %v7227, %v7223
        %v7480 = vpack.c.b16 %v7228, %v7224
        %v7481 = vpack.c.b16 %v7229, %v7225
        %v7482 = vpack.c.b16 %v7230, %v7226
        %v7483 = vpack.c.b16 %v7235, %v7231
        %v7484 = vpack.c.b16 %v7236, %v7232
        %v7485 = vpack.c.b16 %v7237, %v7233
        %v7486 = vpack.c.b16 %v7238, %v7234
        %v7487 = vpack.c.b16 %v7243, %v7239
        %v7488 = vpack.c.b16 %v7244, %v7240
        %v7489 = vpack.c.b16 %v7245, %v7241
        %v7490 = vpack.c.b16 %v7246, %v7242
        %v7491 = vpack.c.b16 %v7251, %v7247
        %v7492 = vpack.c.b16 %v7252, %v7248
        %v7493 = vpack.c.b16 %v7253, %v7249
        %v7494 = vpack.c.b16 %v7254, %v7250
        %v7495 = vpack.c.b16 %v7259, %v7255
        %v7496 = vpack.c.b16 %v7260, %v7256
        %v7497 = vpack.c.b16 %v7261, %v7257
        %v7498 = vpack.c.b16 %v7262, %v7258
        %v7499 = vpack.c.b16 %v7267, %v7263
        %v7500 = vpack.c.b16 %v7268, %v7264
        %v7501 = vpack.c.b16 %v7269, %v7265
        %v7502 = vpack.c.b16 %v7270, %v7266
        %v7503 = vpack.c.b16 %v7275, %v7271
        %v7504 = vpack.c.b16 %v7276, %v7272
        %v7505 = vpack.c.b16 %v7277, %v7273
        %v7506 = vpack.c.b16 %v7278, %v7274
        %v7507 = vpack.c.b16 %v7283, %v7279
        %v7508 = vpack.c.b16 %v7284, %v7280
        %v7509 = vpack.c.b16 %v7285, %v7281
        %v7510 = vpack.c.b16 %v7286, %v7282
        %v7511 = vpack.c.b16 %v7291, %v7287
        %v7512 = vpack.c.b16 %v7292, %v7288
        %v7513 = vpack.c.b16 %v7293, %v7289
        %v7514 = vpack.c.b16 %v7294, %v7290
        %v7515 = vpack.c.b16 %v7299, %v7295
        %v7516 = vpack.c.b16 %v7300, %v7296
        %v7517 = vpack.c.b16 %v7301, %v7297
        %v7518 = vpack.c.b16 %v7302, %v7298
        %v7519 = vpack.c.b16 %v7307, %v7303
        %v7520 = vpack.c.b16 %v7308, %v7304
        %v7521 = vpack.c.b16 %v7309, %v7305
        %v7522 = vpack.c.b16 %v7310, %v7306
        %v7523 = vpack.c.b16 %v7315, %v7311
        %v7524 = vpack.c.b16 %v7316, %v7312
        %v7525 = vpack.c.b16 %v7317, %v7313
        %v7526 = vpack.c.b16 %v7318, %v7314
        %v7527 = vpack.c.b16 %v7323, %v7319
        %v7528 = vpack.c.b16 %v7324, %v7320
        %v7529 = vpack.c.b16 %v7325, %v7321
        %v7530 = vpack.c.b16 %v7326, %v7322
        %v7531 = vpack.c.b16 %v7331, %v7327
        %v7532 = vpack.c.b16 %v7332, %v7328
        %v7533 = vpack.c.b16 %v7333, %v7329
        %v7534 = vpack.c.b16 %v7334, %v7330
        %v7535 = vpack.c.b16 %v7339, %v7335
        %v7536 = vpack.c.b16 %v7340, %v7336
        %v7537 = vpack.c.b16 %v7341, %v7337
        %v7538 = vpack.c.b16 %v7342, %v7338
        %v7539 = vpack.c.b16 %v7347, %v7343
        %v7540 = vpack.c.b16 %v7348, %v7344
        %v7541 = vpack.c.b16 %v7349, %v7345
        %v7542 = vpack.c.b16 %v7350, %v7346
        %v7543 = vpack.c.b16 %v7355, %v7351
        %v7544 = vpack.c.b16 %v7356, %v7352
        %v7545 = vpack.c.b16 %v7357, %v7353
        %v7546 = vpack.c.b16 %v7358, %v7354
        %v7547 = vpack.c.b16 %v7363, %v7359
        %v7548 = vpack.c.b16 %v7364, %v7360
        %v7549 = vpack.c.b16 %v7365, %v7361
        %v7550 = vpack.c.b16 %v7366, %v7362
        %v7551 = vpack.c.b16 %v7371, %v7367
        %v7552 = vpack.c.b16 %v7372, %v7368
        %v7553 = vpack.c.b16 %v7373, %v7369
        %v7554 = vpack.c.b16 %v7374, %v7370
        %v7555 = vpack.c.b16 %v7379, %v7375
        %v7556 = vpack.c.b16 %v7380, %v7376
        %v7557 = vpack.c.b16 %v7381, %v7377
        %v7558 = vpack.c.b16 %v7382, %v7378
        %v7559 = vpack.c.b16 %v7387, %v7383
        %v7560 = vpack.c.b16 %v7388, %v7384
        %v7561 = vpack.c.b16 %v7389, %v7385
        %v7562 = vpack.c.b16 %v7390, %v7386
        %v7563 = vpack.c.b16 %v7395, %v7391
        %v7564 = vpack.c.b16 %v7396, %v7392
        %v7565 = vpack.c.b16 %v7397, %v7393
        %v7566 = vpack.c.b16 %v7398, %v7394
        %v7567 = vpack.c.b16 %v7403, %v7399
        %v7568 = vpack.c.b16 %v7404, %v7400
        %v7569 = vpack.c.b16 %v7405, %v7401
        %v7570 = vpack.c.b16 %v7406, %v7402
        %v7571 = vpack.c.b16 %v7411, %v7407
        %v7572 = vpack.c.b16 %v7412, %v7408
        %v7573 = vpack.c.b16 %v7413, %v7409
        %v7574 = vpack.c.b16 %v7414, %v7410
        %v7575 = vpack.c.b16 %v7419, %v7415
        %v7576 = vpack.c.b16 %v7420, %v7416
        %v7577 = vpack.c.b16 %v7421, %v7417
        %v7578 = vpack.c.b16 %v7422, %v7418
        %v7579 = vpack.c.b16 %v7427, %v7423
        %v7580 = vpack.c.b16 %v7428, %v7424
        %v7581 = vpack.c.b16 %v7429, %v7425
        %v7582 = vpack.c.b16 %v7430, %v7426
        %v7583 = vpack.c.b16 %v7435, %v7431
        %v7584 = vpack.c.b16 %v7436, %v7432
        %v7585 = vpack.c.b16 %v7437, %v7433
        %v7586 = vpack.c.b16 %v7438, %v7434
        %v7587 = vpack.c.b16 %v7443, %v7439
        %v7588 = vpack.c.b16 %v7444, %v7440
        %v7589 = vpack.c.b16 %v7445, %v7441
        %v7590 = vpack.c.b16 %v7446, %v7442
        %v7591 = vpack.c.b16 %v7451, %v7447
        %v7592 = vpack.c.b16 %v7452, %v7448
        %v7593 = vpack.c.b16 %v7453, %v7449
        %v7594 = vpack.c.b16 %v7454, %v7450
        %v7595 = vpack.c.b16 %v7459, %v7455
        %v7596 = vpack.c.b16 %v7460, %v7456
        %v7597 = vpack.c.b16 %v7461, %v7457
        %v7598 = vpack.c.b16 %v7462, %v7458
        %v7599 = vpack.c.b16 %v7467, %v7463
        %v7600 = vpack.c.b16 %v7468, %v7464
        %v7601 = vpack.c.b16 %v7469, %v7465
        %v7602 = vpack.c.b16 %v7470, %v7466
        %v7603 = vpack.c.b16 %v7475, %v7471
        %v7604 = vpack.c.b16 %v7476, %v7472
        %v7605 = vpack.c.b16 %v7477, %v7473
        %v7606 = vpack.c.b16 %v7478, %v7474
        %7735 = vmatprep.subr.bf16.mxu0 %v7480
        %7736 = vmatpush1.bf16.msra.mxu0 %v7479
        %7737 = vmatprep.subr.bf16.mxu0 %v7484
        %7738 = vmatpush1.bf16.msra.mxu0 %v7483
        %7739 = vmatprep.subr.bf16.mxu0 %v7488
        %7740 = vmatpush1.bf16.msra.mxu0 %v7487
        %7741 = vmatprep.subr.bf16.mxu0 %v7492
        %7742 = vmatpush1.bf16.msra.mxu0 %v7491
        %7743 = vmatprep.subr.bf16.mxu0 %v7496
        %7744 = vmatpush1.bf16.msra.mxu0 %v7495
        %7745 = vmatprep.subr.bf16.mxu0 %v7500
        %7746 = vmatpush1.bf16.msra.mxu0 %v7499
        %7747 = vmatprep.subr.bf16.mxu0 %v7504
        %7748 = vmatpush1.bf16.msra.mxu0 %v7503
        %7749 = vmatprep.subr.bf16.mxu0 %v7508
        %7750 = vmatpush1.bf16.msra.mxu0 %v7507
        %7751 = vmatprep.subr.bf16.mxu0 %v7512
        %7752 = vmatpush1.bf16.msra.mxu0 %v7511
        %7753 = vmatprep.subr.bf16.mxu0 %v7516
        %7754 = vmatpush1.bf16.msra.mxu0 %v7515
        %7755 = vmatprep.subr.bf16.mxu0 %v7520
        %7756 = vmatpush1.bf16.msra.mxu0 %v7519
        %7757 = vmatprep.subr.bf16.mxu0 %v7524
        %7758 = vmatpush1.bf16.msra.mxu0 %v7523
        %7759 = vmatprep.subr.bf16.mxu0 %v7528
        %7760 = vmatpush1.bf16.msra.mxu0 %v7527
        %7761 = vmatprep.subr.bf16.mxu0 %v7532
        %7762 = vmatpush1.bf16.msra.mxu0 %v7531
        %7763 = vmatprep.subr.bf16.mxu0 %v7536
        %7764 = vmatpush1.bf16.msra.mxu0 %v7535
        %7765 = vmatprep.subr.bf16.mxu0 %v7540
        %7766 = vmatpush1.bf16.msra.mxu0 %v7539
        %7767 = vmatprep.mubr.bf16.mxu0 %v6964
        %7768 = vmatmul.mubr.bf16.gmra.mrb[0].mxu0 %v6963
        %v7769 = vpop.f32.mrb[0].mxu0
        %v7770 = vadd.f32 0.0, %v7769
        %v7771 = vpop.f32.mrb[0].mxu0
        %v7772 = vadd.f32 0.0, %v7771
        %v7773 = vpop.f32.mrb[0].mxu0
        %v7774 = vpop.f32.mrb[0].mxu0
        %7775 = vdwg.mxu0
        %7776 = vmatprep.subr.bf16.mxu0 %v7544
        %7777 = vmatpush1.bf16.msra.mxu0 %v7543
        %7778 = vmatprep.subr.bf16.mxu0 %v7548
        %7779 = vmatpush1.bf16.msra.mxu0 %v7547
        %7780 = vmatprep.subr.bf16.mxu0 %v7552
        %7781 = vmatpush1.bf16.msra.mxu0 %v7551
        %7782 = vmatprep.subr.bf16.mxu0 %v7556
        %7783 = vmatpush1.bf16.msra.mxu0 %v7555
        %7784 = vmatprep.subr.bf16.mxu0 %v7560
        %7785 = vmatpush1.bf16.msra.mxu0 %v7559
        %7786 = vmatprep.subr.bf16.mxu0 %v7564
        %7787 = vmatpush1.bf16.msra.mxu0 %v7563
        %7788 = vmatprep.subr.bf16.mxu0 %v7568
        %7789 = vmatpush1.bf16.msra.mxu0 %v7567
        %7790 = vmatprep.subr.bf16.mxu0 %v7572
        %7791 = vmatpush1.bf16.msra.mxu0 %v7571
        %7792 = vmatprep.subr.bf16.mxu0 %v7576
        %7793 = vmatpush1.bf16.msra.mxu0 %v7575
        %7794 = vmatprep.subr.bf16.mxu0 %v7580
        %7795 = vmatpush1.bf16.msra.mxu0 %v7579
        %7796 = vmatprep.subr.bf16.mxu0 %v7584
        %7797 = vmatpush1.bf16.msra.mxu0 %v7583
        %7798 = vmatprep.subr.bf16.mxu0 %v7588
        %7799 = vmatpush1.bf16.msra.mxu0 %v7587
        %7800 = vmatprep.subr.bf16.mxu0 %v7592
        %7801 = vmatpush1.bf16.msra.mxu0 %v7591
        %7802 = vmatprep.subr.bf16.mxu0 %v7596
        %7803 = vmatpush1.bf16.msra.mxu0 %v7595
        %7804 = vmatprep.subr.bf16.mxu0 %v7600
        %7805 = vmatpush1.bf16.msra.mxu0 %v7599
        %7806 = vmatprep.subr.bf16.mxu0 %v7604
        %7807 = vmatpush1.bf16.msra.mxu0 %v7603
        %7808 = vmatprep.mubr.bf16.mxu0 %v6966
        %7809 = vmatmul.mubr.bf16.gmra.mrb[0].mxu0 %v6965
        %v7810 = vpop.f32.mrb[0].mxu0
        %v7811 = vadd.f32 %v7770, %v7810
        %v7812 = vpop.f32.mrb[0].mxu0
        %v7813 = vadd.f32 %v7772, %v7812
        %v7814 = vpop.f32.mrb[0].mxu0
        %v7815 = vpop.f32.mrb[0].mxu0
        %7816 = vdwg.mxu0
        %7817 = vmatprep.subr.bf16.mxu0 %v7482
        %7818 = vmatpush1.bf16.msra.mxu0 %v7481
        %7819 = vmatprep.subr.bf16.mxu0 %v7486
        %7820 = vmatpush1.bf16.msra.mxu0 %v7485
        %7821 = vmatprep.subr.bf16.mxu0 %v7490
        %7822 = vmatpush1.bf16.msra.mxu0 %v7489
        %7823 = vmatprep.subr.bf16.mxu0 %v7494
        %7824 = vmatpush1.bf16.msra.mxu0 %v7493
        %7825 = vmatprep.subr.bf16.mxu0 %v7498
        %7826 = vmatpush1.bf16.msra.mxu0 %v7497
        %7827 = vmatprep.subr.bf16.mxu0 %v7502
        %7828 = vmatpush1.bf16.msra.mxu0 %v7501
        %7829 = vmatprep.subr.bf16.mxu0 %v7506
        %7830 = vmatpush1.bf16.msra.mxu0 %v7505
        %7831 = vmatprep.subr.bf16.mxu0 %v7510
        %7832 = vmatpush1.bf16.msra.mxu0 %v7509
        %7833 = vmatprep.subr.bf16.mxu0 %v7514
        %7834 = vmatpush1.bf16.msra.mxu0 %v7513
        %7835 = vmatprep.subr.bf16.mxu0 %v7518
        %7836 = vmatpush1.bf16.msra.mxu0 %v7517
        %7837 = vmatprep.subr.bf16.mxu0 %v7522
        %7838 = vmatpush1.bf16.msra.mxu0 %v7521
        %7839 = vmatprep.subr.bf16.mxu0 %v7526
        %7840 = vmatpush1.bf16.msra.mxu0 %v7525
        %7841 = vmatprep.subr.bf16.mxu0 %v7530
        %7842 = vmatpush1.bf16.msra.mxu0 %v7529
        %7843 = vmatprep.subr.bf16.mxu0 %v7534
        %7844 = vmatpush1.bf16.msra.mxu0 %v7533
        %7845 = vmatprep.subr.bf16.mxu0 %v7538
        %7846 = vmatpush1.bf16.msra.mxu0 %v7537
        %7847 = vmatprep.subr.bf16.mxu0 %v7542
        %7848 = vmatpush1.bf16.msra.mxu0 %v7541
        %7849 = vmatprep.mubr.bf16.mxu0 %v6964
        %7850 = vmatmul.mubr.bf16.gmra.mrb[0].mxu0 %v6963
        %v7851 = vpop.f32.mrb[0].mxu0
        %v7852 = vadd.f32 0.0, %v7851
        %v7853 = vpop.f32.mrb[0].mxu0
        %v7854 = vadd.f32 0.0, %v7853
        %v7855 = vpop.f32.mrb[0].mxu0
        %v7856 = vpop.f32.mrb[0].mxu0
        %7857 = vdwg.mxu0
        %7858 = vmatprep.subr.bf16.mxu0 %v7546
        %7859 = vmatpush1.bf16.msra.mxu0 %v7545
        %7860 = vmatprep.subr.bf16.mxu0 %v7550
        %7861 = vmatpush1.bf16.msra.mxu0 %v7549
        %7862 = vmatprep.subr.bf16.mxu0 %v7554
        %7863 = vmatpush1.bf16.msra.mxu0 %v7553
        %7864 = vmatprep.subr.bf16.mxu0 %v7558
        %7865 = vmatpush1.bf16.msra.mxu0 %v7557
        %7866 = vmatprep.subr.bf16.mxu0 %v7562
        %7867 = vmatpush1.bf16.msra.mxu0 %v7561
        %7868 = vmatprep.subr.bf16.mxu0 %v7566
        %7869 = vmatpush1.bf16.msra.mxu0 %v7565
        %7870 = vmatprep.subr.bf16.mxu0 %v7570
        %7871 = vmatpush1.bf16.msra.mxu0 %v7569
        %7872 = vmatprep.subr.bf16.mxu0 %v7574
        %7873 = vmatpush1.bf16.msra.mxu0 %v7573
        %7874 = vmatprep.subr.bf16.mxu0 %v7578
        %7875 = vmatpush1.bf16.msra.mxu0 %v7577
        %7876 = vmatprep.subr.bf16.mxu0 %v7582
        %7877 = vmatpush1.bf16.msra.mxu0 %v7581
        %7878 = vmatprep.subr.bf16.mxu0 %v7586
        %7879 = vmatpush1.bf16.msra.mxu0 %v7585
        %7880 = vmatprep.subr.bf16.mxu0 %v7590
        %7881 = vmatpush1.bf16.msra.mxu0 %v7589
        %7882 = vmatprep.subr.bf16.mxu0 %v7594
        %7883 = vmatpush1.bf16.msra.mxu0 %v7593
        %7884 = vmatprep.subr.bf16.mxu0 %v7598
        %7885 = vmatpush1.bf16.msra.mxu0 %v7597
        %7886 = vmatprep.subr.bf16.mxu0 %v7602
        %7887 = vmatpush1.bf16.msra.mxu0 %v7601
        %7888 = vmatprep.subr.bf16.mxu0 %v7606
        %7889 = vmatpush1.bf16.msra.mxu0 %v7605
        %7890 = vmatprep.mubr.bf16.mxu0 %v6966
        %7891 = vmatmul.mubr.bf16.gmra.mrb[0].mxu0 %v6965
        %v7892 = vpop.f32.mrb[0].mxu0
        %v7893 = vadd.f32 %v7852, %v7892
        %v7894 = vpop.f32.mrb[0].mxu0
        %v7895 = vadd.f32 %v7854, %v7894
        %v7896 = vpop.f32.mrb[0].mxu0
        %v7897 = vpop.f32.mrb[0].mxu0
        %7898 = vdwg.mxu0
        %v7899 = vadd.f32 %v6001, %v7811
        %v7900 = vadd.f32 %v6002, %v7813
        %v7901 = vadd.f32 %v6003, %v7893
        %v7902 = vadd.f32 %v6004, %v7895
        %v7903 = vadd.f32 %v7899, %v7900
        %v7904 = vadd.f32 %v7903, %v7901
        %v7905 = vadd.f32 %v7904, %v7902
        %7906 = vadd.xlane.f32.xlu0 %v7905
        %v7907 = vpop.xlane.xlu0 %7906
        %v7908 = vrcp.pop 512.0
        %v7909 = vmul.f32 %v7907, %v7908
        %v7910 = vsub.f32 %v7899, %v7909
        %v7911 = vsub.f32 %v7900, %v7909
        %v7912 = vsub.f32 %v7901, %v7909
        %v7913 = vsub.f32 %v7902, %v7909
        %v7914 = vmul.f32 %v7910, %v7910
        %v7915 = vmul.f32 %v7911, %v7911
        %v7916 = vmul.f32 %v7912, %v7912
        %v7917 = vmul.f32 %v7913, %v7913
        %v7918 = vadd.f32 %v7914, %v7915
        %v7919 = vadd.f32 %v7918, %v7916
        %v7920 = vadd.f32 %v7919, %v7917
        %7921 = vadd.xlane.f32.xlu0 %v7920
        %v7922 = vpop.xlane.xlu0 %7921
        %v7923 = vmul.f32 %v7922, %v7908
        %v7924 = vadd.f32 %v7923, 1e-05
        %v7925 = vrsqrt.pop %v7924
        %v7926 = vmul.f32 %v7910, %v7925
        %v7927 = vmul.f32 %v7911, %v7925
        %v7928 = vmul.f32 %v7912, %v7925
        %v7929 = vmul.f32 %v7913, %v7925
        %v7930 = vld [vmem:[%s5] sm:$0xf]
        %v7932 = vlaneseq
        %v7933 = vshrl.u32 %v7932, 7
        %v7934 = vsub.s32 0, %v7933
        %v7935 = vrot.slane %v7930, %v7934
        %v7936 = vlaneseq
        %v7937 = vshrl.u32 %v7936, 7
        %v7938 = vsub.s32 1, %v7937
        %v7939 = vrot.slane %v7930, %v7938
        %v7940 = vlaneseq
        %v7941 = vshrl.u32 %v7940, 7
        %v7942 = vsub.s32 2, %v7941
        %v7943 = vrot.slane %v7930, %v7942
        %v7944 = vlaneseq
        %v7945 = vshrl.u32 %v7944, 7
        %v7946 = vsub.s32 3, %v7945
        %v7947 = vrot.slane %v7930, %v7946
        %v7952 = vmul.f32 %v7926, %v7935
        %v7953 = vmul.f32 %v7927, %v7939
        %v7954 = vmul.f32 %v7928, %v7943
        %v7955 = vmul.f32 %v7929, %v7947
        %v7956 = vld [vmem:[%s6] sm:$0xf]
        %v7958 = vlaneseq
        %v7959 = vshrl.u32 %v7958, 7
        %v7960 = vsub.s32 0, %v7959
        %v7961 = vrot.slane %v7956, %v7960
        %v7962 = vlaneseq
        %v7963 = vshrl.u32 %v7962, 7
        %v7964 = vsub.s32 1, %v7963
        %v7965 = vrot.slane %v7956, %v7964
        %v7966 = vlaneseq
        %v7967 = vshrl.u32 %v7966, 7
        %v7968 = vsub.s32 2, %v7967
        %v7969 = vrot.slane %v7956, %v7968
        %v7970 = vlaneseq
        %v7971 = vshrl.u32 %v7970, 7
        %v7972 = vsub.s32 3, %v7971
        %v7973 = vrot.slane %v7956, %v7972
        %v7978 = vadd.f32 %v7952, %v7961
        %v7979 = vadd.f32 %v7953, %v7965
        %v7980 = vadd.f32 %v7954, %v7969
        %v7981 = vadd.f32 %v7955, %v7973
        %7982 = vst [vmem:[%s271] sm:$0xff] %v7978
        %7983 = vst [vmem:[%s271 + $0x8] sm:$0xff] %v7979
        %7984 = vst [vmem:[%s271 + $0x10] sm:$0xff] %v7980
        %7985 = vst [vmem:[%s271 + $0x18] sm:$0xff] %v7981
        %s7986 = sand.u32 %s181, 1
        %s7987 = scalar_lea.sflag [#allocation3], %s7986
        %s7988 = sand.u32 %s181, 1
        %s7989 = smul.addr %s7988, 32
        %s7990 = scalar_lea.vmem [#allocation2], %s7989
        // Predicated region
        $region49: #{poswise_ffn.1} parent=47 // pred_check
          %p7991 = pneg %p191
        $region50: #{poswise_ffn.1} parent=47 // pred_check_branch
          %7993 = sbr.rel (%p7991) target = $region52
        $region51: #{poswise_ffn.1} parent=47 // pred_region
          %s7995 = ssub.s32 512, 512
          %7996 = vsyncadd %s7987, %s7995
          %s7997 = smul.addr %s21, 4
          %s7998 = smul.addr %s7997, 128
          %s7999 = scalar_lea.hbm %s7, %s7998
          %s8001 = sshll.u32 %s7990, 4
          %s8002 = int_to_ptr.vmem [resolvable:$true] %s8001
          %8004 = dma.vmem_to_hbm [thread:$0]  %s8002, 512, %s7999, %s7987
        $region52: #{poswise_ffn.1} parent=47 // pred_fallthru
          _
      $region48: #{poswise_ffn.1} parent=5 // pred_fallthru
        _
      %p8005 = scmp.le.s32.totalorder 2, %s16
      // Predicated region
      $region53: #{poswise_ffn.1} parent=5 // pred_check
        %p8006 = pneg %p8005
      $region54: #{poswise_ffn.1} parent=5 // pred_check_branch
        %8008 = sbr.rel (%p8006) target = $region56
      $region55: #{poswise_ffn.1} parent=5 // pred_region
        %s8009 = ssub.s32 %s16, 2
        // Predicated region
        $region57: #{poswise_ffn.1} parent=55 // pred_check
          %p8010 = pneg %p197
        $region58: #{poswise_ffn.1} parent=55 // pred_check_branch
          %8012 = sbr.rel (%p8010) target = $region60
        $region59: #{poswise_ffn.1} parent=55 // pred_region
          %s8013 = sand.u32 %s182, 1
          %s8014 = scalar_lea.sflag [#allocation3], %s8013
          %s8015 = sand.u32 %s182, 1
          %s8016 = smul.addr %s8015, 32
          %s8017 = scalar_lea.vmem [#allocation2], %s8016
          %8018 = dma.done %s8014, 512
        $region60: #{poswise_ffn.1} parent=55 // pred_fallthru
          _
      $region56: #{poswise_ffn.1} parent=5 // pred_fallthru
        _
    $region6: #{poswise_ffn.1} parent=1 // loop_footer
      %s20 = sadd.s32 1, %s16
    $region7: #{poswise_ffn.1} parent=1 // loop_footer_branch
      %15 = sbr.rel target = $region3
    $region8: #{poswise_ffn.1} parent=1 // loop_exit
      _
    %8019 = vsyncpa [#allocation3], 1
    %s8020 = scalar_lea.sflag [#allocation3], 1
    %8021 = vsyncpa %s8020, 1

</llo_original>
